<compile_context>
chip_gen: v7x
topology: tpu7x:2x2x1
jax: 0.10.0
libtpu: 0.0.40
codegen_flags: <defaults>
</compile_context>

<pallas_src>
import functools

import jax
import jax.numpy as jnp
from jax import lax
from jax.experimental import pallas as pl
from jax.experimental.pallas import tpu as pltpu

_EPS = 1e-5
_LANES = 128      # channel padding target (lane width / MXU tile)


def _round_up(x, m):
    return (x + m - 1) // m * m


def _pick_batch_block(n, max_blk=8):
    """Largest divisor of n (<= max_blk), preferring >= 2 grid steps."""
    divisors = [b for b in range(1, min(n, max_blk) + 1) if n % b == 0]
    multi_step = [b for b in divisors if n // b >= 2]
    return max(multi_step) if multi_step else max(divisors)


# ---------------------------------------------------------------------------
# Fused Pallas kernel: the whole ResBlk forward, B images per grid step.
#
# Activation layout ("slab", bf16, lane-padded channels):
#   each image is flattened to rows h*Wp + w with Wp = W+1 zero-padded columns
#   (so horizontal conv padding needs no masks) plus halo_lead / halo_tail
#   zero rows above / below the image (vertical conv padding + inter-image
#   isolation).  B images are simply concatenated; every 3x3 tap is then one
#   shifted row-slice of the slab feeding one (L, C) x (C, C) MXU matmul.
# ---------------------------------------------------------------------------
def _resblk_kernel(*refs, Wp, halo_lead, halo_tail, B, M_img, Mp_img, L, W,
                   has_proj):
    if has_proj:
        (x_ref, w1_ref, b1_ref, w2_ref, b2_ref, ws_ref, bs_ref,
         out_ref, out1_ref) = refs
    else:
        x_ref, w1_ref, b1_ref, w2_ref, b2_ref, out_ref, out1_ref = refs

    cp = out1_ref.shape[1]

    def conv3x3(src_ref, w_ref, acc):
        # src_ref: (B*Mp_img, C) bf16 slab with zero halo rows / pad columns.
        # w_ref:   (9, C, cp) bf16, BN scale folded into the weights.
        # acc:     f32 init (broadcastable to (L, cp)).
        for kh in range(3):
            for kw in range(3):
                off = halo_lead + (kh - 1) * Wp + (kw - 1)   # static, >= 0
                patch = src_ref[pl.ds(off, L), :]            # bf16, no mask
                acc = acc + jnp.dot(patch, w_ref[kh * 3 + kw],
                                    preferred_element_type=jnp.float32)
        return acc

    # Rows of the accumulator that are real image pixels (not inter-image
    # halo/gap rows, not zero pad columns).  Computed once per step.
    r = lax.broadcasted_iota(jnp.int32, (L, 1), 0)
    row_in_img = r % Mp_img
    valid = (row_in_img < M_img) & ((row_in_img % Wp) < W)

    # ---- conv1 (3x3, pad 1) + folded BN1 + ReLU --> bf16 out1 slab ----------
    acc1 = conv3x3(x_ref, w1_ref, b1_ref[...])
    out1 = jnp.where(valid, jnp.maximum(acc1, 0.0), 0.0).astype(jnp.bfloat16)

    # Stage out1 in slab layout.  Only the slab-end halo rows need explicit
    # zero stores; interior gap/pad rows were zeroed by the select above.
    out1_ref[pl.ds(0, halo_lead), :] = jnp.zeros((halo_lead, cp), jnp.bfloat16)
    out1_ref[pl.ds(halo_lead + L, halo_tail), :] = jnp.zeros(
        (halo_tail, cp), jnp.bfloat16)
    out1_ref[pl.ds(halo_lead, L), :] = out1

    # ---- shortcut (folded into conv2's accumulator init) --------------------
    xc = x_ref[pl.ds(halo_lead, L), :]
    if has_proj:
        sc = jnp.dot(xc, ws_ref[...],
                     preferred_element_type=jnp.float32) + bs_ref[...]
    else:
        sc = xc.astype(jnp.float32)        # identity shortcut: add x directly

    # ---- conv2 (3x3, pad 1) + folded BN2 + residual + ReLU ------------------
    acc2 = conv3x3(out1_ref, w2_ref, sc + b2_ref[...])
    out = jnp.maximum(acc2, 0.0)

    # Store only the M_img valid rows of each image (lane-dense 128 stores).
    for n in range(B):
        out_ref[pl.ds(n * M_img, M_img), :] = (
            out[n * Mp_img:n * Mp_img + M_img, :].astype(out_ref.dtype))


# ---------------------------------------------------------------------------
# Glue (plain JAX): BN folding, channel/row padding, NCHW plumbing
# ---------------------------------------------------------------------------
def _fold_bn(gamma, beta, mean, var, conv_bias):
    scale = gamma / jnp.sqrt(var + _EPS)
    bias = beta + scale * (conv_bias - mean)
    return scale, bias


def _prep_conv3x3(w_oihw, conv_b, g, b, m, v, cin_p, cout_p):
    cout, cin = w_oihw.shape[0], w_oihw.shape[1]
    scale, bias = _fold_bn(g, b, m, v, conv_b)
    w = jnp.transpose(w_oihw, (2, 3, 1, 0)).reshape(9, cin, cout)
    w = w * scale[None, None, :]                    # fold BN scale into weights
    w = jnp.pad(w, ((0, 0), (0, cin_p - cin), (0, cout_p - cout)))
    bias = jnp.pad(bias, (0, cout_p - cout)).reshape(1, cout_p)
    return w.astype(jnp.bfloat16), bias.astype(jnp.float32)


def _prep_conv1x1(w_oi11, conv_b, g, b, m, v, cin_p, cout_p):
    cout, cin = w_oi11.shape[0], w_oi11.shape[1]
    scale, bias = _fold_bn(g, b, m, v, conv_b)
    w = jnp.transpose(w_oi11[:, :, 0, 0], (1, 0)) * scale[None, :]
    w = jnp.pad(w, ((0, cin_p - cin), (0, cout_p - cout)))
    bias = jnp.pad(bias, (0, cout_p - cout)).reshape(1, cout_p)
    return w.astype(jnp.bfloat16), bias.astype(jnp.float32)


def resblk_forward(x_nchw, p):
    """Pallas-backed ResBlk forward (eval-mode BN).  NCHW in / NCHW out."""
    N, Cin, H, W = x_nchw.shape
    Cout = p["w1"].shape[0]
    has_proj = (Cin != Cout)                 # mirrors the PyTorch module
    Cin_p = _round_up(Cin, _LANES)
    Cout_p = _round_up(Cout, _LANES)

    # Zero-column row layout: row stride Wp >= W+1 provides the horizontal
    # conv padding; keep H*Wp a multiple of 8 so output blocks stay aligned.
    Wp = W + 1
    while (H * Wp) % 8:
        Wp += 1
    M_img = H * Wp
    halo_lead = _round_up(Wp + 1, 16)                      # vertical zero rows
    halo_tail = halo_lead + ((-(M_img + 2 * halo_lead)) % 16)
    Mp_img = M_img + halo_lead + halo_tail                 # multiple of 16

    B = _pick_batch_block(N)                 # images per grid step
    G = N // B
    L = B * Mp_img - halo_lead - halo_tail   # accumulator rows per step

    # Activations: NCHW -> bf16 slab (zero pad columns, zero halo rows,
    # lane-padded channels).
    x = jnp.transpose(x_nchw, (0, 2, 3, 1)).astype(jnp.bfloat16)
    x = jnp.pad(x, ((0, 0), (0, 0), (0, Wp - W), (0, Cin_p - Cin)))
    x = x.reshape(N, M_img, Cin_p)
    x = jnp.pad(x, ((0, 0), (halo_lead, halo_tail), (0, 0)))
    x = x.reshape(N * Mp_img, Cin_p)

    # Weights / biases (BN folded, channel-padded, bf16 for the MXU).
    w1, b1 = _prep_conv3x3(p["w1"], p["b1"], p["bn1_g"], p["bn1_b"],
                           p["bn1_m"], p["bn1_v"], Cin_p, Cout_p)
    w2, b2 = _prep_conv3x3(p["w2"], p["b2"], p["bn2_g"], p["bn2_b"],
                           p["bn2_m"], p["bn2_v"], Cout_p, Cout_p)

    in_specs = [
        pl.BlockSpec((B * Mp_img, Cin_p), lambda n: (n, 0)),
        pl.BlockSpec((9, Cin_p, Cout_p), lambda n: (0, 0, 0)),
        pl.BlockSpec((1, Cout_p), lambda n: (0, 0)),
        pl.BlockSpec((9, Cout_p, Cout_p), lambda n: (0, 0, 0)),
        pl.BlockSpec((1, Cout_p), lambda n: (0, 0)),
    ]
    args = [x, w1, b1, w2, b2]
    if has_proj:
        ws, bs = _prep_conv1x1(p["ws"], p["bs"], p["bns_g"], p["bns_b"],
                               p["bns_m"], p["bns_v"], Cin_p, Cout_p)
        in_specs += [pl.BlockSpec((Cin_p, Cout_p), lambda n: (0, 0)),
                     pl.BlockSpec((1, Cout_p), lambda n: (0, 0))]
        args += [ws, bs]

    kernel = functools.partial(
        _resblk_kernel, Wp=Wp, halo_lead=halo_lead, halo_tail=halo_tail,
        B=B, M_img=M_img, Mp_img=Mp_img, L=L, W=W, has_proj=has_proj)

    out = pl.pallas_call(
        kernel,
        out_shape=jax.ShapeDtypeStruct((N * M_img, Cout_p), jnp.float32),
        grid=(G,),
        in_specs=in_specs,
        out_specs=pl.BlockSpec((B * M_img, Cout_p), lambda n: (n, 0)),
        scratch_shapes=[pltpu.VMEM((B * Mp_img, Cout_p), jnp.bfloat16)],
        compiler_params=pltpu.CompilerParams(
            dimension_semantics=("parallel",),
            vmem_limit_bytes=32 * 1024 * 1024),
    )(*args)

    out = out.reshape(N, H, Wp, Cout_p)[:, :, :W, :Cout]
    return jnp.transpose(out, (0, 3, 1, 2))            # back to NCHW


# ---------------------------------------------------------------------------
# Deterministic parameter initialization (PyTorch-like shapes; no file loads)
# ---------------------------------------------------------------------------
def init_params(key, ch_in, ch_out):
    ks = jax.random.split(key, 18)

    def u(k, shape, bound):
        return jax.random.uniform(k, shape, jnp.float32, -bound, bound)

    p = {}
    p["w1"] = u(ks[0], (ch_out, ch_in, 3, 3), 1.0 / (9 * ch_in) ** 0.5)
    p["b1"] = u(ks[1], (ch_out,), 1.0 / (9 * ch_in) ** 0.5)
    p["w2"] = u(ks[2], (ch_out, ch_out, 3, 3), 1.0 / (9 * ch_out) ** 0.5)
    p["b2"] = u(ks[3], (ch_out,), 1.0 / (9 * ch_out) ** 0.5)

    def bn(k0, k1, k2, k3, name):
        p[f"{name}_g"] = jax.random.uniform(k0, (ch_out,), jnp.float32, 0.5, 1.5)
        p[f"{name}_b"] = 0.1 * jax.random.normal(k1, (ch_out,), jnp.float32)
        p[f"{name}_m"] = 0.1 * jax.random.normal(k2, (ch_out,), jnp.float32)
        p[f"{name}_v"] = jax.random.uniform(k3, (ch_out,), jnp.float32, 0.5, 1.5)

    bn(ks[4], ks[5], ks[6], ks[7], "bn1")
    bn(ks[8], ks[9], ks[10], ks[11], "bn2")
    if ch_in != ch_out:      # projection shortcut only when shapes differ
        p["ws"] = u(ks[12], (ch_out, ch_in, 1, 1), 1.0 / ch_in ** 0.5)
        p["bs"] = u(ks[13], (ch_out,), 1.0 / ch_in ** 0.5)
        bn(ks[14], ks[15], ks[16], ks[17], "bns")
    return p


# ---------------------------------------------------------------------------
# Pure-JAX reference (mirrors the PyTorch forward, eval-mode BN)
# ---------------------------------------------------------------------------
def resblk_reference(x, p):
    def conv(x, w, b, pad):
        y = lax.conv_general_dilated(
            x, w, (1, 1), [(pad, pad), (pad, pad)],
            dimension_numbers=("NCHW", "OIHW", "NCHW"))
        return y + b.reshape(1, -1, 1, 1)

    def bn(x, g, b, m, v):
        g, b, m, v = (t.reshape(1, -1, 1, 1) for t in (g, b, m, v))
        return g * (x - m) / jnp.sqrt(v + _EPS) + b

    out = jax.nn.relu(bn(conv(x, p["w1"], p["b1"], 1),
                         p["bn1_g"], p["bn1_b"], p["bn1_m"], p["bn1_v"]))
    out = bn(conv(out, p["w2"], p["b2"], 1),
             p["bn2_g"], p["bn2_b"], p["bn2_m"], p["bn2_v"])
    if "ws" in p:
        sc = bn(conv(x, p["ws"], p["bs"], 0),
                p["bns_g"], p["bns_b"], p["bns_m"], p["bns_v"])
    else:
        sc = x
    return jax.nn.relu(out + sc)


if __name__ == "__main__":
    key = jax.random.PRNGKey(0)
    k1, k2, k3, k4 = jax.random.split(key, 4)

    # Test 1: projection shortcut (ch_in != ch_out), 2 images -> 2 grid steps.
    x1 = jax.random.normal(k1, (2, 4, 16, 16), jnp.float32)
    p1 = init_params(k2, 4, 8)
    out1 = jax.block_until_ready(resblk_forward(x1, p1))
    ref1 = resblk_reference(x1, p1)
    assert out1.shape == (2, 8, 16, 16)
    # bf16 MXU operands (f32 accumulation) -> slightly looser tolerance.
    assert jnp.allclose(out1, ref1, atol=3e-2, rtol=3e-2), \
        "Pallas ResBlk (projection shortcut) mismatch vs reference"

    # Test 2: identity shortcut (ch_in == ch_out), 8 images -> exercises the
    # batched grid step (4 images per step, 2 steps).
    x2 = jax.random.normal(k3, (8, 8, 16, 16), jnp.float32)
    p2 = init_params(k4, 8, 8)
    out2 = jax.block_until_ready(resblk_forward(x2, p2))
    ref2 = resblk_reference(x2, p2)
    assert out2.shape == (8, 8, 16, 16)
    assert jnp.allclose(out2, ref2, atol=3e-2, rtol=3e-2), \
        "Pallas ResBlk (identity shortcut) mismatch vs reference"

    print("KERNEL_OK")
</pallas_src>

<mosaic_0001>
module attributes {stable_mosaic.version = 11 : i64} {
  func.func @_resblk_kernel(%arg0: i32, %arg1: memref<336x128xbf16, #tpu.memory_space<vmem>>, %arg2: memref<9x128x128xbf16, #tpu.memory_space<vmem>>, %arg3: memref<1x128xf32, #tpu.memory_space<vmem>>, %arg4: memref<9x128x128xbf16, #tpu.memory_space<vmem>>, %arg5: memref<1x128xf32, #tpu.memory_space<vmem>>, %arg6: memref<128x128xbf16, #tpu.memory_space<vmem>>, %arg7: memref<1x128xf32, #tpu.memory_space<vmem>>, %arg8: memref<272x128xf32, #tpu.memory_space<vmem>>, %arg9: memref<336x128xbf16, #tpu.memory_space<vmem>>) attributes {dimension_semantics = [#tpu.dimension_semantics<parallel>], iteration_bounds = array<i64: 2>, scalar_prefetch = 0 : i64, scratch_operands = 1 : i64, tpu.core_type = #tpu.core_type<tc>, window_params = [{transform_indices = @transform_0, window_bounds = array<i64: 336, 128>}, {pipeline_mode = #tpu.pipeline_mode<synchronous>, transform_indices = @transform_1, window_bounds = array<i64: 9, 128, 128>}, {pipeline_mode = #tpu.pipeline_mode<synchronous>, transform_indices = @transform_2, window_bounds = array<i64: 1, 128>}, {pipeline_mode = #tpu.pipeline_mode<synchronous>, transform_indices = @transform_3, window_bounds = array<i64: 9, 128, 128>}, {pipeline_mode = #tpu.pipeline_mode<synchronous>, transform_indices = @transform_4, window_bounds = array<i64: 1, 128>}, {pipeline_mode = #tpu.pipeline_mode<synchronous>, transform_indices = @transform_5, window_bounds = array<i64: 128, 128>}, {pipeline_mode = #tpu.pipeline_mode<synchronous>, transform_indices = @transform_6, window_bounds = array<i64: 1, 128>}, {transform_indices = @transform_7, window_bounds = array<i64: 272, 128>}]} {
    %0 = tpu.iota {dimensions = array<i32: 0>} : vector<272x1xi32>
    %c336_i32 = arith.constant 336 : i32
    %c0_i32 = arith.constant 0 : i32
    %1 = arith.cmpi eq, %c336_i32, %c0_i32 : i32
    %c1_i32 = arith.constant 1 : i32
    %2 = arith.select %1, %c1_i32, %c336_i32 : i32
    %3 = vector.broadcast %2 : i32 to vector<272x1xi32>
    %4 = arith.remsi %0, %3 : vector<272x1xi32>
    %c0_i32_0 = arith.constant 0 : i32
    %5 = vector.broadcast %c0_i32_0 : i32 to vector<272x1xi32>
    %6 = arith.cmpi ne, %4, %5 : vector<272x1xi32>
    %c0_i32_1 = arith.constant 0 : i32
    %7 = vector.broadcast %c0_i32_1 : i32 to vector<272x1xi32>
    %8 = arith.cmpi slt, %4, %7 : vector<272x1xi32>
    %c0_i32_2 = arith.constant 0 : i32
    %9 = arith.cmpi slt, %2, %c0_i32_2 : i32
    %10 = vector.broadcast %9 : i1 to vector<272x1xi1>
    %11 = vector.broadcast %10 : vector<272x1xi1> to vector<272x1xi1>
    %12 = arith.xori %8, %11 : vector<272x1xi1>
    %13 = arith.andi %12, %6 : vector<272x1xi1>
    %14 = vector.broadcast %2 : i32 to vector<272x1xi32>
    %15 = arith.addi %4, %14 : vector<272x1xi32>
    %16 = arith.select %13, %15, %4 : vector<272x1xi1>, vector<272x1xi32>
    %c272_i32 = arith.constant 272 : i32
    %17 = vector.broadcast %c272_i32 : i32 to vector<272x1xi32>
    %18 = arith.cmpi slt, %16, %17 : vector<272x1xi32>
    %c17_i32 = arith.constant 17 : i32
    %c0_i32_3 = arith.constant 0 : i32
    %19 = arith.cmpi eq, %c17_i32, %c0_i32_3 : i32
    %c1_i32_4 = arith.constant 1 : i32
    %20 = arith.select %19, %c1_i32_4, %c17_i32 : i32
    %21 = vector.broadcast %20 : i32 to vector<272x1xi32>
    %22 = arith.remsi %16, %21 : vector<272x1xi32>
    %c0_i32_5 = arith.constant 0 : i32
    %23 = vector.broadcast %c0_i32_5 : i32 to vector<272x1xi32>
    %24 = arith.cmpi ne, %22, %23 : vector<272x1xi32>
    %c0_i32_6 = arith.constant 0 : i32
    %25 = vector.broadcast %c0_i32_6 : i32 to vector<272x1xi32>
    %26 = arith.cmpi slt, %22, %25 : vector<272x1xi32>
    %c0_i32_7 = arith.constant 0 : i32
    %27 = arith.cmpi slt, %20, %c0_i32_7 : i32
    %28 = vector.broadcast %27 : i1 to vector<272x1xi1>
    %29 = vector.broadcast %28 : vector<272x1xi1> to vector<272x1xi1>
    %30 = arith.xori %26, %29 : vector<272x1xi1>
    %31 = arith.andi %30, %24 : vector<272x1xi1>
    %32 = vector.broadcast %20 : i32 to vector<272x1xi32>
    %33 = arith.addi %22, %32 : vector<272x1xi32>
    %34 = arith.select %31, %33, %22 : vector<272x1xi1>, vector<272x1xi32>
    %c16_i32 = arith.constant 16 : i32
    %35 = vector.broadcast %c16_i32 : i32 to vector<272x1xi32>
    %36 = arith.cmpi slt, %34, %35 : vector<272x1xi32>
    %37 = arith.andi %18, %36 : vector<272x1xi1>
    %c0 = arith.constant 0 : index
    %c0_8 = arith.constant 0 : index
    %38 = vector.load %arg3[%c0, %c0_8] : memref<1x128xf32, #tpu.memory_space<vmem>>, vector<1x128xf32>
    %c14 = arith.constant 14 : index
    %c0_9 = arith.constant 0 : index
    %39 = vector.load %arg1[%c14, %c0_9] : memref<336x128xbf16, #tpu.memory_space<vmem>>, vector<272x128xbf16>
    %c0_10 = arith.constant 0 : index
    %c0_11 = arith.constant 0 : index
    %c0_12 = arith.constant 0 : index
    %40 = vector.load %arg2[%c0_10, %c0_11, %c0_12] : memref<9x128x128xbf16, #tpu.memory_space<vmem>>, vector<1x128x128xbf16>
    %41 = vector.shape_cast %40 : vector<1x128x128xbf16> to vector<128x128xbf16>
    %cst = arith.constant dense<0.000000e+00> : vector<272x128xf32>
    %42 = tpu.matmul %39, %41, %cst {dimension_numbers = #tpu.dot_dimension_numbers<[1], [0], [0], [1], [0, 0, 1, 1], [], []>} : vector<272x128xbf16>, vector<128x128xbf16>, vector<272x128xf32> -> vector<272x128xf32>
    %43 = vector.broadcast %38 : vector<1x128xf32> to vector<272x128xf32>
    %44 = arith.addf %43, %42 : vector<272x128xf32>
    %c15 = arith.constant 15 : index
    %c0_13 = arith.constant 0 : index
    %45 = vector.load %arg1[%c15, %c0_13] : memref<336x128xbf16, #tpu.memory_space<vmem>>, vector<272x128xbf16>
    %c1 = arith.constant 1 : index
    %c0_14 = arith.constant 0 : index
    %c0_15 = arith.constant 0 : index
    %46 = vector.load %arg2[%c1, %c0_14, %c0_15] : memref<9x128x128xbf16, #tpu.memory_space<vmem>>, vector<1x128x128xbf16>
    %47 = vector.shape_cast %46 : vector<1x128x128xbf16> to vector<128x128xbf16>
    %cst_16 = arith.constant dense<0.000000e+00> : vector<272x128xf32>
    %48 = tpu.matmul %45, %47, %cst_16 {dimension_numbers = #tpu.dot_dimension_numbers<[1], [0], [0], [1], [0, 0, 1, 1], [], []>} : vector<272x128xbf16>, vector<128x128xbf16>, vector<272x128xf32> -> vector<272x128xf32>
    %49 = arith.addf %44, %48 : vector<272x128xf32>
    %c16 = arith.constant 16 : index
    %c0_17 = arith.constant 0 : index
    %50 = vector.load %arg1[%c16, %c0_17] : memref<336x128xbf16, #tpu.memory_space<vmem>>, vector<272x128xbf16>
    %c2 = arith.constant 2 : index
    %c0_18 = arith.constant 0 : index
    %c0_19 = arith.constant 0 : index
    %51 = vector.load %arg2[%c2, %c0_18, %c0_19] : memref<9x128x128xbf16, #tpu.memory_space<vmem>>, vector<1x128x128xbf16>
    %52 = vector.shape_cast %51 : vector<1x128x128xbf16> to vector<128x128xbf16>
    %cst_20 = arith.constant dense<0.000000e+00> : vector<272x128xf32>
    %53 = tpu.matmul %50, %52, %cst_20 {dimension_numbers = #tpu.dot_dimension_numbers<[1], [0], [0], [1], [0, 0, 1, 1], [], []>} : vector<272x128xbf16>, vector<128x128xbf16>, vector<272x128xf32> -> vector<272x128xf32>
    %54 = arith.addf %49, %53 : vector<272x128xf32>
    %c31 = arith.constant 31 : index
    %c0_21 = arith.constant 0 : index
    %55 = vector.load %arg1[%c31, %c0_21] : memref<336x128xbf16, #tpu.memory_space<vmem>>, vector<272x128xbf16>
    %c3 = arith.constant 3 : index
    %c0_22 = arith.constant 0 : index
    %c0_23 = arith.constant 0 : index
    %56 = vector.load %arg2[%c3, %c0_22, %c0_23] : memref<9x128x128xbf16, #tpu.memory_space<vmem>>, vector<1x128x128xbf16>
    %57 = vector.shape_cast %56 : vector<1x128x128xbf16> to vector<128x128xbf16>
    %cst_24 = arith.constant dense<0.000000e+00> : vector<272x128xf32>
    %58 = tpu.matmul %55, %57, %cst_24 {dimension_numbers = #tpu.dot_dimension_numbers<[1], [0], [0], [1], [0, 0, 1, 1], [], []>} : vector<272x128xbf16>, vector<128x128xbf16>, vector<272x128xf32> -> vector<272x128xf32>
    %59 = arith.addf %54, %58 : vector<272x128xf32>
    %c32 = arith.constant 32 : index
    %c0_25 = arith.constant 0 : index
    %60 = vector.load %arg1[%c32, %c0_25] : memref<336x128xbf16, #tpu.memory_space<vmem>>, vector<272x128xbf16>
    %c4 = arith.constant 4 : index
    %c0_26 = arith.constant 0 : index
    %c0_27 = arith.constant 0 : index
    %61 = vector.load %arg2[%c4, %c0_26, %c0_27] : memref<9x128x128xbf16, #tpu.memory_space<vmem>>, vector<1x128x128xbf16>
    %62 = vector.shape_cast %61 : vector<1x128x128xbf16> to vector<128x128xbf16>
    %cst_28 = arith.constant dense<0.000000e+00> : vector<272x128xf32>
    %63 = tpu.matmul %60, %62, %cst_28 {dimension_numbers = #tpu.dot_dimension_numbers<[1], [0], [0], [1], [0, 0, 1, 1], [], []>} : vector<272x128xbf16>, vector<128x128xbf16>, vector<272x128xf32> -> vector<272x128xf32>
    %64 = arith.addf %59, %63 : vector<272x128xf32>
    %c33 = arith.constant 33 : index
    %c0_29 = arith.constant 0 : index
    %65 = vector.load %arg1[%c33, %c0_29] : memref<336x128xbf16, #tpu.memory_space<vmem>>, vector<272x128xbf16>
    %c5 = arith.constant 5 : index
    %c0_30 = arith.constant 0 : index
    %c0_31 = arith.constant 0 : index
    %66 = vector.load %arg2[%c5, %c0_30, %c0_31] : memref<9x128x128xbf16, #tpu.memory_space<vmem>>, vector<1x128x128xbf16>
    %67 = vector.shape_cast %66 : vector<1x128x128xbf16> to vector<128x128xbf16>
    %cst_32 = arith.constant dense<0.000000e+00> : vector<272x128xf32>
    %68 = tpu.matmul %65, %67, %cst_32 {dimension_numbers = #tpu.dot_dimension_numbers<[1], [0], [0], [1], [0, 0, 1, 1], [], []>} : vector<272x128xbf16>, vector<128x128xbf16>, vector<272x128xf32> -> vector<272x128xf32>
    %69 = arith.addf %64, %68 : vector<272x128xf32>
    %c48 = arith.constant 48 : index
    %c0_33 = arith.constant 0 : index
    %70 = vector.load %arg1[%c48, %c0_33] : memref<336x128xbf16, #tpu.memory_space<vmem>>, vector<272x128xbf16>
    %c6 = arith.constant 6 : index
    %c0_34 = arith.constant 0 : index
    %c0_35 = arith.constant 0 : index
    %71 = vector.load %arg2[%c6, %c0_34, %c0_35] : memref<9x128x128xbf16, #tpu.memory_space<vmem>>, vector<1x128x128xbf16>
    %72 = vector.shape_cast %71 : vector<1x128x128xbf16> to vector<128x128xbf16>
    %cst_36 = arith.constant dense<0.000000e+00> : vector<272x128xf32>
    %73 = tpu.matmul %70, %72, %cst_36 {dimension_numbers = #tpu.dot_dimension_numbers<[1], [0], [0], [1], [0, 0, 1, 1], [], []>} : vector<272x128xbf16>, vector<128x128xbf16>, vector<272x128xf32> -> vector<272x128xf32>
    %74 = arith.addf %69, %73 : vector<272x128xf32>
    %c49 = arith.constant 49 : index
    %c0_37 = arith.constant 0 : index
    %75 = vector.load %arg1[%c49, %c0_37] : memref<336x128xbf16, #tpu.memory_space<vmem>>, vector<272x128xbf16>
    %c7 = arith.constant 7 : index
    %c0_38 = arith.constant 0 : index
    %c0_39 = arith.constant 0 : index
    %76 = vector.load %arg2[%c7, %c0_38, %c0_39] : memref<9x128x128xbf16, #tpu.memory_space<vmem>>, vector<1x128x128xbf16>
    %77 = vector.shape_cast %76 : vector<1x128x128xbf16> to vector<128x128xbf16>
    %cst_40 = arith.constant dense<0.000000e+00> : vector<272x128xf32>
    %78 = tpu.matmul %75, %77, %cst_40 {dimension_numbers = #tpu.dot_dimension_numbers<[1], [0], [0], [1], [0, 0, 1, 1], [], []>} : vector<272x128xbf16>, vector<128x128xbf16>, vector<272x128xf32> -> vector<272x128xf32>
    %79 = arith.addf %74, %78 : vector<272x128xf32>
    %c50 = arith.constant 50 : index
    %c0_41 = arith.constant 0 : index
    %80 = vector.load %arg1[%c50, %c0_41] : memref<336x128xbf16, #tpu.memory_space<vmem>>, vector<272x128xbf16>
    %c8 = arith.constant 8 : index
    %c0_42 = arith.constant 0 : index
    %c0_43 = arith.constant 0 : index
    %81 = vector.load %arg2[%c8, %c0_42, %c0_43] : memref<9x128x128xbf16, #tpu.memory_space<vmem>>, vector<1x128x128xbf16>
    %82 = vector.shape_cast %81 : vector<1x128x128xbf16> to vector<128x128xbf16>
    %cst_44 = arith.constant dense<0.000000e+00> : vector<272x128xf32>
    %83 = tpu.matmul %80, %82, %cst_44 {dimension_numbers = #tpu.dot_dimension_numbers<[1], [0], [0], [1], [0, 0, 1, 1], [], []>} : vector<272x128xbf16>, vector<128x128xbf16>, vector<272x128xf32> -> vector<272x128xf32>
    %84 = arith.addf %79, %83 : vector<272x128xf32>
    %cst_45 = arith.constant 0.000000e+00 : f32
    %85 = vector.broadcast %cst_45 : f32 to vector<272x128xf32>
    %86 = arith.maximumf %84, %85 : vector<272x128xf32>
    %cst_46 = arith.constant 0.000000e+00 : f32
    %87 = vector.shape_cast %37 : vector<272x1xi1> to vector<272x1xi1>
    %88 = vector.broadcast %87 : vector<272x1xi1> to vector<272x128xi1>
    %89 = vector.broadcast %cst_46 : f32 to vector<272x128xf32>
    %90 = arith.select %88, %86, %89 : vector<272x128xi1>, vector<272x128xf32>
    %91 = arith.truncf %90 : vector<272x128xf32> to vector<272x128xbf16>
    %cst_47 = arith.constant 0.000000e+00 : bf16
    %92 = vector.broadcast %cst_47 : bf16 to vector<32x128xbf16>
    %c0_48 = arith.constant 0 : index
    %c0_49 = arith.constant 0 : index
    %93 = vector.load %arg9[%c0_48, %c0_49] : memref<336x128xbf16, #tpu.memory_space<vmem>>, vector<32x128xbf16>
    tpu.vector_store %arg9[%c0_48, %c0_49], %92 {strides = array<i32>} : memref<336x128xbf16, #tpu.memory_space<vmem>>, vector<32x128xbf16>,
    %cst_50 = arith.constant 0.000000e+00 : bf16
    %94 = vector.broadcast %cst_50 : bf16 to vector<32x128xbf16>
    %c304 = arith.constant 304 : index
    %c0_51 = arith.constant 0 : index
    %95 = vector.load %arg9[%c304, %c0_51] : memref<336x128xbf16, #tpu.memory_space<vmem>>, vector<32x128xbf16>
    tpu.vector_store %arg9[%c304, %c0_51], %94 {strides = array<i32>} : memref<336x128xbf16, #tpu.memory_space<vmem>>, vector<32x128xbf16>,
    %c32_52 = arith.constant 32 : index
    %c0_53 = arith.constant 0 : index
    %96 = vector.load %arg9[%c32_52, %c0_53] : memref<336x128xbf16, #tpu.memory_space<vmem>>, vector<272x128xbf16>
    tpu.vector_store %arg9[%c32_52, %c0_53], %91 {strides = array<i32>} : memref<336x128xbf16, #tpu.memory_space<vmem>>, vector<272x128xbf16>,
    %c32_54 = arith.constant 32 : index
    %c0_55 = arith.constant 0 : index
    %97 = vector.load %arg1[%c32_54, %c0_55] : memref<336x128xbf16, #tpu.memory_space<vmem>>, vector<272x128xbf16>
    %c0_56 = arith.constant 0 : index
    %c0_57 = arith.constant 0 : index
    %98 = vector.load %arg6[%c0_56, %c0_57] : memref<128x128xbf16, #tpu.memory_space<vmem>>, vector<128x128xbf16>
    %cst_58 = arith.constant dense<0.000000e+00> : vector<272x128xf32>
    %99 = tpu.matmul %97, %98, %cst_58 {dimension_numbers = #tpu.dot_dimension_numbers<[1], [0], [0], [1], [0, 0, 1, 1], [], []>} : vector<272x128xbf16>, vector<128x128xbf16>, vector<272x128xf32> -> vector<272x128xf32>
    %c0_59 = arith.constant 0 : index
    %c0_60 = arith.constant 0 : index
    %100 = vector.load %arg7[%c0_59, %c0_60] : memref<1x128xf32, #tpu.memory_space<vmem>>, vector<1x128xf32>
    %101 = vector.broadcast %100 : vector<1x128xf32> to vector<272x128xf32>
    %102 = arith.addf %99, %101 : vector<272x128xf32>
    %c0_61 = arith.constant 0 : index
    %c0_62 = arith.constant 0 : index
    %103 = vector.load %arg5[%c0_61, %c0_62] : memref<1x128xf32, #tpu.memory_space<vmem>>, vector<1x128xf32>
    %104 = vector.broadcast %103 : vector<1x128xf32> to vector<272x128xf32>
    %105 = arith.addf %102, %104 : vector<272x128xf32>
    %c14_63 = arith.constant 14 : index
    %c0_64 = arith.constant 0 : index
    %106 = vector.load %arg9[%c14_63, %c0_64] : memref<336x128xbf16, #tpu.memory_space<vmem>>, vector<272x128xbf16>
    %c0_65 = arith.constant 0 : index
    %c0_66 = arith.constant 0 : index
    %c0_67 = arith.constant 0 : index
    %107 = vector.load %arg4[%c0_65, %c0_66, %c0_67] : memref<9x128x128xbf16, #tpu.memory_space<vmem>>, vector<1x128x128xbf16>
    %108 = vector.shape_cast %107 : vector<1x128x128xbf16> to vector<128x128xbf16>
    %cst_68 = arith.constant dense<0.000000e+00> : vector<272x128xf32>
    %109 = tpu.matmul %106, %108, %cst_68 {dimension_numbers = #tpu.dot_dimension_numbers<[1], [0], [0], [1], [0, 0, 1, 1], [], []>} : vector<272x128xbf16>, vector<128x128xbf16>, vector<272x128xf32> -> vector<272x128xf32>
    %110 = arith.addf %105, %109 : vector<272x128xf32>
    %c15_69 = arith.constant 15 : index
    %c0_70 = arith.constant 0 : index
    %111 = vector.load %arg9[%c15_69, %c0_70] : memref<336x128xbf16, #tpu.memory_space<vmem>>, vector<272x128xbf16>
    %c1_71 = arith.constant 1 : index
    %c0_72 = arith.constant 0 : index
    %c0_73 = arith.constant 0 : index
    %112 = vector.load %arg4[%c1_71, %c0_72, %c0_73] : memref<9x128x128xbf16, #tpu.memory_space<vmem>>, vector<1x128x128xbf16>
    %113 = vector.shape_cast %112 : vector<1x128x128xbf16> to vector<128x128xbf16>
    %cst_74 = arith.constant dense<0.000000e+00> : vector<272x128xf32>
    %114 = tpu.matmul %111, %113, %cst_74 {dimension_numbers = #tpu.dot_dimension_numbers<[1], [0], [0], [1], [0, 0, 1, 1], [], []>} : vector<272x128xbf16>, vector<128x128xbf16>, vector<272x128xf32> -> vector<272x128xf32>
    %115 = arith.addf %110, %114 : vector<272x128xf32>
    %c16_75 = arith.constant 16 : index
    %c0_76 = arith.constant 0 : index
    %116 = vector.load %arg9[%c16_75, %c0_76] : memref<336x128xbf16, #tpu.memory_space<vmem>>, vector<272x128xbf16>
    %c2_77 = arith.constant 2 : index
    %c0_78 = arith.constant 0 : index
    %c0_79 = arith.constant 0 : index
    %117 = vector.load %arg4[%c2_77, %c0_78, %c0_79] : memref<9x128x128xbf16, #tpu.memory_space<vmem>>, vector<1x128x128xbf16>
    %118 = vector.shape_cast %117 : vector<1x128x128xbf16> to vector<128x128xbf16>
    %cst_80 = arith.constant dense<0.000000e+00> : vector<272x128xf32>
    %119 = tpu.matmul %116, %118, %cst_80 {dimension_numbers = #tpu.dot_dimension_numbers<[1], [0], [0], [1], [0, 0, 1, 1], [], []>} : vector<272x128xbf16>, vector<128x128xbf16>, vector<272x128xf32> -> vector<272x128xf32>
    %120 = arith.addf %115, %119 : vector<272x128xf32>
    %c31_81 = arith.constant 31 : index
    %c0_82 = arith.constant 0 : index
    %121 = vector.load %arg9[%c31_81, %c0_82] : memref<336x128xbf16, #tpu.memory_space<vmem>>, vector<272x128xbf16>
    %c3_83 = arith.constant 3 : index
    %c0_84 = arith.constant 0 : index
    %c0_85 = arith.constant 0 : index
    %122 = vector.load %arg4[%c3_83, %c0_84, %c0_85] : memref<9x128x128xbf16, #tpu.memory_space<vmem>>, vector<1x128x128xbf16>
    %123 = vector.shape_cast %122 : vector<1x128x128xbf16> to vector<128x128xbf16>
    %cst_86 = arith.constant dense<0.000000e+00> : vector<272x128xf32>
    %124 = tpu.matmul %121, %123, %cst_86 {dimension_numbers = #tpu.dot_dimension_numbers<[1], [0], [0], [1], [0, 0, 1, 1], [], []>} : vector<272x128xbf16>, vector<128x128xbf16>, vector<272x128xf32> -> vector<272x128xf32>
    %125 = arith.addf %120, %124 : vector<272x128xf32>
    %c32_87 = arith.constant 32 : index
    %c0_88 = arith.constant 0 : index
    %126 = vector.load %arg9[%c32_87, %c0_88] : memref<336x128xbf16, #tpu.memory_space<vmem>>, vector<272x128xbf16>
    %c4_89 = arith.constant 4 : index
    %c0_90 = arith.constant 0 : index
    %c0_91 = arith.constant 0 : index
    %127 = vector.load %arg4[%c4_89, %c0_90, %c0_91] : memref<9x128x128xbf16, #tpu.memory_space<vmem>>, vector<1x128x128xbf16>
    %128 = vector.shape_cast %127 : vector<1x128x128xbf16> to vector<128x128xbf16>
    %cst_92 = arith.constant dense<0.000000e+00> : vector<272x128xf32>
    %129 = tpu.matmul %126, %128, %cst_92 {dimension_numbers = #tpu.dot_dimension_numbers<[1], [0], [0], [1], [0, 0, 1, 1], [], []>} : vector<272x128xbf16>, vector<128x128xbf16>, vector<272x128xf32> -> vector<272x128xf32>
    %130 = arith.addf %125, %129 : vector<272x128xf32>
    %c33_93 = arith.constant 33 : index
    %c0_94 = arith.constant 0 : index
    %131 = vector.load %arg9[%c33_93, %c0_94] : memref<336x128xbf16, #tpu.memory_space<vmem>>, vector<272x128xbf16>
    %c5_95 = arith.constant 5 : index
    %c0_96 = arith.constant 0 : index
    %c0_97 = arith.constant 0 : index
    %132 = vector.load %arg4[%c5_95, %c0_96, %c0_97] : memref<9x128x128xbf16, #tpu.memory_space<vmem>>, vector<1x128x128xbf16>
    %133 = vector.shape_cast %132 : vector<1x128x128xbf16> to vector<128x128xbf16>
    %cst_98 = arith.constant dense<0.000000e+00> : vector<272x128xf32>
    %134 = tpu.matmul %131, %133, %cst_98 {dimension_numbers = #tpu.dot_dimension_numbers<[1], [0], [0], [1], [0, 0, 1, 1], [], []>} : vector<272x128xbf16>, vector<128x128xbf16>, vector<272x128xf32> -> vector<272x128xf32>
    %135 = arith.addf %130, %134 : vector<272x128xf32>
    %c48_99 = arith.constant 48 : index
    %c0_100 = arith.constant 0 : index
    %136 = vector.load %arg9[%c48_99, %c0_100] : memref<336x128xbf16, #tpu.memory_space<vmem>>, vector<272x128xbf16>
    %c6_101 = arith.constant 6 : index
    %c0_102 = arith.constant 0 : index
    %c0_103 = arith.constant 0 : index
    %137 = vector.load %arg4[%c6_101, %c0_102, %c0_103] : memref<9x128x128xbf16, #tpu.memory_space<vmem>>, vector<1x128x128xbf16>
    %138 = vector.shape_cast %137 : vector<1x128x128xbf16> to vector<128x128xbf16>
    %cst_104 = arith.constant dense<0.000000e+00> : vector<272x128xf32>
    %139 = tpu.matmul %136, %138, %cst_104 {dimension_numbers = #tpu.dot_dimension_numbers<[1], [0], [0], [1], [0, 0, 1, 1], [], []>} : vector<272x128xbf16>, vector<128x128xbf16>, vector<272x128xf32> -> vector<272x128xf32>
    %140 = arith.addf %135, %139 : vector<272x128xf32>
    %c49_105 = arith.constant 49 : index
    %c0_106 = arith.constant 0 : index
    %141 = vector.load %arg9[%c49_105, %c0_106] : memref<336x128xbf16, #tpu.memory_space<vmem>>, vector<272x128xbf16>
    %c7_107 = arith.constant 7 : index
    %c0_108 = arith.constant 0 : index
    %c0_109 = arith.constant 0 : index
    %142 = vector.load %arg4[%c7_107, %c0_108, %c0_109] : memref<9x128x128xbf16, #tpu.memory_space<vmem>>, vector<1x128x128xbf16>
    %143 = vector.shape_cast %142 : vector<1x128x128xbf16> to vector<128x128xbf16>
    %cst_110 = arith.constant dense<0.000000e+00> : vector<272x128xf32>
    %144 = tpu.matmul %141, %143, %cst_110 {dimension_numbers = #tpu.dot_dimension_numbers<[1], [0], [0], [1], [0, 0, 1, 1], [], []>} : vector<272x128xbf16>, vector<128x128xbf16>, vector<272x128xf32> -> vector<272x128xf32>
    %145 = arith.addf %140, %144 : vector<272x128xf32>
    %c50_111 = arith.constant 50 : index
    %c0_112 = arith.constant 0 : index
    %146 = vector.load %arg9[%c50_111, %c0_112] : memref<336x128xbf16, #tpu.memory_space<vmem>>, vector<272x128xbf16>
    %c8_113 = arith.constant 8 : index
    %c0_114 = arith.constant 0 : index
    %c0_115 = arith.constant 0 : index
    %147 = vector.load %arg4[%c8_113, %c0_114, %c0_115] : memref<9x128x128xbf16, #tpu.memory_space<vmem>>, vector<1x128x128xbf16>
    %148 = vector.shape_cast %147 : vector<1x128x128xbf16> to vector<128x128xbf16>
    %cst_116 = arith.constant dense<0.000000e+00> : vector<272x128xf32>
    %149 = tpu.matmul %146, %148, %cst_116 {dimension_numbers = #tpu.dot_dimension_numbers<[1], [0], [0], [1], [0, 0, 1, 1], [], []>} : vector<272x128xbf16>, vector<128x128xbf16>, vector<272x128xf32> -> vector<272x128xf32>
    %150 = arith.addf %145, %149 : vector<272x128xf32>
    %cst_117 = arith.constant 0.000000e+00 : f32
    %151 = vector.broadcast %cst_117 : f32 to vector<272x128xf32>
    %152 = arith.maximumf %150, %151 : vector<272x128xf32>
    %c0_118 = arith.constant 0 : index
    %c0_119 = arith.constant 0 : index
    %153 = vector.load %arg8[%c0_118, %c0_119] : memref<272x128xf32, #tpu.memory_space<vmem>>, vector<272x128xf32>
    tpu.vector_store %arg8[%c0_118, %c0_119], %152 {strides = array<i32>} : memref<272x128xf32, #tpu.memory_space<vmem>>, vector<272x128xf32>,
    return
  }
  func.func @transform_0(%arg0: i32) -> (i32, i32) {
    %c0_i32 = arith.constant 0 : i32
    %c0_i32_0 = arith.constant 0 : i32
    return %arg0, %c0_i32 : i32, i32
  }
  func.func @transform_1(%arg0: i32) -> (i32, i32, i32) {
    %c0_i32 = arith.constant 0 : i32
    %c0_i32_0 = arith.constant 0 : i32
    %c0_i32_1 = arith.constant 0 : i32
    %c0_i32_2 = arith.constant 0 : i32
    return %c0_i32, %c0_i32_0, %c0_i32_1 : i32, i32, i32
  }
  func.func @transform_2(%arg0: i32) -> (i32, i32) {
    %c0_i32 = arith.constant 0 : i32
    %c0_i32_0 = arith.constant 0 : i32
    %c0_i32_1 = arith.constant 0 : i32
    return %c0_i32, %c0_i32_0 : i32, i32
  }
  func.func @transform_3(%arg0: i32) -> (i32, i32, i32) {
    %c0_i32 = arith.constant 0 : i32
    %c0_i32_0 = arith.constant 0 : i32
    %c0_i32_1 = arith.constant 0 : i32
    %c0_i32_2 = arith.constant 0 : i32
    return %c0_i32, %c0_i32_0, %c0_i32_1 : i32, i32, i32
  }
  func.func @transform_4(%arg0: i32) -> (i32, i32) {
    %c0_i32 = arith.constant 0 : i32
    %c0_i32_0 = arith.constant 0 : i32
    %c0_i32_1 = arith.constant 0 : i32
    return %c0_i32, %c0_i32_0 : i32, i32
  }
  func.func @transform_5(%arg0: i32) -> (i32, i32) {
    %c0_i32 = arith.constant 0 : i32
    %c0_i32_0 = arith.constant 0 : i32
    %c0_i32_1 = arith.constant 0 : i32
    return %c0_i32, %c0_i32_0 : i32, i32
  }
  func.func @transform_6(%arg0: i32) -> (i32, i32) {
    %c0_i32 = arith.constant 0 : i32
    %c0_i32_0 = arith.constant 0 : i32
    %c0_i32_1 = arith.constant 0 : i32
    return %c0_i32, %c0_i32_0 : i32, i32
  }
  func.func @transform_7(%arg0: i32) -> (i32, i32) {
    %c0_i32 = arith.constant 0 : i32
    %c0_i32_0 = arith.constant 0 : i32
    return %arg0, %c0_i32 : i32, i32
  }
}

</mosaic_0001>

<llo_original>
// kernel: tpu_custom_call.1
$region0: #{tpu_custom_call.1}
  #allocation0 [shape = 'u32[]', space=smem, size = 0x4, offset = 0x4, fixed_abs, tag = 'smem constant byte address 0x4 - core index']
  #allocation1 [shape = 'u32[144,128]{1,0:T(1,128)}', space=vmem, size = 0x12000, scoped, tag = 'internal scratch']
  #allocation2 [shape = 'bf16[336,128]{1,0:T(16,128)(2,1)}', space=vmem, size = 0x15000, scoped, tag = 'scratch operand']
  %s0 = inlined_call_operand.hbm [shape: bf16[672,128], index: 0, kind: input, shape index: {}]
  %s1 = inlined_call_operand.hbm [shape: bf16[9,128,128], index: 1, kind: input, shape index: {}]
  %s2 = inlined_call_operand.vmem [shape: f32[1,128], index: 2, kind: input, shape index: {}]
  %s3 = inlined_call_operand.hbm [shape: bf16[9,128,128], index: 3, kind: input, shape index: {}]
  %s4 = inlined_call_operand.vmem [shape: f32[1,128], index: 4, kind: input, shape index: {}]
  %s5 = inlined_call_operand.hbm [shape: bf16[128,128], index: 5, kind: input, shape index: {}]
  %s6 = inlined_call_operand.vmem [shape: f32[1,128], index: 6, kind: input, shape index: {}]
  %s7 = inlined_call_operand.hbm [shape: f32[544,128], index: 7, kind: output, shape index: {}]
  %s8 = sld [smem:[#allocation0]]
  $region77: #{tpu_custom_call.1} parent=0
    _
  %s10 = ssub.s32 1, %s8
  %s11 = scalar_select 0, %s10, %s8
  $region1: #{tpu_custom_call.1} parent=0
    #allocation3 [shape = 'u8[172032]{0}', space=vmem, size = 0x2a000, scoped, tag = 'input window, operand 0']
    #allocation4 [shape = 's32[2]{0}', space=sflag, size = 0x8, scoped, tag = 'scoped memory for tpu_custom_call.1']
    #allocation5 [shape = 's32[2]{0}', space=sflag, size = 0x8, scoped, tag = 'scoped memory for tpu_custom_call.1']
    #allocation6 [shape = 'u8[294912]{0}', space=vmem, size = 0x48000, scoped, tag = 'input window, operand 1, single buffered']
    #allocation7 [shape = 's32[1]{0}', space=sflag, size = 0x4, scoped, tag = 'scoped memory for tpu_custom_call.1']
    #allocation8 [shape = 'u8[294912]{0}', space=vmem, size = 0x48000, scoped, tag = 'input window, operand 3, single buffered']
    #allocation9 [shape = 'u8[32768]{0}', space=vmem, size = 0x8000, scoped, tag = 'input window, operand 5, single buffered']
    #allocation10 [shape = 's32[1]{0}', space=sflag, size = 0x4, scoped, tag = 'scoped memory for tpu_custom_call.1']
    #allocation11 [shape = 'u8[278528]{0}', space=vmem, size = 0x44000, scoped, tag = 'output window, operand 0']
    %12 = vsyncpa [#allocation4], 0
    %s13 = scalar_lea.sflag [#allocation4], 1
    %14 = vsyncpa %s13, 0
    %15 = vsyncpa [#allocation7], 0
    %16 = vsyncpa [#allocation10], 0
    %17 = vsyncpa [#allocation5], 0
    %s18 = scalar_lea.sflag [#allocation5], 1
    %19 = vsyncpa %s18, 0
    loop: start=0, step=1, limit=4
    $region2: #{tpu_custom_call.1} parent=1 // loop_pre_header
      _
    $region3: #{tpu_custom_call.1} parent=1 // loop_header
      %s21 = sphi 0, %s25
      %p22 = scmp.ge.s32.totalorder %s21, 4
      %s31 = sphi 0, %s33
      %s34 = sphi 0, %s31
      %s35 = sphi 0, %s34
      %s51 = sphi 0, %s35
      %s55 = sphi 0, %s55
      %s57 = sphi 0, %s55
      %s58 = sphi 0, %s57
      %s72 = sphi 0, %s58
      %s76 = sphi 0, %s76
      %s78 = sphi 0, %s76
      %s79 = sphi 0, %s78
      %s93 = sphi 0, %s79
      %s97 = sphi 0, %s97
      %s99 = sphi 0, %s97
      %s100 = sphi 0, %s99
      %s114 = sphi 0, %s100
      %s118 = sphi 0, %s118
      %s120 = sphi 0, %s118
      %s121 = sphi 0, %s120
      %s135 = sphi 0, %s121
      %s139 = sphi 0, %s139
      %s141 = sphi 0, %s139
      %s142 = sphi 0, %s141
      %s156 = sphi 0, %s142
      %s160 = sphi 0, %s160
      %s162 = sphi 0, %s160
      %s163 = sphi 0, %s162
      %s177 = sphi 0, %s163
      %s183 = sphi 0, %s185
      %s186 = sphi 0, %s183
      %s187 = sphi 0, %s186
      %s203 = sphi 0, %s187
    $region4: #{tpu_custom_call.1} parent=1 // loop_header_branch
      %24 = sbr.rel (%p22) target = $region8
    $region5: #{tpu_custom_call.1} parent=1 // loop_body
      %s26 = ssub.s32 %s21, 1
      %s27 = ssub.s32 %s21, 2
      %s28 = sadd.s32 %s21, 1
      %s29 = ssub.s32 %s21, %s28
      %p30 = scmp.eq.s32.totalorder %s29, 0
      %s32 = sadd.s32 %s31, 1
      %s33 = scalar_select %p30, %s31, %s32
      %p36 = pneg %p30
      %p37 = scmp.eq.s32.totalorder %s21, 1
      %p38 = por %p36, %p37
      %p39 = scmp.ne.s32.totalorder %s31, %s34
      %p40 = scmp.eq.s32.totalorder %s21, 0
      %p41 = por %p39, %p40
      %p42 = scmp.ne.s32.totalorder %s31, %s34
      %p43 = scmp.eq.s32.totalorder %s26, 1
      %p44 = por %p42, %p43
      %p45 = scmp.ne.s32.totalorder %s34, %s35
      %p46 = scmp.eq.s32.totalorder %s26, 0
      %p47 = por %p45, %p46
      %p48 = scmp.ne.s32.totalorder %s34, %s35
      %p49 = scmp.eq.s32.totalorder %s27, 1
      %p50 = por %p48, %p49
      %p52 = scmp.ne.s32.totalorder %s35, %s51
      %p53 = scmp.eq.s32.totalorder %s27, 0
      %p54 = por %p52, %p53
      %s56 = sadd.s32 %s55, 1
      %p59 = scmp.eq.s32.totalorder %s21, 1
      %p60 = scmp.ne.s32.totalorder %s55, %s57
      %p61 = scmp.eq.s32.totalorder %s21, 0
      %p62 = por %p60, %p61
      %p63 = scmp.ne.s32.totalorder %s55, %s57
      %p64 = scmp.eq.s32.totalorder %s26, 1
      %p65 = por %p63, %p64
      %p66 = scmp.ne.s32.totalorder %s57, %s58
      %p67 = scmp.eq.s32.totalorder %s26, 0
      %p68 = por %p66, %p67
      %p69 = scmp.ne.s32.totalorder %s57, %s58
      %p70 = scmp.eq.s32.totalorder %s27, 1
      %p71 = por %p69, %p70
      %p73 = scmp.ne.s32.totalorder %s58, %s72
      %p74 = scmp.eq.s32.totalorder %s27, 0
      %p75 = por %p73, %p74
      %s77 = sadd.s32 %s76, 1
      %p80 = scmp.eq.s32.totalorder %s21, 1
      %p81 = scmp.ne.s32.totalorder %s76, %s78
      %p82 = scmp.eq.s32.totalorder %s21, 0
      %p83 = por %p81, %p82
      %p84 = scmp.ne.s32.totalorder %s76, %s78
      %p85 = scmp.eq.s32.totalorder %s26, 1
      %p86 = por %p84, %p85
      %p87 = scmp.ne.s32.totalorder %s78, %s79
      %p88 = scmp.eq.s32.totalorder %s26, 0
      %p89 = por %p87, %p88
      %p90 = scmp.ne.s32.totalorder %s78, %s79
      %p91 = scmp.eq.s32.totalorder %s27, 1
      %p92 = por %p90, %p91
      %p94 = scmp.ne.s32.totalorder %s79, %s93
      %p95 = scmp.eq.s32.totalorder %s27, 0
      %p96 = por %p94, %p95
      %s98 = sadd.s32 %s97, 1
      %p101 = scmp.eq.s32.totalorder %s21, 1
      %p102 = scmp.ne.s32.totalorder %s97, %s99
      %p103 = scmp.eq.s32.totalorder %s21, 0
      %p104 = por %p102, %p103
      %p105 = scmp.ne.s32.totalorder %s97, %s99
      %p106 = scmp.eq.s32.totalorder %s26, 1
      %p107 = por %p105, %p106
      %p108 = scmp.ne.s32.totalorder %s99, %s100
      %p109 = scmp.eq.s32.totalorder %s26, 0
      %p110 = por %p108, %p109
      %p111 = scmp.ne.s32.totalorder %s99, %s100
      %p112 = scmp.eq.s32.totalorder %s27, 1
      %p113 = por %p111, %p112
      %p115 = scmp.ne.s32.totalorder %s100, %s114
      %p116 = scmp.eq.s32.totalorder %s27, 0
      %p117 = por %p115, %p116
      %s119 = sadd.s32 %s118, 1
      %p122 = scmp.eq.s32.totalorder %s21, 1
      %p123 = scmp.ne.s32.totalorder %s118, %s120
      %p124 = scmp.eq.s32.totalorder %s21, 0
      %p125 = por %p123, %p124
      %p126 = scmp.ne.s32.totalorder %s118, %s120
      %p127 = scmp.eq.s32.totalorder %s26, 1
      %p128 = por %p126, %p127
      %p129 = scmp.ne.s32.totalorder %s120, %s121
      %p130 = scmp.eq.s32.totalorder %s26, 0
      %p131 = por %p129, %p130
      %p132 = scmp.ne.s32.totalorder %s120, %s121
      %p133 = scmp.eq.s32.totalorder %s27, 1
      %p134 = por %p132, %p133
      %p136 = scmp.ne.s32.totalorder %s121, %s135
      %p137 = scmp.eq.s32.totalorder %s27, 0
      %p138 = por %p136, %p137
      %s140 = sadd.s32 %s139, 1
      %p143 = scmp.eq.s32.totalorder %s21, 1
      %p144 = scmp.ne.s32.totalorder %s139, %s141
      %p145 = scmp.eq.s32.totalorder %s21, 0
      %p146 = por %p144, %p145
      %p147 = scmp.ne.s32.totalorder %s139, %s141
      %p148 = scmp.eq.s32.totalorder %s26, 1
      %p149 = por %p147, %p148
      %p150 = scmp.ne.s32.totalorder %s141, %s142
      %p151 = scmp.eq.s32.totalorder %s26, 0
      %p152 = por %p150, %p151
      %p153 = scmp.ne.s32.totalorder %s141, %s142
      %p154 = scmp.eq.s32.totalorder %s27, 1
      %p155 = por %p153, %p154
      %p157 = scmp.ne.s32.totalorder %s142, %s156
      %p158 = scmp.eq.s32.totalorder %s27, 0
      %p159 = por %p157, %p158
      %s161 = sadd.s32 %s160, 1
      %p164 = scmp.eq.s32.totalorder %s21, 1
      %p165 = scmp.ne.s32.totalorder %s160, %s162
      %p166 = scmp.eq.s32.totalorder %s21, 0
      %p167 = por %p165, %p166
      %p168 = scmp.ne.s32.totalorder %s160, %s162
      %p169 = scmp.eq.s32.totalorder %s26, 1
      %p170 = por %p168, %p169
      %p171 = scmp.ne.s32.totalorder %s162, %s163
      %p172 = scmp.eq.s32.totalorder %s26, 0
      %p173 = por %p171, %p172
      %p174 = scmp.ne.s32.totalorder %s162, %s163
      %p175 = scmp.eq.s32.totalorder %s27, 1
      %p176 = por %p174, %p175
      %p178 = scmp.ne.s32.totalorder %s163, %s177
      %p179 = scmp.eq.s32.totalorder %s27, 0
      %p180 = por %p178, %p179
      %s181 = ssub.s32 %s21, %s28
      %p182 = scmp.eq.s32.totalorder %s181, 0
      %s184 = sadd.s32 %s183, 1
      %s185 = scalar_select %p182, %s183, %s184
      %p188 = pneg %p182
      %p189 = scmp.eq.s32.totalorder %s21, 1
      %p190 = por %p188, %p189
      %p191 = scmp.ne.s32.totalorder %s183, %s186
      %p192 = scmp.eq.s32.totalorder %s21, 0
      %p193 = por %p191, %p192
      %p194 = scmp.ne.s32.totalorder %s183, %s186
      %p195 = scmp.eq.s32.totalorder %s26, 1
      %p196 = por %p194, %p195
      %p197 = scmp.ne.s32.totalorder %s186, %s187
      %p198 = scmp.eq.s32.totalorder %s26, 0
      %p199 = por %p197, %p198
      %p200 = scmp.ne.s32.totalorder %s186, %s187
      %p201 = scmp.eq.s32.totalorder %s27, 1
      %p202 = por %p200, %p201
      %p204 = scmp.ne.s32.totalorder %s187, %s203
      %p205 = scmp.eq.s32.totalorder %s27, 0
      %p206 = por %p204, %p205
      %p207 = scmp.le.s32.totalorder 1, %s21
      %p208 = scmp.lt.s32.totalorder %s21, 3
      %p209 = pnand %p207, %p208
      %p210 = pneg %p209
      // Predicated region
      $region9: #{tpu_custom_call.1} parent=5 // pred_check
        _
      $region10: #{tpu_custom_call.1} parent=5 // pred_check_branch
        %212 = sbr.rel (%p209) target = $region12
      $region11: #{tpu_custom_call.1} parent=5 // pred_region
        %s213 = ssub.s32 %s21, 1
        // Predicated region
        $region13: #{tpu_custom_call.1} parent=11 // pred_check
          %p214 = pneg %p68
        $region14: #{tpu_custom_call.1} parent=11 // pred_check_branch
          %216 = sbr.rel (%p214) target = $region16
        $region15: #{tpu_custom_call.1} parent=11 // pred_region
          %s218 = ssub.s32 9216, 9216
          %219 = vsyncadd [#allocation7], %s218
          %s220 = sshll.u32 [#allocation6], 4
          %s221 = int_to_ptr.vmem [resolvable:$true] %s220
          %226 = dma.hbm_to_vmem [thread:$0]  %s1, 9216, %s221, [#allocation7], 64, 64, 4
        $region16: #{tpu_custom_call.1} parent=11 // pred_fallthru
          _
        // Predicated region
        $region17: #{tpu_custom_call.1} parent=11 // pred_check
          %p227 = pneg %p89
        $region18: #{tpu_custom_call.1} parent=11 // pred_check_branch
          %229 = sbr.rel (%p227) target = $region20
        $region19: #{tpu_custom_call.1} parent=11 // pred_region
          _
        $region20: #{tpu_custom_call.1} parent=11 // pred_fallthru
          _
        // Predicated region
        $region21: #{tpu_custom_call.1} parent=11 // pred_check
          %p230 = pneg %p110
        $region22: #{tpu_custom_call.1} parent=11 // pred_check_branch
          %232 = sbr.rel (%p230) target = $region24
        $region23: #{tpu_custom_call.1} parent=11 // pred_region
          %s234 = ssub.s32 9216, 9216
          %235 = vsyncadd [#allocation7], %s234
          %s236 = sshll.u32 [#allocation8], 4
          %s237 = int_to_ptr.vmem [resolvable:$true] %s236
          %242 = dma.hbm_to_vmem [thread:$0]  %s3, 9216, %s237, [#allocation7], 64, 64, 4
        $region24: #{tpu_custom_call.1} parent=11 // pred_fallthru
          _
        // Predicated region
        $region25: #{tpu_custom_call.1} parent=11 // pred_check
          %p243 = pneg %p131
        $region26: #{tpu_custom_call.1} parent=11 // pred_check_branch
          %245 = sbr.rel (%p243) target = $region28
        $region27: #{tpu_custom_call.1} parent=11 // pred_region
          _
        $region28: #{tpu_custom_call.1} parent=11 // pred_fallthru
          _
        // Predicated region
        $region29: #{tpu_custom_call.1} parent=11 // pred_check
          %p246 = pneg %p152
        $region30: #{tpu_custom_call.1} parent=11 // pred_check_branch
          %248 = sbr.rel (%p246) target = $region32
        $region31: #{tpu_custom_call.1} parent=11 // pred_region
          %s250 = ssub.s32 1024, 1024
          %251 = vsyncadd [#allocation10], %s250
          %s252 = sshll.u32 [#allocation9], 4
          %s253 = int_to_ptr.vmem [resolvable:$true] %s252
          %258 = dma.hbm_to_vmem [thread:$0]  %s5, 1024, %s253, [#allocation10], 64, 64, 4
        $region32: #{tpu_custom_call.1} parent=11 // pred_fallthru
          _
        // Predicated region
        $region33: #{tpu_custom_call.1} parent=11 // pred_check
          %p259 = pneg %p173
        $region34: #{tpu_custom_call.1} parent=11 // pred_check_branch
          %261 = sbr.rel (%p259) target = $region36
        $region35: #{tpu_custom_call.1} parent=11 // pred_region
          _
        $region36: #{tpu_custom_call.1} parent=11 // pred_fallthru
          _
      $region12: #{tpu_custom_call.1} parent=5 // pred_fallthru
        _
      %p262 = scmp.lt.s32.totalorder %s21, 2
      // Predicated region
      $region37: #{tpu_custom_call.1} parent=5 // pred_check
        %p263 = pneg %p262
      $region38: #{tpu_custom_call.1} parent=5 // pred_check_branch
        %265 = sbr.rel (%p263) target = $region40
      $region39: #{tpu_custom_call.1} parent=5 // pred_region
        // Predicated region
        $region41: #{tpu_custom_call.1} parent=39 // pred_check
          %p266 = pneg %p41
        $region42: #{tpu_custom_call.1} parent=39 // pred_check_branch
          %268 = sbr.rel (%p266) target = $region44
        $region43: #{tpu_custom_call.1} parent=39 // pred_region
          %s269 = sand.u32 %s31, 1
          %s270 = scalar_lea.sflag [#allocation4], %s269
          %s271 = sand.u32 %s31, 1
          %s272 = smul.addr %s271, 168
          %s273 = scalar_lea.vmem [#allocation3], %s272
          %s274 = smul.u32 42, %s21
          %s276 = ssub.s32 2688, 2688
          %277 = vsyncadd %s270, %s276
          %s278 = smul.addr %s274, 64
          %s279 = scalar_lea.hbm %s0, %s278
          %s280 = sshll.u32 %s273, 4
          %s281 = int_to_ptr.vmem [resolvable:$true] %s280
          %286 = dma.hbm_to_vmem [thread:$0]  %s279, 2688, %s281, %s270, 64, 64, 4
        $region44: #{tpu_custom_call.1} parent=39 // pred_fallthru
          _
      $region40: #{tpu_custom_call.1} parent=5 // pred_fallthru
        _
      %p287 = scmp.le.s32.totalorder 1, %s21
      %p288 = scmp.lt.s32.totalorder %s21, 3
      %p289 = pnand %p287, %p288
      %p290 = pneg %p289
      // Predicated region
      $region45: #{tpu_custom_call.1} parent=5 // pred_check
        _
      $region46: #{tpu_custom_call.1} parent=5 // pred_check_branch
        %292 = sbr.rel (%p289) target = $region48
      $region47: #{tpu_custom_call.1} parent=5 // pred_region
        %s293 = ssub.s32 %s21, 1
        %s294 = sand.u32 %s34, 1
        %s295 = scalar_lea.sflag [#allocation4], %s294
        %s296 = sand.u32 %s34, 1
        %s297 = smul.addr %s296, 168
        %s298 = scalar_lea.vmem [#allocation3], %s297
        // Predicated region
        $region49: #{tpu_custom_call.1} parent=47 // pred_check
          %p299 = pneg %p47
        $region50: #{tpu_custom_call.1} parent=47 // pred_check_branch
          %301 = sbr.rel (%p299) target = $region52
        $region51: #{tpu_custom_call.1} parent=47 // pred_region
          %302 = dma.done %s295, 2688
        $region52: #{tpu_custom_call.1} parent=47 // pred_fallthru
          _
        // Predicated region
        $region53: #{tpu_custom_call.1} parent=47 // pred_check
          %p303 = pneg %p68
        $region54: #{tpu_custom_call.1} parent=47 // pred_check_branch
          %305 = sbr.rel (%p303) target = $region56
        $region55: #{tpu_custom_call.1} parent=47 // pred_region
          %306 = dma.done [#allocation7], 9216
        $region56: #{tpu_custom_call.1} parent=47 // pred_fallthru
          _
        // Predicated region
        $region57: #{tpu_custom_call.1} parent=47 // pred_check
          %p307 = pneg %p110
        $region58: #{tpu_custom_call.1} parent=47 // pred_check_branch
          %309 = sbr.rel (%p307) target = $region60
        $region59: #{tpu_custom_call.1} parent=47 // pred_region
          %310 = dma.done [#allocation7], 9216
        $region60: #{tpu_custom_call.1} parent=47 // pred_fallthru
          _
        // Predicated region
        $region61: #{tpu_custom_call.1} parent=47 // pred_check
          %p311 = pneg %p152
        $region62: #{tpu_custom_call.1} parent=47 // pred_check_branch
          %313 = sbr.rel (%p311) target = $region64
        $region63: #{tpu_custom_call.1} parent=47 // pred_region
          %314 = dma.done [#allocation10], 1024
        $region64: #{tpu_custom_call.1} parent=47 // pred_fallthru
          _
        %s315 = sand.u32 %s34, 1
        %s316 = scalar_lea.sflag [#allocation4], %s315
        %s317 = sand.u32 %s34, 1
        %s318 = smul.addr %s317, 168
        %s319 = scalar_lea.vmem [#allocation3], %s318
        %p320 = pneg %p47
        %p321 = pneg %p44
        %p322 = pneg %p68
        %p323 = pneg %p65
        %p324 = pneg %p89
        %p325 = pneg %p86
        %p326 = pneg %p110
        %p327 = pneg %p107
        %p328 = pneg %p131
        %p329 = pneg %p128
        %p330 = pneg %p152
        %p331 = pneg %p149
        %p332 = pneg %p173
        %p333 = pneg %p170
        %p334 = pneg %p199
        %p335 = pneg %p196
        %s336 = sand.u32 %s186, 1
        %s337 = scalar_lea.sflag [#allocation5], %s336
        %s338 = sand.u32 %s186, 1
        %s339 = smul.addr %s338, 272
        %s340 = scalar_lea.vmem [#allocation11], %s339
        %s341 = smul.u32 42, %s26
        %s342 = smul.u32 34, %s26
        %v344 = vlaneseq
        %v345 = vshrl.u32 %v344, 7
        %v346 = vadd.s32 %v345, 8
        %v347 = vadd.s32 %v345, 16
        %v348 = vadd.s32 %v345, 24
        %v349 = vadd.s32 %v345, 32
        %v350 = vadd.s32 %v345, 40
        %v351 = vadd.s32 %v345, 48
        %v352 = vadd.s32 %v345, 56
        %v353 = vadd.s32 %v345, 64
        %v354 = vadd.s32 %v345, 72
        %v355 = vadd.s32 %v345, 80
        %v356 = vadd.s32 %v345, 88
        %v357 = vadd.s32 %v345, 96
        %v358 = vadd.s32 %v345, 104
        %v359 = vadd.s32 %v345, 112
        %v360 = vadd.s32 %v345, 120
        %v361 = vadd.s32 %v345, 128
        %v362 = vadd.s32 %v345, 136
        %v363 = vadd.s32 %v345, 144
        %v364 = vadd.s32 %v345, 152
        %v365 = vadd.s32 %v345, 160
        %v366 = vadd.s32 %v345, 168
        %v367 = vadd.s32 %v345, 176
        %v368 = vadd.s32 %v345, 184
        %v369 = vadd.s32 %v345, 192
        %v370 = vadd.s32 %v345, 200
        %v371 = vadd.s32 %v345, 208
        %v372 = vadd.s32 %v345, 216
        %v373 = vadd.s32 %v345, 224
        %v374 = vadd.s32 %v345, 232
        %v375 = vadd.s32 %v345, 240
        %v376 = vadd.s32 %v345, 248
        %v377 = vadd.s32 %v345, 256
        %v378 = vadd.s32 %v345, 264
        %vm379 = vcmp.lt.s32.totalorder %v345, 0
        %v380 = vsub.s32 0, %v345
        %v381 = vsel %vm379, %v380, %v345
        %v382 = vmul.u32.u64.compose %v381, 3272356035
        %v383 = vextract.low.u32 %v382
        %v384 = vextract.high.u32 %v382
        %vm385 = vc.u32 %v383, 3272356035
        %v386 = vsel %vm385, 1, 0
        %v387 = vadd.s32 %v384, %v386
        %v388 = vshrl.u32 %v387, 8
        %v389 = vmul.u32 %v388, 336
        %v390 = vsub.s32 %v381, %v389
        %v391 = vsub.s32 0, %v390
        %v392 = vsel %vm379, %v391, %v390
        %vm393 = vcmp.lt.s32.totalorder %v346, 0
        %v394 = vsub.s32 0, %v346
        %v395 = vsel %vm393, %v394, %v346
        %v396 = vmul.u32.u64.compose %v395, 3272356035
        %v397 = vextract.low.u32 %v396
        %v398 = vextract.high.u32 %v396
        %vm399 = vc.u32 %v397, 3272356035
        %v400 = vsel %vm399, 1, 0
        %v401 = vadd.s32 %v398, %v400
        %v402 = vshrl.u32 %v401, 8
        %v403 = vmul.u32 %v402, 336
        %v404 = vsub.s32 %v395, %v403
        %v405 = vsub.s32 0, %v404
        %v406 = vsel %vm393, %v405, %v404
        %vm407 = vcmp.lt.s32.totalorder %v347, 0
        %v408 = vsub.s32 0, %v347
        %v409 = vsel %vm407, %v408, %v347
        %v410 = vmul.u32.u64.compose %v409, 3272356035
        %v411 = vextract.low.u32 %v410
        %v412 = vextract.high.u32 %v410
        %vm413 = vc.u32 %v411, 3272356035
        %v414 = vsel %vm413, 1, 0
        %v415 = vadd.s32 %v412, %v414
        %v416 = vshrl.u32 %v415, 8
        %v417 = vmul.u32 %v416, 336
        %v418 = vsub.s32 %v409, %v417
        %v419 = vsub.s32 0, %v418
        %v420 = vsel %vm407, %v419, %v418
        %vm421 = vcmp.lt.s32.totalorder %v348, 0
        %v422 = vsub.s32 0, %v348
        %v423 = vsel %vm421, %v422, %v348
        %v424 = vmul.u32.u64.compose %v423, 3272356035
        %v425 = vextract.low.u32 %v424
        %v426 = vextract.high.u32 %v424
        %vm427 = vc.u32 %v425, 3272356035
        %v428 = vsel %vm427, 1, 0
        %v429 = vadd.s32 %v426, %v428
        %v430 = vshrl.u32 %v429, 8
        %v431 = vmul.u32 %v430, 336
        %v432 = vsub.s32 %v423, %v431
        %v433 = vsub.s32 0, %v432
        %v434 = vsel %vm421, %v433, %v432
        %vm435 = vcmp.lt.s32.totalorder %v349, 0
        %v436 = vsub.s32 0, %v349
        %v437 = vsel %vm435, %v436, %v349
        %v438 = vmul.u32.u64.compose %v437, 3272356035
        %v439 = vextract.low.u32 %v438
        %v440 = vextract.high.u32 %v438
        %vm441 = vc.u32 %v439, 3272356035
        %v442 = vsel %vm441, 1, 0
        %v443 = vadd.s32 %v440, %v442
        %v444 = vshrl.u32 %v443, 8
        %v445 = vmul.u32 %v444, 336
        %v446 = vsub.s32 %v437, %v445
        %v447 = vsub.s32 0, %v446
        %v448 = vsel %vm435, %v447, %v446
        %vm449 = vcmp.lt.s32.totalorder %v350, 0
        %v450 = vsub.s32 0, %v350
        %v451 = vsel %vm449, %v450, %v350
        %v452 = vmul.u32.u64.compose %v451, 3272356035
        %v453 = vextract.low.u32 %v452
        %v454 = vextract.high.u32 %v452
        %vm455 = vc.u32 %v453, 3272356035
        %v456 = vsel %vm455, 1, 0
        %v457 = vadd.s32 %v454, %v456
        %v458 = vshrl.u32 %v457, 8
        %v459 = vmul.u32 %v458, 336
        %v460 = vsub.s32 %v451, %v459
        %v461 = vsub.s32 0, %v460
        %v462 = vsel %vm449, %v461, %v460
        %vm463 = vcmp.lt.s32.totalorder %v351, 0
        %v464 = vsub.s32 0, %v351
        %v465 = vsel %vm463, %v464, %v351
        %v466 = vmul.u32.u64.compose %v465, 3272356035
        %v467 = vextract.low.u32 %v466
        %v468 = vextract.high.u32 %v466
        %vm469 = vc.u32 %v467, 3272356035
        %v470 = vsel %vm469, 1, 0
        %v471 = vadd.s32 %v468, %v470
        %v472 = vshrl.u32 %v471, 8
        %v473 = vmul.u32 %v472, 336
        %v474 = vsub.s32 %v465, %v473
        %v475 = vsub.s32 0, %v474
        %v476 = vsel %vm463, %v475, %v474
        %vm477 = vcmp.lt.s32.totalorder %v352, 0
        %v478 = vsub.s32 0, %v352
        %v479 = vsel %vm477, %v478, %v352
        %v480 = vmul.u32.u64.compose %v479, 3272356035
        %v481 = vextract.low.u32 %v480
        %v482 = vextract.high.u32 %v480
        %vm483 = vc.u32 %v481, 3272356035
        %v484 = vsel %vm483, 1, 0
        %v485 = vadd.s32 %v482, %v484
        %v486 = vshrl.u32 %v485, 8
        %v487 = vmul.u32 %v486, 336
        %v488 = vsub.s32 %v479, %v487
        %v489 = vsub.s32 0, %v488
        %v490 = vsel %vm477, %v489, %v488
        %vm491 = vcmp.lt.s32.totalorder %v353, 0
        %v492 = vsub.s32 0, %v353
        %v493 = vsel %vm491, %v492, %v353
        %v494 = vmul.u32.u64.compose %v493, 3272356035
        %v495 = vextract.low.u32 %v494
        %v496 = vextract.high.u32 %v494
        %vm497 = vc.u32 %v495, 3272356035
        %v498 = vsel %vm497, 1, 0
        %v499 = vadd.s32 %v496, %v498
        %v500 = vshrl.u32 %v499, 8
        %v501 = vmul.u32 %v500, 336
        %v502 = vsub.s32 %v493, %v501
        %v503 = vsub.s32 0, %v502
        %v504 = vsel %vm491, %v503, %v502
        %vm505 = vcmp.lt.s32.totalorder %v354, 0
        %v506 = vsub.s32 0, %v354
        %v507 = vsel %vm505, %v506, %v354
        %v508 = vmul.u32.u64.compose %v507, 3272356035
        %v509 = vextract.low.u32 %v508
        %v510 = vextract.high.u32 %v508
        %vm511 = vc.u32 %v509, 3272356035
        %v512 = vsel %vm511, 1, 0
        %v513 = vadd.s32 %v510, %v512
        %v514 = vshrl.u32 %v513, 8
        %v515 = vmul.u32 %v514, 336
        %v516 = vsub.s32 %v507, %v515
        %v517 = vsub.s32 0, %v516
        %v518 = vsel %vm505, %v517, %v516
        %vm519 = vcmp.lt.s32.totalorder %v355, 0
        %v520 = vsub.s32 0, %v355
        %v521 = vsel %vm519, %v520, %v355
        %v522 = vmul.u32.u64.compose %v521, 3272356035
        %v523 = vextract.low.u32 %v522
        %v524 = vextract.high.u32 %v522
        %vm525 = vc.u32 %v523, 3272356035
        %v526 = vsel %vm525, 1, 0
        %v527 = vadd.s32 %v524, %v526
        %v528 = vshrl.u32 %v527, 8
        %v529 = vmul.u32 %v528, 336
        %v530 = vsub.s32 %v521, %v529
        %v531 = vsub.s32 0, %v530
        %v532 = vsel %vm519, %v531, %v530
        %vm533 = vcmp.lt.s32.totalorder %v356, 0
        %v534 = vsub.s32 0, %v356
        %v535 = vsel %vm533, %v534, %v356
        %v536 = vmul.u32.u64.compose %v535, 3272356035
        %v537 = vextract.low.u32 %v536
        %v538 = vextract.high.u32 %v536
        %vm539 = vc.u32 %v537, 3272356035
        %v540 = vsel %vm539, 1, 0
        %v541 = vadd.s32 %v538, %v540
        %v542 = vshrl.u32 %v541, 8
        %v543 = vmul.u32 %v542, 336
        %v544 = vsub.s32 %v535, %v543
        %v545 = vsub.s32 0, %v544
        %v546 = vsel %vm533, %v545, %v544
        %vm547 = vcmp.lt.s32.totalorder %v357, 0
        %v548 = vsub.s32 0, %v357
        %v549 = vsel %vm547, %v548, %v357
        %v550 = vmul.u32.u64.compose %v549, 3272356035
        %v551 = vextract.low.u32 %v550
        %v552 = vextract.high.u32 %v550
        %vm553 = vc.u32 %v551, 3272356035
        %v554 = vsel %vm553, 1, 0
        %v555 = vadd.s32 %v552, %v554
        %v556 = vshrl.u32 %v555, 8
        %v557 = vmul.u32 %v556, 336
        %v558 = vsub.s32 %v549, %v557
        %v559 = vsub.s32 0, %v558
        %v560 = vsel %vm547, %v559, %v558
        %vm561 = vcmp.lt.s32.totalorder %v358, 0
        %v562 = vsub.s32 0, %v358
        %v563 = vsel %vm561, %v562, %v358
        %v564 = vmul.u32.u64.compose %v563, 3272356035
        %v565 = vextract.low.u32 %v564
        %v566 = vextract.high.u32 %v564
        %vm567 = vc.u32 %v565, 3272356035
        %v568 = vsel %vm567, 1, 0
        %v569 = vadd.s32 %v566, %v568
        %v570 = vshrl.u32 %v569, 8
        %v571 = vmul.u32 %v570, 336
        %v572 = vsub.s32 %v563, %v571
        %v573 = vsub.s32 0, %v572
        %v574 = vsel %vm561, %v573, %v572
        %vm575 = vcmp.lt.s32.totalorder %v359, 0
        %v576 = vsub.s32 0, %v359
        %v577 = vsel %vm575, %v576, %v359
        %v578 = vmul.u32.u64.compose %v577, 3272356035
        %v579 = vextract.low.u32 %v578
        %v580 = vextract.high.u32 %v578
        %vm581 = vc.u32 %v579, 3272356035
        %v582 = vsel %vm581, 1, 0
        %v583 = vadd.s32 %v580, %v582
        %v584 = vshrl.u32 %v583, 8
        %v585 = vmul.u32 %v584, 336
        %v586 = vsub.s32 %v577, %v585
        %v587 = vsub.s32 0, %v586
        %v588 = vsel %vm575, %v587, %v586
        %vm589 = vcmp.lt.s32.totalorder %v360, 0
        %v590 = vsub.s32 0, %v360
        %v591 = vsel %vm589, %v590, %v360
        %v592 = vmul.u32.u64.compose %v591, 3272356035
        %v593 = vextract.low.u32 %v592
        %v594 = vextract.high.u32 %v592
        %vm595 = vc.u32 %v593, 3272356035
        %v596 = vsel %vm595, 1, 0
        %v597 = vadd.s32 %v594, %v596
        %v598 = vshrl.u32 %v597, 8
        %v599 = vmul.u32 %v598, 336
        %v600 = vsub.s32 %v591, %v599
        %v601 = vsub.s32 0, %v600
        %v602 = vsel %vm589, %v601, %v600
        %vm603 = vcmp.lt.s32.totalorder %v361, 0
        %v604 = vsub.s32 0, %v361
        %v605 = vsel %vm603, %v604, %v361
        %v606 = vmul.u32.u64.compose %v605, 3272356035
        %v607 = vextract.low.u32 %v606
        %v608 = vextract.high.u32 %v606
        %vm609 = vc.u32 %v607, 3272356035
        %v610 = vsel %vm609, 1, 0
        %v611 = vadd.s32 %v608, %v610
        %v612 = vshrl.u32 %v611, 8
        %v613 = vmul.u32 %v612, 336
        %v614 = vsub.s32 %v605, %v613
        %v615 = vsub.s32 0, %v614
        %v616 = vsel %vm603, %v615, %v614
        %vm617 = vcmp.lt.s32.totalorder %v362, 0
        %v618 = vsub.s32 0, %v362
        %v619 = vsel %vm617, %v618, %v362
        %v620 = vmul.u32.u64.compose %v619, 3272356035
        %v621 = vextract.low.u32 %v620
        %v622 = vextract.high.u32 %v620
        %vm623 = vc.u32 %v621, 3272356035
        %v624 = vsel %vm623, 1, 0
        %v625 = vadd.s32 %v622, %v624
        %v626 = vshrl.u32 %v625, 8
        %v627 = vmul.u32 %v626, 336
        %v628 = vsub.s32 %v619, %v627
        %v629 = vsub.s32 0, %v628
        %v630 = vsel %vm617, %v629, %v628
        %vm631 = vcmp.lt.s32.totalorder %v363, 0
        %v632 = vsub.s32 0, %v363
        %v633 = vsel %vm631, %v632, %v363
        %v634 = vmul.u32.u64.compose %v633, 3272356035
        %v635 = vextract.low.u32 %v634
        %v636 = vextract.high.u32 %v634
        %vm637 = vc.u32 %v635, 3272356035
        %v638 = vsel %vm637, 1, 0
        %v639 = vadd.s32 %v636, %v638
        %v640 = vshrl.u32 %v639, 8
        %v641 = vmul.u32 %v640, 336
        %v642 = vsub.s32 %v633, %v641
        %v643 = vsub.s32 0, %v642
        %v644 = vsel %vm631, %v643, %v642
        %vm645 = vcmp.lt.s32.totalorder %v364, 0
        %v646 = vsub.s32 0, %v364
        %v647 = vsel %vm645, %v646, %v364
        %v648 = vmul.u32.u64.compose %v647, 3272356035
        %v649 = vextract.low.u32 %v648
        %v650 = vextract.high.u32 %v648
        %vm651 = vc.u32 %v649, 3272356035
        %v652 = vsel %vm651, 1, 0
        %v653 = vadd.s32 %v650, %v652
        %v654 = vshrl.u32 %v653, 8
        %v655 = vmul.u32 %v654, 336
        %v656 = vsub.s32 %v647, %v655
        %v657 = vsub.s32 0, %v656
        %v658 = vsel %vm645, %v657, %v656
        %vm659 = vcmp.lt.s32.totalorder %v365, 0
        %v660 = vsub.s32 0, %v365
        %v661 = vsel %vm659, %v660, %v365
        %v662 = vmul.u32.u64.compose %v661, 3272356035
        %v663 = vextract.low.u32 %v662
        %v664 = vextract.high.u32 %v662
        %vm665 = vc.u32 %v663, 3272356035
        %v666 = vsel %vm665, 1, 0
        %v667 = vadd.s32 %v664, %v666
        %v668 = vshrl.u32 %v667, 8
        %v669 = vmul.u32 %v668, 336
        %v670 = vsub.s32 %v661, %v669
        %v671 = vsub.s32 0, %v670
        %v672 = vsel %vm659, %v671, %v670
        %vm673 = vcmp.lt.s32.totalorder %v366, 0
        %v674 = vsub.s32 0, %v366
        %v675 = vsel %vm673, %v674, %v366
        %v676 = vmul.u32.u64.compose %v675, 3272356035
        %v677 = vextract.low.u32 %v676
        %v678 = vextract.high.u32 %v676
        %vm679 = vc.u32 %v677, 3272356035
        %v680 = vsel %vm679, 1, 0
        %v681 = vadd.s32 %v678, %v680
        %v682 = vshrl.u32 %v681, 8
        %v683 = vmul.u32 %v682, 336
        %v684 = vsub.s32 %v675, %v683
        %v685 = vsub.s32 0, %v684
        %v686 = vsel %vm673, %v685, %v684
        %vm687 = vcmp.lt.s32.totalorder %v367, 0
        %v688 = vsub.s32 0, %v367
        %v689 = vsel %vm687, %v688, %v367
        %v690 = vmul.u32.u64.compose %v689, 3272356035
        %v691 = vextract.low.u32 %v690
        %v692 = vextract.high.u32 %v690
        %vm693 = vc.u32 %v691, 3272356035
        %v694 = vsel %vm693, 1, 0
        %v695 = vadd.s32 %v692, %v694
        %v696 = vshrl.u32 %v695, 8
        %v697 = vmul.u32 %v696, 336
        %v698 = vsub.s32 %v689, %v697
        %v699 = vsub.s32 0, %v698
        %v700 = vsel %vm687, %v699, %v698
        %vm701 = vcmp.lt.s32.totalorder %v368, 0
        %v702 = vsub.s32 0, %v368
        %v703 = vsel %vm701, %v702, %v368
        %v704 = vmul.u32.u64.compose %v703, 3272356035
        %v705 = vextract.low.u32 %v704
        %v706 = vextract.high.u32 %v704
        %vm707 = vc.u32 %v705, 3272356035
        %v708 = vsel %vm707, 1, 0
        %v709 = vadd.s32 %v706, %v708
        %v710 = vshrl.u32 %v709, 8
        %v711 = vmul.u32 %v710, 336
        %v712 = vsub.s32 %v703, %v711
        %v713 = vsub.s32 0, %v712
        %v714 = vsel %vm701, %v713, %v712
        %vm715 = vcmp.lt.s32.totalorder %v369, 0
        %v716 = vsub.s32 0, %v369
        %v717 = vsel %vm715, %v716, %v369
        %v718 = vmul.u32.u64.compose %v717, 3272356035
        %v719 = vextract.low.u32 %v718
        %v720 = vextract.high.u32 %v718
        %vm721 = vc.u32 %v719, 3272356035
        %v722 = vsel %vm721, 1, 0
        %v723 = vadd.s32 %v720, %v722
        %v724 = vshrl.u32 %v723, 8
        %v725 = vmul.u32 %v724, 336
        %v726 = vsub.s32 %v717, %v725
        %v727 = vsub.s32 0, %v726
        %v728 = vsel %vm715, %v727, %v726
        %vm729 = vcmp.lt.s32.totalorder %v370, 0
        %v730 = vsub.s32 0, %v370
        %v731 = vsel %vm729, %v730, %v370
        %v732 = vmul.u32.u64.compose %v731, 3272356035
        %v733 = vextract.low.u32 %v732
        %v734 = vextract.high.u32 %v732
        %vm735 = vc.u32 %v733, 3272356035
        %v736 = vsel %vm735, 1, 0
        %v737 = vadd.s32 %v734, %v736
        %v738 = vshrl.u32 %v737, 8
        %v739 = vmul.u32 %v738, 336
        %v740 = vsub.s32 %v731, %v739
        %v741 = vsub.s32 0, %v740
        %v742 = vsel %vm729, %v741, %v740
        %vm743 = vcmp.lt.s32.totalorder %v371, 0
        %v744 = vsub.s32 0, %v371
        %v745 = vsel %vm743, %v744, %v371
        %v746 = vmul.u32.u64.compose %v745, 3272356035
        %v747 = vextract.low.u32 %v746
        %v748 = vextract.high.u32 %v746
        %vm749 = vc.u32 %v747, 3272356035
        %v750 = vsel %vm749, 1, 0
        %v751 = vadd.s32 %v748, %v750
        %v752 = vshrl.u32 %v751, 8
        %v753 = vmul.u32 %v752, 336
        %v754 = vsub.s32 %v745, %v753
        %v755 = vsub.s32 0, %v754
        %v756 = vsel %vm743, %v755, %v754
        %vm757 = vcmp.lt.s32.totalorder %v372, 0
        %v758 = vsub.s32 0, %v372
        %v759 = vsel %vm757, %v758, %v372
        %v760 = vmul.u32.u64.compose %v759, 3272356035
        %v761 = vextract.low.u32 %v760
        %v762 = vextract.high.u32 %v760
        %vm763 = vc.u32 %v761, 3272356035
        %v764 = vsel %vm763, 1, 0
        %v765 = vadd.s32 %v762, %v764
        %v766 = vshrl.u32 %v765, 8
        %v767 = vmul.u32 %v766, 336
        %v768 = vsub.s32 %v759, %v767
        %v769 = vsub.s32 0, %v768
        %v770 = vsel %vm757, %v769, %v768
        %vm771 = vcmp.lt.s32.totalorder %v373, 0
        %v772 = vsub.s32 0, %v373
        %v773 = vsel %vm771, %v772, %v373
        %v774 = vmul.u32.u64.compose %v773, 3272356035
        %v775 = vextract.low.u32 %v774
        %v776 = vextract.high.u32 %v774
        %vm777 = vc.u32 %v775, 3272356035
        %v778 = vsel %vm777, 1, 0
        %v779 = vadd.s32 %v776, %v778
        %v780 = vshrl.u32 %v779, 8
        %v781 = vmul.u32 %v780, 336
        %v782 = vsub.s32 %v773, %v781
        %v783 = vsub.s32 0, %v782
        %v784 = vsel %vm771, %v783, %v782
        %vm785 = vcmp.lt.s32.totalorder %v374, 0
        %v786 = vsub.s32 0, %v374
        %v787 = vsel %vm785, %v786, %v374
        %v788 = vmul.u32.u64.compose %v787, 3272356035
        %v789 = vextract.low.u32 %v788
        %v790 = vextract.high.u32 %v788
        %vm791 = vc.u32 %v789, 3272356035
        %v792 = vsel %vm791, 1, 0
        %v793 = vadd.s32 %v790, %v792
        %v794 = vshrl.u32 %v793, 8
        %v795 = vmul.u32 %v794, 336
        %v796 = vsub.s32 %v787, %v795
        %v797 = vsub.s32 0, %v796
        %v798 = vsel %vm785, %v797, %v796
        %vm799 = vcmp.lt.s32.totalorder %v375, 0
        %v800 = vsub.s32 0, %v375
        %v801 = vsel %vm799, %v800, %v375
        %v802 = vmul.u32.u64.compose %v801, 3272356035
        %v803 = vextract.low.u32 %v802
        %v804 = vextract.high.u32 %v802
        %vm805 = vc.u32 %v803, 3272356035
        %v806 = vsel %vm805, 1, 0
        %v807 = vadd.s32 %v804, %v806
        %v808 = vshrl.u32 %v807, 8
        %v809 = vmul.u32 %v808, 336
        %v810 = vsub.s32 %v801, %v809
        %v811 = vsub.s32 0, %v810
        %v812 = vsel %vm799, %v811, %v810
        %vm813 = vcmp.lt.s32.totalorder %v376, 0
        %v814 = vsub.s32 0, %v376
        %v815 = vsel %vm813, %v814, %v376
        %v816 = vmul.u32.u64.compose %v815, 3272356035
        %v817 = vextract.low.u32 %v816
        %v818 = vextract.high.u32 %v816
        %vm819 = vc.u32 %v817, 3272356035
        %v820 = vsel %vm819, 1, 0
        %v821 = vadd.s32 %v818, %v820
        %v822 = vshrl.u32 %v821, 8
        %v823 = vmul.u32 %v822, 336
        %v824 = vsub.s32 %v815, %v823
        %v825 = vsub.s32 0, %v824
        %v826 = vsel %vm813, %v825, %v824
        %vm827 = vcmp.lt.s32.totalorder %v377, 0
        %v828 = vsub.s32 0, %v377
        %v829 = vsel %vm827, %v828, %v377
        %v830 = vmul.u32.u64.compose %v829, 3272356035
        %v831 = vextract.low.u32 %v830
        %v832 = vextract.high.u32 %v830
        %vm833 = vc.u32 %v831, 3272356035
        %v834 = vsel %vm833, 1, 0
        %v835 = vadd.s32 %v832, %v834
        %v836 = vshrl.u32 %v835, 8
        %v837 = vmul.u32 %v836, 336
        %v838 = vsub.s32 %v829, %v837
        %v839 = vsub.s32 0, %v838
        %v840 = vsel %vm827, %v839, %v838
        %vm841 = vcmp.lt.s32.totalorder %v378, 0
        %v842 = vsub.s32 0, %v378
        %v843 = vsel %vm841, %v842, %v378
        %v844 = vmul.u32.u64.compose %v843, 3272356035
        %v845 = vextract.low.u32 %v844
        %v846 = vextract.high.u32 %v844
        %vm847 = vc.u32 %v845, 3272356035
        %v848 = vsel %vm847, 1, 0
        %v849 = vadd.s32 %v846, %v848
        %v850 = vshrl.u32 %v849, 8
        %v851 = vmul.u32 %v850, 336
        %v852 = vsub.s32 %v843, %v851
        %v853 = vsub.s32 0, %v852
        %v854 = vsel %vm841, %v853, %v852
        %vm855 = vcmp.ne.s32.totalorder %v392, 0
        %vm856 = vcmp.ne.s32.totalorder %v406, 0
        %vm857 = vcmp.ne.s32.totalorder %v420, 0
        %vm858 = vcmp.ne.s32.totalorder %v434, 0
        %vm859 = vcmp.ne.s32.totalorder %v448, 0
        %vm860 = vcmp.ne.s32.totalorder %v462, 0
        %vm861 = vcmp.ne.s32.totalorder %v476, 0
        %vm862 = vcmp.ne.s32.totalorder %v490, 0
        %vm863 = vcmp.ne.s32.totalorder %v504, 0
        %vm864 = vcmp.ne.s32.totalorder %v518, 0
        %vm865 = vcmp.ne.s32.totalorder %v532, 0
        %vm866 = vcmp.ne.s32.totalorder %v546, 0
        %vm867 = vcmp.ne.s32.totalorder %v560, 0
        %vm868 = vcmp.ne.s32.totalorder %v574, 0
        %vm869 = vcmp.ne.s32.totalorder %v588, 0
        %vm870 = vcmp.ne.s32.totalorder %v602, 0
        %vm871 = vcmp.ne.s32.totalorder %v616, 0
        %vm872 = vcmp.ne.s32.totalorder %v630, 0
        %vm873 = vcmp.ne.s32.totalorder %v644, 0
        %vm874 = vcmp.ne.s32.totalorder %v658, 0
        %vm875 = vcmp.ne.s32.totalorder %v672, 0
        %vm876 = vcmp.ne.s32.totalorder %v686, 0
        %vm877 = vcmp.ne.s32.totalorder %v700, 0
        %vm878 = vcmp.ne.s32.totalorder %v714, 0
        %vm879 = vcmp.ne.s32.totalorder %v728, 0
        %vm880 = vcmp.ne.s32.totalorder %v742, 0
        %vm881 = vcmp.ne.s32.totalorder %v756, 0
        %vm882 = vcmp.ne.s32.totalorder %v770, 0
        %vm883 = vcmp.ne.s32.totalorder %v784, 0
        %vm884 = vcmp.ne.s32.totalorder %v798, 0
        %vm885 = vcmp.ne.s32.totalorder %v812, 0
        %vm886 = vcmp.ne.s32.totalorder %v826, 0
        %vm887 = vcmp.ne.s32.totalorder %v840, 0
        %vm888 = vcmp.ne.s32.totalorder %v854, 0
        %vm889 = vcmp.lt.s32.totalorder %v392, 0
        %vm890 = vcmp.lt.s32.totalorder %v406, 0
        %vm891 = vcmp.lt.s32.totalorder %v420, 0
        %vm892 = vcmp.lt.s32.totalorder %v434, 0
        %vm893 = vcmp.lt.s32.totalorder %v448, 0
        %vm894 = vcmp.lt.s32.totalorder %v462, 0
        %vm895 = vcmp.lt.s32.totalorder %v476, 0
        %vm896 = vcmp.lt.s32.totalorder %v490, 0
        %vm897 = vcmp.lt.s32.totalorder %v504, 0
        %vm898 = vcmp.lt.s32.totalorder %v518, 0
        %vm899 = vcmp.lt.s32.totalorder %v532, 0
        %vm900 = vcmp.lt.s32.totalorder %v546, 0
        %vm901 = vcmp.lt.s32.totalorder %v560, 0
        %vm902 = vcmp.lt.s32.totalorder %v574, 0
        %vm903 = vcmp.lt.s32.totalorder %v588, 0
        %vm904 = vcmp.lt.s32.totalorder %v602, 0
        %vm905 = vcmp.lt.s32.totalorder %v616, 0
        %vm906 = vcmp.lt.s32.totalorder %v630, 0
        %vm907 = vcmp.lt.s32.totalorder %v644, 0
        %vm908 = vcmp.lt.s32.totalorder %v658, 0
        %vm909 = vcmp.lt.s32.totalorder %v672, 0
        %vm910 = vcmp.lt.s32.totalorder %v686, 0
        %vm911 = vcmp.lt.s32.totalorder %v700, 0
        %vm912 = vcmp.lt.s32.totalorder %v714, 0
        %vm913 = vcmp.lt.s32.totalorder %v728, 0
        %vm914 = vcmp.lt.s32.totalorder %v742, 0
        %vm915 = vcmp.lt.s32.totalorder %v756, 0
        %vm916 = vcmp.lt.s32.totalorder %v770, 0
        %vm917 = vcmp.lt.s32.totalorder %v784, 0
        %vm918 = vcmp.lt.s32.totalorder %v798, 0
        %vm919 = vcmp.lt.s32.totalorder %v812, 0
        %vm920 = vcmp.lt.s32.totalorder %v826, 0
        %vm921 = vcmp.lt.s32.totalorder %v840, 0
        %vm922 = vcmp.lt.s32.totalorder %v854, 0
        %vm923 = vmand %vm889, %vm855
        %vm924 = vmand %vm890, %vm856
        %vm925 = vmand %vm891, %vm857
        %vm926 = vmand %vm892, %vm858
        %vm927 = vmand %vm893, %vm859
        %vm928 = vmand %vm894, %vm860
        %vm929 = vmand %vm895, %vm861
        %vm930 = vmand %vm896, %vm862
        %vm931 = vmand %vm897, %vm863
        %vm932 = vmand %vm898, %vm864
        %vm933 = vmand %vm899, %vm865
        %vm934 = vmand %vm900, %vm866
        %vm935 = vmand %vm901, %vm867
        %vm936 = vmand %vm902, %vm868
        %vm937 = vmand %vm903, %vm869
        %vm938 = vmand %vm904, %vm870
        %vm939 = vmand %vm905, %vm871
        %vm940 = vmand %vm906, %vm872
        %vm941 = vmand %vm907, %vm873
        %vm942 = vmand %vm908, %vm874
        %vm943 = vmand %vm909, %vm875
        %vm944 = vmand %vm910, %vm876
        %vm945 = vmand %vm911, %vm877
        %vm946 = vmand %vm912, %vm878
        %vm947 = vmand %vm913, %vm879
        %vm948 = vmand %vm914, %vm880
        %vm949 = vmand %vm915, %vm881
        %vm950 = vmand %vm916, %vm882
        %vm951 = vmand %vm917, %vm883
        %vm952 = vmand %vm918, %vm884
        %vm953 = vmand %vm919, %vm885
        %vm954 = vmand %vm920, %vm886
        %vm955 = vmand %vm921, %vm887
        %vm956 = vmand %vm922, %vm888
        %v957 = vadd.s32 %v392, 336
        %v958 = vadd.s32 %v406, 336
        %v959 = vadd.s32 %v420, 336
        %v960 = vadd.s32 %v434, 336
        %v961 = vadd.s32 %v448, 336
        %v962 = vadd.s32 %v462, 336
        %v963 = vadd.s32 %v476, 336
        %v964 = vadd.s32 %v490, 336
        %v965 = vadd.s32 %v504, 336
        %v966 = vadd.s32 %v518, 336
        %v967 = vadd.s32 %v532, 336
        %v968 = vadd.s32 %v546, 336
        %v969 = vadd.s32 %v560, 336
        %v970 = vadd.s32 %v574, 336
        %v971 = vadd.s32 %v588, 336
        %v972 = vadd.s32 %v602, 336
        %v973 = vadd.s32 %v616, 336
        %v974 = vadd.s32 %v630, 336
        %v975 = vadd.s32 %v644, 336
        %v976 = vadd.s32 %v658, 336
        %v977 = vadd.s32 %v672, 336
        %v978 = vadd.s32 %v686, 336
        %v979 = vadd.s32 %v700, 336
        %v980 = vadd.s32 %v714, 336
        %v981 = vadd.s32 %v728, 336
        %v982 = vadd.s32 %v742, 336
        %v983 = vadd.s32 %v756, 336
        %v984 = vadd.s32 %v770, 336
        %v985 = vadd.s32 %v784, 336
        %v986 = vadd.s32 %v798, 336
        %v987 = vadd.s32 %v812, 336
        %v988 = vadd.s32 %v826, 336
        %v989 = vadd.s32 %v840, 336
        %v990 = vadd.s32 %v854, 336
        %v991 = vsel %vm923, %v957, %v392
        %v992 = vsel %vm924, %v958, %v406
        %v993 = vsel %vm925, %v959, %v420
        %v994 = vsel %vm926, %v960, %v434
        %v995 = vsel %vm927, %v961, %v448
        %v996 = vsel %vm928, %v962, %v462
        %v997 = vsel %vm929, %v963, %v476
        %v998 = vsel %vm930, %v964, %v490
        %v999 = vsel %vm931, %v965, %v504
        %v1000 = vsel %vm932, %v966, %v518
        %v1001 = vsel %vm933, %v967, %v532
        %v1002 = vsel %vm934, %v968, %v546
        %v1003 = vsel %vm935, %v969, %v560
        %v1004 = vsel %vm936, %v970, %v574
        %v1005 = vsel %vm937, %v971, %v588
        %v1006 = vsel %vm938, %v972, %v602
        %v1007 = vsel %vm939, %v973, %v616
        %v1008 = vsel %vm940, %v974, %v630
        %v1009 = vsel %vm941, %v975, %v644
        %v1010 = vsel %vm942, %v976, %v658
        %v1011 = vsel %vm943, %v977, %v672
        %v1012 = vsel %vm944, %v978, %v686
        %v1013 = vsel %vm945, %v979, %v700
        %v1014 = vsel %vm946, %v980, %v714
        %v1015 = vsel %vm947, %v981, %v728
        %v1016 = vsel %vm948, %v982, %v742
        %v1017 = vsel %vm949, %v983, %v756
        %v1018 = vsel %vm950, %v984, %v770
        %v1019 = vsel %vm951, %v985, %v784
        %v1020 = vsel %vm952, %v986, %v798
        %v1021 = vsel %vm953, %v987, %v812
        %v1022 = vsel %vm954, %v988, %v826
        %v1023 = vsel %vm955, %v989, %v840
        %v1024 = vsel %vm956, %v990, %v854
        %vm1025 = vcmp.lt.s32.totalorder %v991, 272
        %vm1026 = vcmp.lt.s32.totalorder %v992, 272
        %vm1027 = vcmp.lt.s32.totalorder %v993, 272
        %vm1028 = vcmp.lt.s32.totalorder %v994, 272
        %vm1029 = vcmp.lt.s32.totalorder %v995, 272
        %vm1030 = vcmp.lt.s32.totalorder %v996, 272
        %vm1031 = vcmp.lt.s32.totalorder %v997, 272
        %vm1032 = vcmp.lt.s32.totalorder %v998, 272
        %vm1033 = vcmp.lt.s32.totalorder %v999, 272
        %vm1034 = vcmp.lt.s32.totalorder %v1000, 272
        %vm1035 = vcmp.lt.s32.totalorder %v1001, 272
        %vm1036 = vcmp.lt.s32.totalorder %v1002, 272
        %vm1037 = vcmp.lt.s32.totalorder %v1003, 272
        %vm1038 = vcmp.lt.s32.totalorder %v1004, 272
        %vm1039 = vcmp.lt.s32.totalorder %v1005, 272
        %vm1040 = vcmp.lt.s32.totalorder %v1006, 272
        %vm1041 = vcmp.lt.s32.totalorder %v1007, 272
        %vm1042 = vcmp.lt.s32.totalorder %v1008, 272
        %vm1043 = vcmp.lt.s32.totalorder %v1009, 272
        %vm1044 = vcmp.lt.s32.totalorder %v1010, 272
        %vm1045 = vcmp.lt.s32.totalorder %v1011, 272
        %vm1046 = vcmp.lt.s32.totalorder %v1012, 272
        %vm1047 = vcmp.lt.s32.totalorder %v1013, 272
        %vm1048 = vcmp.lt.s32.totalorder %v1014, 272
        %vm1049 = vcmp.lt.s32.totalorder %v1015, 272
        %vm1050 = vcmp.lt.s32.totalorder %v1016, 272
        %vm1051 = vcmp.lt.s32.totalorder %v1017, 272
        %vm1052 = vcmp.lt.s32.totalorder %v1018, 272
        %vm1053 = vcmp.lt.s32.totalorder %v1019, 272
        %vm1054 = vcmp.lt.s32.totalorder %v1020, 272
        %vm1055 = vcmp.lt.s32.totalorder %v1021, 272
        %vm1056 = vcmp.lt.s32.totalorder %v1022, 272
        %vm1057 = vcmp.lt.s32.totalorder %v1023, 272
        %vm1058 = vcmp.lt.s32.totalorder %v1024, 272
        %vm1059 = vcmp.lt.s32.totalorder %v991, 0
        %v1060 = vsub.s32 0, %v991
        %v1061 = vsel %vm1059, %v1060, %v991
        %v1062 = vmul.u32.u64.compose %v1061, 4042322161
        %v1063 = vextract.low.u32 %v1062
        %v1064 = vextract.high.u32 %v1062
        %v1065 = vshrl.u32 %v1064, 4
        %v1066 = vmul.u32 %v1065, 17
        %v1067 = vsub.s32 %v1061, %v1066
        %v1068 = vsub.s32 0, %v1067
        %v1069 = vsel %vm1059, %v1068, %v1067
        %vm1070 = vcmp.lt.s32.totalorder %v992, 0
        %v1071 = vsub.s32 0, %v992
        %v1072 = vsel %vm1070, %v1071, %v992
        %v1073 = vmul.u32.u64.compose %v1072, 4042322161
        %v1074 = vextract.low.u32 %v1073
        %v1075 = vextract.high.u32 %v1073
        %v1076 = vshrl.u32 %v1075, 4
        %v1077 = vmul.u32 %v1076, 17
        %v1078 = vsub.s32 %v1072, %v1077
        %v1079 = vsub.s32 0, %v1078
        %v1080 = vsel %vm1070, %v1079, %v1078
        %vm1081 = vcmp.lt.s32.totalorder %v993, 0
        %v1082 = vsub.s32 0, %v993
        %v1083 = vsel %vm1081, %v1082, %v993
        %v1084 = vmul.u32.u64.compose %v1083, 4042322161
        %v1085 = vextract.low.u32 %v1084
        %v1086 = vextract.high.u32 %v1084
        %v1087 = vshrl.u32 %v1086, 4
        %v1088 = vmul.u32 %v1087, 17
        %v1089 = vsub.s32 %v1083, %v1088
        %v1090 = vsub.s32 0, %v1089
        %v1091 = vsel %vm1081, %v1090, %v1089
        %vm1092 = vcmp.lt.s32.totalorder %v994, 0
        %v1093 = vsub.s32 0, %v994
        %v1094 = vsel %vm1092, %v1093, %v994
        %v1095 = vmul.u32.u64.compose %v1094, 4042322161
        %v1096 = vextract.low.u32 %v1095
        %v1097 = vextract.high.u32 %v1095
        %v1098 = vshrl.u32 %v1097, 4
        %v1099 = vmul.u32 %v1098, 17
        %v1100 = vsub.s32 %v1094, %v1099
        %v1101 = vsub.s32 0, %v1100
        %v1102 = vsel %vm1092, %v1101, %v1100
        %vm1103 = vcmp.lt.s32.totalorder %v995, 0
        %v1104 = vsub.s32 0, %v995
        %v1105 = vsel %vm1103, %v1104, %v995
        %v1106 = vmul.u32.u64.compose %v1105, 4042322161
        %v1107 = vextract.low.u32 %v1106
        %v1108 = vextract.high.u32 %v1106
        %v1109 = vshrl.u32 %v1108, 4
        %v1110 = vmul.u32 %v1109, 17
        %v1111 = vsub.s32 %v1105, %v1110
        %v1112 = vsub.s32 0, %v1111
        %v1113 = vsel %vm1103, %v1112, %v1111
        %vm1114 = vcmp.lt.s32.totalorder %v996, 0
        %v1115 = vsub.s32 0, %v996
        %v1116 = vsel %vm1114, %v1115, %v996
        %v1117 = vmul.u32.u64.compose %v1116, 4042322161
        %v1118 = vextract.low.u32 %v1117
        %v1119 = vextract.high.u32 %v1117
        %v1120 = vshrl.u32 %v1119, 4
        %v1121 = vmul.u32 %v1120, 17
        %v1122 = vsub.s32 %v1116, %v1121
        %v1123 = vsub.s32 0, %v1122
        %v1124 = vsel %vm1114, %v1123, %v1122
        %vm1125 = vcmp.lt.s32.totalorder %v997, 0
        %v1126 = vsub.s32 0, %v997
        %v1127 = vsel %vm1125, %v1126, %v997
        %v1128 = vmul.u32.u64.compose %v1127, 4042322161
        %v1129 = vextract.low.u32 %v1128
        %v1130 = vextract.high.u32 %v1128
        %v1131 = vshrl.u32 %v1130, 4
        %v1132 = vmul.u32 %v1131, 17
        %v1133 = vsub.s32 %v1127, %v1132
        %v1134 = vsub.s32 0, %v1133
        %v1135 = vsel %vm1125, %v1134, %v1133
        %vm1136 = vcmp.lt.s32.totalorder %v998, 0
        %v1137 = vsub.s32 0, %v998
        %v1138 = vsel %vm1136, %v1137, %v998
        %v1139 = vmul.u32.u64.compose %v1138, 4042322161
        %v1140 = vextract.low.u32 %v1139
        %v1141 = vextract.high.u32 %v1139
        %v1142 = vshrl.u32 %v1141, 4
        %v1143 = vmul.u32 %v1142, 17
        %v1144 = vsub.s32 %v1138, %v1143
        %v1145 = vsub.s32 0, %v1144
        %v1146 = vsel %vm1136, %v1145, %v1144
        %vm1147 = vcmp.lt.s32.totalorder %v999, 0
        %v1148 = vsub.s32 0, %v999
        %v1149 = vsel %vm1147, %v1148, %v999
        %v1150 = vmul.u32.u64.compose %v1149, 4042322161
        %v1151 = vextract.low.u32 %v1150
        %v1152 = vextract.high.u32 %v1150
        %v1153 = vshrl.u32 %v1152, 4
        %v1154 = vmul.u32 %v1153, 17
        %v1155 = vsub.s32 %v1149, %v1154
        %v1156 = vsub.s32 0, %v1155
        %v1157 = vsel %vm1147, %v1156, %v1155
        %vm1158 = vcmp.lt.s32.totalorder %v1000, 0
        %v1159 = vsub.s32 0, %v1000
        %v1160 = vsel %vm1158, %v1159, %v1000
        %v1161 = vmul.u32.u64.compose %v1160, 4042322161
        %v1162 = vextract.low.u32 %v1161
        %v1163 = vextract.high.u32 %v1161
        %v1164 = vshrl.u32 %v1163, 4
        %v1165 = vmul.u32 %v1164, 17
        %v1166 = vsub.s32 %v1160, %v1165
        %v1167 = vsub.s32 0, %v1166
        %v1168 = vsel %vm1158, %v1167, %v1166
        %vm1169 = vcmp.lt.s32.totalorder %v1001, 0
        %v1170 = vsub.s32 0, %v1001
        %v1171 = vsel %vm1169, %v1170, %v1001
        %v1172 = vmul.u32.u64.compose %v1171, 4042322161
        %v1173 = vextract.low.u32 %v1172
        %v1174 = vextract.high.u32 %v1172
        %v1175 = vshrl.u32 %v1174, 4
        %v1176 = vmul.u32 %v1175, 17
        %v1177 = vsub.s32 %v1171, %v1176
        %v1178 = vsub.s32 0, %v1177
        %v1179 = vsel %vm1169, %v1178, %v1177
        %vm1180 = vcmp.lt.s32.totalorder %v1002, 0
        %v1181 = vsub.s32 0, %v1002
        %v1182 = vsel %vm1180, %v1181, %v1002
        %v1183 = vmul.u32.u64.compose %v1182, 4042322161
        %v1184 = vextract.low.u32 %v1183
        %v1185 = vextract.high.u32 %v1183
        %v1186 = vshrl.u32 %v1185, 4
        %v1187 = vmul.u32 %v1186, 17
        %v1188 = vsub.s32 %v1182, %v1187
        %v1189 = vsub.s32 0, %v1188
        %v1190 = vsel %vm1180, %v1189, %v1188
        %vm1191 = vcmp.lt.s32.totalorder %v1003, 0
        %v1192 = vsub.s32 0, %v1003
        %v1193 = vsel %vm1191, %v1192, %v1003
        %v1194 = vmul.u32.u64.compose %v1193, 4042322161
        %v1195 = vextract.low.u32 %v1194
        %v1196 = vextract.high.u32 %v1194
        %v1197 = vshrl.u32 %v1196, 4
        %v1198 = vmul.u32 %v1197, 17
        %v1199 = vsub.s32 %v1193, %v1198
        %v1200 = vsub.s32 0, %v1199
        %v1201 = vsel %vm1191, %v1200, %v1199
        %vm1202 = vcmp.lt.s32.totalorder %v1004, 0
        %v1203 = vsub.s32 0, %v1004
        %v1204 = vsel %vm1202, %v1203, %v1004
        %v1205 = vmul.u32.u64.compose %v1204, 4042322161
        %v1206 = vextract.low.u32 %v1205
        %v1207 = vextract.high.u32 %v1205
        %v1208 = vshrl.u32 %v1207, 4
        %v1209 = vmul.u32 %v1208, 17
        %v1210 = vsub.s32 %v1204, %v1209
        %v1211 = vsub.s32 0, %v1210
        %v1212 = vsel %vm1202, %v1211, %v1210
        %vm1213 = vcmp.lt.s32.totalorder %v1005, 0
        %v1214 = vsub.s32 0, %v1005
        %v1215 = vsel %vm1213, %v1214, %v1005
        %v1216 = vmul.u32.u64.compose %v1215, 4042322161
        %v1217 = vextract.low.u32 %v1216
        %v1218 = vextract.high.u32 %v1216
        %v1219 = vshrl.u32 %v1218, 4
        %v1220 = vmul.u32 %v1219, 17
        %v1221 = vsub.s32 %v1215, %v1220
        %v1222 = vsub.s32 0, %v1221
        %v1223 = vsel %vm1213, %v1222, %v1221
        %vm1224 = vcmp.lt.s32.totalorder %v1006, 0
        %v1225 = vsub.s32 0, %v1006
        %v1226 = vsel %vm1224, %v1225, %v1006
        %v1227 = vmul.u32.u64.compose %v1226, 4042322161
        %v1228 = vextract.low.u32 %v1227
        %v1229 = vextract.high.u32 %v1227
        %v1230 = vshrl.u32 %v1229, 4
        %v1231 = vmul.u32 %v1230, 17
        %v1232 = vsub.s32 %v1226, %v1231
        %v1233 = vsub.s32 0, %v1232
        %v1234 = vsel %vm1224, %v1233, %v1232
        %vm1235 = vcmp.lt.s32.totalorder %v1007, 0
        %v1236 = vsub.s32 0, %v1007
        %v1237 = vsel %vm1235, %v1236, %v1007
        %v1238 = vmul.u32.u64.compose %v1237, 4042322161
        %v1239 = vextract.low.u32 %v1238
        %v1240 = vextract.high.u32 %v1238
        %v1241 = vshrl.u32 %v1240, 4
        %v1242 = vmul.u32 %v1241, 17
        %v1243 = vsub.s32 %v1237, %v1242
        %v1244 = vsub.s32 0, %v1243
        %v1245 = vsel %vm1235, %v1244, %v1243
        %vm1246 = vcmp.lt.s32.totalorder %v1008, 0
        %v1247 = vsub.s32 0, %v1008
        %v1248 = vsel %vm1246, %v1247, %v1008
        %v1249 = vmul.u32.u64.compose %v1248, 4042322161
        %v1250 = vextract.low.u32 %v1249
        %v1251 = vextract.high.u32 %v1249
        %v1252 = vshrl.u32 %v1251, 4
        %v1253 = vmul.u32 %v1252, 17
        %v1254 = vsub.s32 %v1248, %v1253
        %v1255 = vsub.s32 0, %v1254
        %v1256 = vsel %vm1246, %v1255, %v1254
        %vm1257 = vcmp.lt.s32.totalorder %v1009, 0
        %v1258 = vsub.s32 0, %v1009
        %v1259 = vsel %vm1257, %v1258, %v1009
        %v1260 = vmul.u32.u64.compose %v1259, 4042322161
        %v1261 = vextract.low.u32 %v1260
        %v1262 = vextract.high.u32 %v1260
        %v1263 = vshrl.u32 %v1262, 4
        %v1264 = vmul.u32 %v1263, 17
        %v1265 = vsub.s32 %v1259, %v1264
        %v1266 = vsub.s32 0, %v1265
        %v1267 = vsel %vm1257, %v1266, %v1265
        %vm1268 = vcmp.lt.s32.totalorder %v1010, 0
        %v1269 = vsub.s32 0, %v1010
        %v1270 = vsel %vm1268, %v1269, %v1010
        %v1271 = vmul.u32.u64.compose %v1270, 4042322161
        %v1272 = vextract.low.u32 %v1271
        %v1273 = vextract.high.u32 %v1271
        %v1274 = vshrl.u32 %v1273, 4
        %v1275 = vmul.u32 %v1274, 17
        %v1276 = vsub.s32 %v1270, %v1275
        %v1277 = vsub.s32 0, %v1276
        %v1278 = vsel %vm1268, %v1277, %v1276
        %vm1279 = vcmp.lt.s32.totalorder %v1011, 0
        %v1280 = vsub.s32 0, %v1011
        %v1281 = vsel %vm1279, %v1280, %v1011
        %v1282 = vmul.u32.u64.compose %v1281, 4042322161
        %v1283 = vextract.low.u32 %v1282
        %v1284 = vextract.high.u32 %v1282
        %v1285 = vshrl.u32 %v1284, 4
        %v1286 = vmul.u32 %v1285, 17
        %v1287 = vsub.s32 %v1281, %v1286
        %v1288 = vsub.s32 0, %v1287
        %v1289 = vsel %vm1279, %v1288, %v1287
        %vm1290 = vcmp.lt.s32.totalorder %v1012, 0
        %v1291 = vsub.s32 0, %v1012
        %v1292 = vsel %vm1290, %v1291, %v1012
        %v1293 = vmul.u32.u64.compose %v1292, 4042322161
        %v1294 = vextract.low.u32 %v1293
        %v1295 = vextract.high.u32 %v1293
        %v1296 = vshrl.u32 %v1295, 4
        %v1297 = vmul.u32 %v1296, 17
        %v1298 = vsub.s32 %v1292, %v1297
        %v1299 = vsub.s32 0, %v1298
        %v1300 = vsel %vm1290, %v1299, %v1298
        %vm1301 = vcmp.lt.s32.totalorder %v1013, 0
        %v1302 = vsub.s32 0, %v1013
        %v1303 = vsel %vm1301, %v1302, %v1013
        %v1304 = vmul.u32.u64.compose %v1303, 4042322161
        %v1305 = vextract.low.u32 %v1304
        %v1306 = vextract.high.u32 %v1304
        %v1307 = vshrl.u32 %v1306, 4
        %v1308 = vmul.u32 %v1307, 17
        %v1309 = vsub.s32 %v1303, %v1308
        %v1310 = vsub.s32 0, %v1309
        %v1311 = vsel %vm1301, %v1310, %v1309
        %vm1312 = vcmp.lt.s32.totalorder %v1014, 0
        %v1313 = vsub.s32 0, %v1014
        %v1314 = vsel %vm1312, %v1313, %v1014
        %v1315 = vmul.u32.u64.compose %v1314, 4042322161
        %v1316 = vextract.low.u32 %v1315
        %v1317 = vextract.high.u32 %v1315
        %v1318 = vshrl.u32 %v1317, 4
        %v1319 = vmul.u32 %v1318, 17
        %v1320 = vsub.s32 %v1314, %v1319
        %v1321 = vsub.s32 0, %v1320
        %v1322 = vsel %vm1312, %v1321, %v1320
        %vm1323 = vcmp.lt.s32.totalorder %v1015, 0
        %v1324 = vsub.s32 0, %v1015
        %v1325 = vsel %vm1323, %v1324, %v1015
        %v1326 = vmul.u32.u64.compose %v1325, 4042322161
        %v1327 = vextract.low.u32 %v1326
        %v1328 = vextract.high.u32 %v1326
        %v1329 = vshrl.u32 %v1328, 4
        %v1330 = vmul.u32 %v1329, 17
        %v1331 = vsub.s32 %v1325, %v1330
        %v1332 = vsub.s32 0, %v1331
        %v1333 = vsel %vm1323, %v1332, %v1331
        %vm1334 = vcmp.lt.s32.totalorder %v1016, 0
        %v1335 = vsub.s32 0, %v1016
        %v1336 = vsel %vm1334, %v1335, %v1016
        %v1337 = vmul.u32.u64.compose %v1336, 4042322161
        %v1338 = vextract.low.u32 %v1337
        %v1339 = vextract.high.u32 %v1337
        %v1340 = vshrl.u32 %v1339, 4
        %v1341 = vmul.u32 %v1340, 17
        %v1342 = vsub.s32 %v1336, %v1341
        %v1343 = vsub.s32 0, %v1342
        %v1344 = vsel %vm1334, %v1343, %v1342
        %vm1345 = vcmp.lt.s32.totalorder %v1017, 0
        %v1346 = vsub.s32 0, %v1017
        %v1347 = vsel %vm1345, %v1346, %v1017
        %v1348 = vmul.u32.u64.compose %v1347, 4042322161
        %v1349 = vextract.low.u32 %v1348
        %v1350 = vextract.high.u32 %v1348
        %v1351 = vshrl.u32 %v1350, 4
        %v1352 = vmul.u32 %v1351, 17
        %v1353 = vsub.s32 %v1347, %v1352
        %v1354 = vsub.s32 0, %v1353
        %v1355 = vsel %vm1345, %v1354, %v1353
        %vm1356 = vcmp.lt.s32.totalorder %v1018, 0
        %v1357 = vsub.s32 0, %v1018
        %v1358 = vsel %vm1356, %v1357, %v1018
        %v1359 = vmul.u32.u64.compose %v1358, 4042322161
        %v1360 = vextract.low.u32 %v1359
        %v1361 = vextract.high.u32 %v1359
        %v1362 = vshrl.u32 %v1361, 4
        %v1363 = vmul.u32 %v1362, 17
        %v1364 = vsub.s32 %v1358, %v1363
        %v1365 = vsub.s32 0, %v1364
        %v1366 = vsel %vm1356, %v1365, %v1364
        %vm1367 = vcmp.lt.s32.totalorder %v1019, 0
        %v1368 = vsub.s32 0, %v1019
        %v1369 = vsel %vm1367, %v1368, %v1019
        %v1370 = vmul.u32.u64.compose %v1369, 4042322161
        %v1371 = vextract.low.u32 %v1370
        %v1372 = vextract.high.u32 %v1370
        %v1373 = vshrl.u32 %v1372, 4
        %v1374 = vmul.u32 %v1373, 17
        %v1375 = vsub.s32 %v1369, %v1374
        %v1376 = vsub.s32 0, %v1375
        %v1377 = vsel %vm1367, %v1376, %v1375
        %vm1378 = vcmp.lt.s32.totalorder %v1020, 0
        %v1379 = vsub.s32 0, %v1020
        %v1380 = vsel %vm1378, %v1379, %v1020
        %v1381 = vmul.u32.u64.compose %v1380, 4042322161
        %v1382 = vextract.low.u32 %v1381
        %v1383 = vextract.high.u32 %v1381
        %v1384 = vshrl.u32 %v1383, 4
        %v1385 = vmul.u32 %v1384, 17
        %v1386 = vsub.s32 %v1380, %v1385
        %v1387 = vsub.s32 0, %v1386
        %v1388 = vsel %vm1378, %v1387, %v1386
        %vm1389 = vcmp.lt.s32.totalorder %v1021, 0
        %v1390 = vsub.s32 0, %v1021
        %v1391 = vsel %vm1389, %v1390, %v1021
        %v1392 = vmul.u32.u64.compose %v1391, 4042322161
        %v1393 = vextract.low.u32 %v1392
        %v1394 = vextract.high.u32 %v1392
        %v1395 = vshrl.u32 %v1394, 4
        %v1396 = vmul.u32 %v1395, 17
        %v1397 = vsub.s32 %v1391, %v1396
        %v1398 = vsub.s32 0, %v1397
        %v1399 = vsel %vm1389, %v1398, %v1397
        %vm1400 = vcmp.lt.s32.totalorder %v1022, 0
        %v1401 = vsub.s32 0, %v1022
        %v1402 = vsel %vm1400, %v1401, %v1022
        %v1403 = vmul.u32.u64.compose %v1402, 4042322161
        %v1404 = vextract.low.u32 %v1403
        %v1405 = vextract.high.u32 %v1403
        %v1406 = vshrl.u32 %v1405, 4
        %v1407 = vmul.u32 %v1406, 17
        %v1408 = vsub.s32 %v1402, %v1407
        %v1409 = vsub.s32 0, %v1408
        %v1410 = vsel %vm1400, %v1409, %v1408
        %vm1411 = vcmp.lt.s32.totalorder %v1023, 0
        %v1412 = vsub.s32 0, %v1023
        %v1413 = vsel %vm1411, %v1412, %v1023
        %v1414 = vmul.u32.u64.compose %v1413, 4042322161
        %v1415 = vextract.low.u32 %v1414
        %v1416 = vextract.high.u32 %v1414
        %v1417 = vshrl.u32 %v1416, 4
        %v1418 = vmul.u32 %v1417, 17
        %v1419 = vsub.s32 %v1413, %v1418
        %v1420 = vsub.s32 0, %v1419
        %v1421 = vsel %vm1411, %v1420, %v1419
        %vm1422 = vcmp.lt.s32.totalorder %v1024, 0
        %v1423 = vsub.s32 0, %v1024
        %v1424 = vsel %vm1422, %v1423, %v1024
        %v1425 = vmul.u32.u64.compose %v1424, 4042322161
        %v1426 = vextract.low.u32 %v1425
        %v1427 = vextract.high.u32 %v1425
        %v1428 = vshrl.u32 %v1427, 4
        %v1429 = vmul.u32 %v1428, 17
        %v1430 = vsub.s32 %v1424, %v1429
        %v1431 = vsub.s32 0, %v1430
        %v1432 = vsel %vm1422, %v1431, %v1430
        %vm1433 = vcmp.ne.s32.totalorder %v1069, 0
        %vm1434 = vcmp.ne.s32.totalorder %v1080, 0
        %vm1435 = vcmp.ne.s32.totalorder %v1091, 0
        %vm1436 = vcmp.ne.s32.totalorder %v1102, 0
        %vm1437 = vcmp.ne.s32.totalorder %v1113, 0
        %vm1438 = vcmp.ne.s32.totalorder %v1124, 0
        %vm1439 = vcmp.ne.s32.totalorder %v1135, 0
        %vm1440 = vcmp.ne.s32.totalorder %v1146, 0
        %vm1441 = vcmp.ne.s32.totalorder %v1157, 0
        %vm1442 = vcmp.ne.s32.totalorder %v1168, 0
        %vm1443 = vcmp.ne.s32.totalorder %v1179, 0
        %vm1444 = vcmp.ne.s32.totalorder %v1190, 0
        %vm1445 = vcmp.ne.s32.totalorder %v1201, 0
        %vm1446 = vcmp.ne.s32.totalorder %v1212, 0
        %vm1447 = vcmp.ne.s32.totalorder %v1223, 0
        %vm1448 = vcmp.ne.s32.totalorder %v1234, 0
        %vm1449 = vcmp.ne.s32.totalorder %v1245, 0
        %vm1450 = vcmp.ne.s32.totalorder %v1256, 0
        %vm1451 = vcmp.ne.s32.totalorder %v1267, 0
        %vm1452 = vcmp.ne.s32.totalorder %v1278, 0
        %vm1453 = vcmp.ne.s32.totalorder %v1289, 0
        %vm1454 = vcmp.ne.s32.totalorder %v1300, 0
        %vm1455 = vcmp.ne.s32.totalorder %v1311, 0
        %vm1456 = vcmp.ne.s32.totalorder %v1322, 0
        %vm1457 = vcmp.ne.s32.totalorder %v1333, 0
        %vm1458 = vcmp.ne.s32.totalorder %v1344, 0
        %vm1459 = vcmp.ne.s32.totalorder %v1355, 0
        %vm1460 = vcmp.ne.s32.totalorder %v1366, 0
        %vm1461 = vcmp.ne.s32.totalorder %v1377, 0
        %vm1462 = vcmp.ne.s32.totalorder %v1388, 0
        %vm1463 = vcmp.ne.s32.totalorder %v1399, 0
        %vm1464 = vcmp.ne.s32.totalorder %v1410, 0
        %vm1465 = vcmp.ne.s32.totalorder %v1421, 0
        %vm1466 = vcmp.ne.s32.totalorder %v1432, 0
        %vm1467 = vcmp.lt.s32.totalorder %v1069, 0
        %vm1468 = vcmp.lt.s32.totalorder %v1080, 0
        %vm1469 = vcmp.lt.s32.totalorder %v1091, 0
        %vm1470 = vcmp.lt.s32.totalorder %v1102, 0
        %vm1471 = vcmp.lt.s32.totalorder %v1113, 0
        %vm1472 = vcmp.lt.s32.totalorder %v1124, 0
        %vm1473 = vcmp.lt.s32.totalorder %v1135, 0
        %vm1474 = vcmp.lt.s32.totalorder %v1146, 0
        %vm1475 = vcmp.lt.s32.totalorder %v1157, 0
        %vm1476 = vcmp.lt.s32.totalorder %v1168, 0
        %vm1477 = vcmp.lt.s32.totalorder %v1179, 0
        %vm1478 = vcmp.lt.s32.totalorder %v1190, 0
        %vm1479 = vcmp.lt.s32.totalorder %v1201, 0
        %vm1480 = vcmp.lt.s32.totalorder %v1212, 0
        %vm1481 = vcmp.lt.s32.totalorder %v1223, 0
        %vm1482 = vcmp.lt.s32.totalorder %v1234, 0
        %vm1483 = vcmp.lt.s32.totalorder %v1245, 0
        %vm1484 = vcmp.lt.s32.totalorder %v1256, 0
        %vm1485 = vcmp.lt.s32.totalorder %v1267, 0
        %vm1486 = vcmp.lt.s32.totalorder %v1278, 0
        %vm1487 = vcmp.lt.s32.totalorder %v1289, 0
        %vm1488 = vcmp.lt.s32.totalorder %v1300, 0
        %vm1489 = vcmp.lt.s32.totalorder %v1311, 0
        %vm1490 = vcmp.lt.s32.totalorder %v1322, 0
        %vm1491 = vcmp.lt.s32.totalorder %v1333, 0
        %vm1492 = vcmp.lt.s32.totalorder %v1344, 0
        %vm1493 = vcmp.lt.s32.totalorder %v1355, 0
        %vm1494 = vcmp.lt.s32.totalorder %v1366, 0
        %vm1495 = vcmp.lt.s32.totalorder %v1377, 0
        %vm1496 = vcmp.lt.s32.totalorder %v1388, 0
        %vm1497 = vcmp.lt.s32.totalorder %v1399, 0
        %vm1498 = vcmp.lt.s32.totalorder %v1410, 0
        %vm1499 = vcmp.lt.s32.totalorder %v1421, 0
        %vm1500 = vcmp.lt.s32.totalorder %v1432, 0
        %vm1501 = vmand %vm1467, %vm1433
        %vm1502 = vmand %vm1468, %vm1434
        %vm1503 = vmand %vm1469, %vm1435
        %vm1504 = vmand %vm1470, %vm1436
        %vm1505 = vmand %vm1471, %vm1437
        %vm1506 = vmand %vm1472, %vm1438
        %vm1507 = vmand %vm1473, %vm1439
        %vm1508 = vmand %vm1474, %vm1440
        %vm1509 = vmand %vm1475, %vm1441
        %vm1510 = vmand %vm1476, %vm1442
        %vm1511 = vmand %vm1477, %vm1443
        %vm1512 = vmand %vm1478, %vm1444
        %vm1513 = vmand %vm1479, %vm1445
        %vm1514 = vmand %vm1480, %vm1446
        %vm1515 = vmand %vm1481, %vm1447
        %vm1516 = vmand %vm1482, %vm1448
        %vm1517 = vmand %vm1483, %vm1449
        %vm1518 = vmand %vm1484, %vm1450
        %vm1519 = vmand %vm1485, %vm1451
        %vm1520 = vmand %vm1486, %vm1452
        %vm1521 = vmand %vm1487, %vm1453
        %vm1522 = vmand %vm1488, %vm1454
        %vm1523 = vmand %vm1489, %vm1455
        %vm1524 = vmand %vm1490, %vm1456
        %vm1525 = vmand %vm1491, %vm1457
        %vm1526 = vmand %vm1492, %vm1458
        %vm1527 = vmand %vm1493, %vm1459
        %vm1528 = vmand %vm1494, %vm1460
        %vm1529 = vmand %vm1495, %vm1461
        %vm1530 = vmand %vm1496, %vm1462
        %vm1531 = vmand %vm1497, %vm1463
        %vm1532 = vmand %vm1498, %vm1464
        %vm1533 = vmand %vm1499, %vm1465
        %vm1534 = vmand %vm1500, %vm1466
        %v1535 = vadd.s32 %v1069, 17
        %v1536 = vadd.s32 %v1080, 17
        %v1537 = vadd.s32 %v1091, 17
        %v1538 = vadd.s32 %v1102, 17
        %v1539 = vadd.s32 %v1113, 17
        %v1540 = vadd.s32 %v1124, 17
        %v1541 = vadd.s32 %v1135, 17
        %v1542 = vadd.s32 %v1146, 17
        %v1543 = vadd.s32 %v1157, 17
        %v1544 = vadd.s32 %v1168, 17
        %v1545 = vadd.s32 %v1179, 17
        %v1546 = vadd.s32 %v1190, 17
        %v1547 = vadd.s32 %v1201, 17
        %v1548 = vadd.s32 %v1212, 17
        %v1549 = vadd.s32 %v1223, 17
        %v1550 = vadd.s32 %v1234, 17
        %v1551 = vadd.s32 %v1245, 17
        %v1552 = vadd.s32 %v1256, 17
        %v1553 = vadd.s32 %v1267, 17
        %v1554 = vadd.s32 %v1278, 17
        %v1555 = vadd.s32 %v1289, 17
        %v1556 = vadd.s32 %v1300, 17
        %v1557 = vadd.s32 %v1311, 17
        %v1558 = vadd.s32 %v1322, 17
        %v1559 = vadd.s32 %v1333, 17
        %v1560 = vadd.s32 %v1344, 17
        %v1561 = vadd.s32 %v1355, 17
        %v1562 = vadd.s32 %v1366, 17
        %v1563 = vadd.s32 %v1377, 17
        %v1564 = vadd.s32 %v1388, 17
        %v1565 = vadd.s32 %v1399, 17
        %v1566 = vadd.s32 %v1410, 17
        %v1567 = vadd.s32 %v1421, 17
        %v1568 = vadd.s32 %v1432, 17
        %v1569 = vsel %vm1501, %v1535, %v1069
        %v1570 = vsel %vm1502, %v1536, %v1080
        %v1571 = vsel %vm1503, %v1537, %v1091
        %v1572 = vsel %vm1504, %v1538, %v1102
        %v1573 = vsel %vm1505, %v1539, %v1113
        %v1574 = vsel %vm1506, %v1540, %v1124
        %v1575 = vsel %vm1507, %v1541, %v1135
        %v1576 = vsel %vm1508, %v1542, %v1146
        %v1577 = vsel %vm1509, %v1543, %v1157
        %v1578 = vsel %vm1510, %v1544, %v1168
        %v1579 = vsel %vm1511, %v1545, %v1179
        %v1580 = vsel %vm1512, %v1546, %v1190
        %v1581 = vsel %vm1513, %v1547, %v1201
        %v1582 = vsel %vm1514, %v1548, %v1212
        %v1583 = vsel %vm1515, %v1549, %v1223
        %v1584 = vsel %vm1516, %v1550, %v1234
        %v1585 = vsel %vm1517, %v1551, %v1245
        %v1586 = vsel %vm1518, %v1552, %v1256
        %v1587 = vsel %vm1519, %v1553, %v1267
        %v1588 = vsel %vm1520, %v1554, %v1278
        %v1589 = vsel %vm1521, %v1555, %v1289
        %v1590 = vsel %vm1522, %v1556, %v1300
        %v1591 = vsel %vm1523, %v1557, %v1311
        %v1592 = vsel %vm1524, %v1558, %v1322
        %v1593 = vsel %vm1525, %v1559, %v1333
        %v1594 = vsel %vm1526, %v1560, %v1344
        %v1595 = vsel %vm1527, %v1561, %v1355
        %v1596 = vsel %vm1528, %v1562, %v1366
        %v1597 = vsel %vm1529, %v1563, %v1377
        %v1598 = vsel %vm1530, %v1564, %v1388
        %v1599 = vsel %vm1531, %v1565, %v1399
        %v1600 = vsel %vm1532, %v1566, %v1410
        %v1601 = vsel %vm1533, %v1567, %v1421
        %v1602 = vsel %vm1534, %v1568, %v1432
        %vm1603 = vcmp.lt.s32.totalorder %v1569, 16
        %vm1604 = vcmp.lt.s32.totalorder %v1570, 16
        %vm1605 = vcmp.lt.s32.totalorder %v1571, 16
        %vm1606 = vcmp.lt.s32.totalorder %v1572, 16
        %vm1607 = vcmp.lt.s32.totalorder %v1573, 16
        %vm1608 = vcmp.lt.s32.totalorder %v1574, 16
        %vm1609 = vcmp.lt.s32.totalorder %v1575, 16
        %vm1610 = vcmp.lt.s32.totalorder %v1576, 16
        %vm1611 = vcmp.lt.s32.totalorder %v1577, 16
        %vm1612 = vcmp.lt.s32.totalorder %v1578, 16
        %vm1613 = vcmp.lt.s32.totalorder %v1579, 16
        %vm1614 = vcmp.lt.s32.totalorder %v1580, 16
        %vm1615 = vcmp.lt.s32.totalorder %v1581, 16
        %vm1616 = vcmp.lt.s32.totalorder %v1582, 16
        %vm1617 = vcmp.lt.s32.totalorder %v1583, 16
        %vm1618 = vcmp.lt.s32.totalorder %v1584, 16
        %vm1619 = vcmp.lt.s32.totalorder %v1585, 16
        %vm1620 = vcmp.lt.s32.totalorder %v1586, 16
        %vm1621 = vcmp.lt.s32.totalorder %v1587, 16
        %vm1622 = vcmp.lt.s32.totalorder %v1588, 16
        %vm1623 = vcmp.lt.s32.totalorder %v1589, 16
        %vm1624 = vcmp.lt.s32.totalorder %v1590, 16
        %vm1625 = vcmp.lt.s32.totalorder %v1591, 16
        %vm1626 = vcmp.lt.s32.totalorder %v1592, 16
        %vm1627 = vcmp.lt.s32.totalorder %v1593, 16
        %vm1628 = vcmp.lt.s32.totalorder %v1594, 16
        %vm1629 = vcmp.lt.s32.totalorder %v1595, 16
        %vm1630 = vcmp.lt.s32.totalorder %v1596, 16
        %vm1631 = vcmp.lt.s32.totalorder %v1597, 16
        %vm1632 = vcmp.lt.s32.totalorder %v1598, 16
        %vm1633 = vcmp.lt.s32.totalorder %v1599, 16
        %vm1634 = vcmp.lt.s32.totalorder %v1600, 16
        %vm1635 = vcmp.lt.s32.totalorder %v1601, 16
        %vm1636 = vcmp.lt.s32.totalorder %v1602, 16
        %vm1637 = vmand %vm1025, %vm1603
        %vm1638 = vmand %vm1026, %vm1604
        %vm1639 = vmand %vm1027, %vm1605
        %vm1640 = vmand %vm1028, %vm1606
        %vm1641 = vmand %vm1029, %vm1607
        %vm1642 = vmand %vm1030, %vm1608
        %vm1643 = vmand %vm1031, %vm1609
        %vm1644 = vmand %vm1032, %vm1610
        %vm1645 = vmand %vm1033, %vm1611
        %vm1646 = vmand %vm1034, %vm1612
        %vm1647 = vmand %vm1035, %vm1613
        %vm1648 = vmand %vm1036, %vm1614
        %vm1649 = vmand %vm1037, %vm1615
        %vm1650 = vmand %vm1038, %vm1616
        %vm1651 = vmand %vm1039, %vm1617
        %vm1652 = vmand %vm1040, %vm1618
        %vm1653 = vmand %vm1041, %vm1619
        %vm1654 = vmand %vm1042, %vm1620
        %vm1655 = vmand %vm1043, %vm1621
        %vm1656 = vmand %vm1044, %vm1622
        %vm1657 = vmand %vm1045, %vm1623
        %vm1658 = vmand %vm1046, %vm1624
        %vm1659 = vmand %vm1047, %vm1625
        %vm1660 = vmand %vm1048, %vm1626
        %vm1661 = vmand %vm1049, %vm1627
        %vm1662 = vmand %vm1050, %vm1628
        %vm1663 = vmand %vm1051, %vm1629
        %vm1664 = vmand %vm1052, %vm1630
        %vm1665 = vmand %vm1053, %vm1631
        %vm1666 = vmand %vm1054, %vm1632
        %vm1667 = vmand %vm1055, %vm1633
        %vm1668 = vmand %vm1056, %vm1634
        %vm1669 = vmand %vm1057, %vm1635
        %vm1670 = vmand %vm1058, %vm1636
        %v1671 = vld [vmem:[%s2] sm:$0x1]
        %v1672 = vld [vmem:[%s298 + $0x4] sm:$0x8]
        %v1673 = vld [vmem:[%s298 + $0x8] sm:$0xf]
        %v1674 = vld [vmem:[%s298 + $0xc] sm:$0xf]
        %v1675 = vld [vmem:[%s298 + $0x10] sm:$0xf]
        %v1676 = vld [vmem:[%s298 + $0x14] sm:$0xf]
        %v1677 = vld [vmem:[%s298 + $0x18] sm:$0xf]
        %v1678 = vld [vmem:[%s298 + $0x1c] sm:$0xf]
        %v1679 = vld [vmem:[%s298 + $0x20] sm:$0xf]
        %v1680 = vld [vmem:[%s298 + $0x24] sm:$0xf]
        %v1681 = vld [vmem:[%s298 + $0x28] sm:$0xf]
        %v1682 = vld [vmem:[%s298 + $0x2c] sm:$0xf]
        %v1683 = vld [vmem:[%s298 + $0x30] sm:$0xf]
        %v1684 = vld [vmem:[%s298 + $0x34] sm:$0xf]
        %v1685 = vld [vmem:[%s298 + $0x38] sm:$0xf]
        %v1686 = vld [vmem:[%s298 + $0x3c] sm:$0xf]
        %v1687 = vld [vmem:[%s298 + $0x40] sm:$0xf]
        %v1688 = vld [vmem:[%s298 + $0x44] sm:$0xf]
        %v1689 = vld [vmem:[%s298 + $0x48] sm:$0xf]
        %v1690 = vld [vmem:[%s298 + $0x4c] sm:$0xf]
        %v1691 = vld [vmem:[%s298 + $0x50] sm:$0xf]
        %v1692 = vld [vmem:[%s298 + $0x54] sm:$0xf]
        %v1693 = vld [vmem:[%s298 + $0x58] sm:$0xf]
        %v1694 = vld [vmem:[%s298 + $0x5c] sm:$0xf]
        %v1695 = vld [vmem:[%s298 + $0x60] sm:$0xf]
        %v1696 = vld [vmem:[%s298 + $0x64] sm:$0xf]
        %v1697 = vld [vmem:[%s298 + $0x68] sm:$0xf]
        %v1698 = vld [vmem:[%s298 + $0x6c] sm:$0xf]
        %v1699 = vld [vmem:[%s298 + $0x70] sm:$0xf]
        %v1700 = vld [vmem:[%s298 + $0x74] sm:$0xf]
        %v1701 = vld [vmem:[%s298 + $0x78] sm:$0xf]
        %v1702 = vld [vmem:[%s298 + $0x7c] sm:$0xf]
        %v1703 = vld [vmem:[%s298 + $0x80] sm:$0xf]
        %v1704 = vld [vmem:[%s298 + $0x84] sm:$0xf]
        %v1705 = vld [vmem:[%s298 + $0x88] sm:$0xf]
        %v1706 = vld [vmem:[%s298 + $0x8c] sm:$0x7]
        %v1707 = vld [vmem:[#allocation6] sm:$0xf]
        %v1708 = vld [vmem:[#allocation6 + $0x4] sm:$0xf]
        %v1709 = vld [vmem:[#allocation6 + $0x8] sm:$0xf]
        %v1710 = vld [vmem:[#allocation6 + $0xc] sm:$0xf]
        %v1711 = vld [vmem:[#allocation6 + $0x10] sm:$0xf]
        %v1712 = vld [vmem:[#allocation6 + $0x14] sm:$0xf]
        %v1713 = vld [vmem:[#allocation6 + $0x18] sm:$0xf]
        %v1714 = vld [vmem:[#allocation6 + $0x1c] sm:$0xf]
        %v1715 = vld [vmem:[#allocation6 + $0x20] sm:$0xf]
        %v1716 = vld [vmem:[#allocation6 + $0x24] sm:$0xf]
        %v1717 = vld [vmem:[#allocation6 + $0x28] sm:$0xf]
        %v1718 = vld [vmem:[#allocation6 + $0x2c] sm:$0xf]
        %v1719 = vld [vmem:[#allocation6 + $0x30] sm:$0xf]
        %v1720 = vld [vmem:[#allocation6 + $0x34] sm:$0xf]
        %v1721 = vld [vmem:[#allocation6 + $0x38] sm:$0xf]
        %v1722 = vld [vmem:[#allocation6 + $0x3c] sm:$0xf]
        %v1758 = vunpack.c.l.b16 %v1672
        %v1759 = vunpack.c.l.b16 %v1673
        %v1760 = vunpack.c.l.b16 %v1674
        %v1761 = vunpack.c.l.b16 %v1675
        %v1762 = vunpack.c.l.b16 %v1676
        %v1763 = vunpack.c.l.b16 %v1677
        %v1764 = vunpack.c.l.b16 %v1678
        %v1765 = vunpack.c.l.b16 %v1679
        %v1766 = vunpack.c.l.b16 %v1680
        %v1767 = vunpack.c.l.b16 %v1681
        %v1768 = vunpack.c.l.b16 %v1682
        %v1769 = vunpack.c.l.b16 %v1683
        %v1770 = vunpack.c.l.b16 %v1684
        %v1771 = vunpack.c.l.b16 %v1685
        %v1772 = vunpack.c.l.b16 %v1686
        %v1773 = vunpack.c.l.b16 %v1687
        %v1774 = vunpack.c.l.b16 %v1688
        %v1775 = vunpack.c.l.b16 %v1689
        %v1776 = vunpack.c.l.b16 %v1690
        %v1777 = vunpack.c.l.b16 %v1691
        %v1778 = vunpack.c.l.b16 %v1692
        %v1779 = vunpack.c.l.b16 %v1693
        %v1780 = vunpack.c.l.b16 %v1694
        %v1781 = vunpack.c.l.b16 %v1695
        %v1782 = vunpack.c.l.b16 %v1696
        %v1783 = vunpack.c.l.b16 %v1697
        %v1784 = vunpack.c.l.b16 %v1698
        %v1785 = vunpack.c.l.b16 %v1699
        %v1786 = vunpack.c.l.b16 %v1700
        %v1787 = vunpack.c.l.b16 %v1701
        %v1788 = vunpack.c.l.b16 %v1702
        %v1789 = vunpack.c.l.b16 %v1703
        %v1790 = vunpack.c.l.b16 %v1704
        %v1791 = vunpack.c.l.b16 %v1705
        %v1792 = vunpack.c.l.b16 %v1706
        %v1793 = vpack.c.b16 %v1759, %v1758
        %v1794 = vpack.c.b16 %v1761, %v1760
        %v1795 = vpack.c.b16 %v1763, %v1762
        %v1796 = vpack.c.b16 %v1765, %v1764
        %v1797 = vpack.c.b16 %v1767, %v1766
        %v1798 = vpack.c.b16 %v1769, %v1768
        %v1799 = vpack.c.b16 %v1771, %v1770
        %v1800 = vpack.c.b16 %v1773, %v1772
        %v1801 = vpack.c.b16 %v1775, %v1774
        %v1802 = vpack.c.b16 %v1777, %v1776
        %v1803 = vpack.c.b16 %v1779, %v1778
        %v1804 = vpack.c.b16 %v1781, %v1780
        %v1805 = vpack.c.b16 %v1783, %v1782
        %v1806 = vpack.c.b16 %v1785, %v1784
        %v1807 = vpack.c.b16 %v1787, %v1786
        %v1808 = vpack.c.b16 %v1789, %v1788
        %v1809 = vpack.c.b16 %v1791, %v1790
        %v1810 = vpack.c.b16 %v1792, %v1792
        %vm1811 = vcmask 1044480
        %v1812 = vrot.slane %v1793, 3
        %v1813 = vrot.slane %v1794, 3
        %v1814 = vsel %vm1811, %v1812, %v1813
        %v1815 = vrot.slane %v1795, 3
        %v1816 = vsel %vm1811, %v1813, %v1815
        %v1817 = vrot.slane %v1796, 3
        %v1818 = vsel %vm1811, %v1815, %v1817
        %v1819 = vrot.slane %v1797, 3
        %v1820 = vsel %vm1811, %v1817, %v1819
        %v1821 = vrot.slane %v1798, 3
        %v1822 = vsel %vm1811, %v1819, %v1821
        %v1823 = vrot.slane %v1799, 3
        %v1824 = vsel %vm1811, %v1821, %v1823
        %v1825 = vrot.slane %v1800, 3
        %v1826 = vsel %vm1811, %v1823, %v1825
        %v1827 = vrot.slane %v1801, 3
        %v1828 = vsel %vm1811, %v1825, %v1827
        %v1829 = vrot.slane %v1802, 3
        %v1830 = vsel %vm1811, %v1827, %v1829
        %v1831 = vrot.slane %v1803, 3
        %v1832 = vsel %vm1811, %v1829, %v1831
        %v1833 = vrot.slane %v1804, 3
        %v1834 = vsel %vm1811, %v1831, %v1833
        %v1835 = vrot.slane %v1805, 3
        %v1836 = vsel %vm1811, %v1833, %v1835
        %v1837 = vrot.slane %v1806, 3
        %v1838 = vsel %vm1811, %v1835, %v1837
        %v1839 = vrot.slane %v1807, 3
        %v1840 = vsel %vm1811, %v1837, %v1839
        %v1841 = vrot.slane %v1808, 3
        %v1842 = vsel %vm1811, %v1839, %v1841
        %v1843 = vrot.slane %v1809, 3
        %v1844 = vsel %vm1811, %v1841, %v1843
        %v1845 = vrot.slane %v1810, 3
        %v1846 = vsel %vm1811, %v1843, %v1845
        %v1880 = vunpack.c.l.b16 %v1707
        %v1881 = vunpack.c.l.b16 %v1708
        %v1882 = vunpack.c.l.b16 %v1709
        %v1883 = vunpack.c.l.b16 %v1710
        %v1884 = vunpack.c.l.b16 %v1711
        %v1885 = vunpack.c.l.b16 %v1712
        %v1886 = vunpack.c.l.b16 %v1713
        %v1887 = vunpack.c.l.b16 %v1714
        %v1888 = vunpack.c.l.b16 %v1715
        %v1889 = vunpack.c.l.b16 %v1716
        %v1890 = vunpack.c.l.b16 %v1717
        %v1891 = vunpack.c.l.b16 %v1718
        %v1892 = vunpack.c.l.b16 %v1719
        %v1893 = vunpack.c.l.b16 %v1720
        %v1894 = vunpack.c.l.b16 %v1721
        %v1895 = vunpack.c.l.b16 %v1722
        %v1896 = vpack.c.b16 %v1881, %v1880
        %v1897 = vpack.c.b16 %v1883, %v1882
        %v1898 = vpack.c.b16 %v1885, %v1884
        %v1899 = vpack.c.b16 %v1887, %v1886
        %v1900 = vpack.c.b16 %v1889, %v1888
        %v1901 = vpack.c.b16 %v1891, %v1890
        %v1902 = vpack.c.b16 %v1893, %v1892
        %v1903 = vpack.c.b16 %v1895, %v1894
        %1912 = vmatprep.subr.bf16.mxu0 0
        %1913 = vmatpush1.bf16.msra.mxu0 %v1896
        %1914 = vmatprep.subr.bf16.mxu0 0
        %1915 = vmatpush1.bf16.msra.mxu0 %v1897
        %1916 = vmatprep.subr.bf16.mxu0 0
        %1917 = vmatpush1.bf16.msra.mxu0 %v1898
        %1918 = vmatprep.subr.bf16.mxu0 0
        %1919 = vmatpush1.bf16.msra.mxu0 %v1899
        %1920 = vmatprep.subr.bf16.mxu0 0
        %1921 = vmatpush1.bf16.msra.mxu0 %v1900
        %1922 = vmatprep.subr.bf16.mxu0 0
        %1923 = vmatpush1.bf16.msra.mxu0 %v1901
        %1924 = vmatprep.subr.bf16.mxu0 0
        %1925 = vmatpush1.bf16.msra.mxu0 %v1902
        %1926 = vmatprep.subr.bf16.mxu0 0
        %1927 = vmatpush1.bf16.msra.mxu0 %v1903
        %1928 = vmatprep.subr.bf16.mxu0 0
        %1929 = vmatpush1.bf16.msra.mxu0 0
        %1930 = vmatprep.subr.bf16.mxu0 0
        %1931 = vmatpush1.bf16.msra.mxu0 0
        %1932 = vmatprep.subr.bf16.mxu0 0
        %1933 = vmatpush1.bf16.msra.mxu0 0
        %1934 = vmatprep.subr.bf16.mxu0 0
        %1935 = vmatpush1.bf16.msra.mxu0 0
        %1936 = vmatprep.subr.bf16.mxu0 0
        %1937 = vmatpush1.bf16.msra.mxu0 0
        %1938 = vmatprep.subr.bf16.mxu0 0
        %1939 = vmatpush1.bf16.msra.mxu0 0
        %1940 = vmatprep.subr.bf16.mxu0 0
        %1941 = vmatpush1.bf16.msra.mxu0 0
        %1942 = vmatprep.subr.bf16.mxu0 0
        %1943 = vmatpush1.bf16.msra.mxu0 0
        %1944 = vmatprep.mubr.bf16.mxu0 0
        %1945 = vmatmul.mubr.bf16.gmra.mrb[0].mxu0 %v1814
        %v1946 = vpop.f32.mrb[0].mxu0
        %v1947 = vadd.f32 0.0, %v1946
        %v1948 = vpop.f32.mrb[0].mxu0
        %v1949 = vpop.f32.mrb[0].mxu0
        %v1950 = vadd.f32 0.0, %v1949
        %v1951 = vpop.f32.mrb[0].mxu0
        %1952 = vmatprep.mubr.bf16.mxu0 0
        %1953 = vmatmul.mubr.bf16.gmra.mrb[0].mxu0 %v1816
        %v1954 = vpop.f32.mrb[0].mxu0
        %v1955 = vadd.f32 0.0, %v1954
        %v1956 = vpop.f32.mrb[0].mxu0
        %v1957 = vpop.f32.mrb[0].mxu0
        %v1958 = vadd.f32 0.0, %v1957
        %v1959 = vpop.f32.mrb[0].mxu0
        %1960 = vmatprep.mubr.bf16.mxu0 0
        %1961 = vmatmul.mubr.bf16.gmra.mrb[0].mxu0 %v1818
        %v1962 = vpop.f32.mrb[0].mxu0
        %v1963 = vadd.f32 0.0, %v1962
        %v1964 = vpop.f32.mrb[0].mxu0
        %v1965 = vpop.f32.mrb[0].mxu0
        %v1966 = vadd.f32 0.0, %v1965
        %v1967 = vpop.f32.mrb[0].mxu0
        %1968 = vmatprep.mubr.bf16.mxu0 0
        %1969 = vmatmul.mubr.bf16.gmra.mrb[0].mxu0 %v1820
        %v1970 = vpop.f32.mrb[0].mxu0
        %v1971 = vadd.f32 0.0, %v1970
        %v1972 = vpop.f32.mrb[0].mxu0
        %v1973 = vpop.f32.mrb[0].mxu0
        %v1974 = vadd.f32 0.0, %v1973
        %v1975 = vpop.f32.mrb[0].mxu0
        %1976 = vmatprep.mubr.bf16.mxu0 0
        %1977 = vmatmul.mubr.bf16.gmra.mrb[0].mxu0 %v1822
        %v1978 = vpop.f32.mrb[0].mxu0
        %v1979 = vadd.f32 0.0, %v1978
        %v1980 = vpop.f32.mrb[0].mxu0
        %v1981 = vpop.f32.mrb[0].mxu0
        %v1982 = vadd.f32 0.0, %v1981
        %v1983 = vpop.f32.mrb[0].mxu0
        %1984 = vmatprep.mubr.bf16.mxu0 0
        %1985 = vmatmul.mubr.bf16.gmra.mrb[0].mxu0 %v1824
        %v1986 = vpop.f32.mrb[0].mxu0
        %v1987 = vadd.f32 0.0, %v1986
        %v1988 = vpop.f32.mrb[0].mxu0
        %v1989 = vpop.f32.mrb[0].mxu0
        %v1990 = vadd.f32 0.0, %v1989
        %v1991 = vpop.f32.mrb[0].mxu0
        %1992 = vmatprep.mubr.bf16.mxu0 0
        %1993 = vmatmul.mubr.bf16.gmra.mrb[0].mxu0 %v1826
        %v1994 = vpop.f32.mrb[0].mxu0
        %v1995 = vadd.f32 0.0, %v1994
        %v1996 = vpop.f32.mrb[0].mxu0
        %v1997 = vpop.f32.mrb[0].mxu0
        %v1998 = vadd.f32 0.0, %v1997
        %v1999 = vpop.f32.mrb[0].mxu0
        %2000 = vmatprep.mubr.bf16.mxu0 0
        %2001 = vmatmul.mubr.bf16.gmra.mrb[0].mxu0 %v1828
        %v2002 = vpop.f32.mrb[0].mxu0
        %v2003 = vadd.f32 0.0, %v2002
        %v2004 = vpop.f32.mrb[0].mxu0
        %v2005 = vpop.f32.mrb[0].mxu0
        %v2006 = vadd.f32 0.0, %v2005
        %v2007 = vpop.f32.mrb[0].mxu0
        %2008 = vmatprep.mubr.bf16.mxu0 0
        %2009 = vmatmul.mubr.bf16.gmra.mrb[0].mxu0 %v1830
        %v2010 = vpop.f32.mrb[0].mxu0
        %v2011 = vadd.f32 0.0, %v2010
        %v2012 = vpop.f32.mrb[0].mxu0
        %v2013 = vpop.f32.mrb[0].mxu0
        %v2014 = vadd.f32 0.0, %v2013
        %v2015 = vpop.f32.mrb[0].mxu0
        %2016 = vmatprep.mubr.bf16.mxu0 0
        %2017 = vmatmul.mubr.bf16.gmra.mrb[0].mxu0 %v1832
        %v2018 = vpop.f32.mrb[0].mxu0
        %v2019 = vadd.f32 0.0, %v2018
        %v2020 = vpop.f32.mrb[0].mxu0
        %v2021 = vpop.f32.mrb[0].mxu0
        %v2022 = vadd.f32 0.0, %v2021
        %v2023 = vpop.f32.mrb[0].mxu0
        %2024 = vmatprep.mubr.bf16.mxu0 0
        %2025 = vmatmul.mubr.bf16.gmra.mrb[0].mxu0 %v1834
        %v2026 = vpop.f32.mrb[0].mxu0
        %v2027 = vadd.f32 0.0, %v2026
        %v2028 = vpop.f32.mrb[0].mxu0
        %v2029 = vpop.f32.mrb[0].mxu0
        %v2030 = vadd.f32 0.0, %v2029
        %v2031 = vpop.f32.mrb[0].mxu0
        %2032 = vmatprep.mubr.bf16.mxu0 0
        %2033 = vmatmul.mubr.bf16.gmra.mrb[0].mxu0 %v1836
        %v2034 = vpop.f32.mrb[0].mxu0
        %v2035 = vadd.f32 0.0, %v2034
        %v2036 = vpop.f32.mrb[0].mxu0
        %v2037 = vpop.f32.mrb[0].mxu0
        %v2038 = vadd.f32 0.0, %v2037
        %v2039 = vpop.f32.mrb[0].mxu0
        %2040 = vmatprep.mubr.bf16.mxu0 0
        %2041 = vmatmul.mubr.bf16.gmra.mrb[0].mxu0 %v1838
        %v2042 = vpop.f32.mrb[0].mxu0
        %v2043 = vadd.f32 0.0, %v2042
        %v2044 = vpop.f32.mrb[0].mxu0
        %v2045 = vpop.f32.mrb[0].mxu0
        %v2046 = vadd.f32 0.0, %v2045
        %v2047 = vpop.f32.mrb[0].mxu0
        %2048 = vmatprep.mubr.bf16.mxu0 0
        %2049 = vmatmul.mubr.bf16.gmra.mrb[0].mxu0 %v1840
        %v2050 = vpop.f32.mrb[0].mxu0
        %v2051 = vadd.f32 0.0, %v2050
        %v2052 = vpop.f32.mrb[0].mxu0
        %v2053 = vpop.f32.mrb[0].mxu0
        %v2054 = vadd.f32 0.0, %v2053
        %v2055 = vpop.f32.mrb[0].mxu0
        %2056 = vmatprep.mubr.bf16.mxu0 0
        %2057 = vmatmul.mubr.bf16.gmra.mrb[0].mxu0 %v1842
        %v2058 = vpop.f32.mrb[0].mxu0
        %v2059 = vadd.f32 0.0, %v2058
        %v2060 = vpop.f32.mrb[0].mxu0
        %v2061 = vpop.f32.mrb[0].mxu0
        %v2062 = vadd.f32 0.0, %v2061
        %v2063 = vpop.f32.mrb[0].mxu0
        %2064 = vmatprep.mubr.bf16.mxu0 0
        %2065 = vmatmul.mubr.bf16.gmra.mrb[0].mxu0 %v1844
        %v2066 = vpop.f32.mrb[0].mxu0
        %v2067 = vadd.f32 0.0, %v2066
        %v2068 = vpop.f32.mrb[0].mxu0
        %v2069 = vpop.f32.mrb[0].mxu0
        %v2070 = vadd.f32 0.0, %v2069
        %v2071 = vpop.f32.mrb[0].mxu0
        %2072 = vmatprep.mubr.bf16.mxu0 0
        %2073 = vmatmul.mubr.bf16.gmra.mrb[0].mxu0 %v1846
        %v2074 = vpop.f32.mrb[0].mxu0
        %v2075 = vadd.f32 0.0, %v2074
        %v2076 = vpop.f32.mrb[0].mxu0
        %v2077 = vpop.f32.mrb[0].mxu0
        %v2078 = vadd.f32 0.0, %v2077
        %v2079 = vpop.f32.mrb[0].mxu0
        %2080 = vdwg.mxu0
        %v2082 = vlaneseq
        %v2083 = vshrl.u32 %v2082, 7
        %v2084 = vsub.s32 0, %v2083
        %v2085 = vrot.slane %v1671, %v2084
        %v2087 = vadd.f32 %v2085, %v1947
        %v2088 = vadd.f32 %v2085, %v1950
        %v2089 = vadd.f32 %v2085, %v1955
        %v2090 = vadd.f32 %v2085, %v1958
        %v2091 = vadd.f32 %v2085, %v1963
        %v2092 = vadd.f32 %v2085, %v1966
        %v2093 = vadd.f32 %v2085, %v1971
        %v2094 = vadd.f32 %v2085, %v1974
        %v2095 = vadd.f32 %v2085, %v1979
        %v2096 = vadd.f32 %v2085, %v1982
        %v2097 = vadd.f32 %v2085, %v1987
        %v2098 = vadd.f32 %v2085, %v1990
        %v2099 = vadd.f32 %v2085, %v1995
        %v2100 = vadd.f32 %v2085, %v1998
        %v2101 = vadd.f32 %v2085, %v2003
        %v2102 = vadd.f32 %v2085, %v2006
        %v2103 = vadd.f32 %v2085, %v2011
        %v2104 = vadd.f32 %v2085, %v2014
        %v2105 = vadd.f32 %v2085, %v2019
        %v2106 = vadd.f32 %v2085, %v2022
        %v2107 = vadd.f32 %v2085, %v2027
        %v2108 = vadd.f32 %v2085, %v2030
        %v2109 = vadd.f32 %v2085, %v2035
        %v2110 = vadd.f32 %v2085, %v2038
        %v2111 = vadd.f32 %v2085, %v2043
        %v2112 = vadd.f32 %v2085, %v2046
        %v2113 = vadd.f32 %v2085, %v2051
        %v2114 = vadd.f32 %v2085, %v2054
        %v2115 = vadd.f32 %v2085, %v2059
        %v2116 = vadd.f32 %v2085, %v2062
        %v2117 = vadd.f32 %v2085, %v2067
        %v2118 = vadd.f32 %v2085, %v2070
        %v2119 = vadd.f32 %v2085, %v2075
        %v2120 = vadd.f32 %v2085, %v2078
        %v2121 = vld [vmem:[%s298 + $0x8c] sm:$0xf]
        %s2122 = scalar_lea.vmem [#allocation6], 64
        %v2123 = vld [vmem:[%s2122] sm:$0xf]
        %v2124 = vld [vmem:[%s2122 + $0x4] sm:$0xf]
        %v2125 = vld [vmem:[%s2122 + $0x8] sm:$0xf]
        %v2126 = vld [vmem:[%s2122 + $0xc] sm:$0xf]
        %v2127 = vld [vmem:[%s2122 + $0x10] sm:$0xf]
        %v2128 = vld [vmem:[%s2122 + $0x14] sm:$0xf]
        %v2129 = vld [vmem:[%s2122 + $0x18] sm:$0xf]
        %v2130 = vld [vmem:[%s2122 + $0x1c] sm:$0xf]
        %v2131 = vld [vmem:[%s2122 + $0x20] sm:$0xf]
        %v2132 = vld [vmem:[%s2122 + $0x24] sm:$0xf]
        %v2133 = vld [vmem:[%s2122 + $0x28] sm:$0xf]
        %v2134 = vld [vmem:[%s2122 + $0x2c] sm:$0xf]
        %v2135 = vld [vmem:[%s2122 + $0x30] sm:$0xf]
        %v2136 = vld [vmem:[%s2122 + $0x34] sm:$0xf]
        %v2137 = vld [vmem:[%s2122 + $0x38] sm:$0xf]
        %v2138 = vld [vmem:[%s2122 + $0x3c] sm:$0xf]
        %v2140 = vunpack.c.l.b16 %v2121
        %v2141 = vpack.c.b16 %v2140, %v2140
        %vm2142 = vsmask.f32 4352
        %v2144 = vshrl.u32 %v1793, 16
        %v2146 = vrot.slane %v2144, 3
        %v2147 = vshll.u32 %v1793, 16
        %v2149 = vrot.slane %v2147, 4
        %v2150 = vor.u32 %v2146, %v2149
        %v2152 = vshrl.u32 %v1794, 16
        %v2154 = vrot.slane %v2152, 3
        %v2155 = vshll.u32 %v1794, 16
        %v2157 = vrot.slane %v2155, 4
        %v2158 = vor.u32 %v2154, %v2157
        %v2159 = vsel %vm2142, %v2150, %v2158
        %v2161 = vshrl.u32 %v1795, 16
        %v2163 = vrot.slane %v2161, 3
        %v2164 = vshll.u32 %v1795, 16
        %v2166 = vrot.slane %v2164, 4
        %v2167 = vor.u32 %v2163, %v2166
        %v2168 = vsel %vm2142, %v2158, %v2167
        %v2170 = vshrl.u32 %v1796, 16
        %v2172 = vrot.slane %v2170, 3
        %v2173 = vshll.u32 %v1796, 16
        %v2175 = vrot.slane %v2173, 4
        %v2176 = vor.u32 %v2172, %v2175
        %v2177 = vsel %vm2142, %v2167, %v2176
        %v2179 = vshrl.u32 %v1797, 16
        %v2181 = vrot.slane %v2179, 3
        %v2182 = vshll.u32 %v1797, 16
        %v2184 = vrot.slane %v2182, 4
        %v2185 = vor.u32 %v2181, %v2184
        %v2186 = vsel %vm2142, %v2176, %v2185
        %v2188 = vshrl.u32 %v1798, 16
        %v2190 = vrot.slane %v2188, 3
        %v2191 = vshll.u32 %v1798, 16
        %v2193 = vrot.slane %v2191, 4
        %v2194 = vor.u32 %v2190, %v2193
        %v2195 = vsel %vm2142, %v2185, %v2194
        %v2197 = vshrl.u32 %v1799, 16
        %v2199 = vrot.slane %v2197, 3
        %v2200 = vshll.u32 %v1799, 16
        %v2202 = vrot.slane %v2200, 4
        %v2203 = vor.u32 %v2199, %v2202
        %v2204 = vsel %vm2142, %v2194, %v2203
        %v2206 = vshrl.u32 %v1800, 16
        %v2208 = vrot.slane %v2206, 3
        %v2209 = vshll.u32 %v1800, 16
        %v2211 = vrot.slane %v2209, 4
        %v2212 = vor.u32 %v2208, %v2211
        %v2213 = vsel %vm2142, %v2203, %v2212
        %v2215 = vshrl.u32 %v1801, 16
        %v2217 = vrot.slane %v2215, 3
        %v2218 = vshll.u32 %v1801, 16
        %v2220 = vrot.slane %v2218, 4
        %v2221 = vor.u32 %v2217, %v2220
        %v2222 = vsel %vm2142, %v2212, %v2221
        %v2224 = vshrl.u32 %v1802, 16
        %v2226 = vrot.slane %v2224, 3
        %v2227 = vshll.u32 %v1802, 16
        %v2229 = vrot.slane %v2227, 4
        %v2230 = vor.u32 %v2226, %v2229
        %v2231 = vsel %vm2142, %v2221, %v2230
        %v2233 = vshrl.u32 %v1803, 16
        %v2235 = vrot.slane %v2233, 3
        %v2236 = vshll.u32 %v1803, 16
        %v2238 = vrot.slane %v2236, 4
        %v2239 = vor.u32 %v2235, %v2238
        %v2240 = vsel %vm2142, %v2230, %v2239
        %v2242 = vshrl.u32 %v1804, 16
        %v2244 = vrot.slane %v2242, 3
        %v2245 = vshll.u32 %v1804, 16
        %v2247 = vrot.slane %v2245, 4
        %v2248 = vor.u32 %v2244, %v2247
        %v2249 = vsel %vm2142, %v2239, %v2248
        %v2251 = vshrl.u32 %v1805, 16
        %v2253 = vrot.slane %v2251, 3
        %v2254 = vshll.u32 %v1805, 16
        %v2256 = vrot.slane %v2254, 4
        %v2257 = vor.u32 %v2253, %v2256
        %v2258 = vsel %vm2142, %v2248, %v2257
        %v2260 = vshrl.u32 %v1806, 16
        %v2262 = vrot.slane %v2260, 3
        %v2263 = vshll.u32 %v1806, 16
        %v2265 = vrot.slane %v2263, 4
        %v2266 = vor.u32 %v2262, %v2265
        %v2267 = vsel %vm2142, %v2257, %v2266
        %v2269 = vshrl.u32 %v1807, 16
        %v2271 = vrot.slane %v2269, 3
        %v2272 = vshll.u32 %v1807, 16
        %v2274 = vrot.slane %v2272, 4
        %v2275 = vor.u32 %v2271, %v2274
        %v2276 = vsel %vm2142, %v2266, %v2275
        %v2278 = vshrl.u32 %v1808, 16
        %v2280 = vrot.slane %v2278, 3
        %v2281 = vshll.u32 %v1808, 16
        %v2283 = vrot.slane %v2281, 4
        %v2284 = vor.u32 %v2280, %v2283
        %v2285 = vsel %vm2142, %v2275, %v2284
        %v2287 = vshrl.u32 %v1809, 16
        %v2289 = vrot.slane %v2287, 3
        %v2290 = vshll.u32 %v1809, 16
        %v2292 = vrot.slane %v2290, 4
        %v2293 = vor.u32 %v2289, %v2292
        %v2294 = vsel %vm2142, %v2284, %v2293
        %v2296 = vshrl.u32 %v2141, 16
        %v2298 = vrot.slane %v2296, 3
        %v2299 = vshll.u32 %v2141, 16
        %v2301 = vrot.slane %v2299, 4
        %v2302 = vor.u32 %v2298, %v2301
        %v2303 = vsel %vm2142, %v2293, %v2302
        %v2337 = vunpack.c.l.b16 %v2123
        %v2338 = vunpack.c.l.b16 %v2124
        %v2339 = vunpack.c.l.b16 %v2125
        %v2340 = vunpack.c.l.b16 %v2126
        %v2341 = vunpack.c.l.b16 %v2127
        %v2342 = vunpack.c.l.b16 %v2128
        %v2343 = vunpack.c.l.b16 %v2129
        %v2344 = vunpack.c.l.b16 %v2130
        %v2345 = vunpack.c.l.b16 %v2131
        %v2346 = vunpack.c.l.b16 %v2132
        %v2347 = vunpack.c.l.b16 %v2133
        %v2348 = vunpack.c.l.b16 %v2134
        %v2349 = vunpack.c.l.b16 %v2135
        %v2350 = vunpack.c.l.b16 %v2136
        %v2351 = vunpack.c.l.b16 %v2137
        %v2352 = vunpack.c.l.b16 %v2138
        %v2353 = vpack.c.b16 %v2338, %v2337
        %v2354 = vpack.c.b16 %v2340, %v2339
        %v2355 = vpack.c.b16 %v2342, %v2341
        %v2356 = vpack.c.b16 %v2344, %v2343
        %v2357 = vpack.c.b16 %v2346, %v2345
        %v2358 = vpack.c.b16 %v2348, %v2347
        %v2359 = vpack.c.b16 %v2350, %v2349
        %v2360 = vpack.c.b16 %v2352, %v2351
        %2369 = vmatprep.subr.bf16.mxu0 0
        %2370 = vmatpush1.bf16.msra.mxu0 %v2353
        %2371 = vmatprep.subr.bf16.mxu0 0
        %2372 = vmatpush1.bf16.msra.mxu0 %v2354
        %2373 = vmatprep.subr.bf16.mxu0 0
        %2374 = vmatpush1.bf16.msra.mxu0 %v2355
        %2375 = vmatprep.subr.bf16.mxu0 0
        %2376 = vmatpush1.bf16.msra.mxu0 %v2356
        %2377 = vmatprep.subr.bf16.mxu0 0
        %2378 = vmatpush1.bf16.msra.mxu0 %v2357
        %2379 = vmatprep.subr.bf16.mxu0 0
        %2380 = vmatpush1.bf16.msra.mxu0 %v2358
        %2381 = vmatprep.subr.bf16.mxu0 0
        %2382 = vmatpush1.bf16.msra.mxu0 %v2359
        %2383 = vmatprep.subr.bf16.mxu0 0
        %2384 = vmatpush1.bf16.msra.mxu0 %v2360
        %2385 = vmatprep.subr.bf16.mxu0 0
        %2386 = vmatpush1.bf16.msra.mxu0 0
        %2387 = vmatprep.subr.bf16.mxu0 0
        %2388 = vmatpush1.bf16.msra.mxu0 0
        %2389 = vmatprep.subr.bf16.mxu0 0
        %2390 = vmatpush1.bf16.msra.mxu0 0
        %2391 = vmatprep.subr.bf16.mxu0 0
        %2392 = vmatpush1.bf16.msra.mxu0 0
        %2393 = vmatprep.subr.bf16.mxu0 0
        %2394 = vmatpush1.bf16.msra.mxu0 0
        %2395 = vmatprep.subr.bf16.mxu0 0
        %2396 = vmatpush1.bf16.msra.mxu0 0
        %2397 = vmatprep.subr.bf16.mxu0 0
        %2398 = vmatpush1.bf16.msra.mxu0 0
        %2399 = vmatprep.subr.bf16.mxu0 0
        %2400 = vmatpush1.bf16.msra.mxu0 0
        %2401 = vmatprep.mubr.bf16.mxu0 0
        %2402 = vmatmul.mubr.bf16.gmra.mrb[0].mxu0 %v2159
        %v2403 = vpop.f32.mrb[0].mxu0
        %v2404 = vadd.f32 0.0, %v2403
        %v2405 = vpop.f32.mrb[0].mxu0
        %v2406 = vpop.f32.mrb[0].mxu0
        %v2407 = vadd.f32 0.0, %v2406
        %v2408 = vpop.f32.mrb[0].mxu0
        %2409 = vmatprep.mubr.bf16.mxu0 0
        %2410 = vmatmul.mubr.bf16.gmra.mrb[0].mxu0 %v2168
        %v2411 = vpop.f32.mrb[0].mxu0
        %v2412 = vadd.f32 0.0, %v2411
        %v2413 = vpop.f32.mrb[0].mxu0
        %v2414 = vpop.f32.mrb[0].mxu0
        %v2415 = vadd.f32 0.0, %v2414
        %v2416 = vpop.f32.mrb[0].mxu0
        %2417 = vmatprep.mubr.bf16.mxu0 0
        %2418 = vmatmul.mubr.bf16.gmra.mrb[0].mxu0 %v2177
        %v2419 = vpop.f32.mrb[0].mxu0
        %v2420 = vadd.f32 0.0, %v2419
        %v2421 = vpop.f32.mrb[0].mxu0
        %v2422 = vpop.f32.mrb[0].mxu0
        %v2423 = vadd.f32 0.0, %v2422
        %v2424 = vpop.f32.mrb[0].mxu0
        %2425 = vmatprep.mubr.bf16.mxu0 0
        %2426 = vmatmul.mubr.bf16.gmra.mrb[0].mxu0 %v2186
        %v2427 = vpop.f32.mrb[0].mxu0
        %v2428 = vadd.f32 0.0, %v2427
        %v2429 = vpop.f32.mrb[0].mxu0
        %v2430 = vpop.f32.mrb[0].mxu0
        %v2431 = vadd.f32 0.0, %v2430
        %v2432 = vpop.f32.mrb[0].mxu0
        %2433 = vmatprep.mubr.bf16.mxu0 0
        %2434 = vmatmul.mubr.bf16.gmra.mrb[0].mxu0 %v2195
        %v2435 = vpop.f32.mrb[0].mxu0
        %v2436 = vadd.f32 0.0, %v2435
        %v2437 = vpop.f32.mrb[0].mxu0
        %v2438 = vpop.f32.mrb[0].mxu0
        %v2439 = vadd.f32 0.0, %v2438
        %v2440 = vpop.f32.mrb[0].mxu0
        %2441 = vmatprep.mubr.bf16.mxu0 0
        %2442 = vmatmul.mubr.bf16.gmra.mrb[0].mxu0 %v2204
        %v2443 = vpop.f32.mrb[0].mxu0
        %v2444 = vadd.f32 0.0, %v2443
        %v2445 = vpop.f32.mrb[0].mxu0
        %v2446 = vpop.f32.mrb[0].mxu0
        %v2447 = vadd.f32 0.0, %v2446
        %v2448 = vpop.f32.mrb[0].mxu0
        %2449 = vmatprep.mubr.bf16.mxu0 0
        %2450 = vmatmul.mubr.bf16.gmra.mrb[0].mxu0 %v2213
        %v2451 = vpop.f32.mrb[0].mxu0
        %v2452 = vadd.f32 0.0, %v2451
        %v2453 = vpop.f32.mrb[0].mxu0
        %v2454 = vpop.f32.mrb[0].mxu0
        %v2455 = vadd.f32 0.0, %v2454
        %v2456 = vpop.f32.mrb[0].mxu0
        %2457 = vmatprep.mubr.bf16.mxu0 0
        %2458 = vmatmul.mubr.bf16.gmra.mrb[0].mxu0 %v2222
        %v2459 = vpop.f32.mrb[0].mxu0
        %v2460 = vadd.f32 0.0, %v2459
        %v2461 = vpop.f32.mrb[0].mxu0
        %v2462 = vpop.f32.mrb[0].mxu0
        %v2463 = vadd.f32 0.0, %v2462
        %v2464 = vpop.f32.mrb[0].mxu0
        %2465 = vmatprep.mubr.bf16.mxu0 0
        %2466 = vmatmul.mubr.bf16.gmra.mrb[0].mxu0 %v2231
        %v2467 = vpop.f32.mrb[0].mxu0
        %v2468 = vadd.f32 0.0, %v2467
        %v2469 = vpop.f32.mrb[0].mxu0
        %v2470 = vpop.f32.mrb[0].mxu0
        %v2471 = vadd.f32 0.0, %v2470
        %v2472 = vpop.f32.mrb[0].mxu0
        %2473 = vmatprep.mubr.bf16.mxu0 0
        %2474 = vmatmul.mubr.bf16.gmra.mrb[0].mxu0 %v2240
        %v2475 = vpop.f32.mrb[0].mxu0
        %v2476 = vadd.f32 0.0, %v2475
        %v2477 = vpop.f32.mrb[0].mxu0
        %v2478 = vpop.f32.mrb[0].mxu0
        %v2479 = vadd.f32 0.0, %v2478
        %v2480 = vpop.f32.mrb[0].mxu0
        %2481 = vmatprep.mubr.bf16.mxu0 0
        %2482 = vmatmul.mubr.bf16.gmra.mrb[0].mxu0 %v2249
        %v2483 = vpop.f32.mrb[0].mxu0
        %v2484 = vadd.f32 0.0, %v2483
        %v2485 = vpop.f32.mrb[0].mxu0
        %v2486 = vpop.f32.mrb[0].mxu0
        %v2487 = vadd.f32 0.0, %v2486
        %v2488 = vpop.f32.mrb[0].mxu0
        %2489 = vmatprep.mubr.bf16.mxu0 0
        %2490 = vmatmul.mubr.bf16.gmra.mrb[0].mxu0 %v2258
        %v2491 = vpop.f32.mrb[0].mxu0
        %v2492 = vadd.f32 0.0, %v2491
        %v2493 = vpop.f32.mrb[0].mxu0
        %v2494 = vpop.f32.mrb[0].mxu0
        %v2495 = vadd.f32 0.0, %v2494
        %v2496 = vpop.f32.mrb[0].mxu0
        %2497 = vmatprep.mubr.bf16.mxu0 0
        %2498 = vmatmul.mubr.bf16.gmra.mrb[0].mxu0 %v2267
        %v2499 = vpop.f32.mrb[0].mxu0
        %v2500 = vadd.f32 0.0, %v2499
        %v2501 = vpop.f32.mrb[0].mxu0
        %v2502 = vpop.f32.mrb[0].mxu0
        %v2503 = vadd.f32 0.0, %v2502
        %v2504 = vpop.f32.mrb[0].mxu0
        %2505 = vmatprep.mubr.bf16.mxu0 0
        %2506 = vmatmul.mubr.bf16.gmra.mrb[0].mxu0 %v2276
        %v2507 = vpop.f32.mrb[0].mxu0
        %v2508 = vadd.f32 0.0, %v2507
        %v2509 = vpop.f32.mrb[0].mxu0
        %v2510 = vpop.f32.mrb[0].mxu0
        %v2511 = vadd.f32 0.0, %v2510
        %v2512 = vpop.f32.mrb[0].mxu0
        %2513 = vmatprep.mubr.bf16.mxu0 0
        %2514 = vmatmul.mubr.bf16.gmra.mrb[0].mxu0 %v2285
        %v2515 = vpop.f32.mrb[0].mxu0
        %v2516 = vadd.f32 0.0, %v2515
        %v2517 = vpop.f32.mrb[0].mxu0
        %v2518 = vpop.f32.mrb[0].mxu0
        %v2519 = vadd.f32 0.0, %v2518
        %v2520 = vpop.f32.mrb[0].mxu0
        %2521 = vmatprep.mubr.bf16.mxu0 0
        %2522 = vmatmul.mubr.bf16.gmra.mrb[0].mxu0 %v2294
        %v2523 = vpop.f32.mrb[0].mxu0
        %v2524 = vadd.f32 0.0, %v2523
        %v2525 = vpop.f32.mrb[0].mxu0
        %v2526 = vpop.f32.mrb[0].mxu0
        %v2527 = vadd.f32 0.0, %v2526
        %v2528 = vpop.f32.mrb[0].mxu0
        %2529 = vmatprep.mubr.bf16.mxu0 0
        %2530 = vmatmul.mubr.bf16.gmra.mrb[0].mxu0 %v2303
        %v2531 = vpop.f32.mrb[0].mxu0
        %v2532 = vadd.f32 0.0, %v2531
        %v2533 = vpop.f32.mrb[0].mxu0
        %v2534 = vpop.f32.mrb[0].mxu0
        %v2535 = vadd.f32 0.0, %v2534
        %v2536 = vpop.f32.mrb[0].mxu0
        %2537 = vdwg.mxu0
        %v2538 = vadd.f32 %v2087, %v2404
        %v2539 = vadd.f32 %v2088, %v2407
        %v2540 = vadd.f32 %v2089, %v2412
        %v2541 = vadd.f32 %v2090, %v2415
        %v2542 = vadd.f32 %v2091, %v2420
        %v2543 = vadd.f32 %v2092, %v2423
        %v2544 = vadd.f32 %v2093, %v2428
        %v2545 = vadd.f32 %v2094, %v2431
        %v2546 = vadd.f32 %v2095, %v2436
        %v2547 = vadd.f32 %v2096, %v2439
        %v2548 = vadd.f32 %v2097, %v2444
        %v2549 = vadd.f32 %v2098, %v2447
        %v2550 = vadd.f32 %v2099, %v2452
        %v2551 = vadd.f32 %v2100, %v2455
        %v2552 = vadd.f32 %v2101, %v2460
        %v2553 = vadd.f32 %v2102, %v2463
        %v2554 = vadd.f32 %v2103, %v2468
        %v2555 = vadd.f32 %v2104, %v2471
        %v2556 = vadd.f32 %v2105, %v2476
        %v2557 = vadd.f32 %v2106, %v2479
        %v2558 = vadd.f32 %v2107, %v2484
        %v2559 = vadd.f32 %v2108, %v2487
        %v2560 = vadd.f32 %v2109, %v2492
        %v2561 = vadd.f32 %v2110, %v2495
        %v2562 = vadd.f32 %v2111, %v2500
        %v2563 = vadd.f32 %v2112, %v2503
        %v2564 = vadd.f32 %v2113, %v2508
        %v2565 = vadd.f32 %v2114, %v2511
        %v2566 = vadd.f32 %v2115, %v2516
        %v2567 = vadd.f32 %v2116, %v2519
        %v2568 = vadd.f32 %v2117, %v2524
        %v2569 = vadd.f32 %v2118, %v2527
        %v2570 = vadd.f32 %v2119, %v2532
        %v2571 = vadd.f32 %v2120, %v2535
        %s2572 = scalar_lea.vmem [#allocation6], 128
        %v2573 = vld [vmem:[%s2572] sm:$0xf]
        %v2574 = vld [vmem:[%s2572 + $0x4] sm:$0xf]
        %v2575 = vld [vmem:[%s2572 + $0x8] sm:$0xf]
        %v2576 = vld [vmem:[%s2572 + $0xc] sm:$0xf]
        %v2577 = vld [vmem:[%s2572 + $0x10] sm:$0xf]
        %v2578 = vld [vmem:[%s2572 + $0x14] sm:$0xf]
        %v2579 = vld [vmem:[%s2572 + $0x18] sm:$0xf]
        %v2580 = vld [vmem:[%s2572 + $0x1c] sm:$0xf]
        %v2581 = vld [vmem:[%s2572 + $0x20] sm:$0xf]
        %v2582 = vld [vmem:[%s2572 + $0x24] sm:$0xf]
        %v2583 = vld [vmem:[%s2572 + $0x28] sm:$0xf]
        %v2584 = vld [vmem:[%s2572 + $0x2c] sm:$0xf]
        %v2585 = vld [vmem:[%s2572 + $0x30] sm:$0xf]
        %v2586 = vld [vmem:[%s2572 + $0x34] sm:$0xf]
        %v2587 = vld [vmem:[%s2572 + $0x38] sm:$0xf]
        %v2588 = vld [vmem:[%s2572 + $0x3c] sm:$0xf]
        %v2589 = vpack.c.b16 %v1760, %v1759
        %v2590 = vpack.c.b16 %v1762, %v1761
        %v2591 = vpack.c.b16 %v1764, %v1763
        %v2592 = vpack.c.b16 %v1766, %v1765
        %v2593 = vpack.c.b16 %v1768, %v1767
        %v2594 = vpack.c.b16 %v1770, %v1769
        %v2595 = vpack.c.b16 %v1772, %v1771
        %v2596 = vpack.c.b16 %v1774, %v1773
        %v2597 = vpack.c.b16 %v1776, %v1775
        %v2598 = vpack.c.b16 %v1778, %v1777
        %v2599 = vpack.c.b16 %v1780, %v1779
        %v2600 = vpack.c.b16 %v1782, %v1781
        %v2601 = vpack.c.b16 %v1784, %v1783
        %v2602 = vpack.c.b16 %v1786, %v1785
        %v2603 = vpack.c.b16 %v1788, %v1787
        %v2604 = vpack.c.b16 %v1790, %v1789
        %v2605 = vpack.c.b16 %v2140, %v1791
        %v2639 = vunpack.c.l.b16 %v2573
        %v2640 = vunpack.c.l.b16 %v2574
        %v2641 = vunpack.c.l.b16 %v2575
        %v2642 = vunpack.c.l.b16 %v2576
        %v2643 = vunpack.c.l.b16 %v2577
        %v2644 = vunpack.c.l.b16 %v2578
        %v2645 = vunpack.c.l.b16 %v2579
        %v2646 = vunpack.c.l.b16 %v2580
        %v2647 = vunpack.c.l.b16 %v2581
        %v2648 = vunpack.c.l.b16 %v2582
        %v2649 = vunpack.c.l.b16 %v2583
        %v2650 = vunpack.c.l.b16 %v2584
        %v2651 = vunpack.c.l.b16 %v2585
        %v2652 = vunpack.c.l.b16 %v2586
        %v2653 = vunpack.c.l.b16 %v2587
        %v2654 = vunpack.c.l.b16 %v2588
        %v2655 = vpack.c.b16 %v2640, %v2639
        %v2656 = vpack.c.b16 %v2642, %v2641
        %v2657 = vpack.c.b16 %v2644, %v2643
        %v2658 = vpack.c.b16 %v2646, %v2645
        %v2659 = vpack.c.b16 %v2648, %v2647
        %v2660 = vpack.c.b16 %v2650, %v2649
        %v2661 = vpack.c.b16 %v2652, %v2651
        %v2662 = vpack.c.b16 %v2654, %v2653
        %2671 = vmatprep.subr.bf16.mxu0 0
        %2672 = vmatpush1.bf16.msra.mxu0 %v2655
        %2673 = vmatprep.subr.bf16.mxu0 0
        %2674 = vmatpush1.bf16.msra.mxu0 %v2656
        %2675 = vmatprep.subr.bf16.mxu0 0
        %2676 = vmatpush1.bf16.msra.mxu0 %v2657
        %2677 = vmatprep.subr.bf16.mxu0 0
        %2678 = vmatpush1.bf16.msra.mxu0 %v2658
        %2679 = vmatprep.subr.bf16.mxu0 0
        %2680 = vmatpush1.bf16.msra.mxu0 %v2659
        %2681 = vmatprep.subr.bf16.mxu0 0
        %2682 = vmatpush1.bf16.msra.mxu0 %v2660
        %2683 = vmatprep.subr.bf16.mxu0 0
        %2684 = vmatpush1.bf16.msra.mxu0 %v2661
        %2685 = vmatprep.subr.bf16.mxu0 0
        %2686 = vmatpush1.bf16.msra.mxu0 %v2662
        %2687 = vmatprep.subr.bf16.mxu0 0
        %2688 = vmatpush1.bf16.msra.mxu0 0
        %2689 = vmatprep.subr.bf16.mxu0 0
        %2690 = vmatpush1.bf16.msra.mxu0 0
        %2691 = vmatprep.subr.bf16.mxu0 0
        %2692 = vmatpush1.bf16.msra.mxu0 0
        %2693 = vmatprep.subr.bf16.mxu0 0
        %2694 = vmatpush1.bf16.msra.mxu0 0
        %2695 = vmatprep.subr.bf16.mxu0 0
        %2696 = vmatpush1.bf16.msra.mxu0 0
        %2697 = vmatprep.subr.bf16.mxu0 0
        %2698 = vmatpush1.bf16.msra.mxu0 0
        %2699 = vmatprep.subr.bf16.mxu0 0
        %2700 = vmatpush1.bf16.msra.mxu0 0
        %2701 = vmatprep.subr.bf16.mxu0 0
        %2702 = vmatpush1.bf16.msra.mxu0 0
        %2703 = vmatprep.mubr.bf16.mxu0 0
        %2704 = vmatmul.mubr.bf16.gmra.mrb[0].mxu0 %v2589
        %v2705 = vpop.f32.mrb[0].mxu0
        %v2706 = vadd.f32 0.0, %v2705
        %v2707 = vpop.f32.mrb[0].mxu0
        %v2708 = vpop.f32.mrb[0].mxu0
        %v2709 = vadd.f32 0.0, %v2708
        %v2710 = vpop.f32.mrb[0].mxu0
        %2711 = vmatprep.mubr.bf16.mxu0 0
        %2712 = vmatmul.mubr.bf16.gmra.mrb[0].mxu0 %v2590
        %v2713 = vpop.f32.mrb[0].mxu0
        %v2714 = vadd.f32 0.0, %v2713
        %v2715 = vpop.f32.mrb[0].mxu0
        %v2716 = vpop.f32.mrb[0].mxu0
        %v2717 = vadd.f32 0.0, %v2716
        %v2718 = vpop.f32.mrb[0].mxu0
        %2719 = vmatprep.mubr.bf16.mxu0 0
        %2720 = vmatmul.mubr.bf16.gmra.mrb[0].mxu0 %v2591
        %v2721 = vpop.f32.mrb[0].mxu0
        %v2722 = vadd.f32 0.0, %v2721
        %v2723 = vpop.f32.mrb[0].mxu0
        %v2724 = vpop.f32.mrb[0].mxu0
        %v2725 = vadd.f32 0.0, %v2724
        %v2726 = vpop.f32.mrb[0].mxu0
        %2727 = vmatprep.mubr.bf16.mxu0 0
        %2728 = vmatmul.mubr.bf16.gmra.mrb[0].mxu0 %v2592
        %v2729 = vpop.f32.mrb[0].mxu0
        %v2730 = vadd.f32 0.0, %v2729
        %v2731 = vpop.f32.mrb[0].mxu0
        %v2732 = vpop.f32.mrb[0].mxu0
        %v2733 = vadd.f32 0.0, %v2732
        %v2734 = vpop.f32.mrb[0].mxu0
        %2735 = vmatprep.mubr.bf16.mxu0 0
        %2736 = vmatmul.mubr.bf16.gmra.mrb[0].mxu0 %v2593
        %v2737 = vpop.f32.mrb[0].mxu0
        %v2738 = vadd.f32 0.0, %v2737
        %v2739 = vpop.f32.mrb[0].mxu0
        %v2740 = vpop.f32.mrb[0].mxu0
        %v2741 = vadd.f32 0.0, %v2740
        %v2742 = vpop.f32.mrb[0].mxu0
        %2743 = vmatprep.mubr.bf16.mxu0 0
        %2744 = vmatmul.mubr.bf16.gmra.mrb[0].mxu0 %v2594
        %v2745 = vpop.f32.mrb[0].mxu0
        %v2746 = vadd.f32 0.0, %v2745
        %v2747 = vpop.f32.mrb[0].mxu0
        %v2748 = vpop.f32.mrb[0].mxu0
        %v2749 = vadd.f32 0.0, %v2748
        %v2750 = vpop.f32.mrb[0].mxu0
        %2751 = vmatprep.mubr.bf16.mxu0 0
        %2752 = vmatmul.mubr.bf16.gmra.mrb[0].mxu0 %v2595
        %v2753 = vpop.f32.mrb[0].mxu0
        %v2754 = vadd.f32 0.0, %v2753
        %v2755 = vpop.f32.mrb[0].mxu0
        %v2756 = vpop.f32.mrb[0].mxu0
        %v2757 = vadd.f32 0.0, %v2756
        %v2758 = vpop.f32.mrb[0].mxu0
        %2759 = vmatprep.mubr.bf16.mxu0 0
        %2760 = vmatmul.mubr.bf16.gmra.mrb[0].mxu0 %v2596
        %v2761 = vpop.f32.mrb[0].mxu0
        %v2762 = vadd.f32 0.0, %v2761
        %v2763 = vpop.f32.mrb[0].mxu0
        %v2764 = vpop.f32.mrb[0].mxu0
        %v2765 = vadd.f32 0.0, %v2764
        %v2766 = vpop.f32.mrb[0].mxu0
        %2767 = vmatprep.mubr.bf16.mxu0 0
        %2768 = vmatmul.mubr.bf16.gmra.mrb[0].mxu0 %v2597
        %v2769 = vpop.f32.mrb[0].mxu0
        %v2770 = vadd.f32 0.0, %v2769
        %v2771 = vpop.f32.mrb[0].mxu0
        %v2772 = vpop.f32.mrb[0].mxu0
        %v2773 = vadd.f32 0.0, %v2772
        %v2774 = vpop.f32.mrb[0].mxu0
        %2775 = vmatprep.mubr.bf16.mxu0 0
        %2776 = vmatmul.mubr.bf16.gmra.mrb[0].mxu0 %v2598
        %v2777 = vpop.f32.mrb[0].mxu0
        %v2778 = vadd.f32 0.0, %v2777
        %v2779 = vpop.f32.mrb[0].mxu0
        %v2780 = vpop.f32.mrb[0].mxu0
        %v2781 = vadd.f32 0.0, %v2780
        %v2782 = vpop.f32.mrb[0].mxu0
        %2783 = vmatprep.mubr.bf16.mxu0 0
        %2784 = vmatmul.mubr.bf16.gmra.mrb[0].mxu0 %v2599
        %v2785 = vpop.f32.mrb[0].mxu0
        %v2786 = vadd.f32 0.0, %v2785
        %v2787 = vpop.f32.mrb[0].mxu0
        %v2788 = vpop.f32.mrb[0].mxu0
        %v2789 = vadd.f32 0.0, %v2788
        %v2790 = vpop.f32.mrb[0].mxu0
        %2791 = vmatprep.mubr.bf16.mxu0 0
        %2792 = vmatmul.mubr.bf16.gmra.mrb[0].mxu0 %v2600
        %v2793 = vpop.f32.mrb[0].mxu0
        %v2794 = vadd.f32 0.0, %v2793
        %v2795 = vpop.f32.mrb[0].mxu0
        %v2796 = vpop.f32.mrb[0].mxu0
        %v2797 = vadd.f32 0.0, %v2796
        %v2798 = vpop.f32.mrb[0].mxu0
        %2799 = vmatprep.mubr.bf16.mxu0 0
        %2800 = vmatmul.mubr.bf16.gmra.mrb[0].mxu0 %v2601
        %v2801 = vpop.f32.mrb[0].mxu0
        %v2802 = vadd.f32 0.0, %v2801
        %v2803 = vpop.f32.mrb[0].mxu0
        %v2804 = vpop.f32.mrb[0].mxu0
        %v2805 = vadd.f32 0.0, %v2804
        %v2806 = vpop.f32.mrb[0].mxu0
        %2807 = vmatprep.mubr.bf16.mxu0 0
        %2808 = vmatmul.mubr.bf16.gmra.mrb[0].mxu0 %v2602
        %v2809 = vpop.f32.mrb[0].mxu0
        %v2810 = vadd.f32 0.0, %v2809
        %v2811 = vpop.f32.mrb[0].mxu0
        %v2812 = vpop.f32.mrb[0].mxu0
        %v2813 = vadd.f32 0.0, %v2812
        %v2814 = vpop.f32.mrb[0].mxu0
        %2815 = vmatprep.mubr.bf16.mxu0 0
        %2816 = vmatmul.mubr.bf16.gmra.mrb[0].mxu0 %v2603
        %v2817 = vpop.f32.mrb[0].mxu0
        %v2818 = vadd.f32 0.0, %v2817
        %v2819 = vpop.f32.mrb[0].mxu0
        %v2820 = vpop.f32.mrb[0].mxu0
        %v2821 = vadd.f32 0.0, %v2820
        %v2822 = vpop.f32.mrb[0].mxu0
        %2823 = vmatprep.mubr.bf16.mxu0 0
        %2824 = vmatmul.mubr.bf16.gmra.mrb[0].mxu0 %v2604
        %v2825 = vpop.f32.mrb[0].mxu0
        %v2826 = vadd.f32 0.0, %v2825
        %v2827 = vpop.f32.mrb[0].mxu0
        %v2828 = vpop.f32.mrb[0].mxu0
        %v2829 = vadd.f32 0.0, %v2828
        %v2830 = vpop.f32.mrb[0].mxu0
        %2831 = vmatprep.mubr.bf16.mxu0 0
        %2832 = vmatmul.mubr.bf16.gmra.mrb[0].mxu0 %v2605
        %v2833 = vpop.f32.mrb[0].mxu0
        %v2834 = vadd.f32 0.0, %v2833
        %v2835 = vpop.f32.mrb[0].mxu0
        %v2836 = vpop.f32.mrb[0].mxu0
        %v2837 = vadd.f32 0.0, %v2836
        %v2838 = vpop.f32.mrb[0].mxu0
        %2839 = vdwg.mxu0
        %v2840 = vadd.f32 %v2538, %v2706
        %v2841 = vadd.f32 %v2539, %v2709
        %v2842 = vadd.f32 %v2540, %v2714
        %v2843 = vadd.f32 %v2541, %v2717
        %v2844 = vadd.f32 %v2542, %v2722
        %v2845 = vadd.f32 %v2543, %v2725
        %v2846 = vadd.f32 %v2544, %v2730
        %v2847 = vadd.f32 %v2545, %v2733
        %v2848 = vadd.f32 %v2546, %v2738
        %v2849 = vadd.f32 %v2547, %v2741
        %v2850 = vadd.f32 %v2548, %v2746
        %v2851 = vadd.f32 %v2549, %v2749
        %v2852 = vadd.f32 %v2550, %v2754
        %v2853 = vadd.f32 %v2551, %v2757
        %v2854 = vadd.f32 %v2552, %v2762
        %v2855 = vadd.f32 %v2553, %v2765
        %v2856 = vadd.f32 %v2554, %v2770
        %v2857 = vadd.f32 %v2555, %v2773
        %v2858 = vadd.f32 %v2556, %v2778
        %v2859 = vadd.f32 %v2557, %v2781
        %v2860 = vadd.f32 %v2558, %v2786
        %v2861 = vadd.f32 %v2559, %v2789
        %v2862 = vadd.f32 %v2560, %v2794
        %v2863 = vadd.f32 %v2561, %v2797
        %v2864 = vadd.f32 %v2562, %v2802
        %v2865 = vadd.f32 %v2563, %v2805
        %v2866 = vadd.f32 %v2564, %v2810
        %v2867 = vadd.f32 %v2565, %v2813
        %v2868 = vadd.f32 %v2566, %v2818
        %v2869 = vadd.f32 %v2567, %v2821
        %v2870 = vadd.f32 %v2568, %v2826
        %v2871 = vadd.f32 %v2569, %v2829
        %v2872 = vadd.f32 %v2570, %v2834
        %v2873 = vadd.f32 %v2571, %v2837
        %v2874 = vld [vmem:[%s298 + $0xc] sm:$0x8]
        %v2875 = vld [vmem:[%s298 + $0x10] sm:$0xf]
        %v2876 = vld [vmem:[%s298 + $0x14] sm:$0xf]
        %v2877 = vld [vmem:[%s298 + $0x18] sm:$0xf]
        %v2878 = vld [vmem:[%s298 + $0x1c] sm:$0xf]
        %v2879 = vld [vmem:[%s298 + $0x20] sm:$0xf]
        %v2880 = vld [vmem:[%s298 + $0x24] sm:$0xf]
        %v2881 = vld [vmem:[%s298 + $0x28] sm:$0xf]
        %v2882 = vld [vmem:[%s298 + $0x2c] sm:$0xf]
        %v2883 = vld [vmem:[%s298 + $0x30] sm:$0xf]
        %v2884 = vld [vmem:[%s298 + $0x34] sm:$0xf]
        %v2885 = vld [vmem:[%s298 + $0x38] sm:$0xf]
        %v2886 = vld [vmem:[%s298 + $0x3c] sm:$0xf]
        %v2887 = vld [vmem:[%s298 + $0x40] sm:$0xf]
        %v2888 = vld [vmem:[%s298 + $0x44] sm:$0xf]
        %v2889 = vld [vmem:[%s298 + $0x48] sm:$0xf]
        %v2890 = vld [vmem:[%s298 + $0x4c] sm:$0xf]
        %v2891 = vld [vmem:[%s298 + $0x50] sm:$0xf]
        %v2892 = vld [vmem:[%s298 + $0x54] sm:$0xf]
        %v2893 = vld [vmem:[%s298 + $0x58] sm:$0xf]
        %v2894 = vld [vmem:[%s298 + $0x5c] sm:$0xf]
        %v2895 = vld [vmem:[%s298 + $0x60] sm:$0xf]
        %v2896 = vld [vmem:[%s298 + $0x64] sm:$0xf]
        %v2897 = vld [vmem:[%s298 + $0x68] sm:$0xf]
        %v2898 = vld [vmem:[%s298 + $0x6c] sm:$0xf]
        %v2899 = vld [vmem:[%s298 + $0x70] sm:$0xf]
        %v2900 = vld [vmem:[%s298 + $0x74] sm:$0xf]
        %v2901 = vld [vmem:[%s298 + $0x78] sm:$0xf]
        %v2902 = vld [vmem:[%s298 + $0x7c] sm:$0xf]
        %v2903 = vld [vmem:[%s298 + $0x80] sm:$0xf]
        %v2904 = vld [vmem:[%s298 + $0x84] sm:$0xf]
        %v2905 = vld [vmem:[%s298 + $0x88] sm:$0xf]
        %v2906 = vld [vmem:[%s298 + $0x8c] sm:$0xf]
        %v2907 = vld [vmem:[%s298 + $0x90] sm:$0xf]
        %v2908 = vld [vmem:[%s298 + $0x94] sm:$0xf]
        %s2909 = scalar_lea.vmem [#allocation6], 192
        %v2910 = vld [vmem:[%s2909] sm:$0xf]
        %v2911 = vld [vmem:[%s2909 + $0x4] sm:$0xf]
        %v2912 = vld [vmem:[%s2909 + $0x8] sm:$0xf]
        %v2913 = vld [vmem:[%s2909 + $0xc] sm:$0xf]
        %v2914 = vld [vmem:[%s2909 + $0x10] sm:$0xf]
        %v2915 = vld [vmem:[%s2909 + $0x14] sm:$0xf]
        %v2916 = vld [vmem:[%s2909 + $0x18] sm:$0xf]
        %v2917 = vld [vmem:[%s2909 + $0x1c] sm:$0xf]
        %v2918 = vld [vmem:[%s2909 + $0x20] sm:$0xf]
        %v2919 = vld [vmem:[%s2909 + $0x24] sm:$0xf]
        %v2920 = vld [vmem:[%s2909 + $0x28] sm:$0xf]
        %v2921 = vld [vmem:[%s2909 + $0x2c] sm:$0xf]
        %v2922 = vld [vmem:[%s2909 + $0x30] sm:$0xf]
        %v2923 = vld [vmem:[%s2909 + $0x34] sm:$0xf]
        %v2924 = vld [vmem:[%s2909 + $0x38] sm:$0xf]
        %v2925 = vld [vmem:[%s2909 + $0x3c] sm:$0xf]
        %v2961 = vunpack.c.l.b16 %v2874
        %v2962 = vunpack.c.l.b16 %v2875
        %v2963 = vunpack.c.l.b16 %v2876
        %v2964 = vunpack.c.l.b16 %v2877
        %v2965 = vunpack.c.l.b16 %v2878
        %v2966 = vunpack.c.l.b16 %v2879
        %v2967 = vunpack.c.l.b16 %v2880
        %v2968 = vunpack.c.l.b16 %v2881
        %v2969 = vunpack.c.l.b16 %v2882
        %v2970 = vunpack.c.l.b16 %v2883
        %v2971 = vunpack.c.l.b16 %v2884
        %v2972 = vunpack.c.l.b16 %v2885
        %v2973 = vunpack.c.l.b16 %v2886
        %v2974 = vunpack.c.l.b16 %v2887
        %v2975 = vunpack.c.l.b16 %v2888
        %v2976 = vunpack.c.l.b16 %v2889
        %v2977 = vunpack.c.l.b16 %v2890
        %v2978 = vunpack.c.l.b16 %v2891
        %v2979 = vunpack.c.l.b16 %v2892
        %v2980 = vunpack.c.l.b16 %v2893
        %v2981 = vunpack.c.l.b16 %v2894
        %v2982 = vunpack.c.l.b16 %v2895
        %v2983 = vunpack.c.l.b16 %v2896
        %v2984 = vunpack.c.l.b16 %v2897
        %v2985 = vunpack.c.l.b16 %v2898
        %v2986 = vunpack.c.l.b16 %v2899
        %v2987 = vunpack.c.l.b16 %v2900
        %v2988 = vunpack.c.l.b16 %v2901
        %v2989 = vunpack.c.l.b16 %v2902
        %v2990 = vunpack.c.l.b16 %v2903
        %v2991 = vunpack.c.l.b16 %v2904
        %v2992 = vunpack.c.l.b16 %v2905
        %v2993 = vunpack.c.l.b16 %v2906
        %v2994 = vunpack.c.l.b16 %v2907
        %v2995 = vunpack.c.l.b16 %v2908
        %v2996 = vpack.c.b16 %v2962, %v2961
        %v2997 = vpack.c.b16 %v2964, %v2963
        %v2998 = vpack.c.b16 %v2966, %v2965
        %v2999 = vpack.c.b16 %v2968, %v2967
        %v3000 = vpack.c.b16 %v2970, %v2969
        %v3001 = vpack.c.b16 %v2972, %v2971
        %v3002 = vpack.c.b16 %v2974, %v2973
        %v3003 = vpack.c.b16 %v2976, %v2975
        %v3004 = vpack.c.b16 %v2978, %v2977
        %v3005 = vpack.c.b16 %v2980, %v2979
        %v3006 = vpack.c.b16 %v2982, %v2981
        %v3007 = vpack.c.b16 %v2984, %v2983
        %v3008 = vpack.c.b16 %v2986, %v2985
        %v3009 = vpack.c.b16 %v2988, %v2987
        %v3010 = vpack.c.b16 %v2990, %v2989
        %v3011 = vpack.c.b16 %v2992, %v2991
        %v3012 = vpack.c.b16 %v2994, %v2993
        %v3013 = vpack.c.b16 %v2995, %v2995
        %v3015 = vshrl.u32 %v2996, 16
        %v3017 = vrot.slane %v3015, 3
        %v3018 = vshll.u32 %v2996, 16
        %v3020 = vrot.slane %v3018, 4
        %v3021 = vor.u32 %v3017, %v3020
        %v3023 = vshrl.u32 %v2997, 16
        %v3025 = vrot.slane %v3023, 3
        %v3026 = vshll.u32 %v2997, 16
        %v3028 = vrot.slane %v3026, 4
        %v3029 = vor.u32 %v3025, %v3028
        %v3030 = vsel %vm2142, %v3021, %v3029
        %v3032 = vshrl.u32 %v2998, 16
        %v3034 = vrot.slane %v3032, 3
        %v3035 = vshll.u32 %v2998, 16
        %v3037 = vrot.slane %v3035, 4
        %v3038 = vor.u32 %v3034, %v3037
        %v3039 = vsel %vm2142, %v3029, %v3038
        %v3041 = vshrl.u32 %v2999, 16
        %v3043 = vrot.slane %v3041, 3
        %v3044 = vshll.u32 %v2999, 16
        %v3046 = vrot.slane %v3044, 4
        %v3047 = vor.u32 %v3043, %v3046
        %v3048 = vsel %vm2142, %v3038, %v3047
        %v3050 = vshrl.u32 %v3000, 16
        %v3052 = vrot.slane %v3050, 3
        %v3053 = vshll.u32 %v3000, 16
        %v3055 = vrot.slane %v3053, 4
        %v3056 = vor.u32 %v3052, %v3055
        %v3057 = vsel %vm2142, %v3047, %v3056
        %v3059 = vshrl.u32 %v3001, 16
        %v3061 = vrot.slane %v3059, 3
        %v3062 = vshll.u32 %v3001, 16
        %v3064 = vrot.slane %v3062, 4
        %v3065 = vor.u32 %v3061, %v3064
        %v3066 = vsel %vm2142, %v3056, %v3065
        %v3068 = vshrl.u32 %v3002, 16
        %v3070 = vrot.slane %v3068, 3
        %v3071 = vshll.u32 %v3002, 16
        %v3073 = vrot.slane %v3071, 4
        %v3074 = vor.u32 %v3070, %v3073
        %v3075 = vsel %vm2142, %v3065, %v3074
        %v3077 = vshrl.u32 %v3003, 16
        %v3079 = vrot.slane %v3077, 3
        %v3080 = vshll.u32 %v3003, 16
        %v3082 = vrot.slane %v3080, 4
        %v3083 = vor.u32 %v3079, %v3082
        %v3084 = vsel %vm2142, %v3074, %v3083
        %v3086 = vshrl.u32 %v3004, 16
        %v3088 = vrot.slane %v3086, 3
        %v3089 = vshll.u32 %v3004, 16
        %v3091 = vrot.slane %v3089, 4
        %v3092 = vor.u32 %v3088, %v3091
        %v3093 = vsel %vm2142, %v3083, %v3092
        %v3095 = vshrl.u32 %v3005, 16
        %v3097 = vrot.slane %v3095, 3
        %v3098 = vshll.u32 %v3005, 16
        %v3100 = vrot.slane %v3098, 4
        %v3101 = vor.u32 %v3097, %v3100
        %v3102 = vsel %vm2142, %v3092, %v3101
        %v3104 = vshrl.u32 %v3006, 16
        %v3106 = vrot.slane %v3104, 3
        %v3107 = vshll.u32 %v3006, 16
        %v3109 = vrot.slane %v3107, 4
        %v3110 = vor.u32 %v3106, %v3109
        %v3111 = vsel %vm2142, %v3101, %v3110
        %v3113 = vshrl.u32 %v3007, 16
        %v3115 = vrot.slane %v3113, 3
        %v3116 = vshll.u32 %v3007, 16
        %v3118 = vrot.slane %v3116, 4
        %v3119 = vor.u32 %v3115, %v3118
        %v3120 = vsel %vm2142, %v3110, %v3119
        %v3122 = vshrl.u32 %v3008, 16
        %v3124 = vrot.slane %v3122, 3
        %v3125 = vshll.u32 %v3008, 16
        %v3127 = vrot.slane %v3125, 4
        %v3128 = vor.u32 %v3124, %v3127
        %v3129 = vsel %vm2142, %v3119, %v3128
        %v3131 = vshrl.u32 %v3009, 16
        %v3133 = vrot.slane %v3131, 3
        %v3134 = vshll.u32 %v3009, 16
        %v3136 = vrot.slane %v3134, 4
        %v3137 = vor.u32 %v3133, %v3136
        %v3138 = vsel %vm2142, %v3128, %v3137
        %v3140 = vshrl.u32 %v3010, 16
        %v3142 = vrot.slane %v3140, 3
        %v3143 = vshll.u32 %v3010, 16
        %v3145 = vrot.slane %v3143, 4
        %v3146 = vor.u32 %v3142, %v3145
        %v3147 = vsel %vm2142, %v3137, %v3146
        %v3149 = vshrl.u32 %v3011, 16
        %v3151 = vrot.slane %v3149, 3
        %v3152 = vshll.u32 %v3011, 16
        %v3154 = vrot.slane %v3152, 4
        %v3155 = vor.u32 %v3151, %v3154
        %v3156 = vsel %vm2142, %v3146, %v3155
        %v3158 = vshrl.u32 %v3012, 16
        %v3160 = vrot.slane %v3158, 3
        %v3161 = vshll.u32 %v3012, 16
        %v3163 = vrot.slane %v3161, 4
        %v3164 = vor.u32 %v3160, %v3163
        %v3165 = vsel %vm2142, %v3155, %v3164
        %v3167 = vshrl.u32 %v3013, 16
        %v3169 = vrot.slane %v3167, 3
        %v3170 = vshll.u32 %v3013, 16
        %v3172 = vrot.slane %v3170, 4
        %v3173 = vor.u32 %v3169, %v3172
        %v3174 = vsel %vm2142, %v3164, %v3173
        %v3208 = vunpack.c.l.b16 %v2910
        %v3209 = vunpack.c.l.b16 %v2911
        %v3210 = vunpack.c.l.b16 %v2912
        %v3211 = vunpack.c.l.b16 %v2913
        %v3212 = vunpack.c.l.b16 %v2914
        %v3213 = vunpack.c.l.b16 %v2915
        %v3214 = vunpack.c.l.b16 %v2916
        %v3215 = vunpack.c.l.b16 %v2917
        %v3216 = vunpack.c.l.b16 %v2918
        %v3217 = vunpack.c.l.b16 %v2919
        %v3218 = vunpack.c.l.b16 %v2920
        %v3219 = vunpack.c.l.b16 %v2921
        %v3220 = vunpack.c.l.b16 %v2922
        %v3221 = vunpack.c.l.b16 %v2923
        %v3222 = vunpack.c.l.b16 %v2924
        %v3223 = vunpack.c.l.b16 %v2925
        %v3224 = vpack.c.b16 %v3209, %v3208
        %v3225 = vpack.c.b16 %v3211, %v3210
        %v3226 = vpack.c.b16 %v3213, %v3212
        %v3227 = vpack.c.b16 %v3215, %v3214
        %v3228 = vpack.c.b16 %v3217, %v3216
        %v3229 = vpack.c.b16 %v3219, %v3218
        %v3230 = vpack.c.b16 %v3221, %v3220
        %v3231 = vpack.c.b16 %v3223, %v3222
        %3240 = vmatprep.subr.bf16.mxu0 0
        %3241 = vmatpush1.bf16.msra.mxu0 %v3224
        %3242 = vmatprep.subr.bf16.mxu0 0
        %3243 = vmatpush1.bf16.msra.mxu0 %v3225
        %3244 = vmatprep.subr.bf16.mxu0 0
        %3245 = vmatpush1.bf16.msra.mxu0 %v3226
        %3246 = vmatprep.subr.bf16.mxu0 0
        %3247 = vmatpush1.bf16.msra.mxu0 %v3227
        %3248 = vmatprep.subr.bf16.mxu0 0
        %3249 = vmatpush1.bf16.msra.mxu0 %v3228
        %3250 = vmatprep.subr.bf16.mxu0 0
        %3251 = vmatpush1.bf16.msra.mxu0 %v3229
        %3252 = vmatprep.subr.bf16.mxu0 0
        %3253 = vmatpush1.bf16.msra.mxu0 %v3230
        %3254 = vmatprep.subr.bf16.mxu0 0
        %3255 = vmatpush1.bf16.msra.mxu0 %v3231
        %3256 = vmatprep.subr.bf16.mxu0 0
        %3257 = vmatpush1.bf16.msra.mxu0 0
        %3258 = vmatprep.subr.bf16.mxu0 0
        %3259 = vmatpush1.bf16.msra.mxu0 0
        %3260 = vmatprep.subr.bf16.mxu0 0
        %3261 = vmatpush1.bf16.msra.mxu0 0
        %3262 = vmatprep.subr.bf16.mxu0 0
        %3263 = vmatpush1.bf16.msra.mxu0 0
        %3264 = vmatprep.subr.bf16.mxu0 0
        %3265 = vmatpush1.bf16.msra.mxu0 0
        %3266 = vmatprep.subr.bf16.mxu0 0
        %3267 = vmatpush1.bf16.msra.mxu0 0
        %3268 = vmatprep.subr.bf16.mxu0 0
        %3269 = vmatpush1.bf16.msra.mxu0 0
        %3270 = vmatprep.subr.bf16.mxu0 0
        %3271 = vmatpush1.bf16.msra.mxu0 0
        %3272 = vmatprep.mubr.bf16.mxu0 0
        %3273 = vmatmul.mubr.bf16.gmra.mrb[0].mxu0 %v3030
        %v3274 = vpop.f32.mrb[0].mxu0
        %v3275 = vadd.f32 0.0, %v3274
        %v3276 = vpop.f32.mrb[0].mxu0
        %v3277 = vpop.f32.mrb[0].mxu0
        %v3278 = vadd.f32 0.0, %v3277
        %v3279 = vpop.f32.mrb[0].mxu0
        %3280 = vmatprep.mubr.bf16.mxu0 0
        %3281 = vmatmul.mubr.bf16.gmra.mrb[0].mxu0 %v3039
        %v3282 = vpop.f32.mrb[0].mxu0
        %v3283 = vadd.f32 0.0, %v3282
        %v3284 = vpop.f32.mrb[0].mxu0
        %v3285 = vpop.f32.mrb[0].mxu0
        %v3286 = vadd.f32 0.0, %v3285
        %v3287 = vpop.f32.mrb[0].mxu0
        %3288 = vmatprep.mubr.bf16.mxu0 0
        %3289 = vmatmul.mubr.bf16.gmra.mrb[0].mxu0 %v3048
        %v3290 = vpop.f32.mrb[0].mxu0
        %v3291 = vadd.f32 0.0, %v3290
        %v3292 = vpop.f32.mrb[0].mxu0
        %v3293 = vpop.f32.mrb[0].mxu0
        %v3294 = vadd.f32 0.0, %v3293
        %v3295 = vpop.f32.mrb[0].mxu0
        %3296 = vmatprep.mubr.bf16.mxu0 0
        %3297 = vmatmul.mubr.bf16.gmra.mrb[0].mxu0 %v3057
        %v3298 = vpop.f32.mrb[0].mxu0
        %v3299 = vadd.f32 0.0, %v3298
        %v3300 = vpop.f32.mrb[0].mxu0
        %v3301 = vpop.f32.mrb[0].mxu0
        %v3302 = vadd.f32 0.0, %v3301
        %v3303 = vpop.f32.mrb[0].mxu0
        %3304 = vmatprep.mubr.bf16.mxu0 0
        %3305 = vmatmul.mubr.bf16.gmra.mrb[0].mxu0 %v3066
        %v3306 = vpop.f32.mrb[0].mxu0
        %v3307 = vadd.f32 0.0, %v3306
        %v3308 = vpop.f32.mrb[0].mxu0
        %v3309 = vpop.f32.mrb[0].mxu0
        %v3310 = vadd.f32 0.0, %v3309
        %v3311 = vpop.f32.mrb[0].mxu0
        %3312 = vmatprep.mubr.bf16.mxu0 0
        %3313 = vmatmul.mubr.bf16.gmra.mrb[0].mxu0 %v3075
        %v3314 = vpop.f32.mrb[0].mxu0
        %v3315 = vadd.f32 0.0, %v3314
        %v3316 = vpop.f32.mrb[0].mxu0
        %v3317 = vpop.f32.mrb[0].mxu0
        %v3318 = vadd.f32 0.0, %v3317
        %v3319 = vpop.f32.mrb[0].mxu0
        %3320 = vmatprep.mubr.bf16.mxu0 0
        %3321 = vmatmul.mubr.bf16.gmra.mrb[0].mxu0 %v3084
        %v3322 = vpop.f32.mrb[0].mxu0
        %v3323 = vadd.f32 0.0, %v3322
        %v3324 = vpop.f32.mrb[0].mxu0
        %v3325 = vpop.f32.mrb[0].mxu0
        %v3326 = vadd.f32 0.0, %v3325
        %v3327 = vpop.f32.mrb[0].mxu0
        %3328 = vmatprep.mubr.bf16.mxu0 0
        %3329 = vmatmul.mubr.bf16.gmra.mrb[0].mxu0 %v3093
        %v3330 = vpop.f32.mrb[0].mxu0
        %v3331 = vadd.f32 0.0, %v3330
        %v3332 = vpop.f32.mrb[0].mxu0
        %v3333 = vpop.f32.mrb[0].mxu0
        %v3334 = vadd.f32 0.0, %v3333
        %v3335 = vpop.f32.mrb[0].mxu0
        %3336 = vmatprep.mubr.bf16.mxu0 0
        %3337 = vmatmul.mubr.bf16.gmra.mrb[0].mxu0 %v3102
        %v3338 = vpop.f32.mrb[0].mxu0
        %v3339 = vadd.f32 0.0, %v3338
        %v3340 = vpop.f32.mrb[0].mxu0
        %v3341 = vpop.f32.mrb[0].mxu0
        %v3342 = vadd.f32 0.0, %v3341
        %v3343 = vpop.f32.mrb[0].mxu0
        %3344 = vmatprep.mubr.bf16.mxu0 0
        %3345 = vmatmul.mubr.bf16.gmra.mrb[0].mxu0 %v3111
        %v3346 = vpop.f32.mrb[0].mxu0
        %v3347 = vadd.f32 0.0, %v3346
        %v3348 = vpop.f32.mrb[0].mxu0
        %v3349 = vpop.f32.mrb[0].mxu0
        %v3350 = vadd.f32 0.0, %v3349
        %v3351 = vpop.f32.mrb[0].mxu0
        %3352 = vmatprep.mubr.bf16.mxu0 0
        %3353 = vmatmul.mubr.bf16.gmra.mrb[0].mxu0 %v3120
        %v3354 = vpop.f32.mrb[0].mxu0
        %v3355 = vadd.f32 0.0, %v3354
        %v3356 = vpop.f32.mrb[0].mxu0
        %v3357 = vpop.f32.mrb[0].mxu0
        %v3358 = vadd.f32 0.0, %v3357
        %v3359 = vpop.f32.mrb[0].mxu0
        %3360 = vmatprep.mubr.bf16.mxu0 0
        %3361 = vmatmul.mubr.bf16.gmra.mrb[0].mxu0 %v3129
        %v3362 = vpop.f32.mrb[0].mxu0
        %v3363 = vadd.f32 0.0, %v3362
        %v3364 = vpop.f32.mrb[0].mxu0
        %v3365 = vpop.f32.mrb[0].mxu0
        %v3366 = vadd.f32 0.0, %v3365
        %v3367 = vpop.f32.mrb[0].mxu0
        %3368 = vmatprep.mubr.bf16.mxu0 0
        %3369 = vmatmul.mubr.bf16.gmra.mrb[0].mxu0 %v3138
        %v3370 = vpop.f32.mrb[0].mxu0
        %v3371 = vadd.f32 0.0, %v3370
        %v3372 = vpop.f32.mrb[0].mxu0
        %v3373 = vpop.f32.mrb[0].mxu0
        %v3374 = vadd.f32 0.0, %v3373
        %v3375 = vpop.f32.mrb[0].mxu0
        %3376 = vmatprep.mubr.bf16.mxu0 0
        %3377 = vmatmul.mubr.bf16.gmra.mrb[0].mxu0 %v3147
        %v3378 = vpop.f32.mrb[0].mxu0
        %v3379 = vadd.f32 0.0, %v3378
        %v3380 = vpop.f32.mrb[0].mxu0
        %v3381 = vpop.f32.mrb[0].mxu0
        %v3382 = vadd.f32 0.0, %v3381
        %v3383 = vpop.f32.mrb[0].mxu0
        %3384 = vmatprep.mubr.bf16.mxu0 0
        %3385 = vmatmul.mubr.bf16.gmra.mrb[0].mxu0 %v3156
        %v3386 = vpop.f32.mrb[0].mxu0
        %v3387 = vadd.f32 0.0, %v3386
        %v3388 = vpop.f32.mrb[0].mxu0
        %v3389 = vpop.f32.mrb[0].mxu0
        %v3390 = vadd.f32 0.0, %v3389
        %v3391 = vpop.f32.mrb[0].mxu0
        %3392 = vmatprep.mubr.bf16.mxu0 0
        %3393 = vmatmul.mubr.bf16.gmra.mrb[0].mxu0 %v3165
        %v3394 = vpop.f32.mrb[0].mxu0
        %v3395 = vadd.f32 0.0, %v3394
        %v3396 = vpop.f32.mrb[0].mxu0
        %v3397 = vpop.f32.mrb[0].mxu0
        %v3398 = vadd.f32 0.0, %v3397
        %v3399 = vpop.f32.mrb[0].mxu0
        %3400 = vmatprep.mubr.bf16.mxu0 0
        %3401 = vmatmul.mubr.bf16.gmra.mrb[0].mxu0 %v3174
        %v3402 = vpop.f32.mrb[0].mxu0
        %v3403 = vadd.f32 0.0, %v3402
        %v3404 = vpop.f32.mrb[0].mxu0
        %v3405 = vpop.f32.mrb[0].mxu0
        %v3406 = vadd.f32 0.0, %v3405
        %v3407 = vpop.f32.mrb[0].mxu0
        %3408 = vdwg.mxu0
        %v3409 = vadd.f32 %v2840, %v3275
        %v3410 = vadd.f32 %v2841, %v3278
        %v3411 = vadd.f32 %v2842, %v3283
        %v3412 = vadd.f32 %v2843, %v3286
        %v3413 = vadd.f32 %v2844, %v3291
        %v3414 = vadd.f32 %v2845, %v3294
        %v3415 = vadd.f32 %v2846, %v3299
        %v3416 = vadd.f32 %v2847, %v3302
        %v3417 = vadd.f32 %v2848, %v3307
        %v3418 = vadd.f32 %v2849, %v3310
        %v3419 = vadd.f32 %v2850, %v3315
        %v3420 = vadd.f32 %v2851, %v3318
        %v3421 = vadd.f32 %v2852, %v3323
        %v3422 = vadd.f32 %v2853, %v3326
        %v3423 = vadd.f32 %v2854, %v3331
        %v3424 = vadd.f32 %v2855, %v3334
        %v3425 = vadd.f32 %v2856, %v3339
        %v3426 = vadd.f32 %v2857, %v3342
        %v3427 = vadd.f32 %v2858, %v3347
        %v3428 = vadd.f32 %v2859, %v3350
        %v3429 = vadd.f32 %v2860, %v3355
        %v3430 = vadd.f32 %v2861, %v3358
        %v3431 = vadd.f32 %v2862, %v3363
        %v3432 = vadd.f32 %v2863, %v3366
        %v3433 = vadd.f32 %v2864, %v3371
        %v3434 = vadd.f32 %v2865, %v3374
        %v3435 = vadd.f32 %v2866, %v3379
        %v3436 = vadd.f32 %v2867, %v3382
        %v3437 = vadd.f32 %v2868, %v3387
        %v3438 = vadd.f32 %v2869, %v3390
        %v3439 = vadd.f32 %v2870, %v3395
        %v3440 = vadd.f32 %v2871, %v3398
        %v3441 = vadd.f32 %v2872, %v3403
        %v3442 = vadd.f32 %v2873, %v3406
        %s3443 = scalar_lea.vmem [#allocation6], 256
        %v3444 = vld [vmem:[%s3443] sm:$0xf]
        %v3445 = vld [vmem:[%s3443 + $0x4] sm:$0xf]
        %v3446 = vld [vmem:[%s3443 + $0x8] sm:$0xf]
        %v3447 = vld [vmem:[%s3443 + $0xc] sm:$0xf]
        %v3448 = vld [vmem:[%s3443 + $0x10] sm:$0xf]
        %v3449 = vld [vmem:[%s3443 + $0x14] sm:$0xf]
        %v3450 = vld [vmem:[%s3443 + $0x18] sm:$0xf]
        %v3451 = vld [vmem:[%s3443 + $0x1c] sm:$0xf]
        %v3452 = vld [vmem:[%s3443 + $0x20] sm:$0xf]
        %v3453 = vld [vmem:[%s3443 + $0x24] sm:$0xf]
        %v3454 = vld [vmem:[%s3443 + $0x28] sm:$0xf]
        %v3455 = vld [vmem:[%s3443 + $0x2c] sm:$0xf]
        %v3456 = vld [vmem:[%s3443 + $0x30] sm:$0xf]
        %v3457 = vld [vmem:[%s3443 + $0x34] sm:$0xf]
        %v3458 = vld [vmem:[%s3443 + $0x38] sm:$0xf]
        %v3459 = vld [vmem:[%s3443 + $0x3c] sm:$0xf]
        %v3460 = vpack.c.b16 %v2963, %v2962
        %v3461 = vpack.c.b16 %v2965, %v2964
        %v3462 = vpack.c.b16 %v2967, %v2966
        %v3463 = vpack.c.b16 %v2969, %v2968
        %v3464 = vpack.c.b16 %v2971, %v2970
        %v3465 = vpack.c.b16 %v2973, %v2972
        %v3466 = vpack.c.b16 %v2975, %v2974
        %v3467 = vpack.c.b16 %v2977, %v2976
        %v3468 = vpack.c.b16 %v2979, %v2978
        %v3469 = vpack.c.b16 %v2981, %v2980
        %v3470 = vpack.c.b16 %v2983, %v2982
        %v3471 = vpack.c.b16 %v2985, %v2984
        %v3472 = vpack.c.b16 %v2987, %v2986
        %v3473 = vpack.c.b16 %v2989, %v2988
        %v3474 = vpack.c.b16 %v2991, %v2990
        %v3475 = vpack.c.b16 %v2993, %v2992
        %v3476 = vpack.c.b16 %v2995, %v2994
        %v3510 = vunpack.c.l.b16 %v3444
        %v3511 = vunpack.c.l.b16 %v3445
        %v3512 = vunpack.c.l.b16 %v3446
        %v3513 = vunpack.c.l.b16 %v3447
        %v3514 = vunpack.c.l.b16 %v3448
        %v3515 = vunpack.c.l.b16 %v3449
        %v3516 = vunpack.c.l.b16 %v3450
        %v3517 = vunpack.c.l.b16 %v3451
        %v3518 = vunpack.c.l.b16 %v3452
        %v3519 = vunpack.c.l.b16 %v3453
        %v3520 = vunpack.c.l.b16 %v3454
        %v3521 = vunpack.c.l.b16 %v3455
        %v3522 = vunpack.c.l.b16 %v3456
        %v3523 = vunpack.c.l.b16 %v3457
        %v3524 = vunpack.c.l.b16 %v3458
        %v3525 = vunpack.c.l.b16 %v3459
        %v3526 = vpack.c.b16 %v3511, %v3510
        %v3527 = vpack.c.b16 %v3513, %v3512
        %v3528 = vpack.c.b16 %v3515, %v3514
        %v3529 = vpack.c.b16 %v3517, %v3516
        %v3530 = vpack.c.b16 %v3519, %v3518
        %v3531 = vpack.c.b16 %v3521, %v3520
        %v3532 = vpack.c.b16 %v3523, %v3522
        %v3533 = vpack.c.b16 %v3525, %v3524
        %3542 = vmatprep.subr.bf16.mxu0 0
        %3543 = vmatpush1.bf16.msra.mxu0 %v3526
        %3544 = vmatprep.subr.bf16.mxu0 0
        %3545 = vmatpush1.bf16.msra.mxu0 %v3527
        %3546 = vmatprep.subr.bf16.mxu0 0
        %3547 = vmatpush1.bf16.msra.mxu0 %v3528
        %3548 = vmatprep.subr.bf16.mxu0 0
        %3549 = vmatpush1.bf16.msra.mxu0 %v3529
        %3550 = vmatprep.subr.bf16.mxu0 0
        %3551 = vmatpush1.bf16.msra.mxu0 %v3530
        %3552 = vmatprep.subr.bf16.mxu0 0
        %3553 = vmatpush1.bf16.msra.mxu0 %v3531
        %3554 = vmatprep.subr.bf16.mxu0 0
        %3555 = vmatpush1.bf16.msra.mxu0 %v3532
        %3556 = vmatprep.subr.bf16.mxu0 0
        %3557 = vmatpush1.bf16.msra.mxu0 %v3533
        %3558 = vmatprep.subr.bf16.mxu0 0
        %3559 = vmatpush1.bf16.msra.mxu0 0
        %3560 = vmatprep.subr.bf16.mxu0 0
        %3561 = vmatpush1.bf16.msra.mxu0 0
        %3562 = vmatprep.subr.bf16.mxu0 0
        %3563 = vmatpush1.bf16.msra.mxu0 0
        %3564 = vmatprep.subr.bf16.mxu0 0
        %3565 = vmatpush1.bf16.msra.mxu0 0
        %3566 = vmatprep.subr.bf16.mxu0 0
        %3567 = vmatpush1.bf16.msra.mxu0 0
        %3568 = vmatprep.subr.bf16.mxu0 0
        %3569 = vmatpush1.bf16.msra.mxu0 0
        %3570 = vmatprep.subr.bf16.mxu0 0
        %3571 = vmatpush1.bf16.msra.mxu0 0
        %3572 = vmatprep.subr.bf16.mxu0 0
        %3573 = vmatpush1.bf16.msra.mxu0 0
        %3574 = vmatprep.mubr.bf16.mxu0 0
        %3575 = vmatmul.mubr.bf16.gmra.mrb[0].mxu0 %v3460
        %v3576 = vpop.f32.mrb[0].mxu0
        %v3577 = vadd.f32 0.0, %v3576
        %v3578 = vpop.f32.mrb[0].mxu0
        %v3579 = vpop.f32.mrb[0].mxu0
        %v3580 = vadd.f32 0.0, %v3579
        %v3581 = vpop.f32.mrb[0].mxu0
        %3582 = vmatprep.mubr.bf16.mxu0 0
        %3583 = vmatmul.mubr.bf16.gmra.mrb[0].mxu0 %v3461
        %v3584 = vpop.f32.mrb[0].mxu0
        %v3585 = vadd.f32 0.0, %v3584
        %v3586 = vpop.f32.mrb[0].mxu0
        %v3587 = vpop.f32.mrb[0].mxu0
        %v3588 = vadd.f32 0.0, %v3587
        %v3589 = vpop.f32.mrb[0].mxu0
        %3590 = vmatprep.mubr.bf16.mxu0 0
        %3591 = vmatmul.mubr.bf16.gmra.mrb[0].mxu0 %v3462
        %v3592 = vpop.f32.mrb[0].mxu0
        %v3593 = vadd.f32 0.0, %v3592
        %v3594 = vpop.f32.mrb[0].mxu0
        %v3595 = vpop.f32.mrb[0].mxu0
        %v3596 = vadd.f32 0.0, %v3595
        %v3597 = vpop.f32.mrb[0].mxu0
        %3598 = vmatprep.mubr.bf16.mxu0 0
        %3599 = vmatmul.mubr.bf16.gmra.mrb[0].mxu0 %v3463
        %v3600 = vpop.f32.mrb[0].mxu0
        %v3601 = vadd.f32 0.0, %v3600
        %v3602 = vpop.f32.mrb[0].mxu0
        %v3603 = vpop.f32.mrb[0].mxu0
        %v3604 = vadd.f32 0.0, %v3603
        %v3605 = vpop.f32.mrb[0].mxu0
        %3606 = vmatprep.mubr.bf16.mxu0 0
        %3607 = vmatmul.mubr.bf16.gmra.mrb[0].mxu0 %v3464
        %v3608 = vpop.f32.mrb[0].mxu0
        %v3609 = vadd.f32 0.0, %v3608
        %v3610 = vpop.f32.mrb[0].mxu0
        %v3611 = vpop.f32.mrb[0].mxu0
        %v3612 = vadd.f32 0.0, %v3611
        %v3613 = vpop.f32.mrb[0].mxu0
        %3614 = vmatprep.mubr.bf16.mxu0 0
        %3615 = vmatmul.mubr.bf16.gmra.mrb[0].mxu0 %v3465
        %v3616 = vpop.f32.mrb[0].mxu0
        %v3617 = vadd.f32 0.0, %v3616
        %v3618 = vpop.f32.mrb[0].mxu0
        %v3619 = vpop.f32.mrb[0].mxu0
        %v3620 = vadd.f32 0.0, %v3619
        %v3621 = vpop.f32.mrb[0].mxu0
        %3622 = vmatprep.mubr.bf16.mxu0 0
        %3623 = vmatmul.mubr.bf16.gmra.mrb[0].mxu0 %v3466
        %v3624 = vpop.f32.mrb[0].mxu0
        %v3625 = vadd.f32 0.0, %v3624
        %v3626 = vpop.f32.mrb[0].mxu0
        %v3627 = vpop.f32.mrb[0].mxu0
        %v3628 = vadd.f32 0.0, %v3627
        %v3629 = vpop.f32.mrb[0].mxu0
        %3630 = vmatprep.mubr.bf16.mxu0 0
        %3631 = vmatmul.mubr.bf16.gmra.mrb[0].mxu0 %v3467
        %v3632 = vpop.f32.mrb[0].mxu0
        %v3633 = vadd.f32 0.0, %v3632
        %v3634 = vpop.f32.mrb[0].mxu0
        %v3635 = vpop.f32.mrb[0].mxu0
        %v3636 = vadd.f32 0.0, %v3635
        %v3637 = vpop.f32.mrb[0].mxu0
        %3638 = vmatprep.mubr.bf16.mxu0 0
        %3639 = vmatmul.mubr.bf16.gmra.mrb[0].mxu0 %v3468
        %v3640 = vpop.f32.mrb[0].mxu0
        %v3641 = vadd.f32 0.0, %v3640
        %v3642 = vpop.f32.mrb[0].mxu0
        %v3643 = vpop.f32.mrb[0].mxu0
        %v3644 = vadd.f32 0.0, %v3643
        %v3645 = vpop.f32.mrb[0].mxu0
        %3646 = vmatprep.mubr.bf16.mxu0 0
        %3647 = vmatmul.mubr.bf16.gmra.mrb[0].mxu0 %v3469
        %v3648 = vpop.f32.mrb[0].mxu0
        %v3649 = vadd.f32 0.0, %v3648
        %v3650 = vpop.f32.mrb[0].mxu0
        %v3651 = vpop.f32.mrb[0].mxu0
        %v3652 = vadd.f32 0.0, %v3651
        %v3653 = vpop.f32.mrb[0].mxu0
        %3654 = vmatprep.mubr.bf16.mxu0 0
        %3655 = vmatmul.mubr.bf16.gmra.mrb[0].mxu0 %v3470
        %v3656 = vpop.f32.mrb[0].mxu0
        %v3657 = vadd.f32 0.0, %v3656
        %v3658 = vpop.f32.mrb[0].mxu0
        %v3659 = vpop.f32.mrb[0].mxu0
        %v3660 = vadd.f32 0.0, %v3659
        %v3661 = vpop.f32.mrb[0].mxu0
        %3662 = vmatprep.mubr.bf16.mxu0 0
        %3663 = vmatmul.mubr.bf16.gmra.mrb[0].mxu0 %v3471
        %v3664 = vpop.f32.mrb[0].mxu0
        %v3665 = vadd.f32 0.0, %v3664
        %v3666 = vpop.f32.mrb[0].mxu0
        %v3667 = vpop.f32.mrb[0].mxu0
        %v3668 = vadd.f32 0.0, %v3667
        %v3669 = vpop.f32.mrb[0].mxu0
        %3670 = vmatprep.mubr.bf16.mxu0 0
        %3671 = vmatmul.mubr.bf16.gmra.mrb[0].mxu0 %v3472
        %v3672 = vpop.f32.mrb[0].mxu0
        %v3673 = vadd.f32 0.0, %v3672
        %v3674 = vpop.f32.mrb[0].mxu0
        %v3675 = vpop.f32.mrb[0].mxu0
        %v3676 = vadd.f32 0.0, %v3675
        %v3677 = vpop.f32.mrb[0].mxu0
        %3678 = vmatprep.mubr.bf16.mxu0 0
        %3679 = vmatmul.mubr.bf16.gmra.mrb[0].mxu0 %v3473
        %v3680 = vpop.f32.mrb[0].mxu0
        %v3681 = vadd.f32 0.0, %v3680
        %v3682 = vpop.f32.mrb[0].mxu0
        %v3683 = vpop.f32.mrb[0].mxu0
        %v3684 = vadd.f32 0.0, %v3683
        %v3685 = vpop.f32.mrb[0].mxu0
        %3686 = vmatprep.mubr.bf16.mxu0 0
        %3687 = vmatmul.mubr.bf16.gmra.mrb[0].mxu0 %v3474
        %v3688 = vpop.f32.mrb[0].mxu0
        %v3689 = vadd.f32 0.0, %v3688
        %v3690 = vpop.f32.mrb[0].mxu0
        %v3691 = vpop.f32.mrb[0].mxu0
        %v3692 = vadd.f32 0.0, %v3691
        %v3693 = vpop.f32.mrb[0].mxu0
        %3694 = vmatprep.mubr.bf16.mxu0 0
        %3695 = vmatmul.mubr.bf16.gmra.mrb[0].mxu0 %v3475
        %v3696 = vpop.f32.mrb[0].mxu0
        %v3697 = vadd.f32 0.0, %v3696
        %v3698 = vpop.f32.mrb[0].mxu0
        %v3699 = vpop.f32.mrb[0].mxu0
        %v3700 = vadd.f32 0.0, %v3699
        %v3701 = vpop.f32.mrb[0].mxu0
        %3702 = vmatprep.mubr.bf16.mxu0 0
        %3703 = vmatmul.mubr.bf16.gmra.mrb[0].mxu0 %v3476
        %v3704 = vpop.f32.mrb[0].mxu0
        %v3705 = vadd.f32 0.0, %v3704
        %v3706 = vpop.f32.mrb[0].mxu0
        %v3707 = vpop.f32.mrb[0].mxu0
        %v3708 = vadd.f32 0.0, %v3707
        %v3709 = vpop.f32.mrb[0].mxu0
        %3710 = vdwg.mxu0
        %v3711 = vadd.f32 %v3409, %v3577
        %v3712 = vadd.f32 %v3410, %v3580
        %v3713 = vadd.f32 %v3411, %v3585
        %v3714 = vadd.f32 %v3412, %v3588
        %v3715 = vadd.f32 %v3413, %v3593
        %v3716 = vadd.f32 %v3414, %v3596
        %v3717 = vadd.f32 %v3415, %v3601
        %v3718 = vadd.f32 %v3416, %v3604
        %v3719 = vadd.f32 %v3417, %v3609
        %v3720 = vadd.f32 %v3418, %v3612
        %v3721 = vadd.f32 %v3419, %v3617
        %v3722 = vadd.f32 %v3420, %v3620
        %v3723 = vadd.f32 %v3421, %v3625
        %v3724 = vadd.f32 %v3422, %v3628
        %v3725 = vadd.f32 %v3423, %v3633
        %v3726 = vadd.f32 %v3424, %v3636
        %v3727 = vadd.f32 %v3425, %v3641
        %v3728 = vadd.f32 %v3426, %v3644
        %v3729 = vadd.f32 %v3427, %v3649
        %v3730 = vadd.f32 %v3428, %v3652
        %v3731 = vadd.f32 %v3429, %v3657
        %v3732 = vadd.f32 %v3430, %v3660
        %v3733 = vadd.f32 %v3431, %v3665
        %v3734 = vadd.f32 %v3432, %v3668
        %v3735 = vadd.f32 %v3433, %v3673
        %v3736 = vadd.f32 %v3434, %v3676
        %v3737 = vadd.f32 %v3435, %v3681
        %v3738 = vadd.f32 %v3436, %v3684
        %v3739 = vadd.f32 %v3437, %v3689
        %v3740 = vadd.f32 %v3438, %v3692
        %v3741 = vadd.f32 %v3439, %v3697
        %v3742 = vadd.f32 %v3440, %v3700
        %v3743 = vadd.f32 %v3441, %v3705
        %v3744 = vadd.f32 %v3442, %v3708
        %v3745 = vld [vmem:[%s298 + $0x10] sm:$0xf]
        %v3746 = vld [vmem:[%s298 + $0x14] sm:$0xf]
        %v3747 = vld [vmem:[%s298 + $0x18] sm:$0xf]
        %v3748 = vld [vmem:[%s298 + $0x1c] sm:$0xf]
        %v3749 = vld [vmem:[%s298 + $0x20] sm:$0xf]
        %v3750 = vld [vmem:[%s298 + $0x24] sm:$0xf]
        %v3751 = vld [vmem:[%s298 + $0x28] sm:$0xf]
        %v3752 = vld [vmem:[%s298 + $0x2c] sm:$0xf]
        %v3753 = vld [vmem:[%s298 + $0x30] sm:$0xf]
        %v3754 = vld [vmem:[%s298 + $0x34] sm:$0xf]
        %v3755 = vld [vmem:[%s298 + $0x38] sm:$0xf]
        %v3756 = vld [vmem:[%s298 + $0x3c] sm:$0xf]
        %v3757 = vld [vmem:[%s298 + $0x40] sm:$0xf]
        %v3758 = vld [vmem:[%s298 + $0x44] sm:$0xf]
        %v3759 = vld [vmem:[%s298 + $0x48] sm:$0xf]
        %v3760 = vld [vmem:[%s298 + $0x4c] sm:$0xf]
        %v3761 = vld [vmem:[%s298 + $0x50] sm:$0xf]
        %v3762 = vld [vmem:[%s298 + $0x54] sm:$0xf]
        %v3763 = vld [vmem:[%s298 + $0x58] sm:$0xf]
        %v3764 = vld [vmem:[%s298 + $0x5c] sm:$0xf]
        %v3765 = vld [vmem:[%s298 + $0x60] sm:$0xf]
        %v3766 = vld [vmem:[%s298 + $0x64] sm:$0xf]
        %v3767 = vld [vmem:[%s298 + $0x68] sm:$0xf]
        %v3768 = vld [vmem:[%s298 + $0x6c] sm:$0xf]
        %v3769 = vld [vmem:[%s298 + $0x70] sm:$0xf]
        %v3770 = vld [vmem:[%s298 + $0x74] sm:$0xf]
        %v3771 = vld [vmem:[%s298 + $0x78] sm:$0xf]
        %v3772 = vld [vmem:[%s298 + $0x7c] sm:$0xf]
        %v3773 = vld [vmem:[%s298 + $0x80] sm:$0xf]
        %v3774 = vld [vmem:[%s298 + $0x84] sm:$0xf]
        %v3775 = vld [vmem:[%s298 + $0x88] sm:$0xf]
        %v3776 = vld [vmem:[%s298 + $0x8c] sm:$0xf]
        %v3777 = vld [vmem:[%s298 + $0x90] sm:$0xf]
        %v3778 = vld [vmem:[%s298 + $0x94] sm:$0xf]
        %v3779 = vld [vmem:[%s298 + $0x98] sm:$0x1]
        %s3780 = scalar_lea.vmem [#allocation6], 320
        %v3781 = vld [vmem:[%s3780] sm:$0xf]
        %v3782 = vld [vmem:[%s3780 + $0x4] sm:$0xf]
        %v3783 = vld [vmem:[%s3780 + $0x8] sm:$0xf]
        %v3784 = vld [vmem:[%s3780 + $0xc] sm:$0xf]
        %v3785 = vld [vmem:[%s3780 + $0x10] sm:$0xf]
        %v3786 = vld [vmem:[%s3780 + $0x14] sm:$0xf]
        %v3787 = vld [vmem:[%s3780 + $0x18] sm:$0xf]
        %v3788 = vld [vmem:[%s3780 + $0x1c] sm:$0xf]
        %v3789 = vld [vmem:[%s3780 + $0x20] sm:$0xf]
        %v3790 = vld [vmem:[%s3780 + $0x24] sm:$0xf]
        %v3791 = vld [vmem:[%s3780 + $0x28] sm:$0xf]
        %v3792 = vld [vmem:[%s3780 + $0x2c] sm:$0xf]
        %v3793 = vld [vmem:[%s3780 + $0x30] sm:$0xf]
        %v3794 = vld [vmem:[%s3780 + $0x34] sm:$0xf]
        %v3795 = vld [vmem:[%s3780 + $0x38] sm:$0xf]
        %v3796 = vld [vmem:[%s3780 + $0x3c] sm:$0xf]
        %v3832 = vunpack.c.l.b16 %v3745
        %v3833 = vunpack.c.l.b16 %v3746
        %v3834 = vunpack.c.l.b16 %v3747
        %v3835 = vunpack.c.l.b16 %v3748
        %v3836 = vunpack.c.l.b16 %v3749
        %v3837 = vunpack.c.l.b16 %v3750
        %v3838 = vunpack.c.l.b16 %v3751
        %v3839 = vunpack.c.l.b16 %v3752
        %v3840 = vunpack.c.l.b16 %v3753
        %v3841 = vunpack.c.l.b16 %v3754
        %v3842 = vunpack.c.l.b16 %v3755
        %v3843 = vunpack.c.l.b16 %v3756
        %v3844 = vunpack.c.l.b16 %v3757
        %v3845 = vunpack.c.l.b16 %v3758
        %v3846 = vunpack.c.l.b16 %v3759
        %v3847 = vunpack.c.l.b16 %v3760
        %v3848 = vunpack.c.l.b16 %v3761
        %v3849 = vunpack.c.l.b16 %v3762
        %v3850 = vunpack.c.l.b16 %v3763
        %v3851 = vunpack.c.l.b16 %v3764
        %v3852 = vunpack.c.l.b16 %v3765
        %v3853 = vunpack.c.l.b16 %v3766
        %v3854 = vunpack.c.l.b16 %v3767
        %v3855 = vunpack.c.l.b16 %v3768
        %v3856 = vunpack.c.l.b16 %v3769
        %v3857 = vunpack.c.l.b16 %v3770
        %v3858 = vunpack.c.l.b16 %v3771
        %v3859 = vunpack.c.l.b16 %v3772
        %v3860 = vunpack.c.l.b16 %v3773
        %v3861 = vunpack.c.l.b16 %v3774
        %v3862 = vunpack.c.l.b16 %v3775
        %v3863 = vunpack.c.l.b16 %v3776
        %v3864 = vunpack.c.l.b16 %v3777
        %v3865 = vunpack.c.l.b16 %v3778
        %v3866 = vunpack.c.l.b16 %v3779
        %v3867 = vpack.c.b16 %v3833, %v3832
        %v3868 = vpack.c.b16 %v3835, %v3834
        %v3869 = vpack.c.b16 %v3837, %v3836
        %v3870 = vpack.c.b16 %v3839, %v3838
        %v3871 = vpack.c.b16 %v3841, %v3840
        %v3872 = vpack.c.b16 %v3843, %v3842
        %v3873 = vpack.c.b16 %v3845, %v3844
        %v3874 = vpack.c.b16 %v3847, %v3846
        %v3875 = vpack.c.b16 %v3849, %v3848
        %v3876 = vpack.c.b16 %v3851, %v3850
        %v3877 = vpack.c.b16 %v3853, %v3852
        %v3878 = vpack.c.b16 %v3855, %v3854
        %v3879 = vpack.c.b16 %v3857, %v3856
        %v3880 = vpack.c.b16 %v3859, %v3858
        %v3881 = vpack.c.b16 %v3861, %v3860
        %v3882 = vpack.c.b16 %v3863, %v3862
        %v3883 = vpack.c.b16 %v3865, %v3864
        %v3884 = vpack.c.b16 %v3866, %v3866
        %vm3885 = vsmask.f32 7424
        %v3887 = vshrl.u32 %v3867, 16
        %v3889 = vshll.u32 %v3867, 16
        %v3891 = vrot.slane %v3889, 1
        %v3892 = vor.u32 %v3887, %v3891
        %v3894 = vshll.u32 %v3868, 16
        %v3896 = vrot.slane %v3894, 1
        %v3897 = vsel %vm3885, %v3892, %v3896
        %v3898 = vshrl.u32 %v3868, 16
        %v3900 = vor.u32 %v3898, %v3896
        %v3902 = vshll.u32 %v3869, 16
        %v3904 = vrot.slane %v3902, 1
        %v3905 = vsel %vm3885, %v3900, %v3904
        %v3906 = vshrl.u32 %v3869, 16
        %v3908 = vor.u32 %v3906, %v3904
        %v3910 = vshll.u32 %v3870, 16
        %v3912 = vrot.slane %v3910, 1
        %v3913 = vsel %vm3885, %v3908, %v3912
        %v3914 = vshrl.u32 %v3870, 16
        %v3916 = vor.u32 %v3914, %v3912
        %v3918 = vshll.u32 %v3871, 16
        %v3920 = vrot.slane %v3918, 1
        %v3921 = vsel %vm3885, %v3916, %v3920
        %v3922 = vshrl.u32 %v3871, 16
        %v3924 = vor.u32 %v3922, %v3920
        %v3926 = vshll.u32 %v3872, 16
        %v3928 = vrot.slane %v3926, 1
        %v3929 = vsel %vm3885, %v3924, %v3928
        %v3930 = vshrl.u32 %v3872, 16
        %v3932 = vor.u32 %v3930, %v3928
        %v3934 = vshll.u32 %v3873, 16
        %v3936 = vrot.slane %v3934, 1
        %v3937 = vsel %vm3885, %v3932, %v3936
        %v3938 = vshrl.u32 %v3873, 16
        %v3940 = vor.u32 %v3938, %v3936
        %v3942 = vshll.u32 %v3874, 16
        %v3944 = vrot.slane %v3942, 1
        %v3945 = vsel %vm3885, %v3940, %v3944
        %v3946 = vshrl.u32 %v3874, 16
        %v3948 = vor.u32 %v3946, %v3944
        %v3950 = vshll.u32 %v3875, 16
        %v3952 = vrot.slane %v3950, 1
        %v3953 = vsel %vm3885, %v3948, %v3952
        %v3954 = vshrl.u32 %v3875, 16
        %v3956 = vor.u32 %v3954, %v3952
        %v3958 = vshll.u32 %v3876, 16
        %v3960 = vrot.slane %v3958, 1
        %v3961 = vsel %vm3885, %v3956, %v3960
        %v3962 = vshrl.u32 %v3876, 16
        %v3964 = vor.u32 %v3962, %v3960
        %v3966 = vshll.u32 %v3877, 16
        %v3968 = vrot.slane %v3966, 1
        %v3969 = vsel %vm3885, %v3964, %v3968
        %v3970 = vshrl.u32 %v3877, 16
        %v3972 = vor.u32 %v3970, %v3968
        %v3974 = vshll.u32 %v3878, 16
        %v3976 = vrot.slane %v3974, 1
        %v3977 = vsel %vm3885, %v3972, %v3976
        %v3978 = vshrl.u32 %v3878, 16
        %v3980 = vor.u32 %v3978, %v3976
        %v3982 = vshll.u32 %v3879, 16
        %v3984 = vrot.slane %v3982, 1
        %v3985 = vsel %vm3885, %v3980, %v3984
        %v3986 = vshrl.u32 %v3879, 16
        %v3988 = vor.u32 %v3986, %v3984
        %v3990 = vshll.u32 %v3880, 16
        %v3992 = vrot.slane %v3990, 1
        %v3993 = vsel %vm3885, %v3988, %v3992
        %v3994 = vshrl.u32 %v3880, 16
        %v3996 = vor.u32 %v3994, %v3992
        %v3998 = vshll.u32 %v3881, 16
        %v4000 = vrot.slane %v3998, 1
        %v4001 = vsel %vm3885, %v3996, %v4000
        %v4002 = vshrl.u32 %v3881, 16
        %v4004 = vor.u32 %v4002, %v4000
        %v4006 = vshll.u32 %v3882, 16
        %v4008 = vrot.slane %v4006, 1
        %v4009 = vsel %vm3885, %v4004, %v4008
        %v4010 = vshrl.u32 %v3882, 16
        %v4012 = vor.u32 %v4010, %v4008
        %v4014 = vshll.u32 %v3883, 16
        %v4016 = vrot.slane %v4014, 1
        %v4017 = vsel %vm3885, %v4012, %v4016
        %v4018 = vshrl.u32 %v3883, 16
        %v4020 = vor.u32 %v4018, %v4016
        %v4022 = vshll.u32 %v3884, 16
        %v4024 = vrot.slane %v4022, 1
        %v4025 = vsel %vm3885, %v4020, %v4024
        %v4059 = vunpack.c.l.b16 %v3781
        %v4060 = vunpack.c.l.b16 %v3782
        %v4061 = vunpack.c.l.b16 %v3783
        %v4062 = vunpack.c.l.b16 %v3784
        %v4063 = vunpack.c.l.b16 %v3785
        %v4064 = vunpack.c.l.b16 %v3786
        %v4065 = vunpack.c.l.b16 %v3787
        %v4066 = vunpack.c.l.b16 %v3788
        %v4067 = vunpack.c.l.b16 %v3789
        %v4068 = vunpack.c.l.b16 %v3790
        %v4069 = vunpack.c.l.b16 %v3791
        %v4070 = vunpack.c.l.b16 %v3792
        %v4071 = vunpack.c.l.b16 %v3793
        %v4072 = vunpack.c.l.b16 %v3794
        %v4073 = vunpack.c.l.b16 %v3795
        %v4074 = vunpack.c.l.b16 %v3796
        %v4075 = vpack.c.b16 %v4060, %v4059
        %v4076 = vpack.c.b16 %v4062, %v4061
        %v4077 = vpack.c.b16 %v4064, %v4063
        %v4078 = vpack.c.b16 %v4066, %v4065
        %v4079 = vpack.c.b16 %v4068, %v4067
        %v4080 = vpack.c.b16 %v4070, %v4069
        %v4081 = vpack.c.b16 %v4072, %v4071
        %v4082 = vpack.c.b16 %v4074, %v4073
        %4091 = vmatprep.subr.bf16.mxu0 0
        %4092 = vmatpush1.bf16.msra.mxu0 %v4075
        %4093 = vmatprep.subr.bf16.mxu0 0
        %4094 = vmatpush1.bf16.msra.mxu0 %v4076
        %4095 = vmatprep.subr.bf16.mxu0 0
        %4096 = vmatpush1.bf16.msra.mxu0 %v4077
        %4097 = vmatprep.subr.bf16.mxu0 0
        %4098 = vmatpush1.bf16.msra.mxu0 %v4078
        %4099 = vmatprep.subr.bf16.mxu0 0
        %4100 = vmatpush1.bf16.msra.mxu0 %v4079
        %4101 = vmatprep.subr.bf16.mxu0 0
        %4102 = vmatpush1.bf16.msra.mxu0 %v4080
        %4103 = vmatprep.subr.bf16.mxu0 0
        %4104 = vmatpush1.bf16.msra.mxu0 %v4081
        %4105 = vmatprep.subr.bf16.mxu0 0
        %4106 = vmatpush1.bf16.msra.mxu0 %v4082
        %4107 = vmatprep.subr.bf16.mxu0 0
        %4108 = vmatpush1.bf16.msra.mxu0 0
        %4109 = vmatprep.subr.bf16.mxu0 0
        %4110 = vmatpush1.bf16.msra.mxu0 0
        %4111 = vmatprep.subr.bf16.mxu0 0
        %4112 = vmatpush1.bf16.msra.mxu0 0
        %4113 = vmatprep.subr.bf16.mxu0 0
        %4114 = vmatpush1.bf16.msra.mxu0 0
        %4115 = vmatprep.subr.bf16.mxu0 0
        %4116 = vmatpush1.bf16.msra.mxu0 0
        %4117 = vmatprep.subr.bf16.mxu0 0
        %4118 = vmatpush1.bf16.msra.mxu0 0
        %4119 = vmatprep.subr.bf16.mxu0 0
        %4120 = vmatpush1.bf16.msra.mxu0 0
        %4121 = vmatprep.subr.bf16.mxu0 0
        %4122 = vmatpush1.bf16.msra.mxu0 0
        %4123 = vmatprep.mubr.bf16.mxu0 0
        %4124 = vmatmul.mubr.bf16.gmra.mrb[0].mxu0 %v3897
        %v4125 = vpop.f32.mrb[0].mxu0
        %v4126 = vadd.f32 0.0, %v4125
        %v4127 = vpop.f32.mrb[0].mxu0
        %v4128 = vpop.f32.mrb[0].mxu0
        %v4129 = vadd.f32 0.0, %v4128
        %v4130 = vpop.f32.mrb[0].mxu0
        %4131 = vmatprep.mubr.bf16.mxu0 0
        %4132 = vmatmul.mubr.bf16.gmra.mrb[0].mxu0 %v3905
        %v4133 = vpop.f32.mrb[0].mxu0
        %v4134 = vadd.f32 0.0, %v4133
        %v4135 = vpop.f32.mrb[0].mxu0
        %v4136 = vpop.f32.mrb[0].mxu0
        %v4137 = vadd.f32 0.0, %v4136
        %v4138 = vpop.f32.mrb[0].mxu0
        %4139 = vmatprep.mubr.bf16.mxu0 0
        %4140 = vmatmul.mubr.bf16.gmra.mrb[0].mxu0 %v3913
        %v4141 = vpop.f32.mrb[0].mxu0
        %v4142 = vadd.f32 0.0, %v4141
        %v4143 = vpop.f32.mrb[0].mxu0
        %v4144 = vpop.f32.mrb[0].mxu0
        %v4145 = vadd.f32 0.0, %v4144
        %v4146 = vpop.f32.mrb[0].mxu0
        %4147 = vmatprep.mubr.bf16.mxu0 0
        %4148 = vmatmul.mubr.bf16.gmra.mrb[0].mxu0 %v3921
        %v4149 = vpop.f32.mrb[0].mxu0
        %v4150 = vadd.f32 0.0, %v4149
        %v4151 = vpop.f32.mrb[0].mxu0
        %v4152 = vpop.f32.mrb[0].mxu0
        %v4153 = vadd.f32 0.0, %v4152
        %v4154 = vpop.f32.mrb[0].mxu0
        %4155 = vmatprep.mubr.bf16.mxu0 0
        %4156 = vmatmul.mubr.bf16.gmra.mrb[0].mxu0 %v3929
        %v4157 = vpop.f32.mrb[0].mxu0
        %v4158 = vadd.f32 0.0, %v4157
        %v4159 = vpop.f32.mrb[0].mxu0
        %v4160 = vpop.f32.mrb[0].mxu0
        %v4161 = vadd.f32 0.0, %v4160
        %v4162 = vpop.f32.mrb[0].mxu0
        %4163 = vmatprep.mubr.bf16.mxu0 0
        %4164 = vmatmul.mubr.bf16.gmra.mrb[0].mxu0 %v3937
        %v4165 = vpop.f32.mrb[0].mxu0
        %v4166 = vadd.f32 0.0, %v4165
        %v4167 = vpop.f32.mrb[0].mxu0
        %v4168 = vpop.f32.mrb[0].mxu0
        %v4169 = vadd.f32 0.0, %v4168
        %v4170 = vpop.f32.mrb[0].mxu0
        %4171 = vmatprep.mubr.bf16.mxu0 0
        %4172 = vmatmul.mubr.bf16.gmra.mrb[0].mxu0 %v3945
        %v4173 = vpop.f32.mrb[0].mxu0
        %v4174 = vadd.f32 0.0, %v4173
        %v4175 = vpop.f32.mrb[0].mxu0
        %v4176 = vpop.f32.mrb[0].mxu0
        %v4177 = vadd.f32 0.0, %v4176
        %v4178 = vpop.f32.mrb[0].mxu0
        %4179 = vmatprep.mubr.bf16.mxu0 0
        %4180 = vmatmul.mubr.bf16.gmra.mrb[0].mxu0 %v3953
        %v4181 = vpop.f32.mrb[0].mxu0
        %v4182 = vadd.f32 0.0, %v4181
        %v4183 = vpop.f32.mrb[0].mxu0
        %v4184 = vpop.f32.mrb[0].mxu0
        %v4185 = vadd.f32 0.0, %v4184
        %v4186 = vpop.f32.mrb[0].mxu0
        %4187 = vmatprep.mubr.bf16.mxu0 0
        %4188 = vmatmul.mubr.bf16.gmra.mrb[0].mxu0 %v3961
        %v4189 = vpop.f32.mrb[0].mxu0
        %v4190 = vadd.f32 0.0, %v4189
        %v4191 = vpop.f32.mrb[0].mxu0
        %v4192 = vpop.f32.mrb[0].mxu0
        %v4193 = vadd.f32 0.0, %v4192
        %v4194 = vpop.f32.mrb[0].mxu0
        %4195 = vmatprep.mubr.bf16.mxu0 0
        %4196 = vmatmul.mubr.bf16.gmra.mrb[0].mxu0 %v3969
        %v4197 = vpop.f32.mrb[0].mxu0
        %v4198 = vadd.f32 0.0, %v4197
        %v4199 = vpop.f32.mrb[0].mxu0
        %v4200 = vpop.f32.mrb[0].mxu0
        %v4201 = vadd.f32 0.0, %v4200
        %v4202 = vpop.f32.mrb[0].mxu0
        %4203 = vmatprep.mubr.bf16.mxu0 0
        %4204 = vmatmul.mubr.bf16.gmra.mrb[0].mxu0 %v3977
        %v4205 = vpop.f32.mrb[0].mxu0
        %v4206 = vadd.f32 0.0, %v4205
        %v4207 = vpop.f32.mrb[0].mxu0
        %v4208 = vpop.f32.mrb[0].mxu0
        %v4209 = vadd.f32 0.0, %v4208
        %v4210 = vpop.f32.mrb[0].mxu0
        %4211 = vmatprep.mubr.bf16.mxu0 0
        %4212 = vmatmul.mubr.bf16.gmra.mrb[0].mxu0 %v3985
        %v4213 = vpop.f32.mrb[0].mxu0
        %v4214 = vadd.f32 0.0, %v4213
        %v4215 = vpop.f32.mrb[0].mxu0
        %v4216 = vpop.f32.mrb[0].mxu0
        %v4217 = vadd.f32 0.0, %v4216
        %v4218 = vpop.f32.mrb[0].mxu0
        %4219 = vmatprep.mubr.bf16.mxu0 0
        %4220 = vmatmul.mubr.bf16.gmra.mrb[0].mxu0 %v3993
        %v4221 = vpop.f32.mrb[0].mxu0
        %v4222 = vadd.f32 0.0, %v4221
        %v4223 = vpop.f32.mrb[0].mxu0
        %v4224 = vpop.f32.mrb[0].mxu0
        %v4225 = vadd.f32 0.0, %v4224
        %v4226 = vpop.f32.mrb[0].mxu0
        %4227 = vmatprep.mubr.bf16.mxu0 0
        %4228 = vmatmul.mubr.bf16.gmra.mrb[0].mxu0 %v4001
        %v4229 = vpop.f32.mrb[0].mxu0
        %v4230 = vadd.f32 0.0, %v4229
        %v4231 = vpop.f32.mrb[0].mxu0
        %v4232 = vpop.f32.mrb[0].mxu0
        %v4233 = vadd.f32 0.0, %v4232
        %v4234 = vpop.f32.mrb[0].mxu0
        %4235 = vmatprep.mubr.bf16.mxu0 0
        %4236 = vmatmul.mubr.bf16.gmra.mrb[0].mxu0 %v4009
        %v4237 = vpop.f32.mrb[0].mxu0
        %v4238 = vadd.f32 0.0, %v4237
        %v4239 = vpop.f32.mrb[0].mxu0
        %v4240 = vpop.f32.mrb[0].mxu0
        %v4241 = vadd.f32 0.0, %v4240
        %v4242 = vpop.f32.mrb[0].mxu0
        %4243 = vmatprep.mubr.bf16.mxu0 0
        %4244 = vmatmul.mubr.bf16.gmra.mrb[0].mxu0 %v4017
        %v4245 = vpop.f32.mrb[0].mxu0
        %v4246 = vadd.f32 0.0, %v4245
        %v4247 = vpop.f32.mrb[0].mxu0
        %v4248 = vpop.f32.mrb[0].mxu0
        %v4249 = vadd.f32 0.0, %v4248
        %v4250 = vpop.f32.mrb[0].mxu0
        %4251 = vmatprep.mubr.bf16.mxu0 0
        %4252 = vmatmul.mubr.bf16.gmra.mrb[0].mxu0 %v4025
        %v4253 = vpop.f32.mrb[0].mxu0
        %v4254 = vadd.f32 0.0, %v4253
        %v4255 = vpop.f32.mrb[0].mxu0
        %v4256 = vpop.f32.mrb[0].mxu0
        %v4257 = vadd.f32 0.0, %v4256
        %v4258 = vpop.f32.mrb[0].mxu0
        %4259 = vdwg.mxu0
        %v4260 = vadd.f32 %v3711, %v4126
        %v4261 = vadd.f32 %v3712, %v4129
        %v4262 = vadd.f32 %v3713, %v4134
        %v4263 = vadd.f32 %v3714, %v4137
        %v4264 = vadd.f32 %v3715, %v4142
        %v4265 = vadd.f32 %v3716, %v4145
        %v4266 = vadd.f32 %v3717, %v4150
        %v4267 = vadd.f32 %v3718, %v4153
        %v4268 = vadd.f32 %v3719, %v4158
        %v4269 = vadd.f32 %v3720, %v4161
        %v4270 = vadd.f32 %v3721, %v4166
        %v4271 = vadd.f32 %v3722, %v4169
        %v4272 = vadd.f32 %v3723, %v4174
        %v4273 = vadd.f32 %v3724, %v4177
        %v4274 = vadd.f32 %v3725, %v4182
        %v4275 = vadd.f32 %v3726, %v4185
        %v4276 = vadd.f32 %v3727, %v4190
        %v4277 = vadd.f32 %v3728, %v4193
        %v4278 = vadd.f32 %v3729, %v4198
        %v4279 = vadd.f32 %v3730, %v4201
        %v4280 = vadd.f32 %v3731, %v4206
        %v4281 = vadd.f32 %v3732, %v4209
        %v4282 = vadd.f32 %v3733, %v4214
        %v4283 = vadd.f32 %v3734, %v4217
        %v4284 = vadd.f32 %v3735, %v4222
        %v4285 = vadd.f32 %v3736, %v4225
        %v4286 = vadd.f32 %v3737, %v4230
        %v4287 = vadd.f32 %v3738, %v4233
        %v4288 = vadd.f32 %v3739, %v4238
        %v4289 = vadd.f32 %v3740, %v4241
        %v4290 = vadd.f32 %v3741, %v4246
        %v4291 = vadd.f32 %v3742, %v4249
        %v4292 = vadd.f32 %v3743, %v4254
        %v4293 = vadd.f32 %v3744, %v4257
        %v4294 = vld [vmem:[%s298 + $0x18] sm:$0xf]
        %v4295 = vld [vmem:[%s298 + $0x1c] sm:$0xf]
        %v4296 = vld [vmem:[%s298 + $0x20] sm:$0xf]
        %v4297 = vld [vmem:[%s298 + $0x24] sm:$0xf]
        %v4298 = vld [vmem:[%s298 + $0x28] sm:$0xf]
        %v4299 = vld [vmem:[%s298 + $0x2c] sm:$0xf]
        %v4300 = vld [vmem:[%s298 + $0x30] sm:$0xf]
        %v4301 = vld [vmem:[%s298 + $0x34] sm:$0xf]
        %v4302 = vld [vmem:[%s298 + $0x38] sm:$0xf]
        %v4303 = vld [vmem:[%s298 + $0x3c] sm:$0xf]
        %v4304 = vld [vmem:[%s298 + $0x40] sm:$0xf]
        %v4305 = vld [vmem:[%s298 + $0x44] sm:$0xf]
        %v4306 = vld [vmem:[%s298 + $0x48] sm:$0xf]
        %v4307 = vld [vmem:[%s298 + $0x4c] sm:$0xf]
        %v4308 = vld [vmem:[%s298 + $0x50] sm:$0xf]
        %v4309 = vld [vmem:[%s298 + $0x54] sm:$0xf]
        %v4310 = vld [vmem:[%s298 + $0x58] sm:$0xf]
        %v4311 = vld [vmem:[%s298 + $0x5c] sm:$0xf]
        %v4312 = vld [vmem:[%s298 + $0x60] sm:$0xf]
        %v4313 = vld [vmem:[%s298 + $0x64] sm:$0xf]
        %v4314 = vld [vmem:[%s298 + $0x68] sm:$0xf]
        %v4315 = vld [vmem:[%s298 + $0x6c] sm:$0xf]
        %v4316 = vld [vmem:[%s298 + $0x70] sm:$0xf]
        %v4317 = vld [vmem:[%s298 + $0x74] sm:$0xf]
        %v4318 = vld [vmem:[%s298 + $0x78] sm:$0xf]
        %v4319 = vld [vmem:[%s298 + $0x7c] sm:$0xf]
        %v4320 = vld [vmem:[%s298 + $0x80] sm:$0xf]
        %v4321 = vld [vmem:[%s298 + $0x84] sm:$0xf]
        %v4322 = vld [vmem:[%s298 + $0x88] sm:$0xf]
        %v4323 = vld [vmem:[%s298 + $0x8c] sm:$0xf]
        %v4324 = vld [vmem:[%s298 + $0x90] sm:$0xf]
        %v4325 = vld [vmem:[%s298 + $0x94] sm:$0xf]
        %v4326 = vld [vmem:[%s298 + $0x98] sm:$0xf]
        %v4327 = vld [vmem:[%s298 + $0x9c] sm:$0xf]
        %s4328 = scalar_lea.vmem [#allocation6], 384
        %v4329 = vld [vmem:[%s4328] sm:$0xf]
        %v4330 = vld [vmem:[%s4328 + $0x4] sm:$0xf]
        %v4331 = vld [vmem:[%s4328 + $0x8] sm:$0xf]
        %v4332 = vld [vmem:[%s4328 + $0xc] sm:$0xf]
        %v4333 = vld [vmem:[%s4328 + $0x10] sm:$0xf]
        %v4334 = vld [vmem:[%s4328 + $0x14] sm:$0xf]
        %v4335 = vld [vmem:[%s4328 + $0x18] sm:$0xf]
        %v4336 = vld [vmem:[%s4328 + $0x1c] sm:$0xf]
        %v4337 = vld [vmem:[%s4328 + $0x20] sm:$0xf]
        %v4338 = vld [vmem:[%s4328 + $0x24] sm:$0xf]
        %v4339 = vld [vmem:[%s4328 + $0x28] sm:$0xf]
        %v4340 = vld [vmem:[%s4328 + $0x2c] sm:$0xf]
        %v4341 = vld [vmem:[%s4328 + $0x30] sm:$0xf]
        %v4342 = vld [vmem:[%s4328 + $0x34] sm:$0xf]
        %v4343 = vld [vmem:[%s4328 + $0x38] sm:$0xf]
        %v4344 = vld [vmem:[%s4328 + $0x3c] sm:$0xf]
        %v4379 = vunpack.c.l.b16 %v4294
        %v4380 = vunpack.c.l.b16 %v4295
        %v4381 = vunpack.c.l.b16 %v4296
        %v4382 = vunpack.c.l.b16 %v4297
        %v4383 = vunpack.c.l.b16 %v4298
        %v4384 = vunpack.c.l.b16 %v4299
        %v4385 = vunpack.c.l.b16 %v4300
        %v4386 = vunpack.c.l.b16 %v4301
        %v4387 = vunpack.c.l.b16 %v4302
        %v4388 = vunpack.c.l.b16 %v4303
        %v4389 = vunpack.c.l.b16 %v4304
        %v4390 = vunpack.c.l.b16 %v4305
        %v4391 = vunpack.c.l.b16 %v4306
        %v4392 = vunpack.c.l.b16 %v4307
        %v4393 = vunpack.c.l.b16 %v4308
        %v4394 = vunpack.c.l.b16 %v4309
        %v4395 = vunpack.c.l.b16 %v4310
        %v4396 = vunpack.c.l.b16 %v4311
        %v4397 = vunpack.c.l.b16 %v4312
        %v4398 = vunpack.c.l.b16 %v4313
        %v4399 = vunpack.c.l.b16 %v4314
        %v4400 = vunpack.c.l.b16 %v4315
        %v4401 = vunpack.c.l.b16 %v4316
        %v4402 = vunpack.c.l.b16 %v4317
        %v4403 = vunpack.c.l.b16 %v4318
        %v4404 = vunpack.c.l.b16 %v4319
        %v4405 = vunpack.c.l.b16 %v4320
        %v4406 = vunpack.c.l.b16 %v4321
        %v4407 = vunpack.c.l.b16 %v4322
        %v4408 = vunpack.c.l.b16 %v4323
        %v4409 = vunpack.c.l.b16 %v4324
        %v4410 = vunpack.c.l.b16 %v4325
        %v4411 = vunpack.c.l.b16 %v4326
        %v4412 = vunpack.c.l.b16 %v4327
        %v4413 = vpack.c.b16 %v4380, %v4379
        %v4414 = vpack.c.b16 %v4382, %v4381
        %v4415 = vpack.c.b16 %v4384, %v4383
        %v4416 = vpack.c.b16 %v4386, %v4385
        %v4417 = vpack.c.b16 %v4388, %v4387
        %v4418 = vpack.c.b16 %v4390, %v4389
        %v4419 = vpack.c.b16 %v4392, %v4391
        %v4420 = vpack.c.b16 %v4394, %v4393
        %v4421 = vpack.c.b16 %v4396, %v4395
        %v4422 = vpack.c.b16 %v4398, %v4397
        %v4423 = vpack.c.b16 %v4400, %v4399
        %v4424 = vpack.c.b16 %v4402, %v4401
        %v4425 = vpack.c.b16 %v4404, %v4403
        %v4426 = vpack.c.b16 %v4406, %v4405
        %v4427 = vpack.c.b16 %v4408, %v4407
        %v4428 = vpack.c.b16 %v4410, %v4409
        %v4429 = vpack.c.b16 %v4412, %v4411
        %v4463 = vunpack.c.l.b16 %v4329
        %v4464 = vunpack.c.l.b16 %v4330
        %v4465 = vunpack.c.l.b16 %v4331
        %v4466 = vunpack.c.l.b16 %v4332
        %v4467 = vunpack.c.l.b16 %v4333
        %v4468 = vunpack.c.l.b16 %v4334
        %v4469 = vunpack.c.l.b16 %v4335
        %v4470 = vunpack.c.l.b16 %v4336
        %v4471 = vunpack.c.l.b16 %v4337
        %v4472 = vunpack.c.l.b16 %v4338
        %v4473 = vunpack.c.l.b16 %v4339
        %v4474 = vunpack.c.l.b16 %v4340
        %v4475 = vunpack.c.l.b16 %v4341
        %v4476 = vunpack.c.l.b16 %v4342
        %v4477 = vunpack.c.l.b16 %v4343
        %v4478 = vunpack.c.l.b16 %v4344
        %v4479 = vpack.c.b16 %v4464, %v4463
        %v4480 = vpack.c.b16 %v4466, %v4465
        %v4481 = vpack.c.b16 %v4468, %v4467
        %v4482 = vpack.c.b16 %v4470, %v4469
        %v4483 = vpack.c.b16 %v4472, %v4471
        %v4484 = vpack.c.b16 %v4474, %v4473
        %v4485 = vpack.c.b16 %v4476, %v4475
        %v4486 = vpack.c.b16 %v4478, %v4477
        %4495 = vmatprep.subr.bf16.mxu0 0
        %4496 = vmatpush1.bf16.msra.mxu0 %v4479
        %4497 = vmatprep.subr.bf16.mxu0 0
        %4498 = vmatpush1.bf16.msra.mxu0 %v4480
        %4499 = vmatprep.subr.bf16.mxu0 0
        %4500 = vmatpush1.bf16.msra.mxu0 %v4481
        %4501 = vmatprep.subr.bf16.mxu0 0
        %4502 = vmatpush1.bf16.msra.mxu0 %v4482
        %4503 = vmatprep.subr.bf16.mxu0 0
        %4504 = vmatpush1.bf16.msra.mxu0 %v4483
        %4505 = vmatprep.subr.bf16.mxu0 0
        %4506 = vmatpush1.bf16.msra.mxu0 %v4484
        %4507 = vmatprep.subr.bf16.mxu0 0
        %4508 = vmatpush1.bf16.msra.mxu0 %v4485
        %4509 = vmatprep.subr.bf16.mxu0 0
        %4510 = vmatpush1.bf16.msra.mxu0 %v4486
        %4511 = vmatprep.subr.bf16.mxu0 0
        %4512 = vmatpush1.bf16.msra.mxu0 0
        %4513 = vmatprep.subr.bf16.mxu0 0
        %4514 = vmatpush1.bf16.msra.mxu0 0
        %4515 = vmatprep.subr.bf16.mxu0 0
        %4516 = vmatpush1.bf16.msra.mxu0 0
        %4517 = vmatprep.subr.bf16.mxu0 0
        %4518 = vmatpush1.bf16.msra.mxu0 0
        %4519 = vmatprep.subr.bf16.mxu0 0
        %4520 = vmatpush1.bf16.msra.mxu0 0
        %4521 = vmatprep.subr.bf16.mxu0 0
        %4522 = vmatpush1.bf16.msra.mxu0 0
        %4523 = vmatprep.subr.bf16.mxu0 0
        %4524 = vmatpush1.bf16.msra.mxu0 0
        %4525 = vmatprep.subr.bf16.mxu0 0
        %4526 = vmatpush1.bf16.msra.mxu0 0
        %4527 = vmatprep.mubr.bf16.mxu0 0
        %4528 = vmatmul.mubr.bf16.gmra.mrb[0].mxu0 %v4413
        %v4529 = vpop.f32.mrb[0].mxu0
        %v4530 = vadd.f32 0.0, %v4529
        %v4531 = vpop.f32.mrb[0].mxu0
        %v4532 = vpop.f32.mrb[0].mxu0
        %v4533 = vadd.f32 0.0, %v4532
        %v4534 = vpop.f32.mrb[0].mxu0
        %4535 = vmatprep.mubr.bf16.mxu0 0
        %4536 = vmatmul.mubr.bf16.gmra.mrb[0].mxu0 %v4414
        %v4537 = vpop.f32.mrb[0].mxu0
        %v4538 = vadd.f32 0.0, %v4537
        %v4539 = vpop.f32.mrb[0].mxu0
        %v4540 = vpop.f32.mrb[0].mxu0
        %v4541 = vadd.f32 0.0, %v4540
        %v4542 = vpop.f32.mrb[0].mxu0
        %4543 = vmatprep.mubr.bf16.mxu0 0
        %4544 = vmatmul.mubr.bf16.gmra.mrb[0].mxu0 %v4415
        %v4545 = vpop.f32.mrb[0].mxu0
        %v4546 = vadd.f32 0.0, %v4545
        %v4547 = vpop.f32.mrb[0].mxu0
        %v4548 = vpop.f32.mrb[0].mxu0
        %v4549 = vadd.f32 0.0, %v4548
        %v4550 = vpop.f32.mrb[0].mxu0
        %4551 = vmatprep.mubr.bf16.mxu0 0
        %4552 = vmatmul.mubr.bf16.gmra.mrb[0].mxu0 %v4416
        %v4553 = vpop.f32.mrb[0].mxu0
        %v4554 = vadd.f32 0.0, %v4553
        %v4555 = vpop.f32.mrb[0].mxu0
        %v4556 = vpop.f32.mrb[0].mxu0
        %v4557 = vadd.f32 0.0, %v4556
        %v4558 = vpop.f32.mrb[0].mxu0
        %4559 = vmatprep.mubr.bf16.mxu0 0
        %4560 = vmatmul.mubr.bf16.gmra.mrb[0].mxu0 %v4417
        %v4561 = vpop.f32.mrb[0].mxu0
        %v4562 = vadd.f32 0.0, %v4561
        %v4563 = vpop.f32.mrb[0].mxu0
        %v4564 = vpop.f32.mrb[0].mxu0
        %v4565 = vadd.f32 0.0, %v4564
        %v4566 = vpop.f32.mrb[0].mxu0
        %4567 = vmatprep.mubr.bf16.mxu0 0
        %4568 = vmatmul.mubr.bf16.gmra.mrb[0].mxu0 %v4418
        %v4569 = vpop.f32.mrb[0].mxu0
        %v4570 = vadd.f32 0.0, %v4569
        %v4571 = vpop.f32.mrb[0].mxu0
        %v4572 = vpop.f32.mrb[0].mxu0
        %v4573 = vadd.f32 0.0, %v4572
        %v4574 = vpop.f32.mrb[0].mxu0
        %4575 = vmatprep.mubr.bf16.mxu0 0
        %4576 = vmatmul.mubr.bf16.gmra.mrb[0].mxu0 %v4419
        %v4577 = vpop.f32.mrb[0].mxu0
        %v4578 = vadd.f32 0.0, %v4577
        %v4579 = vpop.f32.mrb[0].mxu0
        %v4580 = vpop.f32.mrb[0].mxu0
        %v4581 = vadd.f32 0.0, %v4580
        %v4582 = vpop.f32.mrb[0].mxu0
        %4583 = vmatprep.mubr.bf16.mxu0 0
        %4584 = vmatmul.mubr.bf16.gmra.mrb[0].mxu0 %v4420
        %v4585 = vpop.f32.mrb[0].mxu0
        %v4586 = vadd.f32 0.0, %v4585
        %v4587 = vpop.f32.mrb[0].mxu0
        %v4588 = vpop.f32.mrb[0].mxu0
        %v4589 = vadd.f32 0.0, %v4588
        %v4590 = vpop.f32.mrb[0].mxu0
        %4591 = vmatprep.mubr.bf16.mxu0 0
        %4592 = vmatmul.mubr.bf16.gmra.mrb[0].mxu0 %v4421
        %v4593 = vpop.f32.mrb[0].mxu0
        %v4594 = vadd.f32 0.0, %v4593
        %v4595 = vpop.f32.mrb[0].mxu0
        %v4596 = vpop.f32.mrb[0].mxu0
        %v4597 = vadd.f32 0.0, %v4596
        %v4598 = vpop.f32.mrb[0].mxu0
        %4599 = vmatprep.mubr.bf16.mxu0 0
        %4600 = vmatmul.mubr.bf16.gmra.mrb[0].mxu0 %v4422
        %v4601 = vpop.f32.mrb[0].mxu0
        %v4602 = vadd.f32 0.0, %v4601
        %v4603 = vpop.f32.mrb[0].mxu0
        %v4604 = vpop.f32.mrb[0].mxu0
        %v4605 = vadd.f32 0.0, %v4604
        %v4606 = vpop.f32.mrb[0].mxu0
        %4607 = vmatprep.mubr.bf16.mxu0 0
        %4608 = vmatmul.mubr.bf16.gmra.mrb[0].mxu0 %v4423
        %v4609 = vpop.f32.mrb[0].mxu0
        %v4610 = vadd.f32 0.0, %v4609
        %v4611 = vpop.f32.mrb[0].mxu0
        %v4612 = vpop.f32.mrb[0].mxu0
        %v4613 = vadd.f32 0.0, %v4612
        %v4614 = vpop.f32.mrb[0].mxu0
        %4615 = vmatprep.mubr.bf16.mxu0 0
        %4616 = vmatmul.mubr.bf16.gmra.mrb[0].mxu0 %v4424
        %v4617 = vpop.f32.mrb[0].mxu0
        %v4618 = vadd.f32 0.0, %v4617
        %v4619 = vpop.f32.mrb[0].mxu0
        %v4620 = vpop.f32.mrb[0].mxu0
        %v4621 = vadd.f32 0.0, %v4620
        %v4622 = vpop.f32.mrb[0].mxu0
        %4623 = vmatprep.mubr.bf16.mxu0 0
        %4624 = vmatmul.mubr.bf16.gmra.mrb[0].mxu0 %v4425
        %v4625 = vpop.f32.mrb[0].mxu0
        %v4626 = vadd.f32 0.0, %v4625
        %v4627 = vpop.f32.mrb[0].mxu0
        %v4628 = vpop.f32.mrb[0].mxu0
        %v4629 = vadd.f32 0.0, %v4628
        %v4630 = vpop.f32.mrb[0].mxu0
        %4631 = vmatprep.mubr.bf16.mxu0 0
        %4632 = vmatmul.mubr.bf16.gmra.mrb[0].mxu0 %v4426
        %v4633 = vpop.f32.mrb[0].mxu0
        %v4634 = vadd.f32 0.0, %v4633
        %v4635 = vpop.f32.mrb[0].mxu0
        %v4636 = vpop.f32.mrb[0].mxu0
        %v4637 = vadd.f32 0.0, %v4636
        %v4638 = vpop.f32.mrb[0].mxu0
        %4639 = vmatprep.mubr.bf16.mxu0 0
        %4640 = vmatmul.mubr.bf16.gmra.mrb[0].mxu0 %v4427
        %v4641 = vpop.f32.mrb[0].mxu0
        %v4642 = vadd.f32 0.0, %v4641
        %v4643 = vpop.f32.mrb[0].mxu0
        %v4644 = vpop.f32.mrb[0].mxu0
        %v4645 = vadd.f32 0.0, %v4644
        %v4646 = vpop.f32.mrb[0].mxu0
        %4647 = vmatprep.mubr.bf16.mxu0 0
        %4648 = vmatmul.mubr.bf16.gmra.mrb[0].mxu0 %v4428
        %v4649 = vpop.f32.mrb[0].mxu0
        %v4650 = vadd.f32 0.0, %v4649
        %v4651 = vpop.f32.mrb[0].mxu0
        %v4652 = vpop.f32.mrb[0].mxu0
        %v4653 = vadd.f32 0.0, %v4652
        %v4654 = vpop.f32.mrb[0].mxu0
        %4655 = vmatprep.mubr.bf16.mxu0 0
        %4656 = vmatmul.mubr.bf16.gmra.mrb[0].mxu0 %v4429
        %v4657 = vpop.f32.mrb[0].mxu0
        %v4658 = vadd.f32 0.0, %v4657
        %v4659 = vpop.f32.mrb[0].mxu0
        %v4660 = vpop.f32.mrb[0].mxu0
        %v4661 = vadd.f32 0.0, %v4660
        %v4662 = vpop.f32.mrb[0].mxu0
        %4663 = vdwg.mxu0
        %v4664 = vadd.f32 %v4260, %v4530
        %v4665 = vadd.f32 %v4261, %v4533
        %v4666 = vadd.f32 %v4262, %v4538
        %v4667 = vadd.f32 %v4263, %v4541
        %v4668 = vadd.f32 %v4264, %v4546
        %v4669 = vadd.f32 %v4265, %v4549
        %v4670 = vadd.f32 %v4266, %v4554
        %v4671 = vadd.f32 %v4267, %v4557
        %v4672 = vadd.f32 %v4268, %v4562
        %v4673 = vadd.f32 %v4269, %v4565
        %v4674 = vadd.f32 %v4270, %v4570
        %v4675 = vadd.f32 %v4271, %v4573
        %v4676 = vadd.f32 %v4272, %v4578
        %v4677 = vadd.f32 %v4273, %v4581
        %v4678 = vadd.f32 %v4274, %v4586
        %v4679 = vadd.f32 %v4275, %v4589
        %v4680 = vadd.f32 %v4276, %v4594
        %v4681 = vadd.f32 %v4277, %v4597
        %v4682 = vadd.f32 %v4278, %v4602
        %v4683 = vadd.f32 %v4279, %v4605
        %v4684 = vadd.f32 %v4280, %v4610
        %v4685 = vadd.f32 %v4281, %v4613
        %v4686 = vadd.f32 %v4282, %v4618
        %v4687 = vadd.f32 %v4283, %v4621
        %v4688 = vadd.f32 %v4284, %v4626
        %v4689 = vadd.f32 %v4285, %v4629
        %v4690 = vadd.f32 %v4286, %v4634
        %v4691 = vadd.f32 %v4287, %v4637
        %v4692 = vadd.f32 %v4288, %v4642
        %v4693 = vadd.f32 %v4289, %v4645
        %v4694 = vadd.f32 %v4290, %v4650
        %v4695 = vadd.f32 %v4291, %v4653
        %v4696 = vadd.f32 %v4292, %v4658
        %v4697 = vadd.f32 %v4293, %v4661
        %v4698 = vld [vmem:[%s298 + $0x18] sm:$0xf]
        %v4699 = vld [vmem:[%s298 + $0x1c] sm:$0xf]
        %v4700 = vld [vmem:[%s298 + $0x20] sm:$0xf]
        %v4701 = vld [vmem:[%s298 + $0x24] sm:$0xf]
        %v4702 = vld [vmem:[%s298 + $0x28] sm:$0xf]
        %v4703 = vld [vmem:[%s298 + $0x2c] sm:$0xf]
        %v4704 = vld [vmem:[%s298 + $0x30] sm:$0xf]
        %v4705 = vld [vmem:[%s298 + $0x34] sm:$0xf]
        %v4706 = vld [vmem:[%s298 + $0x38] sm:$0xf]
        %v4707 = vld [vmem:[%s298 + $0x3c] sm:$0xf]
        %v4708 = vld [vmem:[%s298 + $0x40] sm:$0xf]
        %v4709 = vld [vmem:[%s298 + $0x44] sm:$0xf]
        %v4710 = vld [vmem:[%s298 + $0x48] sm:$0xf]
        %v4711 = vld [vmem:[%s298 + $0x4c] sm:$0xf]
        %v4712 = vld [vmem:[%s298 + $0x50] sm:$0xf]
        %v4713 = vld [vmem:[%s298 + $0x54] sm:$0xf]
        %v4714 = vld [vmem:[%s298 + $0x58] sm:$0xf]
        %v4715 = vld [vmem:[%s298 + $0x5c] sm:$0xf]
        %v4716 = vld [vmem:[%s298 + $0x60] sm:$0xf]
        %v4717 = vld [vmem:[%s298 + $0x64] sm:$0xf]
        %v4718 = vld [vmem:[%s298 + $0x68] sm:$0xf]
        %v4719 = vld [vmem:[%s298 + $0x6c] sm:$0xf]
        %v4720 = vld [vmem:[%s298 + $0x70] sm:$0xf]
        %v4721 = vld [vmem:[%s298 + $0x74] sm:$0xf]
        %v4722 = vld [vmem:[%s298 + $0x78] sm:$0xf]
        %v4723 = vld [vmem:[%s298 + $0x7c] sm:$0xf]
        %v4724 = vld [vmem:[%s298 + $0x80] sm:$0xf]
        %v4725 = vld [vmem:[%s298 + $0x84] sm:$0xf]
        %v4726 = vld [vmem:[%s298 + $0x88] sm:$0xf]
        %v4727 = vld [vmem:[%s298 + $0x8c] sm:$0xf]
        %v4728 = vld [vmem:[%s298 + $0x90] sm:$0xf]
        %v4729 = vld [vmem:[%s298 + $0x94] sm:$0xf]
        %v4730 = vld [vmem:[%s298 + $0x98] sm:$0xf]
        %v4731 = vld [vmem:[%s298 + $0x9c] sm:$0xf]
        %v4732 = vld [vmem:[%s298 + $0xa0] sm:$0x1]
        %s4733 = scalar_lea.vmem [#allocation6], 448
        %v4734 = vld [vmem:[%s4733] sm:$0xf]
        %v4735 = vld [vmem:[%s4733 + $0x4] sm:$0xf]
        %v4736 = vld [vmem:[%s4733 + $0x8] sm:$0xf]
        %v4737 = vld [vmem:[%s4733 + $0xc] sm:$0xf]
        %v4738 = vld [vmem:[%s4733 + $0x10] sm:$0xf]
        %v4739 = vld [vmem:[%s4733 + $0x14] sm:$0xf]
        %v4740 = vld [vmem:[%s4733 + $0x18] sm:$0xf]
        %v4741 = vld [vmem:[%s4733 + $0x1c] sm:$0xf]
        %v4742 = vld [vmem:[%s4733 + $0x20] sm:$0xf]
        %v4743 = vld [vmem:[%s4733 + $0x24] sm:$0xf]
        %v4744 = vld [vmem:[%s4733 + $0x28] sm:$0xf]
        %v4745 = vld [vmem:[%s4733 + $0x2c] sm:$0xf]
        %v4746 = vld [vmem:[%s4733 + $0x30] sm:$0xf]
        %v4747 = vld [vmem:[%s4733 + $0x34] sm:$0xf]
        %v4748 = vld [vmem:[%s4733 + $0x38] sm:$0xf]
        %v4749 = vld [vmem:[%s4733 + $0x3c] sm:$0xf]
        %v4785 = vunpack.c.l.b16 %v4698
        %v4786 = vunpack.c.l.b16 %v4699
        %v4787 = vunpack.c.l.b16 %v4700
        %v4788 = vunpack.c.l.b16 %v4701
        %v4789 = vunpack.c.l.b16 %v4702
        %v4790 = vunpack.c.l.b16 %v4703
        %v4791 = vunpack.c.l.b16 %v4704
        %v4792 = vunpack.c.l.b16 %v4705
        %v4793 = vunpack.c.l.b16 %v4706
        %v4794 = vunpack.c.l.b16 %v4707
        %v4795 = vunpack.c.l.b16 %v4708
        %v4796 = vunpack.c.l.b16 %v4709
        %v4797 = vunpack.c.l.b16 %v4710
        %v4798 = vunpack.c.l.b16 %v4711
        %v4799 = vunpack.c.l.b16 %v4712
        %v4800 = vunpack.c.l.b16 %v4713
        %v4801 = vunpack.c.l.b16 %v4714
        %v4802 = vunpack.c.l.b16 %v4715
        %v4803 = vunpack.c.l.b16 %v4716
        %v4804 = vunpack.c.l.b16 %v4717
        %v4805 = vunpack.c.l.b16 %v4718
        %v4806 = vunpack.c.l.b16 %v4719
        %v4807 = vunpack.c.l.b16 %v4720
        %v4808 = vunpack.c.l.b16 %v4721
        %v4809 = vunpack.c.l.b16 %v4722
        %v4810 = vunpack.c.l.b16 %v4723
        %v4811 = vunpack.c.l.b16 %v4724
        %v4812 = vunpack.c.l.b16 %v4725
        %v4813 = vunpack.c.l.b16 %v4726
        %v4814 = vunpack.c.l.b16 %v4727
        %v4815 = vunpack.c.l.b16 %v4728
        %v4816 = vunpack.c.l.b16 %v4729
        %v4817 = vunpack.c.l.b16 %v4730
        %v4818 = vunpack.c.l.b16 %v4731
        %v4819 = vunpack.c.l.b16 %v4732
        %v4820 = vpack.c.b16 %v4786, %v4785
        %v4821 = vpack.c.b16 %v4788, %v4787
        %v4822 = vpack.c.b16 %v4790, %v4789
        %v4823 = vpack.c.b16 %v4792, %v4791
        %v4824 = vpack.c.b16 %v4794, %v4793
        %v4825 = vpack.c.b16 %v4796, %v4795
        %v4826 = vpack.c.b16 %v4798, %v4797
        %v4827 = vpack.c.b16 %v4800, %v4799
        %v4828 = vpack.c.b16 %v4802, %v4801
        %v4829 = vpack.c.b16 %v4804, %v4803
        %v4830 = vpack.c.b16 %v4806, %v4805
        %v4831 = vpack.c.b16 %v4808, %v4807
        %v4832 = vpack.c.b16 %v4810, %v4809
        %v4833 = vpack.c.b16 %v4812, %v4811
        %v4834 = vpack.c.b16 %v4814, %v4813
        %v4835 = vpack.c.b16 %v4816, %v4815
        %v4836 = vpack.c.b16 %v4818, %v4817
        %v4837 = vpack.c.b16 %v4819, %v4819
        %v4839 = vshrl.u32 %v4820, 16
        %v4841 = vshll.u32 %v4820, 16
        %v4843 = vrot.slane %v4841, 1
        %v4844 = vor.u32 %v4839, %v4843
        %v4846 = vshll.u32 %v4821, 16
        %v4848 = vrot.slane %v4846, 1
        %v4849 = vsel %vm3885, %v4844, %v4848
        %v4850 = vshrl.u32 %v4821, 16
        %v4852 = vor.u32 %v4850, %v4848
        %v4854 = vshll.u32 %v4822, 16
        %v4856 = vrot.slane %v4854, 1
        %v4857 = vsel %vm3885, %v4852, %v4856
        %v4858 = vshrl.u32 %v4822, 16
        %v4860 = vor.u32 %v4858, %v4856
        %v4862 = vshll.u32 %v4823, 16
        %v4864 = vrot.slane %v4862, 1
        %v4865 = vsel %vm3885, %v4860, %v4864
        %v4866 = vshrl.u32 %v4823, 16
        %v4868 = vor.u32 %v4866, %v4864
        %v4870 = vshll.u32 %v4824, 16
        %v4872 = vrot.slane %v4870, 1
        %v4873 = vsel %vm3885, %v4868, %v4872
        %v4874 = vshrl.u32 %v4824, 16
        %v4876 = vor.u32 %v4874, %v4872
        %v4878 = vshll.u32 %v4825, 16
        %v4880 = vrot.slane %v4878, 1
        %v4881 = vsel %vm3885, %v4876, %v4880
        %v4882 = vshrl.u32 %v4825, 16
        %v4884 = vor.u32 %v4882, %v4880
        %v4886 = vshll.u32 %v4826, 16
        %v4888 = vrot.slane %v4886, 1
        %v4889 = vsel %vm3885, %v4884, %v4888
        %v4890 = vshrl.u32 %v4826, 16
        %v4892 = vor.u32 %v4890, %v4888
        %v4894 = vshll.u32 %v4827, 16
        %v4896 = vrot.slane %v4894, 1
        %v4897 = vsel %vm3885, %v4892, %v4896
        %v4898 = vshrl.u32 %v4827, 16
        %v4900 = vor.u32 %v4898, %v4896
        %v4902 = vshll.u32 %v4828, 16
        %v4904 = vrot.slane %v4902, 1
        %v4905 = vsel %vm3885, %v4900, %v4904
        %v4906 = vshrl.u32 %v4828, 16
        %v4908 = vor.u32 %v4906, %v4904
        %v4910 = vshll.u32 %v4829, 16
        %v4912 = vrot.slane %v4910, 1
        %v4913 = vsel %vm3885, %v4908, %v4912
        %v4914 = vshrl.u32 %v4829, 16
        %v4916 = vor.u32 %v4914, %v4912
        %v4918 = vshll.u32 %v4830, 16
        %v4920 = vrot.slane %v4918, 1
        %v4921 = vsel %vm3885, %v4916, %v4920
        %v4922 = vshrl.u32 %v4830, 16
        %v4924 = vor.u32 %v4922, %v4920
        %v4926 = vshll.u32 %v4831, 16
        %v4928 = vrot.slane %v4926, 1
        %v4929 = vsel %vm3885, %v4924, %v4928
        %v4930 = vshrl.u32 %v4831, 16
        %v4932 = vor.u32 %v4930, %v4928
        %v4934 = vshll.u32 %v4832, 16
        %v4936 = vrot.slane %v4934, 1
        %v4937 = vsel %vm3885, %v4932, %v4936
        %v4938 = vshrl.u32 %v4832, 16
        %v4940 = vor.u32 %v4938, %v4936
        %v4942 = vshll.u32 %v4833, 16
        %v4944 = vrot.slane %v4942, 1
        %v4945 = vsel %vm3885, %v4940, %v4944
        %v4946 = vshrl.u32 %v4833, 16
        %v4948 = vor.u32 %v4946, %v4944
        %v4950 = vshll.u32 %v4834, 16
        %v4952 = vrot.slane %v4950, 1
        %v4953 = vsel %vm3885, %v4948, %v4952
        %v4954 = vshrl.u32 %v4834, 16
        %v4956 = vor.u32 %v4954, %v4952
        %v4958 = vshll.u32 %v4835, 16
        %v4960 = vrot.slane %v4958, 1
        %v4961 = vsel %vm3885, %v4956, %v4960
        %v4962 = vshrl.u32 %v4835, 16
        %v4964 = vor.u32 %v4962, %v4960
        %v4966 = vshll.u32 %v4836, 16
        %v4968 = vrot.slane %v4966, 1
        %v4969 = vsel %vm3885, %v4964, %v4968
        %v4970 = vshrl.u32 %v4836, 16
        %v4972 = vor.u32 %v4970, %v4968
        %v4974 = vshll.u32 %v4837, 16
        %v4976 = vrot.slane %v4974, 1
        %v4977 = vsel %vm3885, %v4972, %v4976
        %v5011 = vunpack.c.l.b16 %v4734
        %v5012 = vunpack.c.l.b16 %v4735
        %v5013 = vunpack.c.l.b16 %v4736
        %v5014 = vunpack.c.l.b16 %v4737
        %v5015 = vunpack.c.l.b16 %v4738
        %v5016 = vunpack.c.l.b16 %v4739
        %v5017 = vunpack.c.l.b16 %v4740
        %v5018 = vunpack.c.l.b16 %v4741
        %v5019 = vunpack.c.l.b16 %v4742
        %v5020 = vunpack.c.l.b16 %v4743
        %v5021 = vunpack.c.l.b16 %v4744
        %v5022 = vunpack.c.l.b16 %v4745
        %v5023 = vunpack.c.l.b16 %v4746
        %v5024 = vunpack.c.l.b16 %v4747
        %v5025 = vunpack.c.l.b16 %v4748
        %v5026 = vunpack.c.l.b16 %v4749
        %v5027 = vpack.c.b16 %v5012, %v5011
        %v5028 = vpack.c.b16 %v5014, %v5013
        %v5029 = vpack.c.b16 %v5016, %v5015
        %v5030 = vpack.c.b16 %v5018, %v5017
        %v5031 = vpack.c.b16 %v5020, %v5019
        %v5032 = vpack.c.b16 %v5022, %v5021
        %v5033 = vpack.c.b16 %v5024, %v5023
        %v5034 = vpack.c.b16 %v5026, %v5025
        %5043 = vmatprep.subr.bf16.mxu0 0
        %5044 = vmatpush1.bf16.msra.mxu0 %v5027
        %5045 = vmatprep.subr.bf16.mxu0 0
        %5046 = vmatpush1.bf16.msra.mxu0 %v5028
        %5047 = vmatprep.subr.bf16.mxu0 0
        %5048 = vmatpush1.bf16.msra.mxu0 %v5029
        %5049 = vmatprep.subr.bf16.mxu0 0
        %5050 = vmatpush1.bf16.msra.mxu0 %v5030
        %5051 = vmatprep.subr.bf16.mxu0 0
        %5052 = vmatpush1.bf16.msra.mxu0 %v5031
        %5053 = vmatprep.subr.bf16.mxu0 0
        %5054 = vmatpush1.bf16.msra.mxu0 %v5032
        %5055 = vmatprep.subr.bf16.mxu0 0
        %5056 = vmatpush1.bf16.msra.mxu0 %v5033
        %5057 = vmatprep.subr.bf16.mxu0 0
        %5058 = vmatpush1.bf16.msra.mxu0 %v5034
        %5059 = vmatprep.subr.bf16.mxu0 0
        %5060 = vmatpush1.bf16.msra.mxu0 0
        %5061 = vmatprep.subr.bf16.mxu0 0
        %5062 = vmatpush1.bf16.msra.mxu0 0
        %5063 = vmatprep.subr.bf16.mxu0 0
        %5064 = vmatpush1.bf16.msra.mxu0 0
        %5065 = vmatprep.subr.bf16.mxu0 0
        %5066 = vmatpush1.bf16.msra.mxu0 0
        %5067 = vmatprep.subr.bf16.mxu0 0
        %5068 = vmatpush1.bf16.msra.mxu0 0
        %5069 = vmatprep.subr.bf16.mxu0 0
        %5070 = vmatpush1.bf16.msra.mxu0 0
        %5071 = vmatprep.subr.bf16.mxu0 0
        %5072 = vmatpush1.bf16.msra.mxu0 0
        %5073 = vmatprep.subr.bf16.mxu0 0
        %5074 = vmatpush1.bf16.msra.mxu0 0
        %5075 = vmatprep.mubr.bf16.mxu0 0
        %5076 = vmatmul.mubr.bf16.gmra.mrb[0].mxu0 %v4849
        %v5077 = vpop.f32.mrb[0].mxu0
        %v5078 = vadd.f32 0.0, %v5077
        %v5079 = vpop.f32.mrb[0].mxu0
        %v5080 = vpop.f32.mrb[0].mxu0
        %v5081 = vadd.f32 0.0, %v5080
        %v5082 = vpop.f32.mrb[0].mxu0
        %5083 = vmatprep.mubr.bf16.mxu0 0
        %5084 = vmatmul.mubr.bf16.gmra.mrb[0].mxu0 %v4857
        %v5085 = vpop.f32.mrb[0].mxu0
        %v5086 = vadd.f32 0.0, %v5085
        %v5087 = vpop.f32.mrb[0].mxu0
        %v5088 = vpop.f32.mrb[0].mxu0
        %v5089 = vadd.f32 0.0, %v5088
        %v5090 = vpop.f32.mrb[0].mxu0
        %5091 = vmatprep.mubr.bf16.mxu0 0
        %5092 = vmatmul.mubr.bf16.gmra.mrb[0].mxu0 %v4865
        %v5093 = vpop.f32.mrb[0].mxu0
        %v5094 = vadd.f32 0.0, %v5093
        %v5095 = vpop.f32.mrb[0].mxu0
        %v5096 = vpop.f32.mrb[0].mxu0
        %v5097 = vadd.f32 0.0, %v5096
        %v5098 = vpop.f32.mrb[0].mxu0
        %5099 = vmatprep.mubr.bf16.mxu0 0
        %5100 = vmatmul.mubr.bf16.gmra.mrb[0].mxu0 %v4873
        %v5101 = vpop.f32.mrb[0].mxu0
        %v5102 = vadd.f32 0.0, %v5101
        %v5103 = vpop.f32.mrb[0].mxu0
        %v5104 = vpop.f32.mrb[0].mxu0
        %v5105 = vadd.f32 0.0, %v5104
        %v5106 = vpop.f32.mrb[0].mxu0
        %5107 = vmatprep.mubr.bf16.mxu0 0
        %5108 = vmatmul.mubr.bf16.gmra.mrb[0].mxu0 %v4881
        %v5109 = vpop.f32.mrb[0].mxu0
        %v5110 = vadd.f32 0.0, %v5109
        %v5111 = vpop.f32.mrb[0].mxu0
        %v5112 = vpop.f32.mrb[0].mxu0
        %v5113 = vadd.f32 0.0, %v5112
        %v5114 = vpop.f32.mrb[0].mxu0
        %5115 = vmatprep.mubr.bf16.mxu0 0
        %5116 = vmatmul.mubr.bf16.gmra.mrb[0].mxu0 %v4889
        %v5117 = vpop.f32.mrb[0].mxu0
        %v5118 = vadd.f32 0.0, %v5117
        %v5119 = vpop.f32.mrb[0].mxu0
        %v5120 = vpop.f32.mrb[0].mxu0
        %v5121 = vadd.f32 0.0, %v5120
        %v5122 = vpop.f32.mrb[0].mxu0
        %5123 = vmatprep.mubr.bf16.mxu0 0
        %5124 = vmatmul.mubr.bf16.gmra.mrb[0].mxu0 %v4897
        %v5125 = vpop.f32.mrb[0].mxu0
        %v5126 = vadd.f32 0.0, %v5125
        %v5127 = vpop.f32.mrb[0].mxu0
        %v5128 = vpop.f32.mrb[0].mxu0
        %v5129 = vadd.f32 0.0, %v5128
        %v5130 = vpop.f32.mrb[0].mxu0
        %5131 = vmatprep.mubr.bf16.mxu0 0
        %5132 = vmatmul.mubr.bf16.gmra.mrb[0].mxu0 %v4905
        %v5133 = vpop.f32.mrb[0].mxu0
        %v5134 = vadd.f32 0.0, %v5133
        %v5135 = vpop.f32.mrb[0].mxu0
        %v5136 = vpop.f32.mrb[0].mxu0
        %v5137 = vadd.f32 0.0, %v5136
        %v5138 = vpop.f32.mrb[0].mxu0
        %5139 = vmatprep.mubr.bf16.mxu0 0
        %5140 = vmatmul.mubr.bf16.gmra.mrb[0].mxu0 %v4913
        %v5141 = vpop.f32.mrb[0].mxu0
        %v5142 = vadd.f32 0.0, %v5141
        %v5143 = vpop.f32.mrb[0].mxu0
        %v5144 = vpop.f32.mrb[0].mxu0
        %v5145 = vadd.f32 0.0, %v5144
        %v5146 = vpop.f32.mrb[0].mxu0
        %5147 = vmatprep.mubr.bf16.mxu0 0
        %5148 = vmatmul.mubr.bf16.gmra.mrb[0].mxu0 %v4921
        %v5149 = vpop.f32.mrb[0].mxu0
        %v5150 = vadd.f32 0.0, %v5149
        %v5151 = vpop.f32.mrb[0].mxu0
        %v5152 = vpop.f32.mrb[0].mxu0
        %v5153 = vadd.f32 0.0, %v5152
        %v5154 = vpop.f32.mrb[0].mxu0
        %5155 = vmatprep.mubr.bf16.mxu0 0
        %5156 = vmatmul.mubr.bf16.gmra.mrb[0].mxu0 %v4929
        %v5157 = vpop.f32.mrb[0].mxu0
        %v5158 = vadd.f32 0.0, %v5157
        %v5159 = vpop.f32.mrb[0].mxu0
        %v5160 = vpop.f32.mrb[0].mxu0
        %v5161 = vadd.f32 0.0, %v5160
        %v5162 = vpop.f32.mrb[0].mxu0
        %5163 = vmatprep.mubr.bf16.mxu0 0
        %5164 = vmatmul.mubr.bf16.gmra.mrb[0].mxu0 %v4937
        %v5165 = vpop.f32.mrb[0].mxu0
        %v5166 = vadd.f32 0.0, %v5165
        %v5167 = vpop.f32.mrb[0].mxu0
        %v5168 = vpop.f32.mrb[0].mxu0
        %v5169 = vadd.f32 0.0, %v5168
        %v5170 = vpop.f32.mrb[0].mxu0
        %5171 = vmatprep.mubr.bf16.mxu0 0
        %5172 = vmatmul.mubr.bf16.gmra.mrb[0].mxu0 %v4945
        %v5173 = vpop.f32.mrb[0].mxu0
        %v5174 = vadd.f32 0.0, %v5173
        %v5175 = vpop.f32.mrb[0].mxu0
        %v5176 = vpop.f32.mrb[0].mxu0
        %v5177 = vadd.f32 0.0, %v5176
        %v5178 = vpop.f32.mrb[0].mxu0
        %5179 = vmatprep.mubr.bf16.mxu0 0
        %5180 = vmatmul.mubr.bf16.gmra.mrb[0].mxu0 %v4953
        %v5181 = vpop.f32.mrb[0].mxu0
        %v5182 = vadd.f32 0.0, %v5181
        %v5183 = vpop.f32.mrb[0].mxu0
        %v5184 = vpop.f32.mrb[0].mxu0
        %v5185 = vadd.f32 0.0, %v5184
        %v5186 = vpop.f32.mrb[0].mxu0
        %5187 = vmatprep.mubr.bf16.mxu0 0
        %5188 = vmatmul.mubr.bf16.gmra.mrb[0].mxu0 %v4961
        %v5189 = vpop.f32.mrb[0].mxu0
        %v5190 = vadd.f32 0.0, %v5189
        %v5191 = vpop.f32.mrb[0].mxu0
        %v5192 = vpop.f32.mrb[0].mxu0
        %v5193 = vadd.f32 0.0, %v5192
        %v5194 = vpop.f32.mrb[0].mxu0
        %5195 = vmatprep.mubr.bf16.mxu0 0
        %5196 = vmatmul.mubr.bf16.gmra.mrb[0].mxu0 %v4969
        %v5197 = vpop.f32.mrb[0].mxu0
        %v5198 = vadd.f32 0.0, %v5197
        %v5199 = vpop.f32.mrb[0].mxu0
        %v5200 = vpop.f32.mrb[0].mxu0
        %v5201 = vadd.f32 0.0, %v5200
        %v5202 = vpop.f32.mrb[0].mxu0
        %5203 = vmatprep.mubr.bf16.mxu0 0
        %5204 = vmatmul.mubr.bf16.gmra.mrb[0].mxu0 %v4977
        %v5205 = vpop.f32.mrb[0].mxu0
        %v5206 = vadd.f32 0.0, %v5205
        %v5207 = vpop.f32.mrb[0].mxu0
        %v5208 = vpop.f32.mrb[0].mxu0
        %v5209 = vadd.f32 0.0, %v5208
        %v5210 = vpop.f32.mrb[0].mxu0
        %5211 = vdwg.mxu0
        %v5212 = vadd.f32 %v4664, %v5078
        %v5213 = vadd.f32 %v4665, %v5081
        %v5214 = vadd.f32 %v4666, %v5086
        %v5215 = vadd.f32 %v4667, %v5089
        %v5216 = vadd.f32 %v4668, %v5094
        %v5217 = vadd.f32 %v4669, %v5097
        %v5218 = vadd.f32 %v4670, %v5102
        %v5219 = vadd.f32 %v4671, %v5105
        %v5220 = vadd.f32 %v4672, %v5110
        %v5221 = vadd.f32 %v4673, %v5113
        %v5222 = vadd.f32 %v4674, %v5118
        %v5223 = vadd.f32 %v4675, %v5121
        %v5224 = vadd.f32 %v4676, %v5126
        %v5225 = vadd.f32 %v4677, %v5129
        %v5226 = vadd.f32 %v4678, %v5134
        %v5227 = vadd.f32 %v4679, %v5137
        %v5228 = vadd.f32 %v4680, %v5142
        %v5229 = vadd.f32 %v4681, %v5145
        %v5230 = vadd.f32 %v4682, %v5150
        %v5231 = vadd.f32 %v4683, %v5153
        %v5232 = vadd.f32 %v4684, %v5158
        %v5233 = vadd.f32 %v4685, %v5161
        %v5234 = vadd.f32 %v4686, %v5166
        %v5235 = vadd.f32 %v4687, %v5169
        %v5236 = vadd.f32 %v4688, %v5174
        %v5237 = vadd.f32 %v4689, %v5177
        %v5238 = vadd.f32 %v4690, %v5182
        %v5239 = vadd.f32 %v4691, %v5185
        %v5240 = vadd.f32 %v4692, %v5190
        %v5241 = vadd.f32 %v4693, %v5193
        %v5242 = vadd.f32 %v4694, %v5198
        %v5243 = vadd.f32 %v4695, %v5201
        %v5244 = vadd.f32 %v4696, %v5206
        %v5245 = vadd.f32 %v4697, %v5209
        %v5246 = vld [vmem:[%s298 + $0x18] sm:$0xe]
        %s5247 = scalar_lea.vmem [#allocation6], 512
        %v5248 = vld [vmem:[%s5247] sm:$0xf]
        %v5249 = vld [vmem:[%s5247 + $0x4] sm:$0xf]
        %v5250 = vld [vmem:[%s5247 + $0x8] sm:$0xf]
        %v5251 = vld [vmem:[%s5247 + $0xc] sm:$0xf]
        %v5252 = vld [vmem:[%s5247 + $0x10] sm:$0xf]
        %v5253 = vld [vmem:[%s5247 + $0x14] sm:$0xf]
        %v5254 = vld [vmem:[%s5247 + $0x18] sm:$0xf]
        %v5255 = vld [vmem:[%s5247 + $0x1c] sm:$0xf]
        %v5256 = vld [vmem:[%s5247 + $0x20] sm:$0xf]
        %v5257 = vld [vmem:[%s5247 + $0x24] sm:$0xf]
        %v5258 = vld [vmem:[%s5247 + $0x28] sm:$0xf]
        %v5259 = vld [vmem:[%s5247 + $0x2c] sm:$0xf]
        %v5260 = vld [vmem:[%s5247 + $0x30] sm:$0xf]
        %v5261 = vld [vmem:[%s5247 + $0x34] sm:$0xf]
        %v5262 = vld [vmem:[%s5247 + $0x38] sm:$0xf]
        %v5263 = vld [vmem:[%s5247 + $0x3c] sm:$0xf]
        %v5265 = vunpack.c.l.b16 %v5246
        %v5266 = vpack.c.b16 %v4786, %v5265
        %vm5267 = vcmask 1046528
        %v5268 = vrot.slane %v5266, 1
        %v5269 = vrot.slane %v4821, 1
        %v5270 = vsel %vm5267, %v5268, %v5269
        %v5271 = vrot.slane %v4822, 1
        %v5272 = vsel %vm5267, %v5269, %v5271
        %v5273 = vrot.slane %v4823, 1
        %v5274 = vsel %vm5267, %v5271, %v5273
        %v5275 = vrot.slane %v4824, 1
        %v5276 = vsel %vm5267, %v5273, %v5275
        %v5277 = vrot.slane %v4825, 1
        %v5278 = vsel %vm5267, %v5275, %v5277
        %v5279 = vrot.slane %v4826, 1
        %v5280 = vsel %vm5267, %v5277, %v5279
        %v5281 = vrot.slane %v4827, 1
        %v5282 = vsel %vm5267, %v5279, %v5281
        %v5283 = vrot.slane %v4828, 1
        %v5284 = vsel %vm5267, %v5281, %v5283
        %v5285 = vrot.slane %v4829, 1
        %v5286 = vsel %vm5267, %v5283, %v5285
        %v5287 = vrot.slane %v4830, 1
        %v5288 = vsel %vm5267, %v5285, %v5287
        %v5289 = vrot.slane %v4831, 1
        %v5290 = vsel %vm5267, %v5287, %v5289
        %v5291 = vrot.slane %v4832, 1
        %v5292 = vsel %vm5267, %v5289, %v5291
        %v5293 = vrot.slane %v4833, 1
        %v5294 = vsel %vm5267, %v5291, %v5293
        %v5295 = vrot.slane %v4834, 1
        %v5296 = vsel %vm5267, %v5293, %v5295
        %v5297 = vrot.slane %v4835, 1
        %v5298 = vsel %vm5267, %v5295, %v5297
        %v5299 = vrot.slane %v4836, 1
        %v5300 = vsel %vm5267, %v5297, %v5299
        %v5301 = vrot.slane %v4837, 1
        %v5302 = vsel %vm5267, %v5299, %v5301
        %v5336 = vunpack.c.l.b16 %v5248
        %v5337 = vunpack.c.l.b16 %v5249
        %v5338 = vunpack.c.l.b16 %v5250
        %v5339 = vunpack.c.l.b16 %v5251
        %v5340 = vunpack.c.l.b16 %v5252
        %v5341 = vunpack.c.l.b16 %v5253
        %v5342 = vunpack.c.l.b16 %v5254
        %v5343 = vunpack.c.l.b16 %v5255
        %v5344 = vunpack.c.l.b16 %v5256
        %v5345 = vunpack.c.l.b16 %v5257
        %v5346 = vunpack.c.l.b16 %v5258
        %v5347 = vunpack.c.l.b16 %v5259
        %v5348 = vunpack.c.l.b16 %v5260
        %v5349 = vunpack.c.l.b16 %v5261
        %v5350 = vunpack.c.l.b16 %v5262
        %v5351 = vunpack.c.l.b16 %v5263
        %v5352 = vpack.c.b16 %v5337, %v5336
        %v5353 = vpack.c.b16 %v5339, %v5338
        %v5354 = vpack.c.b16 %v5341, %v5340
        %v5355 = vpack.c.b16 %v5343, %v5342
        %v5356 = vpack.c.b16 %v5345, %v5344
        %v5357 = vpack.c.b16 %v5347, %v5346
        %v5358 = vpack.c.b16 %v5349, %v5348
        %v5359 = vpack.c.b16 %v5351, %v5350
        %5368 = vmatprep.subr.bf16.mxu0 0
        %5369 = vmatpush1.bf16.msra.mxu0 %v5352
        %5370 = vmatprep.subr.bf16.mxu0 0
        %5371 = vmatpush1.bf16.msra.mxu0 %v5353
        %5372 = vmatprep.subr.bf16.mxu0 0
        %5373 = vmatpush1.bf16.msra.mxu0 %v5354
        %5374 = vmatprep.subr.bf16.mxu0 0
        %5375 = vmatpush1.bf16.msra.mxu0 %v5355
        %5376 = vmatprep.subr.bf16.mxu0 0
        %5377 = vmatpush1.bf16.msra.mxu0 %v5356
        %5378 = vmatprep.subr.bf16.mxu0 0
        %5379 = vmatpush1.bf16.msra.mxu0 %v5357
        %5380 = vmatprep.subr.bf16.mxu0 0
        %5381 = vmatpush1.bf16.msra.mxu0 %v5358
        %5382 = vmatprep.subr.bf16.mxu0 0
        %5383 = vmatpush1.bf16.msra.mxu0 %v5359
        %5384 = vmatprep.subr.bf16.mxu0 0
        %5385 = vmatpush1.bf16.msra.mxu0 0
        %5386 = vmatprep.subr.bf16.mxu0 0
        %5387 = vmatpush1.bf16.msra.mxu0 0
        %5388 = vmatprep.subr.bf16.mxu0 0
        %5389 = vmatpush1.bf16.msra.mxu0 0
        %5390 = vmatprep.subr.bf16.mxu0 0
        %5391 = vmatpush1.bf16.msra.mxu0 0
        %5392 = vmatprep.subr.bf16.mxu0 0
        %5393 = vmatpush1.bf16.msra.mxu0 0
        %5394 = vmatprep.subr.bf16.mxu0 0
        %5395 = vmatpush1.bf16.msra.mxu0 0
        %5396 = vmatprep.subr.bf16.mxu0 0
        %5397 = vmatpush1.bf16.msra.mxu0 0
        %5398 = vmatprep.subr.bf16.mxu0 0
        %5399 = vmatpush1.bf16.msra.mxu0 0
        %5400 = vmatprep.mubr.bf16.mxu0 0
        %5401 = vmatmul.mubr.bf16.gmra.mrb[0].mxu0 %v5270
        %v5402 = vpop.f32.mrb[0].mxu0
        %v5403 = vadd.f32 0.0, %v5402
        %v5404 = vpop.f32.mrb[0].mxu0
        %v5405 = vpop.f32.mrb[0].mxu0
        %v5406 = vadd.f32 0.0, %v5405
        %v5407 = vpop.f32.mrb[0].mxu0
        %5408 = vmatprep.mubr.bf16.mxu0 0
        %5409 = vmatmul.mubr.bf16.gmra.mrb[0].mxu0 %v5272
        %v5410 = vpop.f32.mrb[0].mxu0
        %v5411 = vadd.f32 0.0, %v5410
        %v5412 = vpop.f32.mrb[0].mxu0
        %v5413 = vpop.f32.mrb[0].mxu0
        %v5414 = vadd.f32 0.0, %v5413
        %v5415 = vpop.f32.mrb[0].mxu0
        %5416 = vmatprep.mubr.bf16.mxu0 0
        %5417 = vmatmul.mubr.bf16.gmra.mrb[0].mxu0 %v5274
        %v5418 = vpop.f32.mrb[0].mxu0
        %v5419 = vadd.f32 0.0, %v5418
        %v5420 = vpop.f32.mrb[0].mxu0
        %v5421 = vpop.f32.mrb[0].mxu0
        %v5422 = vadd.f32 0.0, %v5421
        %v5423 = vpop.f32.mrb[0].mxu0
        %5424 = vmatprep.mubr.bf16.mxu0 0
        %5425 = vmatmul.mubr.bf16.gmra.mrb[0].mxu0 %v5276
        %v5426 = vpop.f32.mrb[0].mxu0
        %v5427 = vadd.f32 0.0, %v5426
        %v5428 = vpop.f32.mrb[0].mxu0
        %v5429 = vpop.f32.mrb[0].mxu0
        %v5430 = vadd.f32 0.0, %v5429
        %v5431 = vpop.f32.mrb[0].mxu0
        %5432 = vmatprep.mubr.bf16.mxu0 0
        %5433 = vmatmul.mubr.bf16.gmra.mrb[0].mxu0 %v5278
        %v5434 = vpop.f32.mrb[0].mxu0
        %v5435 = vadd.f32 0.0, %v5434
        %v5436 = vpop.f32.mrb[0].mxu0
        %v5437 = vpop.f32.mrb[0].mxu0
        %v5438 = vadd.f32 0.0, %v5437
        %v5439 = vpop.f32.mrb[0].mxu0
        %5440 = vmatprep.mubr.bf16.mxu0 0
        %5441 = vmatmul.mubr.bf16.gmra.mrb[0].mxu0 %v5280
        %v5442 = vpop.f32.mrb[0].mxu0
        %v5443 = vadd.f32 0.0, %v5442
        %v5444 = vpop.f32.mrb[0].mxu0
        %v5445 = vpop.f32.mrb[0].mxu0
        %v5446 = vadd.f32 0.0, %v5445
        %v5447 = vpop.f32.mrb[0].mxu0
        %5448 = vmatprep.mubr.bf16.mxu0 0
        %5449 = vmatmul.mubr.bf16.gmra.mrb[0].mxu0 %v5282
        %v5450 = vpop.f32.mrb[0].mxu0
        %v5451 = vadd.f32 0.0, %v5450
        %v5452 = vpop.f32.mrb[0].mxu0
        %v5453 = vpop.f32.mrb[0].mxu0
        %v5454 = vadd.f32 0.0, %v5453
        %v5455 = vpop.f32.mrb[0].mxu0
        %5456 = vmatprep.mubr.bf16.mxu0 0
        %5457 = vmatmul.mubr.bf16.gmra.mrb[0].mxu0 %v5284
        %v5458 = vpop.f32.mrb[0].mxu0
        %v5459 = vadd.f32 0.0, %v5458
        %v5460 = vpop.f32.mrb[0].mxu0
        %v5461 = vpop.f32.mrb[0].mxu0
        %v5462 = vadd.f32 0.0, %v5461
        %v5463 = vpop.f32.mrb[0].mxu0
        %5464 = vmatprep.mubr.bf16.mxu0 0
        %5465 = vmatmul.mubr.bf16.gmra.mrb[0].mxu0 %v5286
        %v5466 = vpop.f32.mrb[0].mxu0
        %v5467 = vadd.f32 0.0, %v5466
        %v5468 = vpop.f32.mrb[0].mxu0
        %v5469 = vpop.f32.mrb[0].mxu0
        %v5470 = vadd.f32 0.0, %v5469
        %v5471 = vpop.f32.mrb[0].mxu0
        %5472 = vmatprep.mubr.bf16.mxu0 0
        %5473 = vmatmul.mubr.bf16.gmra.mrb[0].mxu0 %v5288
        %v5474 = vpop.f32.mrb[0].mxu0
        %v5475 = vadd.f32 0.0, %v5474
        %v5476 = vpop.f32.mrb[0].mxu0
        %v5477 = vpop.f32.mrb[0].mxu0
        %v5478 = vadd.f32 0.0, %v5477
        %v5479 = vpop.f32.mrb[0].mxu0
        %5480 = vmatprep.mubr.bf16.mxu0 0
        %5481 = vmatmul.mubr.bf16.gmra.mrb[0].mxu0 %v5290
        %v5482 = vpop.f32.mrb[0].mxu0
        %v5483 = vadd.f32 0.0, %v5482
        %v5484 = vpop.f32.mrb[0].mxu0
        %v5485 = vpop.f32.mrb[0].mxu0
        %v5486 = vadd.f32 0.0, %v5485
        %v5487 = vpop.f32.mrb[0].mxu0
        %5488 = vmatprep.mubr.bf16.mxu0 0
        %5489 = vmatmul.mubr.bf16.gmra.mrb[0].mxu0 %v5292
        %v5490 = vpop.f32.mrb[0].mxu0
        %v5491 = vadd.f32 0.0, %v5490
        %v5492 = vpop.f32.mrb[0].mxu0
        %v5493 = vpop.f32.mrb[0].mxu0
        %v5494 = vadd.f32 0.0, %v5493
        %v5495 = vpop.f32.mrb[0].mxu0
        %5496 = vmatprep.mubr.bf16.mxu0 0
        %5497 = vmatmul.mubr.bf16.gmra.mrb[0].mxu0 %v5294
        %v5498 = vpop.f32.mrb[0].mxu0
        %v5499 = vadd.f32 0.0, %v5498
        %v5500 = vpop.f32.mrb[0].mxu0
        %v5501 = vpop.f32.mrb[0].mxu0
        %v5502 = vadd.f32 0.0, %v5501
        %v5503 = vpop.f32.mrb[0].mxu0
        %5504 = vmatprep.mubr.bf16.mxu0 0
        %5505 = vmatmul.mubr.bf16.gmra.mrb[0].mxu0 %v5296
        %v5506 = vpop.f32.mrb[0].mxu0
        %v5507 = vadd.f32 0.0, %v5506
        %v5508 = vpop.f32.mrb[0].mxu0
        %v5509 = vpop.f32.mrb[0].mxu0
        %v5510 = vadd.f32 0.0, %v5509
        %v5511 = vpop.f32.mrb[0].mxu0
        %5512 = vmatprep.mubr.bf16.mxu0 0
        %5513 = vmatmul.mubr.bf16.gmra.mrb[0].mxu0 %v5298
        %v5514 = vpop.f32.mrb[0].mxu0
        %v5515 = vadd.f32 0.0, %v5514
        %v5516 = vpop.f32.mrb[0].mxu0
        %v5517 = vpop.f32.mrb[0].mxu0
        %v5518 = vadd.f32 0.0, %v5517
        %v5519 = vpop.f32.mrb[0].mxu0
        %5520 = vmatprep.mubr.bf16.mxu0 0
        %5521 = vmatmul.mubr.bf16.gmra.mrb[0].mxu0 %v5300
        %v5522 = vpop.f32.mrb[0].mxu0
        %v5523 = vadd.f32 0.0, %v5522
        %v5524 = vpop.f32.mrb[0].mxu0
        %v5525 = vpop.f32.mrb[0].mxu0
        %v5526 = vadd.f32 0.0, %v5525
        %v5527 = vpop.f32.mrb[0].mxu0
        %5528 = vmatprep.mubr.bf16.mxu0 0
        %5529 = vmatmul.mubr.bf16.gmra.mrb[0].mxu0 %v5302
        %v5530 = vpop.f32.mrb[0].mxu0
        %v5531 = vadd.f32 0.0, %v5530
        %v5532 = vpop.f32.mrb[0].mxu0
        %v5533 = vpop.f32.mrb[0].mxu0
        %v5534 = vadd.f32 0.0, %v5533
        %v5535 = vpop.f32.mrb[0].mxu0
        %5536 = vdwg.mxu0
        %v5537 = vadd.f32 %v5212, %v5403
        %v5538 = vadd.f32 %v5213, %v5406
        %v5539 = vadd.f32 %v5214, %v5411
        %v5540 = vadd.f32 %v5215, %v5414
        %v5541 = vadd.f32 %v5216, %v5419
        %v5542 = vadd.f32 %v5217, %v5422
        %v5543 = vadd.f32 %v5218, %v5427
        %v5544 = vadd.f32 %v5219, %v5430
        %v5545 = vadd.f32 %v5220, %v5435
        %v5546 = vadd.f32 %v5221, %v5438
        %v5547 = vadd.f32 %v5222, %v5443
        %v5548 = vadd.f32 %v5223, %v5446
        %v5549 = vadd.f32 %v5224, %v5451
        %v5550 = vadd.f32 %v5225, %v5454
        %v5551 = vadd.f32 %v5226, %v5459
        %v5552 = vadd.f32 %v5227, %v5462
        %v5553 = vadd.f32 %v5228, %v5467
        %v5554 = vadd.f32 %v5229, %v5470
        %v5555 = vadd.f32 %v5230, %v5475
        %v5556 = vadd.f32 %v5231, %v5478
        %v5557 = vadd.f32 %v5232, %v5483
        %v5558 = vadd.f32 %v5233, %v5486
        %v5559 = vadd.f32 %v5234, %v5491
        %v5560 = vadd.f32 %v5235, %v5494
        %v5561 = vadd.f32 %v5236, %v5499
        %v5562 = vadd.f32 %v5237, %v5502
        %v5563 = vadd.f32 %v5238, %v5507
        %v5564 = vadd.f32 %v5239, %v5510
        %v5565 = vadd.f32 %v5240, %v5515
        %v5566 = vadd.f32 %v5241, %v5518
        %v5567 = vadd.f32 %v5242, %v5523
        %v5568 = vadd.f32 %v5243, %v5526
        %v5569 = vadd.f32 %v5244, %v5531
        %v5570 = vadd.f32 %v5245, %v5534
        %v5571 = vmax.f32 %v5537, 0.0
        %v5572 = vmax.f32 %v5538, 0.0
        %v5573 = vmax.f32 %v5539, 0.0
        %v5574 = vmax.f32 %v5540, 0.0
        %v5575 = vmax.f32 %v5541, 0.0
        %v5576 = vmax.f32 %v5542, 0.0
        %v5577 = vmax.f32 %v5543, 0.0
        %v5578 = vmax.f32 %v5544, 0.0
        %v5579 = vmax.f32 %v5545, 0.0
        %v5580 = vmax.f32 %v5546, 0.0
        %v5581 = vmax.f32 %v5547, 0.0
        %v5582 = vmax.f32 %v5548, 0.0
        %v5583 = vmax.f32 %v5549, 0.0
        %v5584 = vmax.f32 %v5550, 0.0
        %v5585 = vmax.f32 %v5551, 0.0
        %v5586 = vmax.f32 %v5552, 0.0
        %v5587 = vmax.f32 %v5553, 0.0
        %v5588 = vmax.f32 %v5554, 0.0
        %v5589 = vmax.f32 %v5555, 0.0
        %v5590 = vmax.f32 %v5556, 0.0
        %v5591 = vmax.f32 %v5557, 0.0
        %v5592 = vmax.f32 %v5558, 0.0
        %v5593 = vmax.f32 %v5559, 0.0
        %v5594 = vmax.f32 %v5560, 0.0
        %v5595 = vmax.f32 %v5561, 0.0
        %v5596 = vmax.f32 %v5562, 0.0
        %v5597 = vmax.f32 %v5563, 0.0
        %v5598 = vmax.f32 %v5564, 0.0
        %v5599 = vmax.f32 %v5565, 0.0
        %v5600 = vmax.f32 %v5566, 0.0
        %v5601 = vmax.f32 %v5567, 0.0
        %v5602 = vmax.f32 %v5568, 0.0
        %v5603 = vmax.f32 %v5569, 0.0
        %v5604 = vmax.f32 %v5570, 0.0
        %v5605 = vsel %vm1637, 1, 0
        %v5606 = vsel %vm1638, 1, 0
        %v5607 = vsel %vm1639, 1, 0
        %v5608 = vsel %vm1640, 1, 0
        %v5609 = vsel %vm1641, 1, 0
        %v5610 = vsel %vm1642, 1, 0
        %v5611 = vsel %vm1643, 1, 0
        %v5612 = vsel %vm1644, 1, 0
        %v5613 = vsel %vm1645, 1, 0
        %v5614 = vsel %vm1646, 1, 0
        %v5615 = vsel %vm1647, 1, 0
        %v5616 = vsel %vm1648, 1, 0
        %v5617 = vsel %vm1649, 1, 0
        %v5618 = vsel %vm1650, 1, 0
        %v5619 = vsel %vm1651, 1, 0
        %v5620 = vsel %vm1652, 1, 0
        %v5621 = vsel %vm1653, 1, 0
        %v5622 = vsel %vm1654, 1, 0
        %v5623 = vsel %vm1655, 1, 0
        %v5624 = vsel %vm1656, 1, 0
        %v5625 = vsel %vm1657, 1, 0
        %v5626 = vsel %vm1658, 1, 0
        %v5627 = vsel %vm1659, 1, 0
        %v5628 = vsel %vm1660, 1, 0
        %v5629 = vsel %vm1661, 1, 0
        %v5630 = vsel %vm1662, 1, 0
        %v5631 = vsel %vm1663, 1, 0
        %v5632 = vsel %vm1664, 1, 0
        %v5633 = vsel %vm1665, 1, 0
        %v5634 = vsel %vm1666, 1, 0
        %v5635 = vsel %vm1667, 1, 0
        %v5636 = vsel %vm1668, 1, 0
        %v5637 = vsel %vm1669, 1, 0
        %v5638 = vsel %vm1670, 1, 0
        %vm5639 = vcmp.eq.s32.totalorder %v5605, 1
        %vm5640 = vcmp.eq.s32.totalorder %v5606, 1
        %vm5641 = vcmp.eq.s32.totalorder %v5607, 1
        %vm5642 = vcmp.eq.s32.totalorder %v5608, 1
        %vm5643 = vcmp.eq.s32.totalorder %v5609, 1
        %vm5644 = vcmp.eq.s32.totalorder %v5610, 1
        %vm5645 = vcmp.eq.s32.totalorder %v5611, 1
        %vm5646 = vcmp.eq.s32.totalorder %v5612, 1
        %vm5647 = vcmp.eq.s32.totalorder %v5613, 1
        %vm5648 = vcmp.eq.s32.totalorder %v5614, 1
        %vm5649 = vcmp.eq.s32.totalorder %v5615, 1
        %vm5650 = vcmp.eq.s32.totalorder %v5616, 1
        %vm5651 = vcmp.eq.s32.totalorder %v5617, 1
        %vm5652 = vcmp.eq.s32.totalorder %v5618, 1
        %vm5653 = vcmp.eq.s32.totalorder %v5619, 1
        %vm5654 = vcmp.eq.s32.totalorder %v5620, 1
        %vm5655 = vcmp.eq.s32.totalorder %v5621, 1
        %vm5656 = vcmp.eq.s32.totalorder %v5622, 1
        %vm5657 = vcmp.eq.s32.totalorder %v5623, 1
        %vm5658 = vcmp.eq.s32.totalorder %v5624, 1
        %vm5659 = vcmp.eq.s32.totalorder %v5625, 1
        %vm5660 = vcmp.eq.s32.totalorder %v5626, 1
        %vm5661 = vcmp.eq.s32.totalorder %v5627, 1
        %vm5662 = vcmp.eq.s32.totalorder %v5628, 1
        %vm5663 = vcmp.eq.s32.totalorder %v5629, 1
        %vm5664 = vcmp.eq.s32.totalorder %v5630, 1
        %vm5665 = vcmp.eq.s32.totalorder %v5631, 1
        %vm5666 = vcmp.eq.s32.totalorder %v5632, 1
        %vm5667 = vcmp.eq.s32.totalorder %v5633, 1
        %vm5668 = vcmp.eq.s32.totalorder %v5634, 1
        %vm5669 = vcmp.eq.s32.totalorder %v5635, 1
        %vm5670 = vcmp.eq.s32.totalorder %v5636, 1
        %vm5671 = vcmp.eq.s32.totalorder %v5637, 1
        %vm5672 = vcmp.eq.s32.totalorder %v5638, 1
        %v5673 = vsel %vm5639, %v5571, 0.0
        %v5674 = vsel %vm5640, %v5572, 0.0
        %v5675 = vsel %vm5641, %v5573, 0.0
        %v5676 = vsel %vm5642, %v5574, 0.0
        %v5677 = vsel %vm5643, %v5575, 0.0
        %v5678 = vsel %vm5644, %v5576, 0.0
        %v5679 = vsel %vm5645, %v5577, 0.0
        %v5680 = vsel %vm5646, %v5578, 0.0
        %v5681 = vsel %vm5647, %v5579, 0.0
        %v5682 = vsel %vm5648, %v5580, 0.0
        %v5683 = vsel %vm5649, %v5581, 0.0
        %v5684 = vsel %vm5650, %v5582, 0.0
        %v5685 = vsel %vm5651, %v5583, 0.0
        %v5686 = vsel %vm5652, %v5584, 0.0
        %v5687 = vsel %vm5653, %v5585, 0.0
        %v5688 = vsel %vm5654, %v5586, 0.0
        %v5689 = vsel %vm5655, %v5587, 0.0
        %v5690 = vsel %vm5656, %v5588, 0.0
        %v5691 = vsel %vm5657, %v5589, 0.0
        %v5692 = vsel %vm5658, %v5590, 0.0
        %v5693 = vsel %vm5659, %v5591, 0.0
        %v5694 = vsel %vm5660, %v5592, 0.0
        %v5695 = vsel %vm5661, %v5593, 0.0
        %v5696 = vsel %vm5662, %v5594, 0.0
        %v5697 = vsel %vm5663, %v5595, 0.0
        %v5698 = vsel %vm5664, %v5596, 0.0
        %v5699 = vsel %vm5665, %v5597, 0.0
        %v5700 = vsel %vm5666, %v5598, 0.0
        %v5701 = vsel %vm5667, %v5599, 0.0
        %v5702 = vsel %vm5668, %v5600, 0.0
        %v5703 = vsel %vm5669, %v5601, 0.0
        %v5704 = vsel %vm5670, %v5602, 0.0
        %v5705 = vsel %vm5671, %v5603, 0.0
        %v5706 = vsel %vm5672, %v5604, 0.0
        %v5707 = vpack.c.bf16 %v5674, %v5673
        %v5708 = vpack.c.bf16 %v5676, %v5675
        %v5709 = vpack.c.bf16 %v5678, %v5677
        %v5710 = vpack.c.bf16 %v5680, %v5679
        %v5711 = vpack.c.bf16 %v5682, %v5681
        %v5712 = vpack.c.bf16 %v5684, %v5683
        %v5713 = vpack.c.bf16 %v5686, %v5685
        %v5714 = vpack.c.bf16 %v5688, %v5687
        %v5715 = vpack.c.bf16 %v5690, %v5689
        %v5716 = vpack.c.bf16 %v5692, %v5691
        %v5717 = vpack.c.bf16 %v5694, %v5693
        %v5718 = vpack.c.bf16 %v5696, %v5695
        %v5719 = vpack.c.bf16 %v5698, %v5697
        %v5720 = vpack.c.bf16 %v5700, %v5699
        %v5721 = vpack.c.bf16 %v5702, %v5701
        %v5722 = vpack.c.bf16 %v5704, %v5703
        %v5723 = vpack.c.bf16 %v5706, %v5705
        %5724 = vst [vmem:[#allocation2] sm:$0xff] 0
        %5725 = vst [vmem:[#allocation2 + $0x8] sm:$0xff] 0
        %5726 = vst [vmem:[#allocation2 + $0x98] sm:$0xff] 0
        %5727 = vst [vmem:[#allocation2 + $0xa0] sm:$0xff] 0
        %5728 = vst [vmem:[#allocation2 + $0x10] sm:$0xff] %v5707
        %5729 = vst [vmem:[#allocation2 + $0x18] sm:$0xff] %v5708
        %5730 = vst [vmem:[#allocation2 + $0x20] sm:$0xff] %v5709
        %5731 = vst [vmem:[#allocation2 + $0x28] sm:$0xff] %v5710
        %5732 = vst [vmem:[#allocation2 + $0x30] sm:$0xff] %v5711
        %5733 = vst [vmem:[#allocation2 + $0x38] sm:$0xff] %v5712
        %5734 = vst [vmem:[#allocation2 + $0x40] sm:$0xff] %v5713
        %5735 = vst [vmem:[#allocation2 + $0x48] sm:$0xff] %v5714
        %5736 = vst [vmem:[#allocation2 + $0x50] sm:$0xff] %v5715
        %5737 = vst [vmem:[#allocation2 + $0x58] sm:$0xff] %v5716
        %5738 = vst [vmem:[#allocation2 + $0x60] sm:$0xff] %v5717
        %5739 = vst [vmem:[#allocation2 + $0x68] sm:$0xff] %v5718
        %5740 = vst [vmem:[#allocation2 + $0x70] sm:$0xff] %v5719
        %5741 = vst [vmem:[#allocation2 + $0x78] sm:$0xff] %v5720
        %5742 = vst [vmem:[#allocation2 + $0x80] sm:$0xff] %v5721
        %5743 = vst [vmem:[#allocation2 + $0x88] sm:$0xff] %v5722
        %5744 = vst [vmem:[#allocation2 + $0x90] sm:$0xff] %v5723
        %v5745 = vld [vmem:[%s298 + $0x10] sm:$0xf]
        %v5746 = vld [vmem:[%s298 + $0x14] sm:$0xf]
        %v5747 = vld [vmem:[%s298 + $0x18] sm:$0xf]
        %v5748 = vld [vmem:[%s298 + $0x1c] sm:$0xf]
        %v5749 = vld [vmem:[%s298 + $0x20] sm:$0xf]
        %v5750 = vld [vmem:[%s298 + $0x24] sm:$0xf]
        %v5751 = vld [vmem:[%s298 + $0x28] sm:$0xf]
        %v5752 = vld [vmem:[%s298 + $0x2c] sm:$0xf]
        %v5753 = vld [vmem:[%s298 + $0x30] sm:$0xf]
        %v5754 = vld [vmem:[%s298 + $0x34] sm:$0xf]
        %v5755 = vld [vmem:[%s298 + $0x38] sm:$0xf]
        %v5756 = vld [vmem:[%s298 + $0x3c] sm:$0xf]
        %v5757 = vld [vmem:[%s298 + $0x40] sm:$0xf]
        %v5758 = vld [vmem:[%s298 + $0x44] sm:$0xf]
        %v5759 = vld [vmem:[%s298 + $0x48] sm:$0xf]
        %v5760 = vld [vmem:[%s298 + $0x4c] sm:$0xf]
        %v5761 = vld [vmem:[%s298 + $0x50] sm:$0xf]
        %v5762 = vld [vmem:[%s298 + $0x54] sm:$0xf]
        %v5763 = vld [vmem:[%s298 + $0x58] sm:$0xf]
        %v5764 = vld [vmem:[%s298 + $0x5c] sm:$0xf]
        %v5765 = vld [vmem:[%s298 + $0x60] sm:$0xf]
        %v5766 = vld [vmem:[%s298 + $0x64] sm:$0xf]
        %v5767 = vld [vmem:[%s298 + $0x68] sm:$0xf]
        %v5768 = vld [vmem:[%s298 + $0x6c] sm:$0xf]
        %v5769 = vld [vmem:[%s298 + $0x70] sm:$0xf]
        %v5770 = vld [vmem:[%s298 + $0x74] sm:$0xf]
        %v5771 = vld [vmem:[%s298 + $0x78] sm:$0xf]
        %v5772 = vld [vmem:[%s298 + $0x7c] sm:$0xf]
        %v5773 = vld [vmem:[%s298 + $0x80] sm:$0xf]
        %v5774 = vld [vmem:[%s298 + $0x84] sm:$0xf]
        %v5775 = vld [vmem:[%s298 + $0x88] sm:$0xf]
        %v5776 = vld [vmem:[%s298 + $0x8c] sm:$0xf]
        %v5777 = vld [vmem:[%s298 + $0x90] sm:$0xf]
        %v5778 = vld [vmem:[%s298 + $0x94] sm:$0xf]
        %v5779 = vld [vmem:[#allocation9] sm:$0xf]
        %v5780 = vld [vmem:[#allocation9 + $0x4] sm:$0xf]
        %v5781 = vld [vmem:[#allocation9 + $0x8] sm:$0xf]
        %v5782 = vld [vmem:[#allocation9 + $0xc] sm:$0xf]
        %v5783 = vld [vmem:[#allocation9 + $0x10] sm:$0xf]
        %v5784 = vld [vmem:[#allocation9 + $0x14] sm:$0xf]
        %v5785 = vld [vmem:[#allocation9 + $0x18] sm:$0xf]
        %v5786 = vld [vmem:[#allocation9 + $0x1c] sm:$0xf]
        %v5787 = vld [vmem:[#allocation9 + $0x20] sm:$0xf]
        %v5788 = vld [vmem:[#allocation9 + $0x24] sm:$0xf]
        %v5789 = vld [vmem:[#allocation9 + $0x28] sm:$0xf]
        %v5790 = vld [vmem:[#allocation9 + $0x2c] sm:$0xf]
        %v5791 = vld [vmem:[#allocation9 + $0x30] sm:$0xf]
        %v5792 = vld [vmem:[#allocation9 + $0x34] sm:$0xf]
        %v5793 = vld [vmem:[#allocation9 + $0x38] sm:$0xf]
        %v5794 = vld [vmem:[#allocation9 + $0x3c] sm:$0xf]
        %v5795 = vld [vmem:[%s6] sm:$0x1]
        %v5797 = vlaneseq
        %v5798 = vshrl.u32 %v5797, 7
        %v5799 = vsub.s32 0, %v5798
        %v5800 = vrot.slane %v5795, %v5799
        %v5836 = vunpack.c.l.b16 %v5745
        %v5837 = vunpack.c.l.b16 %v5746
        %v5838 = vunpack.c.l.b16 %v5747
        %v5839 = vunpack.c.l.b16 %v5748
        %v5840 = vunpack.c.l.b16 %v5749
        %v5841 = vunpack.c.l.b16 %v5750
        %v5842 = vunpack.c.l.b16 %v5751
        %v5843 = vunpack.c.l.b16 %v5752
        %v5844 = vunpack.c.l.b16 %v5753
        %v5845 = vunpack.c.l.b16 %v5754
        %v5846 = vunpack.c.l.b16 %v5755
        %v5847 = vunpack.c.l.b16 %v5756
        %v5848 = vunpack.c.l.b16 %v5757
        %v5849 = vunpack.c.l.b16 %v5758
        %v5850 = vunpack.c.l.b16 %v5759
        %v5851 = vunpack.c.l.b16 %v5760
        %v5852 = vunpack.c.l.b16 %v5761
        %v5853 = vunpack.c.l.b16 %v5762
        %v5854 = vunpack.c.l.b16 %v5763
        %v5855 = vunpack.c.l.b16 %v5764
        %v5856 = vunpack.c.l.b16 %v5765
        %v5857 = vunpack.c.l.b16 %v5766
        %v5858 = vunpack.c.l.b16 %v5767
        %v5859 = vunpack.c.l.b16 %v5768
        %v5860 = vunpack.c.l.b16 %v5769
        %v5861 = vunpack.c.l.b16 %v5770
        %v5862 = vunpack.c.l.b16 %v5771
        %v5863 = vunpack.c.l.b16 %v5772
        %v5864 = vunpack.c.l.b16 %v5773
        %v5865 = vunpack.c.l.b16 %v5774
        %v5866 = vunpack.c.l.b16 %v5775
        %v5867 = vunpack.c.l.b16 %v5776
        %v5868 = vunpack.c.l.b16 %v5777
        %v5869 = vunpack.c.l.b16 %v5778
        %v5870 = vpack.c.b16 %v5837, %v5836
        %v5871 = vpack.c.b16 %v5839, %v5838
        %v5872 = vpack.c.b16 %v5841, %v5840
        %v5873 = vpack.c.b16 %v5843, %v5842
        %v5874 = vpack.c.b16 %v5845, %v5844
        %v5875 = vpack.c.b16 %v5847, %v5846
        %v5876 = vpack.c.b16 %v5849, %v5848
        %v5877 = vpack.c.b16 %v5851, %v5850
        %v5878 = vpack.c.b16 %v5853, %v5852
        %v5879 = vpack.c.b16 %v5855, %v5854
        %v5880 = vpack.c.b16 %v5857, %v5856
        %v5881 = vpack.c.b16 %v5859, %v5858
        %v5882 = vpack.c.b16 %v5861, %v5860
        %v5883 = vpack.c.b16 %v5863, %v5862
        %v5884 = vpack.c.b16 %v5865, %v5864
        %v5885 = vpack.c.b16 %v5867, %v5866
        %v5886 = vpack.c.b16 %v5869, %v5868
        %v5920 = vunpack.c.l.b16 %v5779
        %v5921 = vunpack.c.l.b16 %v5780
        %v5922 = vunpack.c.l.b16 %v5781
        %v5923 = vunpack.c.l.b16 %v5782
        %v5924 = vunpack.c.l.b16 %v5783
        %v5925 = vunpack.c.l.b16 %v5784
        %v5926 = vunpack.c.l.b16 %v5785
        %v5927 = vunpack.c.l.b16 %v5786
        %v5928 = vunpack.c.l.b16 %v5787
        %v5929 = vunpack.c.l.b16 %v5788
        %v5930 = vunpack.c.l.b16 %v5789
        %v5931 = vunpack.c.l.b16 %v5790
        %v5932 = vunpack.c.l.b16 %v5791
        %v5933 = vunpack.c.l.b16 %v5792
        %v5934 = vunpack.c.l.b16 %v5793
        %v5935 = vunpack.c.l.b16 %v5794
        %v5936 = vpack.c.b16 %v5921, %v5920
        %v5937 = vpack.c.b16 %v5923, %v5922
        %v5938 = vpack.c.b16 %v5925, %v5924
        %v5939 = vpack.c.b16 %v5927, %v5926
        %v5940 = vpack.c.b16 %v5929, %v5928
        %v5941 = vpack.c.b16 %v5931, %v5930
        %v5942 = vpack.c.b16 %v5933, %v5932
        %v5943 = vpack.c.b16 %v5935, %v5934
        %5952 = vmatprep.subr.bf16.mxu0 0
        %5953 = vmatpush1.bf16.msra.mxu0 %v5936
        %5954 = vmatprep.subr.bf16.mxu0 0
        %5955 = vmatpush1.bf16.msra.mxu0 %v5937
        %5956 = vmatprep.subr.bf16.mxu0 0
        %5957 = vmatpush1.bf16.msra.mxu0 %v5938
        %5958 = vmatprep.subr.bf16.mxu0 0
        %5959 = vmatpush1.bf16.msra.mxu0 %v5939
        %5960 = vmatprep.subr.bf16.mxu0 0
        %5961 = vmatpush1.bf16.msra.mxu0 %v5940
        %5962 = vmatprep.subr.bf16.mxu0 0
        %5963 = vmatpush1.bf16.msra.mxu0 %v5941
        %5964 = vmatprep.subr.bf16.mxu0 0
        %5965 = vmatpush1.bf16.msra.mxu0 %v5942
        %5966 = vmatprep.subr.bf16.mxu0 0
        %5967 = vmatpush1.bf16.msra.mxu0 %v5943
        %5968 = vmatprep.subr.bf16.mxu0 0
        %5969 = vmatpush1.bf16.msra.mxu0 0
        %5970 = vmatprep.subr.bf16.mxu0 0
        %5971 = vmatpush1.bf16.msra.mxu0 0
        %5972 = vmatprep.subr.bf16.mxu0 0
        %5973 = vmatpush1.bf16.msra.mxu0 0
        %5974 = vmatprep.subr.bf16.mxu0 0
        %5975 = vmatpush1.bf16.msra.mxu0 0
        %5976 = vmatprep.subr.bf16.mxu0 0
        %5977 = vmatpush1.bf16.msra.mxu0 0
        %5978 = vmatprep.subr.bf16.mxu0 0
        %5979 = vmatpush1.bf16.msra.mxu0 0
        %5980 = vmatprep.subr.bf16.mxu0 0
        %5981 = vmatpush1.bf16.msra.mxu0 0
        %5982 = vmatprep.subr.bf16.mxu0 0
        %5983 = vmatpush1.bf16.msra.mxu0 0
        %5984 = vmatprep.mubr.bf16.mxu0 0
        %5985 = vmatmul.mubr.bf16.gmra.mrb[0].mxu0 %v5870
        %v5986 = vpop.f32.mrb[0].mxu0
        %v5987 = vadd.f32 %v5800, %v5986
        %v5988 = vpop.f32.mrb[0].mxu0
        %v5989 = vpop.f32.mrb[0].mxu0
        %v5990 = vadd.f32 %v5800, %v5989
        %v5991 = vpop.f32.mrb[0].mxu0
        %5992 = vmatprep.mubr.bf16.mxu0 0
        %5993 = vmatmul.mubr.bf16.gmra.mrb[0].mxu0 %v5871
        %v5994 = vpop.f32.mrb[0].mxu0
        %v5995 = vadd.f32 %v5800, %v5994
        %v5996 = vpop.f32.mrb[0].mxu0
        %v5997 = vpop.f32.mrb[0].mxu0
        %v5998 = vadd.f32 %v5800, %v5997
        %v5999 = vpop.f32.mrb[0].mxu0
        %6000 = vmatprep.mubr.bf16.mxu0 0
        %6001 = vmatmul.mubr.bf16.gmra.mrb[0].mxu0 %v5872
        %v6002 = vpop.f32.mrb[0].mxu0
        %v6003 = vadd.f32 %v5800, %v6002
        %v6004 = vpop.f32.mrb[0].mxu0
        %v6005 = vpop.f32.mrb[0].mxu0
        %v6006 = vadd.f32 %v5800, %v6005
        %v6007 = vpop.f32.mrb[0].mxu0
        %6008 = vmatprep.mubr.bf16.mxu0 0
        %6009 = vmatmul.mubr.bf16.gmra.mrb[0].mxu0 %v5873
        %v6010 = vpop.f32.mrb[0].mxu0
        %v6011 = vadd.f32 %v5800, %v6010
        %v6012 = vpop.f32.mrb[0].mxu0
        %v6013 = vpop.f32.mrb[0].mxu0
        %v6014 = vadd.f32 %v5800, %v6013
        %v6015 = vpop.f32.mrb[0].mxu0
        %6016 = vmatprep.mubr.bf16.mxu0 0
        %6017 = vmatmul.mubr.bf16.gmra.mrb[0].mxu0 %v5874
        %v6018 = vpop.f32.mrb[0].mxu0
        %v6019 = vadd.f32 %v5800, %v6018
        %v6020 = vpop.f32.mrb[0].mxu0
        %v6021 = vpop.f32.mrb[0].mxu0
        %v6022 = vadd.f32 %v5800, %v6021
        %v6023 = vpop.f32.mrb[0].mxu0
        %6024 = vmatprep.mubr.bf16.mxu0 0
        %6025 = vmatmul.mubr.bf16.gmra.mrb[0].mxu0 %v5875
        %v6026 = vpop.f32.mrb[0].mxu0
        %v6027 = vadd.f32 %v5800, %v6026
        %v6028 = vpop.f32.mrb[0].mxu0
        %v6029 = vpop.f32.mrb[0].mxu0
        %v6030 = vadd.f32 %v5800, %v6029
        %v6031 = vpop.f32.mrb[0].mxu0
        %6032 = vmatprep.mubr.bf16.mxu0 0
        %6033 = vmatmul.mubr.bf16.gmra.mrb[0].mxu0 %v5876
        %v6034 = vpop.f32.mrb[0].mxu0
        %v6035 = vadd.f32 %v5800, %v6034
        %v6036 = vpop.f32.mrb[0].mxu0
        %v6037 = vpop.f32.mrb[0].mxu0
        %v6038 = vadd.f32 %v5800, %v6037
        %v6039 = vpop.f32.mrb[0].mxu0
        %6040 = vmatprep.mubr.bf16.mxu0 0
        %6041 = vmatmul.mubr.bf16.gmra.mrb[0].mxu0 %v5877
        %v6042 = vpop.f32.mrb[0].mxu0
        %v6043 = vadd.f32 %v5800, %v6042
        %v6044 = vpop.f32.mrb[0].mxu0
        %v6045 = vpop.f32.mrb[0].mxu0
        %v6046 = vadd.f32 %v5800, %v6045
        %v6047 = vpop.f32.mrb[0].mxu0
        %6048 = vmatprep.mubr.bf16.mxu0 0
        %6049 = vmatmul.mubr.bf16.gmra.mrb[0].mxu0 %v5878
        %v6050 = vpop.f32.mrb[0].mxu0
        %v6051 = vadd.f32 %v5800, %v6050
        %v6052 = vpop.f32.mrb[0].mxu0
        %v6053 = vpop.f32.mrb[0].mxu0
        %v6054 = vadd.f32 %v5800, %v6053
        %v6055 = vpop.f32.mrb[0].mxu0
        %6056 = vmatprep.mubr.bf16.mxu0 0
        %6057 = vmatmul.mubr.bf16.gmra.mrb[0].mxu0 %v5879
        %v6058 = vpop.f32.mrb[0].mxu0
        %v6059 = vadd.f32 %v5800, %v6058
        %v6060 = vpop.f32.mrb[0].mxu0
        %v6061 = vpop.f32.mrb[0].mxu0
        %v6062 = vadd.f32 %v5800, %v6061
        %v6063 = vpop.f32.mrb[0].mxu0
        %6064 = vmatprep.mubr.bf16.mxu0 0
        %6065 = vmatmul.mubr.bf16.gmra.mrb[0].mxu0 %v5880
        %v6066 = vpop.f32.mrb[0].mxu0
        %v6067 = vadd.f32 %v5800, %v6066
        %v6068 = vpop.f32.mrb[0].mxu0
        %v6069 = vpop.f32.mrb[0].mxu0
        %v6070 = vadd.f32 %v5800, %v6069
        %v6071 = vpop.f32.mrb[0].mxu0
        %6072 = vmatprep.mubr.bf16.mxu0 0
        %6073 = vmatmul.mubr.bf16.gmra.mrb[0].mxu0 %v5881
        %v6074 = vpop.f32.mrb[0].mxu0
        %v6075 = vadd.f32 %v5800, %v6074
        %v6076 = vpop.f32.mrb[0].mxu0
        %v6077 = vpop.f32.mrb[0].mxu0
        %v6078 = vadd.f32 %v5800, %v6077
        %v6079 = vpop.f32.mrb[0].mxu0
        %6080 = vmatprep.mubr.bf16.mxu0 0
        %6081 = vmatmul.mubr.bf16.gmra.mrb[0].mxu0 %v5882
        %v6082 = vpop.f32.mrb[0].mxu0
        %v6083 = vadd.f32 %v5800, %v6082
        %v6084 = vpop.f32.mrb[0].mxu0
        %v6085 = vpop.f32.mrb[0].mxu0
        %v6086 = vadd.f32 %v5800, %v6085
        %v6087 = vpop.f32.mrb[0].mxu0
        %6088 = vmatprep.mubr.bf16.mxu0 0
        %6089 = vmatmul.mubr.bf16.gmra.mrb[0].mxu0 %v5883
        %v6090 = vpop.f32.mrb[0].mxu0
        %v6091 = vadd.f32 %v5800, %v6090
        %v6092 = vpop.f32.mrb[0].mxu0
        %v6093 = vpop.f32.mrb[0].mxu0
        %v6094 = vadd.f32 %v5800, %v6093
        %v6095 = vpop.f32.mrb[0].mxu0
        %6096 = vmatprep.mubr.bf16.mxu0 0
        %6097 = vmatmul.mubr.bf16.gmra.mrb[0].mxu0 %v5884
        %v6098 = vpop.f32.mrb[0].mxu0
        %v6099 = vadd.f32 %v5800, %v6098
        %v6100 = vpop.f32.mrb[0].mxu0
        %v6101 = vpop.f32.mrb[0].mxu0
        %v6102 = vadd.f32 %v5800, %v6101
        %v6103 = vpop.f32.mrb[0].mxu0
        %6104 = vmatprep.mubr.bf16.mxu0 0
        %6105 = vmatmul.mubr.bf16.gmra.mrb[0].mxu0 %v5885
        %v6106 = vpop.f32.mrb[0].mxu0
        %v6107 = vadd.f32 %v5800, %v6106
        %v6108 = vpop.f32.mrb[0].mxu0
        %v6109 = vpop.f32.mrb[0].mxu0
        %v6110 = vadd.f32 %v5800, %v6109
        %v6111 = vpop.f32.mrb[0].mxu0
        %6112 = vmatprep.mubr.bf16.mxu0 0
        %6113 = vmatmul.mubr.bf16.gmra.mrb[0].mxu0 %v5886
        %v6114 = vpop.f32.mrb[0].mxu0
        %v6115 = vadd.f32 %v5800, %v6114
        %v6116 = vpop.f32.mrb[0].mxu0
        %v6117 = vpop.f32.mrb[0].mxu0
        %v6118 = vadd.f32 %v5800, %v6117
        %v6119 = vpop.f32.mrb[0].mxu0
        %6120 = vdwg.mxu0
        %v6121 = vld [vmem:[%s4] sm:$0x1]
        %v6123 = vlaneseq
        %v6124 = vshrl.u32 %v6123, 7
        %v6125 = vsub.s32 0, %v6124
        %v6126 = vrot.slane %v6121, %v6125
        %v6128 = vadd.f32 %v5987, %v6126
        %v6129 = vadd.f32 %v5990, %v6126
        %v6130 = vadd.f32 %v5995, %v6126
        %v6131 = vadd.f32 %v5998, %v6126
        %v6132 = vadd.f32 %v6003, %v6126
        %v6133 = vadd.f32 %v6006, %v6126
        %v6134 = vadd.f32 %v6011, %v6126
        %v6135 = vadd.f32 %v6014, %v6126
        %v6136 = vadd.f32 %v6019, %v6126
        %v6137 = vadd.f32 %v6022, %v6126
        %v6138 = vadd.f32 %v6027, %v6126
        %v6139 = vadd.f32 %v6030, %v6126
        %v6140 = vadd.f32 %v6035, %v6126
        %v6141 = vadd.f32 %v6038, %v6126
        %v6142 = vadd.f32 %v6043, %v6126
        %v6143 = vadd.f32 %v6046, %v6126
        %v6144 = vadd.f32 %v6051, %v6126
        %v6145 = vadd.f32 %v6054, %v6126
        %v6146 = vadd.f32 %v6059, %v6126
        %v6147 = vadd.f32 %v6062, %v6126
        %v6148 = vadd.f32 %v6067, %v6126
        %v6149 = vadd.f32 %v6070, %v6126
        %v6150 = vadd.f32 %v6075, %v6126
        %v6151 = vadd.f32 %v6078, %v6126
        %v6152 = vadd.f32 %v6083, %v6126
        %v6153 = vadd.f32 %v6086, %v6126
        %v6154 = vadd.f32 %v6091, %v6126
        %v6155 = vadd.f32 %v6094, %v6126
        %v6156 = vadd.f32 %v6099, %v6126
        %v6157 = vadd.f32 %v6102, %v6126
        %v6158 = vadd.f32 %v6107, %v6126
        %v6159 = vadd.f32 %v6110, %v6126
        %v6160 = vadd.f32 %v6115, %v6126
        %v6161 = vadd.f32 %v6118, %v6126
        %v6162 = vld [vmem:[#allocation2] sm:$0x80]
        %v6163 = vld [vmem:[#allocation2 + $0x8] sm:$0xff]
        %v6164 = vld [vmem:[#allocation2 + $0x10] sm:$0xff]
        %v6165 = vld [vmem:[#allocation2 + $0x18] sm:$0xff]
        %v6166 = vld [vmem:[#allocation2 + $0x20] sm:$0xff]
        %v6167 = vld [vmem:[#allocation2 + $0x28] sm:$0xff]
        %v6168 = vld [vmem:[#allocation2 + $0x30] sm:$0xff]
        %v6169 = vld [vmem:[#allocation2 + $0x38] sm:$0xff]
        %v6170 = vld [vmem:[#allocation2 + $0x40] sm:$0xff]
        %v6171 = vld [vmem:[#allocation2 + $0x48] sm:$0xff]
        %v6172 = vld [vmem:[#allocation2 + $0x50] sm:$0xff]
        %v6173 = vld [vmem:[#allocation2 + $0x58] sm:$0xff]
        %v6174 = vld [vmem:[#allocation2 + $0x60] sm:$0xff]
        %v6175 = vld [vmem:[#allocation2 + $0x68] sm:$0xff]
        %v6176 = vld [vmem:[#allocation2 + $0x70] sm:$0xff]
        %v6177 = vld [vmem:[#allocation2 + $0x78] sm:$0xff]
        %v6178 = vld [vmem:[#allocation2 + $0x80] sm:$0xff]
        %v6179 = vld [vmem:[#allocation2 + $0x88] sm:$0x7f]
        %v6180 = vld [vmem:[#allocation8] sm:$0xf]
        %v6181 = vld [vmem:[#allocation8 + $0x4] sm:$0xf]
        %v6182 = vld [vmem:[#allocation8 + $0x8] sm:$0xf]
        %v6183 = vld [vmem:[#allocation8 + $0xc] sm:$0xf]
        %v6184 = vld [vmem:[#allocation8 + $0x10] sm:$0xf]
        %v6185 = vld [vmem:[#allocation8 + $0x14] sm:$0xf]
        %v6186 = vld [vmem:[#allocation8 + $0x18] sm:$0xf]
        %v6187 = vld [vmem:[#allocation8 + $0x1c] sm:$0xf]
        %v6188 = vld [vmem:[#allocation8 + $0x20] sm:$0xf]
        %v6189 = vld [vmem:[#allocation8 + $0x24] sm:$0xf]
        %v6190 = vld [vmem:[#allocation8 + $0x28] sm:$0xf]
        %v6191 = vld [vmem:[#allocation8 + $0x2c] sm:$0xf]
        %v6192 = vld [vmem:[#allocation8 + $0x30] sm:$0xf]
        %v6193 = vld [vmem:[#allocation8 + $0x34] sm:$0xf]
        %v6194 = vld [vmem:[#allocation8 + $0x38] sm:$0xf]
        %v6195 = vld [vmem:[#allocation8 + $0x3c] sm:$0xf]
        %vm6214 = vcmask 1040384
        %v6215 = vrot.slane %v6162, 7
        %v6216 = vrot.slane %v6163, 7
        %v6217 = vsel %vm6214, %v6215, %v6216
        %v6218 = vrot.slane %v6164, 7
        %v6219 = vsel %vm6214, %v6216, %v6218
        %v6220 = vrot.slane %v6165, 7
        %v6221 = vsel %vm6214, %v6218, %v6220
        %v6222 = vrot.slane %v6166, 7
        %v6223 = vsel %vm6214, %v6220, %v6222
        %v6224 = vrot.slane %v6167, 7
        %v6225 = vsel %vm6214, %v6222, %v6224
        %v6226 = vrot.slane %v6168, 7
        %v6227 = vsel %vm6214, %v6224, %v6226
        %v6228 = vrot.slane %v6169, 7
        %v6229 = vsel %vm6214, %v6226, %v6228
        %v6230 = vrot.slane %v6170, 7
        %v6231 = vsel %vm6214, %v6228, %v6230
        %v6232 = vrot.slane %v6171, 7
        %v6233 = vsel %vm6214, %v6230, %v6232
        %v6234 = vrot.slane %v6172, 7
        %v6235 = vsel %vm6214, %v6232, %v6234
        %v6236 = vrot.slane %v6173, 7
        %v6237 = vsel %vm6214, %v6234, %v6236
        %v6238 = vrot.slane %v6174, 7
        %v6239 = vsel %vm6214, %v6236, %v6238
        %v6240 = vrot.slane %v6175, 7
        %v6241 = vsel %vm6214, %v6238, %v6240
        %v6242 = vrot.slane %v6176, 7
        %v6243 = vsel %vm6214, %v6240, %v6242
        %v6244 = vrot.slane %v6177, 7
        %v6245 = vsel %vm6214, %v6242, %v6244
        %v6246 = vrot.slane %v6178, 7
        %v6247 = vsel %vm6214, %v6244, %v6246
        %v6248 = vrot.slane %v6179, 7
        %v6249 = vsel %vm6214, %v6246, %v6248
        %v6283 = vunpack.c.l.b16 %v6180
        %v6284 = vunpack.c.l.b16 %v6181
        %v6285 = vunpack.c.l.b16 %v6182
        %v6286 = vunpack.c.l.b16 %v6183
        %v6287 = vunpack.c.l.b16 %v6184
        %v6288 = vunpack.c.l.b16 %v6185
        %v6289 = vunpack.c.l.b16 %v6186
        %v6290 = vunpack.c.l.b16 %v6187
        %v6291 = vunpack.c.l.b16 %v6188
        %v6292 = vunpack.c.l.b16 %v6189
        %v6293 = vunpack.c.l.b16 %v6190
        %v6294 = vunpack.c.l.b16 %v6191
        %v6295 = vunpack.c.l.b16 %v6192
        %v6296 = vunpack.c.l.b16 %v6193
        %v6297 = vunpack.c.l.b16 %v6194
        %v6298 = vunpack.c.l.b16 %v6195
        %v6299 = vpack.c.b16 %v6284, %v6283
        %v6300 = vpack.c.b16 %v6286, %v6285
        %v6301 = vpack.c.b16 %v6288, %v6287
        %v6302 = vpack.c.b16 %v6290, %v6289
        %v6303 = vpack.c.b16 %v6292, %v6291
        %v6304 = vpack.c.b16 %v6294, %v6293
        %v6305 = vpack.c.b16 %v6296, %v6295
        %v6306 = vpack.c.b16 %v6298, %v6297
        %6315 = vmatprep.subr.bf16.mxu0 0
        %6316 = vmatpush1.bf16.msra.mxu0 %v6299
        %6317 = vmatprep.subr.bf16.mxu0 0
        %6318 = vmatpush1.bf16.msra.mxu0 %v6300
        %6319 = vmatprep.subr.bf16.mxu0 0
        %6320 = vmatpush1.bf16.msra.mxu0 %v6301
        %6321 = vmatprep.subr.bf16.mxu0 0
        %6322 = vmatpush1.bf16.msra.mxu0 %v6302
        %6323 = vmatprep.subr.bf16.mxu0 0
        %6324 = vmatpush1.bf16.msra.mxu0 %v6303
        %6325 = vmatprep.subr.bf16.mxu0 0
        %6326 = vmatpush1.bf16.msra.mxu0 %v6304
        %6327 = vmatprep.subr.bf16.mxu0 0
        %6328 = vmatpush1.bf16.msra.mxu0 %v6305
        %6329 = vmatprep.subr.bf16.mxu0 0
        %6330 = vmatpush1.bf16.msra.mxu0 %v6306
        %6331 = vmatprep.subr.bf16.mxu0 0
        %6332 = vmatpush1.bf16.msra.mxu0 0
        %6333 = vmatprep.subr.bf16.mxu0 0
        %6334 = vmatpush1.bf16.msra.mxu0 0
        %6335 = vmatprep.subr.bf16.mxu0 0
        %6336 = vmatpush1.bf16.msra.mxu0 0
        %6337 = vmatprep.subr.bf16.mxu0 0
        %6338 = vmatpush1.bf16.msra.mxu0 0
        %6339 = vmatprep.subr.bf16.mxu0 0
        %6340 = vmatpush1.bf16.msra.mxu0 0
        %6341 = vmatprep.subr.bf16.mxu0 0
        %6342 = vmatpush1.bf16.msra.mxu0 0
        %6343 = vmatprep.subr.bf16.mxu0 0
        %6344 = vmatpush1.bf16.msra.mxu0 0
        %6345 = vmatprep.subr.bf16.mxu0 0
        %6346 = vmatpush1.bf16.msra.mxu0 0
        %6347 = vmatprep.mubr.bf16.mxu0 0
        %6348 = vmatmul.mubr.bf16.gmra.mrb[0].mxu0 %v6217
        %v6349 = vpop.f32.mrb[0].mxu0
        %v6350 = vadd.f32 0.0, %v6349
        %v6351 = vpop.f32.mrb[0].mxu0
        %v6352 = vpop.f32.mrb[0].mxu0
        %v6353 = vadd.f32 0.0, %v6352
        %v6354 = vpop.f32.mrb[0].mxu0
        %6355 = vmatprep.mubr.bf16.mxu0 0
        %6356 = vmatmul.mubr.bf16.gmra.mrb[0].mxu0 %v6219
        %v6357 = vpop.f32.mrb[0].mxu0
        %v6358 = vadd.f32 0.0, %v6357
        %v6359 = vpop.f32.mrb[0].mxu0
        %v6360 = vpop.f32.mrb[0].mxu0
        %v6361 = vadd.f32 0.0, %v6360
        %v6362 = vpop.f32.mrb[0].mxu0
        %6363 = vmatprep.mubr.bf16.mxu0 0
        %6364 = vmatmul.mubr.bf16.gmra.mrb[0].mxu0 %v6221
        %v6365 = vpop.f32.mrb[0].mxu0
        %v6366 = vadd.f32 0.0, %v6365
        %v6367 = vpop.f32.mrb[0].mxu0
        %v6368 = vpop.f32.mrb[0].mxu0
        %v6369 = vadd.f32 0.0, %v6368
        %v6370 = vpop.f32.mrb[0].mxu0
        %6371 = vmatprep.mubr.bf16.mxu0 0
        %6372 = vmatmul.mubr.bf16.gmra.mrb[0].mxu0 %v6223
        %v6373 = vpop.f32.mrb[0].mxu0
        %v6374 = vadd.f32 0.0, %v6373
        %v6375 = vpop.f32.mrb[0].mxu0
        %v6376 = vpop.f32.mrb[0].mxu0
        %v6377 = vadd.f32 0.0, %v6376
        %v6378 = vpop.f32.mrb[0].mxu0
        %6379 = vmatprep.mubr.bf16.mxu0 0
        %6380 = vmatmul.mubr.bf16.gmra.mrb[0].mxu0 %v6225
        %v6381 = vpop.f32.mrb[0].mxu0
        %v6382 = vadd.f32 0.0, %v6381
        %v6383 = vpop.f32.mrb[0].mxu0
        %v6384 = vpop.f32.mrb[0].mxu0
        %v6385 = vadd.f32 0.0, %v6384
        %v6386 = vpop.f32.mrb[0].mxu0
        %6387 = vmatprep.mubr.bf16.mxu0 0
        %6388 = vmatmul.mubr.bf16.gmra.mrb[0].mxu0 %v6227
        %v6389 = vpop.f32.mrb[0].mxu0
        %v6390 = vadd.f32 0.0, %v6389
        %v6391 = vpop.f32.mrb[0].mxu0
        %v6392 = vpop.f32.mrb[0].mxu0
        %v6393 = vadd.f32 0.0, %v6392
        %v6394 = vpop.f32.mrb[0].mxu0
        %6395 = vmatprep.mubr.bf16.mxu0 0
        %6396 = vmatmul.mubr.bf16.gmra.mrb[0].mxu0 %v6229
        %v6397 = vpop.f32.mrb[0].mxu0
        %v6398 = vadd.f32 0.0, %v6397
        %v6399 = vpop.f32.mrb[0].mxu0
        %v6400 = vpop.f32.mrb[0].mxu0
        %v6401 = vadd.f32 0.0, %v6400
        %v6402 = vpop.f32.mrb[0].mxu0
        %6403 = vmatprep.mubr.bf16.mxu0 0
        %6404 = vmatmul.mubr.bf16.gmra.mrb[0].mxu0 %v6231
        %v6405 = vpop.f32.mrb[0].mxu0
        %v6406 = vadd.f32 0.0, %v6405
        %v6407 = vpop.f32.mrb[0].mxu0
        %v6408 = vpop.f32.mrb[0].mxu0
        %v6409 = vadd.f32 0.0, %v6408
        %v6410 = vpop.f32.mrb[0].mxu0
        %6411 = vmatprep.mubr.bf16.mxu0 0
        %6412 = vmatmul.mubr.bf16.gmra.mrb[0].mxu0 %v6233
        %v6413 = vpop.f32.mrb[0].mxu0
        %v6414 = vadd.f32 0.0, %v6413
        %v6415 = vpop.f32.mrb[0].mxu0
        %v6416 = vpop.f32.mrb[0].mxu0
        %v6417 = vadd.f32 0.0, %v6416
        %v6418 = vpop.f32.mrb[0].mxu0
        %6419 = vmatprep.mubr.bf16.mxu0 0
        %6420 = vmatmul.mubr.bf16.gmra.mrb[0].mxu0 %v6235
        %v6421 = vpop.f32.mrb[0].mxu0
        %v6422 = vadd.f32 0.0, %v6421
        %v6423 = vpop.f32.mrb[0].mxu0
        %v6424 = vpop.f32.mrb[0].mxu0
        %v6425 = vadd.f32 0.0, %v6424
        %v6426 = vpop.f32.mrb[0].mxu0
        %6427 = vmatprep.mubr.bf16.mxu0 0
        %6428 = vmatmul.mubr.bf16.gmra.mrb[0].mxu0 %v6237
        %v6429 = vpop.f32.mrb[0].mxu0
        %v6430 = vadd.f32 0.0, %v6429
        %v6431 = vpop.f32.mrb[0].mxu0
        %v6432 = vpop.f32.mrb[0].mxu0
        %v6433 = vadd.f32 0.0, %v6432
        %v6434 = vpop.f32.mrb[0].mxu0
        %6435 = vmatprep.mubr.bf16.mxu0 0
        %6436 = vmatmul.mubr.bf16.gmra.mrb[0].mxu0 %v6239
        %v6437 = vpop.f32.mrb[0].mxu0
        %v6438 = vadd.f32 0.0, %v6437
        %v6439 = vpop.f32.mrb[0].mxu0
        %v6440 = vpop.f32.mrb[0].mxu0
        %v6441 = vadd.f32 0.0, %v6440
        %v6442 = vpop.f32.mrb[0].mxu0
        %6443 = vmatprep.mubr.bf16.mxu0 0
        %6444 = vmatmul.mubr.bf16.gmra.mrb[0].mxu0 %v6241
        %v6445 = vpop.f32.mrb[0].mxu0
        %v6446 = vadd.f32 0.0, %v6445
        %v6447 = vpop.f32.mrb[0].mxu0
        %v6448 = vpop.f32.mrb[0].mxu0
        %v6449 = vadd.f32 0.0, %v6448
        %v6450 = vpop.f32.mrb[0].mxu0
        %6451 = vmatprep.mubr.bf16.mxu0 0
        %6452 = vmatmul.mubr.bf16.gmra.mrb[0].mxu0 %v6243
        %v6453 = vpop.f32.mrb[0].mxu0
        %v6454 = vadd.f32 0.0, %v6453
        %v6455 = vpop.f32.mrb[0].mxu0
        %v6456 = vpop.f32.mrb[0].mxu0
        %v6457 = vadd.f32 0.0, %v6456
        %v6458 = vpop.f32.mrb[0].mxu0
        %6459 = vmatprep.mubr.bf16.mxu0 0
        %6460 = vmatmul.mubr.bf16.gmra.mrb[0].mxu0 %v6245
        %v6461 = vpop.f32.mrb[0].mxu0
        %v6462 = vadd.f32 0.0, %v6461
        %v6463 = vpop.f32.mrb[0].mxu0
        %v6464 = vpop.f32.mrb[0].mxu0
        %v6465 = vadd.f32 0.0, %v6464
        %v6466 = vpop.f32.mrb[0].mxu0
        %6467 = vmatprep.mubr.bf16.mxu0 0
        %6468 = vmatmul.mubr.bf16.gmra.mrb[0].mxu0 %v6247
        %v6469 = vpop.f32.mrb[0].mxu0
        %v6470 = vadd.f32 0.0, %v6469
        %v6471 = vpop.f32.mrb[0].mxu0
        %v6472 = vpop.f32.mrb[0].mxu0
        %v6473 = vadd.f32 0.0, %v6472
        %v6474 = vpop.f32.mrb[0].mxu0
        %6475 = vmatprep.mubr.bf16.mxu0 0
        %6476 = vmatmul.mubr.bf16.gmra.mrb[0].mxu0 %v6249
        %v6477 = vpop.f32.mrb[0].mxu0
        %v6478 = vadd.f32 0.0, %v6477
        %v6479 = vpop.f32.mrb[0].mxu0
        %v6480 = vpop.f32.mrb[0].mxu0
        %v6481 = vadd.f32 0.0, %v6480
        %v6482 = vpop.f32.mrb[0].mxu0
        %6483 = vdwg.mxu0
        %v6484 = vadd.f32 %v6128, %v6350
        %v6485 = vadd.f32 %v6129, %v6353
        %v6486 = vadd.f32 %v6130, %v6358
        %v6487 = vadd.f32 %v6131, %v6361
        %v6488 = vadd.f32 %v6132, %v6366
        %v6489 = vadd.f32 %v6133, %v6369
        %v6490 = vadd.f32 %v6134, %v6374
        %v6491 = vadd.f32 %v6135, %v6377
        %v6492 = vadd.f32 %v6136, %v6382
        %v6493 = vadd.f32 %v6137, %v6385
        %v6494 = vadd.f32 %v6138, %v6390
        %v6495 = vadd.f32 %v6139, %v6393
        %v6496 = vadd.f32 %v6140, %v6398
        %v6497 = vadd.f32 %v6141, %v6401
        %v6498 = vadd.f32 %v6142, %v6406
        %v6499 = vadd.f32 %v6143, %v6409
        %v6500 = vadd.f32 %v6144, %v6414
        %v6501 = vadd.f32 %v6145, %v6417
        %v6502 = vadd.f32 %v6146, %v6422
        %v6503 = vadd.f32 %v6147, %v6425
        %v6504 = vadd.f32 %v6148, %v6430
        %v6505 = vadd.f32 %v6149, %v6433
        %v6506 = vadd.f32 %v6150, %v6438
        %v6507 = vadd.f32 %v6151, %v6441
        %v6508 = vadd.f32 %v6152, %v6446
        %v6509 = vadd.f32 %v6153, %v6449
        %v6510 = vadd.f32 %v6154, %v6454
        %v6511 = vadd.f32 %v6155, %v6457
        %v6512 = vadd.f32 %v6156, %v6462
        %v6513 = vadd.f32 %v6157, %v6465
        %v6514 = vadd.f32 %v6158, %v6470
        %v6515 = vadd.f32 %v6159, %v6473
        %v6516 = vadd.f32 %v6160, %v6478
        %v6517 = vadd.f32 %v6161, %v6481
        %v6518 = vld [vmem:[#allocation2 + $0x88] sm:$0xff]
        %s6519 = scalar_lea.vmem [#allocation8], 64
        %v6520 = vld [vmem:[%s6519] sm:$0xf]
        %v6521 = vld [vmem:[%s6519 + $0x4] sm:$0xf]
        %v6522 = vld [vmem:[%s6519 + $0x8] sm:$0xf]
        %v6523 = vld [vmem:[%s6519 + $0xc] sm:$0xf]
        %v6524 = vld [vmem:[%s6519 + $0x10] sm:$0xf]
        %v6525 = vld [vmem:[%s6519 + $0x14] sm:$0xf]
        %v6526 = vld [vmem:[%s6519 + $0x18] sm:$0xf]
        %v6527 = vld [vmem:[%s6519 + $0x1c] sm:$0xf]
        %v6528 = vld [vmem:[%s6519 + $0x20] sm:$0xf]
        %v6529 = vld [vmem:[%s6519 + $0x24] sm:$0xf]
        %v6530 = vld [vmem:[%s6519 + $0x28] sm:$0xf]
        %v6531 = vld [vmem:[%s6519 + $0x2c] sm:$0xf]
        %v6532 = vld [vmem:[%s6519 + $0x30] sm:$0xf]
        %v6533 = vld [vmem:[%s6519 + $0x34] sm:$0xf]
        %v6534 = vld [vmem:[%s6519 + $0x38] sm:$0xf]
        %v6535 = vld [vmem:[%s6519 + $0x3c] sm:$0xf]
        %vm6536 = vsmask.f32 256
        %v6538 = vshrl.u32 %v6162, 16
        %v6540 = vrot.slane %v6538, 7
        %v6542 = vshrl.u32 %v6163, 16
        %v6544 = vrot.slane %v6542, 7
        %v6545 = vshll.u32 %v6163, 16
        %v6547 = vor.u32 %v6544, %v6545
        %v6548 = vsel %vm6536, %v6540, %v6547
        %v6550 = vshrl.u32 %v6164, 16
        %v6552 = vrot.slane %v6550, 7
        %v6553 = vshll.u32 %v6164, 16
        %v6555 = vor.u32 %v6552, %v6553
        %v6556 = vsel %vm6536, %v6544, %v6555
        %v6558 = vshrl.u32 %v6165, 16
        %v6560 = vrot.slane %v6558, 7
        %v6561 = vshll.u32 %v6165, 16
        %v6563 = vor.u32 %v6560, %v6561
        %v6564 = vsel %vm6536, %v6552, %v6563
        %v6566 = vshrl.u32 %v6166, 16
        %v6568 = vrot.slane %v6566, 7
        %v6569 = vshll.u32 %v6166, 16
        %v6571 = vor.u32 %v6568, %v6569
        %v6572 = vsel %vm6536, %v6560, %v6571
        %v6574 = vshrl.u32 %v6167, 16
        %v6576 = vrot.slane %v6574, 7
        %v6577 = vshll.u32 %v6167, 16
        %v6579 = vor.u32 %v6576, %v6577
        %v6580 = vsel %vm6536, %v6568, %v6579
        %v6582 = vshrl.u32 %v6168, 16
        %v6584 = vrot.slane %v6582, 7
        %v6585 = vshll.u32 %v6168, 16
        %v6587 = vor.u32 %v6584, %v6585
        %v6588 = vsel %vm6536, %v6576, %v6587
        %v6590 = vshrl.u32 %v6169, 16
        %v6592 = vrot.slane %v6590, 7
        %v6593 = vshll.u32 %v6169, 16
        %v6595 = vor.u32 %v6592, %v6593
        %v6596 = vsel %vm6536, %v6584, %v6595
        %v6598 = vshrl.u32 %v6170, 16
        %v6600 = vrot.slane %v6598, 7
        %v6601 = vshll.u32 %v6170, 16
        %v6603 = vor.u32 %v6600, %v6601
        %v6604 = vsel %vm6536, %v6592, %v6603
        %v6606 = vshrl.u32 %v6171, 16
        %v6608 = vrot.slane %v6606, 7
        %v6609 = vshll.u32 %v6171, 16
        %v6611 = vor.u32 %v6608, %v6609
        %v6612 = vsel %vm6536, %v6600, %v6611
        %v6614 = vshrl.u32 %v6172, 16
        %v6616 = vrot.slane %v6614, 7
        %v6617 = vshll.u32 %v6172, 16
        %v6619 = vor.u32 %v6616, %v6617
        %v6620 = vsel %vm6536, %v6608, %v6619
        %v6622 = vshrl.u32 %v6173, 16
        %v6624 = vrot.slane %v6622, 7
        %v6625 = vshll.u32 %v6173, 16
        %v6627 = vor.u32 %v6624, %v6625
        %v6628 = vsel %vm6536, %v6616, %v6627
        %v6630 = vshrl.u32 %v6174, 16
        %v6632 = vrot.slane %v6630, 7
        %v6633 = vshll.u32 %v6174, 16
        %v6635 = vor.u32 %v6632, %v6633
        %v6636 = vsel %vm6536, %v6624, %v6635
        %v6638 = vshrl.u32 %v6175, 16
        %v6640 = vrot.slane %v6638, 7
        %v6641 = vshll.u32 %v6175, 16
        %v6643 = vor.u32 %v6640, %v6641
        %v6644 = vsel %vm6536, %v6632, %v6643
        %v6646 = vshrl.u32 %v6176, 16
        %v6648 = vrot.slane %v6646, 7
        %v6649 = vshll.u32 %v6176, 16
        %v6651 = vor.u32 %v6648, %v6649
        %v6652 = vsel %vm6536, %v6640, %v6651
        %v6654 = vshrl.u32 %v6177, 16
        %v6656 = vrot.slane %v6654, 7
        %v6657 = vshll.u32 %v6177, 16
        %v6659 = vor.u32 %v6656, %v6657
        %v6660 = vsel %vm6536, %v6648, %v6659
        %v6662 = vshrl.u32 %v6178, 16
        %v6664 = vrot.slane %v6662, 7
        %v6665 = vshll.u32 %v6178, 16
        %v6667 = vor.u32 %v6664, %v6665
        %v6668 = vsel %vm6536, %v6656, %v6667
        %v6670 = vshrl.u32 %v6518, 16
        %v6672 = vrot.slane %v6670, 7
        %v6673 = vshll.u32 %v6518, 16
        %v6675 = vor.u32 %v6672, %v6673
        %v6676 = vsel %vm6536, %v6664, %v6675
        %v6710 = vunpack.c.l.b16 %v6520
        %v6711 = vunpack.c.l.b16 %v6521
        %v6712 = vunpack.c.l.b16 %v6522
        %v6713 = vunpack.c.l.b16 %v6523
        %v6714 = vunpack.c.l.b16 %v6524
        %v6715 = vunpack.c.l.b16 %v6525
        %v6716 = vunpack.c.l.b16 %v6526
        %v6717 = vunpack.c.l.b16 %v6527
        %v6718 = vunpack.c.l.b16 %v6528
        %v6719 = vunpack.c.l.b16 %v6529
        %v6720 = vunpack.c.l.b16 %v6530
        %v6721 = vunpack.c.l.b16 %v6531
        %v6722 = vunpack.c.l.b16 %v6532
        %v6723 = vunpack.c.l.b16 %v6533
        %v6724 = vunpack.c.l.b16 %v6534
        %v6725 = vunpack.c.l.b16 %v6535
        %v6726 = vpack.c.b16 %v6711, %v6710
        %v6727 = vpack.c.b16 %v6713, %v6712
        %v6728 = vpack.c.b16 %v6715, %v6714
        %v6729 = vpack.c.b16 %v6717, %v6716
        %v6730 = vpack.c.b16 %v6719, %v6718
        %v6731 = vpack.c.b16 %v6721, %v6720
        %v6732 = vpack.c.b16 %v6723, %v6722
        %v6733 = vpack.c.b16 %v6725, %v6724
        %6742 = vmatprep.subr.bf16.mxu0 0
        %6743 = vmatpush1.bf16.msra.mxu0 %v6726
        %6744 = vmatprep.subr.bf16.mxu0 0
        %6745 = vmatpush1.bf16.msra.mxu0 %v6727
        %6746 = vmatprep.subr.bf16.mxu0 0
        %6747 = vmatpush1.bf16.msra.mxu0 %v6728
        %6748 = vmatprep.subr.bf16.mxu0 0
        %6749 = vmatpush1.bf16.msra.mxu0 %v6729
        %6750 = vmatprep.subr.bf16.mxu0 0
        %6751 = vmatpush1.bf16.msra.mxu0 %v6730
        %6752 = vmatprep.subr.bf16.mxu0 0
        %6753 = vmatpush1.bf16.msra.mxu0 %v6731
        %6754 = vmatprep.subr.bf16.mxu0 0
        %6755 = vmatpush1.bf16.msra.mxu0 %v6732
        %6756 = vmatprep.subr.bf16.mxu0 0
        %6757 = vmatpush1.bf16.msra.mxu0 %v6733
        %6758 = vmatprep.subr.bf16.mxu0 0
        %6759 = vmatpush1.bf16.msra.mxu0 0
        %6760 = vmatprep.subr.bf16.mxu0 0
        %6761 = vmatpush1.bf16.msra.mxu0 0
        %6762 = vmatprep.subr.bf16.mxu0 0
        %6763 = vmatpush1.bf16.msra.mxu0 0
        %6764 = vmatprep.subr.bf16.mxu0 0
        %6765 = vmatpush1.bf16.msra.mxu0 0
        %6766 = vmatprep.subr.bf16.mxu0 0
        %6767 = vmatpush1.bf16.msra.mxu0 0
        %6768 = vmatprep.subr.bf16.mxu0 0
        %6769 = vmatpush1.bf16.msra.mxu0 0
        %6770 = vmatprep.subr.bf16.mxu0 0
        %6771 = vmatpush1.bf16.msra.mxu0 0
        %6772 = vmatprep.subr.bf16.mxu0 0
        %6773 = vmatpush1.bf16.msra.mxu0 0
        %6774 = vmatprep.mubr.bf16.mxu0 0
        %6775 = vmatmul.mubr.bf16.gmra.mrb[0].mxu0 %v6548
        %v6776 = vpop.f32.mrb[0].mxu0
        %v6777 = vadd.f32 0.0, %v6776
        %v6778 = vpop.f32.mrb[0].mxu0
        %v6779 = vpop.f32.mrb[0].mxu0
        %v6780 = vadd.f32 0.0, %v6779
        %v6781 = vpop.f32.mrb[0].mxu0
        %6782 = vmatprep.mubr.bf16.mxu0 0
        %6783 = vmatmul.mubr.bf16.gmra.mrb[0].mxu0 %v6556
        %v6784 = vpop.f32.mrb[0].mxu0
        %v6785 = vadd.f32 0.0, %v6784
        %v6786 = vpop.f32.mrb[0].mxu0
        %v6787 = vpop.f32.mrb[0].mxu0
        %v6788 = vadd.f32 0.0, %v6787
        %v6789 = vpop.f32.mrb[0].mxu0
        %6790 = vmatprep.mubr.bf16.mxu0 0
        %6791 = vmatmul.mubr.bf16.gmra.mrb[0].mxu0 %v6564
        %v6792 = vpop.f32.mrb[0].mxu0
        %v6793 = vadd.f32 0.0, %v6792
        %v6794 = vpop.f32.mrb[0].mxu0
        %v6795 = vpop.f32.mrb[0].mxu0
        %v6796 = vadd.f32 0.0, %v6795
        %v6797 = vpop.f32.mrb[0].mxu0
        %6798 = vmatprep.mubr.bf16.mxu0 0
        %6799 = vmatmul.mubr.bf16.gmra.mrb[0].mxu0 %v6572
        %v6800 = vpop.f32.mrb[0].mxu0
        %v6801 = vadd.f32 0.0, %v6800
        %v6802 = vpop.f32.mrb[0].mxu0
        %v6803 = vpop.f32.mrb[0].mxu0
        %v6804 = vadd.f32 0.0, %v6803
        %v6805 = vpop.f32.mrb[0].mxu0
        %6806 = vmatprep.mubr.bf16.mxu0 0
        %6807 = vmatmul.mubr.bf16.gmra.mrb[0].mxu0 %v6580
        %v6808 = vpop.f32.mrb[0].mxu0
        %v6809 = vadd.f32 0.0, %v6808
        %v6810 = vpop.f32.mrb[0].mxu0
        %v6811 = vpop.f32.mrb[0].mxu0
        %v6812 = vadd.f32 0.0, %v6811
        %v6813 = vpop.f32.mrb[0].mxu0
        %6814 = vmatprep.mubr.bf16.mxu0 0
        %6815 = vmatmul.mubr.bf16.gmra.mrb[0].mxu0 %v6588
        %v6816 = vpop.f32.mrb[0].mxu0
        %v6817 = vadd.f32 0.0, %v6816
        %v6818 = vpop.f32.mrb[0].mxu0
        %v6819 = vpop.f32.mrb[0].mxu0
        %v6820 = vadd.f32 0.0, %v6819
        %v6821 = vpop.f32.mrb[0].mxu0
        %6822 = vmatprep.mubr.bf16.mxu0 0
        %6823 = vmatmul.mubr.bf16.gmra.mrb[0].mxu0 %v6596
        %v6824 = vpop.f32.mrb[0].mxu0
        %v6825 = vadd.f32 0.0, %v6824
        %v6826 = vpop.f32.mrb[0].mxu0
        %v6827 = vpop.f32.mrb[0].mxu0
        %v6828 = vadd.f32 0.0, %v6827
        %v6829 = vpop.f32.mrb[0].mxu0
        %6830 = vmatprep.mubr.bf16.mxu0 0
        %6831 = vmatmul.mubr.bf16.gmra.mrb[0].mxu0 %v6604
        %v6832 = vpop.f32.mrb[0].mxu0
        %v6833 = vadd.f32 0.0, %v6832
        %v6834 = vpop.f32.mrb[0].mxu0
        %v6835 = vpop.f32.mrb[0].mxu0
        %v6836 = vadd.f32 0.0, %v6835
        %v6837 = vpop.f32.mrb[0].mxu0
        %6838 = vmatprep.mubr.bf16.mxu0 0
        %6839 = vmatmul.mubr.bf16.gmra.mrb[0].mxu0 %v6612
        %v6840 = vpop.f32.mrb[0].mxu0
        %v6841 = vadd.f32 0.0, %v6840
        %v6842 = vpop.f32.mrb[0].mxu0
        %v6843 = vpop.f32.mrb[0].mxu0
        %v6844 = vadd.f32 0.0, %v6843
        %v6845 = vpop.f32.mrb[0].mxu0
        %6846 = vmatprep.mubr.bf16.mxu0 0
        %6847 = vmatmul.mubr.bf16.gmra.mrb[0].mxu0 %v6620
        %v6848 = vpop.f32.mrb[0].mxu0
        %v6849 = vadd.f32 0.0, %v6848
        %v6850 = vpop.f32.mrb[0].mxu0
        %v6851 = vpop.f32.mrb[0].mxu0
        %v6852 = vadd.f32 0.0, %v6851
        %v6853 = vpop.f32.mrb[0].mxu0
        %6854 = vmatprep.mubr.bf16.mxu0 0
        %6855 = vmatmul.mubr.bf16.gmra.mrb[0].mxu0 %v6628
        %v6856 = vpop.f32.mrb[0].mxu0
        %v6857 = vadd.f32 0.0, %v6856
        %v6858 = vpop.f32.mrb[0].mxu0
        %v6859 = vpop.f32.mrb[0].mxu0
        %v6860 = vadd.f32 0.0, %v6859
        %v6861 = vpop.f32.mrb[0].mxu0
        %6862 = vmatprep.mubr.bf16.mxu0 0
        %6863 = vmatmul.mubr.bf16.gmra.mrb[0].mxu0 %v6636
        %v6864 = vpop.f32.mrb[0].mxu0
        %v6865 = vadd.f32 0.0, %v6864
        %v6866 = vpop.f32.mrb[0].mxu0
        %v6867 = vpop.f32.mrb[0].mxu0
        %v6868 = vadd.f32 0.0, %v6867
        %v6869 = vpop.f32.mrb[0].mxu0
        %6870 = vmatprep.mubr.bf16.mxu0 0
        %6871 = vmatmul.mubr.bf16.gmra.mrb[0].mxu0 %v6644
        %v6872 = vpop.f32.mrb[0].mxu0
        %v6873 = vadd.f32 0.0, %v6872
        %v6874 = vpop.f32.mrb[0].mxu0
        %v6875 = vpop.f32.mrb[0].mxu0
        %v6876 = vadd.f32 0.0, %v6875
        %v6877 = vpop.f32.mrb[0].mxu0
        %6878 = vmatprep.mubr.bf16.mxu0 0
        %6879 = vmatmul.mubr.bf16.gmra.mrb[0].mxu0 %v6652
        %v6880 = vpop.f32.mrb[0].mxu0
        %v6881 = vadd.f32 0.0, %v6880
        %v6882 = vpop.f32.mrb[0].mxu0
        %v6883 = vpop.f32.mrb[0].mxu0
        %v6884 = vadd.f32 0.0, %v6883
        %v6885 = vpop.f32.mrb[0].mxu0
        %6886 = vmatprep.mubr.bf16.mxu0 0
        %6887 = vmatmul.mubr.bf16.gmra.mrb[0].mxu0 %v6660
        %v6888 = vpop.f32.mrb[0].mxu0
        %v6889 = vadd.f32 0.0, %v6888
        %v6890 = vpop.f32.mrb[0].mxu0
        %v6891 = vpop.f32.mrb[0].mxu0
        %v6892 = vadd.f32 0.0, %v6891
        %v6893 = vpop.f32.mrb[0].mxu0
        %6894 = vmatprep.mubr.bf16.mxu0 0
        %6895 = vmatmul.mubr.bf16.gmra.mrb[0].mxu0 %v6668
        %v6896 = vpop.f32.mrb[0].mxu0
        %v6897 = vadd.f32 0.0, %v6896
        %v6898 = vpop.f32.mrb[0].mxu0
        %v6899 = vpop.f32.mrb[0].mxu0
        %v6900 = vadd.f32 0.0, %v6899
        %v6901 = vpop.f32.mrb[0].mxu0
        %6902 = vmatprep.mubr.bf16.mxu0 0
        %6903 = vmatmul.mubr.bf16.gmra.mrb[0].mxu0 %v6676
        %v6904 = vpop.f32.mrb[0].mxu0
        %v6905 = vadd.f32 0.0, %v6904
        %v6906 = vpop.f32.mrb[0].mxu0
        %v6907 = vpop.f32.mrb[0].mxu0
        %v6908 = vadd.f32 0.0, %v6907
        %v6909 = vpop.f32.mrb[0].mxu0
        %6910 = vdwg.mxu0
        %v6911 = vadd.f32 %v6484, %v6777
        %v6912 = vadd.f32 %v6485, %v6780
        %v6913 = vadd.f32 %v6486, %v6785
        %v6914 = vadd.f32 %v6487, %v6788
        %v6915 = vadd.f32 %v6488, %v6793
        %v6916 = vadd.f32 %v6489, %v6796
        %v6917 = vadd.f32 %v6490, %v6801
        %v6918 = vadd.f32 %v6491, %v6804
        %v6919 = vadd.f32 %v6492, %v6809
        %v6920 = vadd.f32 %v6493, %v6812
        %v6921 = vadd.f32 %v6494, %v6817
        %v6922 = vadd.f32 %v6495, %v6820
        %v6923 = vadd.f32 %v6496, %v6825
        %v6924 = vadd.f32 %v6497, %v6828
        %v6925 = vadd.f32 %v6498, %v6833
        %v6926 = vadd.f32 %v6499, %v6836
        %v6927 = vadd.f32 %v6500, %v6841
        %v6928 = vadd.f32 %v6501, %v6844
        %v6929 = vadd.f32 %v6502, %v6849
        %v6930 = vadd.f32 %v6503, %v6852
        %v6931 = vadd.f32 %v6504, %v6857
        %v6932 = vadd.f32 %v6505, %v6860
        %v6933 = vadd.f32 %v6506, %v6865
        %v6934 = vadd.f32 %v6507, %v6868
        %v6935 = vadd.f32 %v6508, %v6873
        %v6936 = vadd.f32 %v6509, %v6876
        %v6937 = vadd.f32 %v6510, %v6881
        %v6938 = vadd.f32 %v6511, %v6884
        %v6939 = vadd.f32 %v6512, %v6889
        %v6940 = vadd.f32 %v6513, %v6892
        %v6941 = vadd.f32 %v6514, %v6897
        %v6942 = vadd.f32 %v6515, %v6900
        %v6943 = vadd.f32 %v6516, %v6905
        %v6944 = vadd.f32 %v6517, %v6908
        %s6945 = scalar_lea.vmem [#allocation8], 128
        %v6946 = vld [vmem:[%s6945] sm:$0xf]
        %v6947 = vld [vmem:[%s6945 + $0x4] sm:$0xf]
        %v6948 = vld [vmem:[%s6945 + $0x8] sm:$0xf]
        %v6949 = vld [vmem:[%s6945 + $0xc] sm:$0xf]
        %v6950 = vld [vmem:[%s6945 + $0x10] sm:$0xf]
        %v6951 = vld [vmem:[%s6945 + $0x14] sm:$0xf]
        %v6952 = vld [vmem:[%s6945 + $0x18] sm:$0xf]
        %v6953 = vld [vmem:[%s6945 + $0x1c] sm:$0xf]
        %v6954 = vld [vmem:[%s6945 + $0x20] sm:$0xf]
        %v6955 = vld [vmem:[%s6945 + $0x24] sm:$0xf]
        %v6956 = vld [vmem:[%s6945 + $0x28] sm:$0xf]
        %v6957 = vld [vmem:[%s6945 + $0x2c] sm:$0xf]
        %v6958 = vld [vmem:[%s6945 + $0x30] sm:$0xf]
        %v6959 = vld [vmem:[%s6945 + $0x34] sm:$0xf]
        %v6960 = vld [vmem:[%s6945 + $0x38] sm:$0xf]
        %v6961 = vld [vmem:[%s6945 + $0x3c] sm:$0xf]
        %v6978 = vunpack.c.l.b16 %v6946
        %v6979 = vunpack.c.l.b16 %v6947
        %v6980 = vunpack.c.l.b16 %v6948
        %v6981 = vunpack.c.l.b16 %v6949
        %v6982 = vunpack.c.l.b16 %v6950
        %v6983 = vunpack.c.l.b16 %v6951
        %v6984 = vunpack.c.l.b16 %v6952
        %v6985 = vunpack.c.l.b16 %v6953
        %v6986 = vunpack.c.l.b16 %v6954
        %v6987 = vunpack.c.l.b16 %v6955
        %v6988 = vunpack.c.l.b16 %v6956
        %v6989 = vunpack.c.l.b16 %v6957
        %v6990 = vunpack.c.l.b16 %v6958
        %v6991 = vunpack.c.l.b16 %v6959
        %v6992 = vunpack.c.l.b16 %v6960
        %v6993 = vunpack.c.l.b16 %v6961
        %v6994 = vpack.c.b16 %v6979, %v6978
        %v6995 = vpack.c.b16 %v6981, %v6980
        %v6996 = vpack.c.b16 %v6983, %v6982
        %v6997 = vpack.c.b16 %v6985, %v6984
        %v6998 = vpack.c.b16 %v6987, %v6986
        %v6999 = vpack.c.b16 %v6989, %v6988
        %v7000 = vpack.c.b16 %v6991, %v6990
        %v7001 = vpack.c.b16 %v6993, %v6992
        %7010 = vmatprep.subr.bf16.mxu0 0
        %7011 = vmatpush1.bf16.msra.mxu0 %v6994
        %7012 = vmatprep.subr.bf16.mxu0 0
        %7013 = vmatpush1.bf16.msra.mxu0 %v6995
        %7014 = vmatprep.subr.bf16.mxu0 0
        %7015 = vmatpush1.bf16.msra.mxu0 %v6996
        %7016 = vmatprep.subr.bf16.mxu0 0
        %7017 = vmatpush1.bf16.msra.mxu0 %v6997
        %7018 = vmatprep.subr.bf16.mxu0 0
        %7019 = vmatpush1.bf16.msra.mxu0 %v6998
        %7020 = vmatprep.subr.bf16.mxu0 0
        %7021 = vmatpush1.bf16.msra.mxu0 %v6999
        %7022 = vmatprep.subr.bf16.mxu0 0
        %7023 = vmatpush1.bf16.msra.mxu0 %v7000
        %7024 = vmatprep.subr.bf16.mxu0 0
        %7025 = vmatpush1.bf16.msra.mxu0 %v7001
        %7026 = vmatprep.subr.bf16.mxu0 0
        %7027 = vmatpush1.bf16.msra.mxu0 0
        %7028 = vmatprep.subr.bf16.mxu0 0
        %7029 = vmatpush1.bf16.msra.mxu0 0
        %7030 = vmatprep.subr.bf16.mxu0 0
        %7031 = vmatpush1.bf16.msra.mxu0 0
        %7032 = vmatprep.subr.bf16.mxu0 0
        %7033 = vmatpush1.bf16.msra.mxu0 0
        %7034 = vmatprep.subr.bf16.mxu0 0
        %7035 = vmatpush1.bf16.msra.mxu0 0
        %7036 = vmatprep.subr.bf16.mxu0 0
        %7037 = vmatpush1.bf16.msra.mxu0 0
        %7038 = vmatprep.subr.bf16.mxu0 0
        %7039 = vmatpush1.bf16.msra.mxu0 0
        %7040 = vmatprep.subr.bf16.mxu0 0
        %7041 = vmatpush1.bf16.msra.mxu0 0
        %7042 = vmatprep.mubr.bf16.mxu0 0
        %7043 = vmatmul.mubr.bf16.gmra.mrb[0].mxu0 %v6163
        %v7044 = vpop.f32.mrb[0].mxu0
        %v7045 = vadd.f32 0.0, %v7044
        %v7046 = vpop.f32.mrb[0].mxu0
        %v7047 = vpop.f32.mrb[0].mxu0
        %v7048 = vadd.f32 0.0, %v7047
        %v7049 = vpop.f32.mrb[0].mxu0
        %7050 = vmatprep.mubr.bf16.mxu0 0
        %7051 = vmatmul.mubr.bf16.gmra.mrb[0].mxu0 %v6164
        %v7052 = vpop.f32.mrb[0].mxu0
        %v7053 = vadd.f32 0.0, %v7052
        %v7054 = vpop.f32.mrb[0].mxu0
        %v7055 = vpop.f32.mrb[0].mxu0
        %v7056 = vadd.f32 0.0, %v7055
        %v7057 = vpop.f32.mrb[0].mxu0
        %7058 = vmatprep.mubr.bf16.mxu0 0
        %7059 = vmatmul.mubr.bf16.gmra.mrb[0].mxu0 %v6165
        %v7060 = vpop.f32.mrb[0].mxu0
        %v7061 = vadd.f32 0.0, %v7060
        %v7062 = vpop.f32.mrb[0].mxu0
        %v7063 = vpop.f32.mrb[0].mxu0
        %v7064 = vadd.f32 0.0, %v7063
        %v7065 = vpop.f32.mrb[0].mxu0
        %7066 = vmatprep.mubr.bf16.mxu0 0
        %7067 = vmatmul.mubr.bf16.gmra.mrb[0].mxu0 %v6166
        %v7068 = vpop.f32.mrb[0].mxu0
        %v7069 = vadd.f32 0.0, %v7068
        %v7070 = vpop.f32.mrb[0].mxu0
        %v7071 = vpop.f32.mrb[0].mxu0
        %v7072 = vadd.f32 0.0, %v7071
        %v7073 = vpop.f32.mrb[0].mxu0
        %7074 = vmatprep.mubr.bf16.mxu0 0
        %7075 = vmatmul.mubr.bf16.gmra.mrb[0].mxu0 %v6167
        %v7076 = vpop.f32.mrb[0].mxu0
        %v7077 = vadd.f32 0.0, %v7076
        %v7078 = vpop.f32.mrb[0].mxu0
        %v7079 = vpop.f32.mrb[0].mxu0
        %v7080 = vadd.f32 0.0, %v7079
        %v7081 = vpop.f32.mrb[0].mxu0
        %7082 = vmatprep.mubr.bf16.mxu0 0
        %7083 = vmatmul.mubr.bf16.gmra.mrb[0].mxu0 %v6168
        %v7084 = vpop.f32.mrb[0].mxu0
        %v7085 = vadd.f32 0.0, %v7084
        %v7086 = vpop.f32.mrb[0].mxu0
        %v7087 = vpop.f32.mrb[0].mxu0
        %v7088 = vadd.f32 0.0, %v7087
        %v7089 = vpop.f32.mrb[0].mxu0
        %7090 = vmatprep.mubr.bf16.mxu0 0
        %7091 = vmatmul.mubr.bf16.gmra.mrb[0].mxu0 %v6169
        %v7092 = vpop.f32.mrb[0].mxu0
        %v7093 = vadd.f32 0.0, %v7092
        %v7094 = vpop.f32.mrb[0].mxu0
        %v7095 = vpop.f32.mrb[0].mxu0
        %v7096 = vadd.f32 0.0, %v7095
        %v7097 = vpop.f32.mrb[0].mxu0
        %7098 = vmatprep.mubr.bf16.mxu0 0
        %7099 = vmatmul.mubr.bf16.gmra.mrb[0].mxu0 %v6170
        %v7100 = vpop.f32.mrb[0].mxu0
        %v7101 = vadd.f32 0.0, %v7100
        %v7102 = vpop.f32.mrb[0].mxu0
        %v7103 = vpop.f32.mrb[0].mxu0
        %v7104 = vadd.f32 0.0, %v7103
        %v7105 = vpop.f32.mrb[0].mxu0
        %7106 = vmatprep.mubr.bf16.mxu0 0
        %7107 = vmatmul.mubr.bf16.gmra.mrb[0].mxu0 %v6171
        %v7108 = vpop.f32.mrb[0].mxu0
        %v7109 = vadd.f32 0.0, %v7108
        %v7110 = vpop.f32.mrb[0].mxu0
        %v7111 = vpop.f32.mrb[0].mxu0
        %v7112 = vadd.f32 0.0, %v7111
        %v7113 = vpop.f32.mrb[0].mxu0
        %7114 = vmatprep.mubr.bf16.mxu0 0
        %7115 = vmatmul.mubr.bf16.gmra.mrb[0].mxu0 %v6172
        %v7116 = vpop.f32.mrb[0].mxu0
        %v7117 = vadd.f32 0.0, %v7116
        %v7118 = vpop.f32.mrb[0].mxu0
        %v7119 = vpop.f32.mrb[0].mxu0
        %v7120 = vadd.f32 0.0, %v7119
        %v7121 = vpop.f32.mrb[0].mxu0
        %7122 = vmatprep.mubr.bf16.mxu0 0
        %7123 = vmatmul.mubr.bf16.gmra.mrb[0].mxu0 %v6173
        %v7124 = vpop.f32.mrb[0].mxu0
        %v7125 = vadd.f32 0.0, %v7124
        %v7126 = vpop.f32.mrb[0].mxu0
        %v7127 = vpop.f32.mrb[0].mxu0
        %v7128 = vadd.f32 0.0, %v7127
        %v7129 = vpop.f32.mrb[0].mxu0
        %7130 = vmatprep.mubr.bf16.mxu0 0
        %7131 = vmatmul.mubr.bf16.gmra.mrb[0].mxu0 %v6174
        %v7132 = vpop.f32.mrb[0].mxu0
        %v7133 = vadd.f32 0.0, %v7132
        %v7134 = vpop.f32.mrb[0].mxu0
        %v7135 = vpop.f32.mrb[0].mxu0
        %v7136 = vadd.f32 0.0, %v7135
        %v7137 = vpop.f32.mrb[0].mxu0
        %7138 = vmatprep.mubr.bf16.mxu0 0
        %7139 = vmatmul.mubr.bf16.gmra.mrb[0].mxu0 %v6175
        %v7140 = vpop.f32.mrb[0].mxu0
        %v7141 = vadd.f32 0.0, %v7140
        %v7142 = vpop.f32.mrb[0].mxu0
        %v7143 = vpop.f32.mrb[0].mxu0
        %v7144 = vadd.f32 0.0, %v7143
        %v7145 = vpop.f32.mrb[0].mxu0
        %7146 = vmatprep.mubr.bf16.mxu0 0
        %7147 = vmatmul.mubr.bf16.gmra.mrb[0].mxu0 %v6176
        %v7148 = vpop.f32.mrb[0].mxu0
        %v7149 = vadd.f32 0.0, %v7148
        %v7150 = vpop.f32.mrb[0].mxu0
        %v7151 = vpop.f32.mrb[0].mxu0
        %v7152 = vadd.f32 0.0, %v7151
        %v7153 = vpop.f32.mrb[0].mxu0
        %7154 = vmatprep.mubr.bf16.mxu0 0
        %7155 = vmatmul.mubr.bf16.gmra.mrb[0].mxu0 %v6177
        %v7156 = vpop.f32.mrb[0].mxu0
        %v7157 = vadd.f32 0.0, %v7156
        %v7158 = vpop.f32.mrb[0].mxu0
        %v7159 = vpop.f32.mrb[0].mxu0
        %v7160 = vadd.f32 0.0, %v7159
        %v7161 = vpop.f32.mrb[0].mxu0
        %7162 = vmatprep.mubr.bf16.mxu0 0
        %7163 = vmatmul.mubr.bf16.gmra.mrb[0].mxu0 %v6178
        %v7164 = vpop.f32.mrb[0].mxu0
        %v7165 = vadd.f32 0.0, %v7164
        %v7166 = vpop.f32.mrb[0].mxu0
        %v7167 = vpop.f32.mrb[0].mxu0
        %v7168 = vadd.f32 0.0, %v7167
        %v7169 = vpop.f32.mrb[0].mxu0
        %7170 = vmatprep.mubr.bf16.mxu0 0
        %7171 = vmatmul.mubr.bf16.gmra.mrb[0].mxu0 %v6518
        %v7172 = vpop.f32.mrb[0].mxu0
        %v7173 = vadd.f32 0.0, %v7172
        %v7174 = vpop.f32.mrb[0].mxu0
        %v7175 = vpop.f32.mrb[0].mxu0
        %v7176 = vadd.f32 0.0, %v7175
        %v7177 = vpop.f32.mrb[0].mxu0
        %7178 = vdwg.mxu0
        %v7179 = vadd.f32 %v6911, %v7045
        %v7180 = vadd.f32 %v6912, %v7048
        %v7181 = vadd.f32 %v6913, %v7053
        %v7182 = vadd.f32 %v6914, %v7056
        %v7183 = vadd.f32 %v6915, %v7061
        %v7184 = vadd.f32 %v6916, %v7064
        %v7185 = vadd.f32 %v6917, %v7069
        %v7186 = vadd.f32 %v6918, %v7072
        %v7187 = vadd.f32 %v6919, %v7077
        %v7188 = vadd.f32 %v6920, %v7080
        %v7189 = vadd.f32 %v6921, %v7085
        %v7190 = vadd.f32 %v6922, %v7088
        %v7191 = vadd.f32 %v6923, %v7093
        %v7192 = vadd.f32 %v6924, %v7096
        %v7193 = vadd.f32 %v6925, %v7101
        %v7194 = vadd.f32 %v6926, %v7104
        %v7195 = vadd.f32 %v6927, %v7109
        %v7196 = vadd.f32 %v6928, %v7112
        %v7197 = vadd.f32 %v6929, %v7117
        %v7198 = vadd.f32 %v6930, %v7120
        %v7199 = vadd.f32 %v6931, %v7125
        %v7200 = vadd.f32 %v6932, %v7128
        %v7201 = vadd.f32 %v6933, %v7133
        %v7202 = vadd.f32 %v6934, %v7136
        %v7203 = vadd.f32 %v6935, %v7141
        %v7204 = vadd.f32 %v6936, %v7144
        %v7205 = vadd.f32 %v6937, %v7149
        %v7206 = vadd.f32 %v6938, %v7152
        %v7207 = vadd.f32 %v6939, %v7157
        %v7208 = vadd.f32 %v6940, %v7160
        %v7209 = vadd.f32 %v6941, %v7165
        %v7210 = vadd.f32 %v6942, %v7168
        %v7211 = vadd.f32 %v6943, %v7173
        %v7212 = vadd.f32 %v6944, %v7176
        %v7213 = vld [vmem:[#allocation2 + $0x8] sm:$0x80]
        %v7214 = vld [vmem:[#allocation2 + $0x10] sm:$0xff]
        %v7215 = vld [vmem:[#allocation2 + $0x18] sm:$0xff]
        %v7216 = vld [vmem:[#allocation2 + $0x20] sm:$0xff]
        %v7217 = vld [vmem:[#allocation2 + $0x28] sm:$0xff]
        %v7218 = vld [vmem:[#allocation2 + $0x30] sm:$0xff]
        %v7219 = vld [vmem:[#allocation2 + $0x38] sm:$0xff]
        %v7220 = vld [vmem:[#allocation2 + $0x40] sm:$0xff]
        %v7221 = vld [vmem:[#allocation2 + $0x48] sm:$0xff]
        %v7222 = vld [vmem:[#allocation2 + $0x50] sm:$0xff]
        %v7223 = vld [vmem:[#allocation2 + $0x58] sm:$0xff]
        %v7224 = vld [vmem:[#allocation2 + $0x60] sm:$0xff]
        %v7225 = vld [vmem:[#allocation2 + $0x68] sm:$0xff]
        %v7226 = vld [vmem:[#allocation2 + $0x70] sm:$0xff]
        %v7227 = vld [vmem:[#allocation2 + $0x78] sm:$0xff]
        %v7228 = vld [vmem:[#allocation2 + $0x80] sm:$0xff]
        %v7229 = vld [vmem:[#allocation2 + $0x88] sm:$0xff]
        %v7230 = vld [vmem:[#allocation2 + $0x90] sm:$0xff]
        %s7231 = scalar_lea.vmem [#allocation8], 192
        %v7232 = vld [vmem:[%s7231] sm:$0xf]
        %v7233 = vld [vmem:[%s7231 + $0x4] sm:$0xf]
        %v7234 = vld [vmem:[%s7231 + $0x8] sm:$0xf]
        %v7235 = vld [vmem:[%s7231 + $0xc] sm:$0xf]
        %v7236 = vld [vmem:[%s7231 + $0x10] sm:$0xf]
        %v7237 = vld [vmem:[%s7231 + $0x14] sm:$0xf]
        %v7238 = vld [vmem:[%s7231 + $0x18] sm:$0xf]
        %v7239 = vld [vmem:[%s7231 + $0x1c] sm:$0xf]
        %v7240 = vld [vmem:[%s7231 + $0x20] sm:$0xf]
        %v7241 = vld [vmem:[%s7231 + $0x24] sm:$0xf]
        %v7242 = vld [vmem:[%s7231 + $0x28] sm:$0xf]
        %v7243 = vld [vmem:[%s7231 + $0x2c] sm:$0xf]
        %v7244 = vld [vmem:[%s7231 + $0x30] sm:$0xf]
        %v7245 = vld [vmem:[%s7231 + $0x34] sm:$0xf]
        %v7246 = vld [vmem:[%s7231 + $0x38] sm:$0xf]
        %v7247 = vld [vmem:[%s7231 + $0x3c] sm:$0xf]
        %v7249 = vshrl.u32 %v7213, 16
        %v7251 = vrot.slane %v7249, 7
        %v7253 = vshrl.u32 %v7214, 16
        %v7255 = vrot.slane %v7253, 7
        %v7256 = vshll.u32 %v7214, 16
        %v7258 = vor.u32 %v7255, %v7256
        %v7259 = vsel %vm6536, %v7251, %v7258
        %v7261 = vshrl.u32 %v7215, 16
        %v7263 = vrot.slane %v7261, 7
        %v7264 = vshll.u32 %v7215, 16
        %v7266 = vor.u32 %v7263, %v7264
        %v7267 = vsel %vm6536, %v7255, %v7266
        %v7269 = vshrl.u32 %v7216, 16
        %v7271 = vrot.slane %v7269, 7
        %v7272 = vshll.u32 %v7216, 16
        %v7274 = vor.u32 %v7271, %v7272
        %v7275 = vsel %vm6536, %v7263, %v7274
        %v7277 = vshrl.u32 %v7217, 16
        %v7279 = vrot.slane %v7277, 7
        %v7280 = vshll.u32 %v7217, 16
        %v7282 = vor.u32 %v7279, %v7280
        %v7283 = vsel %vm6536, %v7271, %v7282
        %v7285 = vshrl.u32 %v7218, 16
        %v7287 = vrot.slane %v7285, 7
        %v7288 = vshll.u32 %v7218, 16
        %v7290 = vor.u32 %v7287, %v7288
        %v7291 = vsel %vm6536, %v7279, %v7290
        %v7293 = vshrl.u32 %v7219, 16
        %v7295 = vrot.slane %v7293, 7
        %v7296 = vshll.u32 %v7219, 16
        %v7298 = vor.u32 %v7295, %v7296
        %v7299 = vsel %vm6536, %v7287, %v7298
        %v7301 = vshrl.u32 %v7220, 16
        %v7303 = vrot.slane %v7301, 7
        %v7304 = vshll.u32 %v7220, 16
        %v7306 = vor.u32 %v7303, %v7304
        %v7307 = vsel %vm6536, %v7295, %v7306
        %v7309 = vshrl.u32 %v7221, 16
        %v7311 = vrot.slane %v7309, 7
        %v7312 = vshll.u32 %v7221, 16
        %v7314 = vor.u32 %v7311, %v7312
        %v7315 = vsel %vm6536, %v7303, %v7314
        %v7317 = vshrl.u32 %v7222, 16
        %v7319 = vrot.slane %v7317, 7
        %v7320 = vshll.u32 %v7222, 16
        %v7322 = vor.u32 %v7319, %v7320
        %v7323 = vsel %vm6536, %v7311, %v7322
        %v7325 = vshrl.u32 %v7223, 16
        %v7327 = vrot.slane %v7325, 7
        %v7328 = vshll.u32 %v7223, 16
        %v7330 = vor.u32 %v7327, %v7328
        %v7331 = vsel %vm6536, %v7319, %v7330
        %v7333 = vshrl.u32 %v7224, 16
        %v7335 = vrot.slane %v7333, 7
        %v7336 = vshll.u32 %v7224, 16
        %v7338 = vor.u32 %v7335, %v7336
        %v7339 = vsel %vm6536, %v7327, %v7338
        %v7341 = vshrl.u32 %v7225, 16
        %v7343 = vrot.slane %v7341, 7
        %v7344 = vshll.u32 %v7225, 16
        %v7346 = vor.u32 %v7343, %v7344
        %v7347 = vsel %vm6536, %v7335, %v7346
        %v7349 = vshrl.u32 %v7226, 16
        %v7351 = vrot.slane %v7349, 7
        %v7352 = vshll.u32 %v7226, 16
        %v7354 = vor.u32 %v7351, %v7352
        %v7355 = vsel %vm6536, %v7343, %v7354
        %v7357 = vshrl.u32 %v7227, 16
        %v7359 = vrot.slane %v7357, 7
        %v7360 = vshll.u32 %v7227, 16
        %v7362 = vor.u32 %v7359, %v7360
        %v7363 = vsel %vm6536, %v7351, %v7362
        %v7365 = vshrl.u32 %v7228, 16
        %v7367 = vrot.slane %v7365, 7
        %v7368 = vshll.u32 %v7228, 16
        %v7370 = vor.u32 %v7367, %v7368
        %v7371 = vsel %vm6536, %v7359, %v7370
        %v7373 = vshrl.u32 %v7229, 16
        %v7375 = vrot.slane %v7373, 7
        %v7376 = vshll.u32 %v7229, 16
        %v7378 = vor.u32 %v7375, %v7376
        %v7379 = vsel %vm6536, %v7367, %v7378
        %v7381 = vshrl.u32 %v7230, 16
        %v7383 = vrot.slane %v7381, 7
        %v7384 = vshll.u32 %v7230, 16
        %v7386 = vor.u32 %v7383, %v7384
        %v7387 = vsel %vm6536, %v7375, %v7386
        %v7421 = vunpack.c.l.b16 %v7232
        %v7422 = vunpack.c.l.b16 %v7233
        %v7423 = vunpack.c.l.b16 %v7234
        %v7424 = vunpack.c.l.b16 %v7235
        %v7425 = vunpack.c.l.b16 %v7236
        %v7426 = vunpack.c.l.b16 %v7237
        %v7427 = vunpack.c.l.b16 %v7238
        %v7428 = vunpack.c.l.b16 %v7239
        %v7429 = vunpack.c.l.b16 %v7240
        %v7430 = vunpack.c.l.b16 %v7241
        %v7431 = vunpack.c.l.b16 %v7242
        %v7432 = vunpack.c.l.b16 %v7243
        %v7433 = vunpack.c.l.b16 %v7244
        %v7434 = vunpack.c.l.b16 %v7245
        %v7435 = vunpack.c.l.b16 %v7246
        %v7436 = vunpack.c.l.b16 %v7247
        %v7437 = vpack.c.b16 %v7422, %v7421
        %v7438 = vpack.c.b16 %v7424, %v7423
        %v7439 = vpack.c.b16 %v7426, %v7425
        %v7440 = vpack.c.b16 %v7428, %v7427
        %v7441 = vpack.c.b16 %v7430, %v7429
        %v7442 = vpack.c.b16 %v7432, %v7431
        %v7443 = vpack.c.b16 %v7434, %v7433
        %v7444 = vpack.c.b16 %v7436, %v7435
        %7453 = vmatprep.subr.bf16.mxu0 0
        %7454 = vmatpush1.bf16.msra.mxu0 %v7437
        %7455 = vmatprep.subr.bf16.mxu0 0
        %7456 = vmatpush1.bf16.msra.mxu0 %v7438
        %7457 = vmatprep.subr.bf16.mxu0 0
        %7458 = vmatpush1.bf16.msra.mxu0 %v7439
        %7459 = vmatprep.subr.bf16.mxu0 0
        %7460 = vmatpush1.bf16.msra.mxu0 %v7440
        %7461 = vmatprep.subr.bf16.mxu0 0
        %7462 = vmatpush1.bf16.msra.mxu0 %v7441
        %7463 = vmatprep.subr.bf16.mxu0 0
        %7464 = vmatpush1.bf16.msra.mxu0 %v7442
        %7465 = vmatprep.subr.bf16.mxu0 0
        %7466 = vmatpush1.bf16.msra.mxu0 %v7443
        %7467 = vmatprep.subr.bf16.mxu0 0
        %7468 = vmatpush1.bf16.msra.mxu0 %v7444
        %7469 = vmatprep.subr.bf16.mxu0 0
        %7470 = vmatpush1.bf16.msra.mxu0 0
        %7471 = vmatprep.subr.bf16.mxu0 0
        %7472 = vmatpush1.bf16.msra.mxu0 0
        %7473 = vmatprep.subr.bf16.mxu0 0
        %7474 = vmatpush1.bf16.msra.mxu0 0
        %7475 = vmatprep.subr.bf16.mxu0 0
        %7476 = vmatpush1.bf16.msra.mxu0 0
        %7477 = vmatprep.subr.bf16.mxu0 0
        %7478 = vmatpush1.bf16.msra.mxu0 0
        %7479 = vmatprep.subr.bf16.mxu0 0
        %7480 = vmatpush1.bf16.msra.mxu0 0
        %7481 = vmatprep.subr.bf16.mxu0 0
        %7482 = vmatpush1.bf16.msra.mxu0 0
        %7483 = vmatprep.subr.bf16.mxu0 0
        %7484 = vmatpush1.bf16.msra.mxu0 0
        %7485 = vmatprep.mubr.bf16.mxu0 0
        %7486 = vmatmul.mubr.bf16.gmra.mrb[0].mxu0 %v7259
        %v7487 = vpop.f32.mrb[0].mxu0
        %v7488 = vadd.f32 0.0, %v7487
        %v7489 = vpop.f32.mrb[0].mxu0
        %v7490 = vpop.f32.mrb[0].mxu0
        %v7491 = vadd.f32 0.0, %v7490
        %v7492 = vpop.f32.mrb[0].mxu0
        %7493 = vmatprep.mubr.bf16.mxu0 0
        %7494 = vmatmul.mubr.bf16.gmra.mrb[0].mxu0 %v7267
        %v7495 = vpop.f32.mrb[0].mxu0
        %v7496 = vadd.f32 0.0, %v7495
        %v7497 = vpop.f32.mrb[0].mxu0
        %v7498 = vpop.f32.mrb[0].mxu0
        %v7499 = vadd.f32 0.0, %v7498
        %v7500 = vpop.f32.mrb[0].mxu0
        %7501 = vmatprep.mubr.bf16.mxu0 0
        %7502 = vmatmul.mubr.bf16.gmra.mrb[0].mxu0 %v7275
        %v7503 = vpop.f32.mrb[0].mxu0
        %v7504 = vadd.f32 0.0, %v7503
        %v7505 = vpop.f32.mrb[0].mxu0
        %v7506 = vpop.f32.mrb[0].mxu0
        %v7507 = vadd.f32 0.0, %v7506
        %v7508 = vpop.f32.mrb[0].mxu0
        %7509 = vmatprep.mubr.bf16.mxu0 0
        %7510 = vmatmul.mubr.bf16.gmra.mrb[0].mxu0 %v7283
        %v7511 = vpop.f32.mrb[0].mxu0
        %v7512 = vadd.f32 0.0, %v7511
        %v7513 = vpop.f32.mrb[0].mxu0
        %v7514 = vpop.f32.mrb[0].mxu0
        %v7515 = vadd.f32 0.0, %v7514
        %v7516 = vpop.f32.mrb[0].mxu0
        %7517 = vmatprep.mubr.bf16.mxu0 0
        %7518 = vmatmul.mubr.bf16.gmra.mrb[0].mxu0 %v7291
        %v7519 = vpop.f32.mrb[0].mxu0
        %v7520 = vadd.f32 0.0, %v7519
        %v7521 = vpop.f32.mrb[0].mxu0
        %v7522 = vpop.f32.mrb[0].mxu0
        %v7523 = vadd.f32 0.0, %v7522
        %v7524 = vpop.f32.mrb[0].mxu0
        %7525 = vmatprep.mubr.bf16.mxu0 0
        %7526 = vmatmul.mubr.bf16.gmra.mrb[0].mxu0 %v7299
        %v7527 = vpop.f32.mrb[0].mxu0
        %v7528 = vadd.f32 0.0, %v7527
        %v7529 = vpop.f32.mrb[0].mxu0
        %v7530 = vpop.f32.mrb[0].mxu0
        %v7531 = vadd.f32 0.0, %v7530
        %v7532 = vpop.f32.mrb[0].mxu0
        %7533 = vmatprep.mubr.bf16.mxu0 0
        %7534 = vmatmul.mubr.bf16.gmra.mrb[0].mxu0 %v7307
        %v7535 = vpop.f32.mrb[0].mxu0
        %v7536 = vadd.f32 0.0, %v7535
        %v7537 = vpop.f32.mrb[0].mxu0
        %v7538 = vpop.f32.mrb[0].mxu0
        %v7539 = vadd.f32 0.0, %v7538
        %v7540 = vpop.f32.mrb[0].mxu0
        %7541 = vmatprep.mubr.bf16.mxu0 0
        %7542 = vmatmul.mubr.bf16.gmra.mrb[0].mxu0 %v7315
        %v7543 = vpop.f32.mrb[0].mxu0
        %v7544 = vadd.f32 0.0, %v7543
        %v7545 = vpop.f32.mrb[0].mxu0
        %v7546 = vpop.f32.mrb[0].mxu0
        %v7547 = vadd.f32 0.0, %v7546
        %v7548 = vpop.f32.mrb[0].mxu0
        %7549 = vmatprep.mubr.bf16.mxu0 0
        %7550 = vmatmul.mubr.bf16.gmra.mrb[0].mxu0 %v7323
        %v7551 = vpop.f32.mrb[0].mxu0
        %v7552 = vadd.f32 0.0, %v7551
        %v7553 = vpop.f32.mrb[0].mxu0
        %v7554 = vpop.f32.mrb[0].mxu0
        %v7555 = vadd.f32 0.0, %v7554
        %v7556 = vpop.f32.mrb[0].mxu0
        %7557 = vmatprep.mubr.bf16.mxu0 0
        %7558 = vmatmul.mubr.bf16.gmra.mrb[0].mxu0 %v7331
        %v7559 = vpop.f32.mrb[0].mxu0
        %v7560 = vadd.f32 0.0, %v7559
        %v7561 = vpop.f32.mrb[0].mxu0
        %v7562 = vpop.f32.mrb[0].mxu0
        %v7563 = vadd.f32 0.0, %v7562
        %v7564 = vpop.f32.mrb[0].mxu0
        %7565 = vmatprep.mubr.bf16.mxu0 0
        %7566 = vmatmul.mubr.bf16.gmra.mrb[0].mxu0 %v7339
        %v7567 = vpop.f32.mrb[0].mxu0
        %v7568 = vadd.f32 0.0, %v7567
        %v7569 = vpop.f32.mrb[0].mxu0
        %v7570 = vpop.f32.mrb[0].mxu0
        %v7571 = vadd.f32 0.0, %v7570
        %v7572 = vpop.f32.mrb[0].mxu0
        %7573 = vmatprep.mubr.bf16.mxu0 0
        %7574 = vmatmul.mubr.bf16.gmra.mrb[0].mxu0 %v7347
        %v7575 = vpop.f32.mrb[0].mxu0
        %v7576 = vadd.f32 0.0, %v7575
        %v7577 = vpop.f32.mrb[0].mxu0
        %v7578 = vpop.f32.mrb[0].mxu0
        %v7579 = vadd.f32 0.0, %v7578
        %v7580 = vpop.f32.mrb[0].mxu0
        %7581 = vmatprep.mubr.bf16.mxu0 0
        %7582 = vmatmul.mubr.bf16.gmra.mrb[0].mxu0 %v7355
        %v7583 = vpop.f32.mrb[0].mxu0
        %v7584 = vadd.f32 0.0, %v7583
        %v7585 = vpop.f32.mrb[0].mxu0
        %v7586 = vpop.f32.mrb[0].mxu0
        %v7587 = vadd.f32 0.0, %v7586
        %v7588 = vpop.f32.mrb[0].mxu0
        %7589 = vmatprep.mubr.bf16.mxu0 0
        %7590 = vmatmul.mubr.bf16.gmra.mrb[0].mxu0 %v7363
        %v7591 = vpop.f32.mrb[0].mxu0
        %v7592 = vadd.f32 0.0, %v7591
        %v7593 = vpop.f32.mrb[0].mxu0
        %v7594 = vpop.f32.mrb[0].mxu0
        %v7595 = vadd.f32 0.0, %v7594
        %v7596 = vpop.f32.mrb[0].mxu0
        %7597 = vmatprep.mubr.bf16.mxu0 0
        %7598 = vmatmul.mubr.bf16.gmra.mrb[0].mxu0 %v7371
        %v7599 = vpop.f32.mrb[0].mxu0
        %v7600 = vadd.f32 0.0, %v7599
        %v7601 = vpop.f32.mrb[0].mxu0
        %v7602 = vpop.f32.mrb[0].mxu0
        %v7603 = vadd.f32 0.0, %v7602
        %v7604 = vpop.f32.mrb[0].mxu0
        %7605 = vmatprep.mubr.bf16.mxu0 0
        %7606 = vmatmul.mubr.bf16.gmra.mrb[0].mxu0 %v7379
        %v7607 = vpop.f32.mrb[0].mxu0
        %v7608 = vadd.f32 0.0, %v7607
        %v7609 = vpop.f32.mrb[0].mxu0
        %v7610 = vpop.f32.mrb[0].mxu0
        %v7611 = vadd.f32 0.0, %v7610
        %v7612 = vpop.f32.mrb[0].mxu0
        %7613 = vmatprep.mubr.bf16.mxu0 0
        %7614 = vmatmul.mubr.bf16.gmra.mrb[0].mxu0 %v7387
        %v7615 = vpop.f32.mrb[0].mxu0
        %v7616 = vadd.f32 0.0, %v7615
        %v7617 = vpop.f32.mrb[0].mxu0
        %v7618 = vpop.f32.mrb[0].mxu0
        %v7619 = vadd.f32 0.0, %v7618
        %v7620 = vpop.f32.mrb[0].mxu0
        %7621 = vdwg.mxu0
        %v7622 = vadd.f32 %v7179, %v7488
        %v7623 = vadd.f32 %v7180, %v7491
        %v7624 = vadd.f32 %v7181, %v7496
        %v7625 = vadd.f32 %v7182, %v7499
        %v7626 = vadd.f32 %v7183, %v7504
        %v7627 = vadd.f32 %v7184, %v7507
        %v7628 = vadd.f32 %v7185, %v7512
        %v7629 = vadd.f32 %v7186, %v7515
        %v7630 = vadd.f32 %v7187, %v7520
        %v7631 = vadd.f32 %v7188, %v7523
        %v7632 = vadd.f32 %v7189, %v7528
        %v7633 = vadd.f32 %v7190, %v7531
        %v7634 = vadd.f32 %v7191, %v7536
        %v7635 = vadd.f32 %v7192, %v7539
        %v7636 = vadd.f32 %v7193, %v7544
        %v7637 = vadd.f32 %v7194, %v7547
        %v7638 = vadd.f32 %v7195, %v7552
        %v7639 = vadd.f32 %v7196, %v7555
        %v7640 = vadd.f32 %v7197, %v7560
        %v7641 = vadd.f32 %v7198, %v7563
        %v7642 = vadd.f32 %v7199, %v7568
        %v7643 = vadd.f32 %v7200, %v7571
        %v7644 = vadd.f32 %v7201, %v7576
        %v7645 = vadd.f32 %v7202, %v7579
        %v7646 = vadd.f32 %v7203, %v7584
        %v7647 = vadd.f32 %v7204, %v7587
        %v7648 = vadd.f32 %v7205, %v7592
        %v7649 = vadd.f32 %v7206, %v7595
        %v7650 = vadd.f32 %v7207, %v7600
        %v7651 = vadd.f32 %v7208, %v7603
        %v7652 = vadd.f32 %v7209, %v7608
        %v7653 = vadd.f32 %v7210, %v7611
        %v7654 = vadd.f32 %v7211, %v7616
        %v7655 = vadd.f32 %v7212, %v7619
        %s7656 = scalar_lea.vmem [#allocation8], 256
        %v7657 = vld [vmem:[%s7656] sm:$0xf]
        %v7658 = vld [vmem:[%s7656 + $0x4] sm:$0xf]
        %v7659 = vld [vmem:[%s7656 + $0x8] sm:$0xf]
        %v7660 = vld [vmem:[%s7656 + $0xc] sm:$0xf]
        %v7661 = vld [vmem:[%s7656 + $0x10] sm:$0xf]
        %v7662 = vld [vmem:[%s7656 + $0x14] sm:$0xf]
        %v7663 = vld [vmem:[%s7656 + $0x18] sm:$0xf]
        %v7664 = vld [vmem:[%s7656 + $0x1c] sm:$0xf]
        %v7665 = vld [vmem:[%s7656 + $0x20] sm:$0xf]
        %v7666 = vld [vmem:[%s7656 + $0x24] sm:$0xf]
        %v7667 = vld [vmem:[%s7656 + $0x28] sm:$0xf]
        %v7668 = vld [vmem:[%s7656 + $0x2c] sm:$0xf]
        %v7669 = vld [vmem:[%s7656 + $0x30] sm:$0xf]
        %v7670 = vld [vmem:[%s7656 + $0x34] sm:$0xf]
        %v7671 = vld [vmem:[%s7656 + $0x38] sm:$0xf]
        %v7672 = vld [vmem:[%s7656 + $0x3c] sm:$0xf]
        %v7689 = vunpack.c.l.b16 %v7657
        %v7690 = vunpack.c.l.b16 %v7658
        %v7691 = vunpack.c.l.b16 %v7659
        %v7692 = vunpack.c.l.b16 %v7660
        %v7693 = vunpack.c.l.b16 %v7661
        %v7694 = vunpack.c.l.b16 %v7662
        %v7695 = vunpack.c.l.b16 %v7663
        %v7696 = vunpack.c.l.b16 %v7664
        %v7697 = vunpack.c.l.b16 %v7665
        %v7698 = vunpack.c.l.b16 %v7666
        %v7699 = vunpack.c.l.b16 %v7667
        %v7700 = vunpack.c.l.b16 %v7668
        %v7701 = vunpack.c.l.b16 %v7669
        %v7702 = vunpack.c.l.b16 %v7670
        %v7703 = vunpack.c.l.b16 %v7671
        %v7704 = vunpack.c.l.b16 %v7672
        %v7705 = vpack.c.b16 %v7690, %v7689
        %v7706 = vpack.c.b16 %v7692, %v7691
        %v7707 = vpack.c.b16 %v7694, %v7693
        %v7708 = vpack.c.b16 %v7696, %v7695
        %v7709 = vpack.c.b16 %v7698, %v7697
        %v7710 = vpack.c.b16 %v7700, %v7699
        %v7711 = vpack.c.b16 %v7702, %v7701
        %v7712 = vpack.c.b16 %v7704, %v7703
        %7721 = vmatprep.subr.bf16.mxu0 0
        %7722 = vmatpush1.bf16.msra.mxu0 %v7705
        %7723 = vmatprep.subr.bf16.mxu0 0
        %7724 = vmatpush1.bf16.msra.mxu0 %v7706
        %7725 = vmatprep.subr.bf16.mxu0 0
        %7726 = vmatpush1.bf16.msra.mxu0 %v7707
        %7727 = vmatprep.subr.bf16.mxu0 0
        %7728 = vmatpush1.bf16.msra.mxu0 %v7708
        %7729 = vmatprep.subr.bf16.mxu0 0
        %7730 = vmatpush1.bf16.msra.mxu0 %v7709
        %7731 = vmatprep.subr.bf16.mxu0 0
        %7732 = vmatpush1.bf16.msra.mxu0 %v7710
        %7733 = vmatprep.subr.bf16.mxu0 0
        %7734 = vmatpush1.bf16.msra.mxu0 %v7711
        %7735 = vmatprep.subr.bf16.mxu0 0
        %7736 = vmatpush1.bf16.msra.mxu0 %v7712
        %7737 = vmatprep.subr.bf16.mxu0 0
        %7738 = vmatpush1.bf16.msra.mxu0 0
        %7739 = vmatprep.subr.bf16.mxu0 0
        %7740 = vmatpush1.bf16.msra.mxu0 0
        %7741 = vmatprep.subr.bf16.mxu0 0
        %7742 = vmatpush1.bf16.msra.mxu0 0
        %7743 = vmatprep.subr.bf16.mxu0 0
        %7744 = vmatpush1.bf16.msra.mxu0 0
        %7745 = vmatprep.subr.bf16.mxu0 0
        %7746 = vmatpush1.bf16.msra.mxu0 0
        %7747 = vmatprep.subr.bf16.mxu0 0
        %7748 = vmatpush1.bf16.msra.mxu0 0
        %7749 = vmatprep.subr.bf16.mxu0 0
        %7750 = vmatpush1.bf16.msra.mxu0 0
        %7751 = vmatprep.subr.bf16.mxu0 0
        %7752 = vmatpush1.bf16.msra.mxu0 0
        %7753 = vmatprep.mubr.bf16.mxu0 0
        %7754 = vmatmul.mubr.bf16.gmra.mrb[0].mxu0 %v7214
        %v7755 = vpop.f32.mrb[0].mxu0
        %v7756 = vadd.f32 0.0, %v7755
        %v7757 = vpop.f32.mrb[0].mxu0
        %v7758 = vpop.f32.mrb[0].mxu0
        %v7759 = vadd.f32 0.0, %v7758
        %v7760 = vpop.f32.mrb[0].mxu0
        %7761 = vmatprep.mubr.bf16.mxu0 0
        %7762 = vmatmul.mubr.bf16.gmra.mrb[0].mxu0 %v7215
        %v7763 = vpop.f32.mrb[0].mxu0
        %v7764 = vadd.f32 0.0, %v7763
        %v7765 = vpop.f32.mrb[0].mxu0
        %v7766 = vpop.f32.mrb[0].mxu0
        %v7767 = vadd.f32 0.0, %v7766
        %v7768 = vpop.f32.mrb[0].mxu0
        %7769 = vmatprep.mubr.bf16.mxu0 0
        %7770 = vmatmul.mubr.bf16.gmra.mrb[0].mxu0 %v7216
        %v7771 = vpop.f32.mrb[0].mxu0
        %v7772 = vadd.f32 0.0, %v7771
        %v7773 = vpop.f32.mrb[0].mxu0
        %v7774 = vpop.f32.mrb[0].mxu0
        %v7775 = vadd.f32 0.0, %v7774
        %v7776 = vpop.f32.mrb[0].mxu0
        %7777 = vmatprep.mubr.bf16.mxu0 0
        %7778 = vmatmul.mubr.bf16.gmra.mrb[0].mxu0 %v7217
        %v7779 = vpop.f32.mrb[0].mxu0
        %v7780 = vadd.f32 0.0, %v7779
        %v7781 = vpop.f32.mrb[0].mxu0
        %v7782 = vpop.f32.mrb[0].mxu0
        %v7783 = vadd.f32 0.0, %v7782
        %v7784 = vpop.f32.mrb[0].mxu0
        %7785 = vmatprep.mubr.bf16.mxu0 0
        %7786 = vmatmul.mubr.bf16.gmra.mrb[0].mxu0 %v7218
        %v7787 = vpop.f32.mrb[0].mxu0
        %v7788 = vadd.f32 0.0, %v7787
        %v7789 = vpop.f32.mrb[0].mxu0
        %v7790 = vpop.f32.mrb[0].mxu0
        %v7791 = vadd.f32 0.0, %v7790
        %v7792 = vpop.f32.mrb[0].mxu0
        %7793 = vmatprep.mubr.bf16.mxu0 0
        %7794 = vmatmul.mubr.bf16.gmra.mrb[0].mxu0 %v7219
        %v7795 = vpop.f32.mrb[0].mxu0
        %v7796 = vadd.f32 0.0, %v7795
        %v7797 = vpop.f32.mrb[0].mxu0
        %v7798 = vpop.f32.mrb[0].mxu0
        %v7799 = vadd.f32 0.0, %v7798
        %v7800 = vpop.f32.mrb[0].mxu0
        %7801 = vmatprep.mubr.bf16.mxu0 0
        %7802 = vmatmul.mubr.bf16.gmra.mrb[0].mxu0 %v7220
        %v7803 = vpop.f32.mrb[0].mxu0
        %v7804 = vadd.f32 0.0, %v7803
        %v7805 = vpop.f32.mrb[0].mxu0
        %v7806 = vpop.f32.mrb[0].mxu0
        %v7807 = vadd.f32 0.0, %v7806
        %v7808 = vpop.f32.mrb[0].mxu0
        %7809 = vmatprep.mubr.bf16.mxu0 0
        %7810 = vmatmul.mubr.bf16.gmra.mrb[0].mxu0 %v7221
        %v7811 = vpop.f32.mrb[0].mxu0
        %v7812 = vadd.f32 0.0, %v7811
        %v7813 = vpop.f32.mrb[0].mxu0
        %v7814 = vpop.f32.mrb[0].mxu0
        %v7815 = vadd.f32 0.0, %v7814
        %v7816 = vpop.f32.mrb[0].mxu0
        %7817 = vmatprep.mubr.bf16.mxu0 0
        %7818 = vmatmul.mubr.bf16.gmra.mrb[0].mxu0 %v7222
        %v7819 = vpop.f32.mrb[0].mxu0
        %v7820 = vadd.f32 0.0, %v7819
        %v7821 = vpop.f32.mrb[0].mxu0
        %v7822 = vpop.f32.mrb[0].mxu0
        %v7823 = vadd.f32 0.0, %v7822
        %v7824 = vpop.f32.mrb[0].mxu0
        %7825 = vmatprep.mubr.bf16.mxu0 0
        %7826 = vmatmul.mubr.bf16.gmra.mrb[0].mxu0 %v7223
        %v7827 = vpop.f32.mrb[0].mxu0
        %v7828 = vadd.f32 0.0, %v7827
        %v7829 = vpop.f32.mrb[0].mxu0
        %v7830 = vpop.f32.mrb[0].mxu0
        %v7831 = vadd.f32 0.0, %v7830
        %v7832 = vpop.f32.mrb[0].mxu0
        %7833 = vmatprep.mubr.bf16.mxu0 0
        %7834 = vmatmul.mubr.bf16.gmra.mrb[0].mxu0 %v7224
        %v7835 = vpop.f32.mrb[0].mxu0
        %v7836 = vadd.f32 0.0, %v7835
        %v7837 = vpop.f32.mrb[0].mxu0
        %v7838 = vpop.f32.mrb[0].mxu0
        %v7839 = vadd.f32 0.0, %v7838
        %v7840 = vpop.f32.mrb[0].mxu0
        %7841 = vmatprep.mubr.bf16.mxu0 0
        %7842 = vmatmul.mubr.bf16.gmra.mrb[0].mxu0 %v7225
        %v7843 = vpop.f32.mrb[0].mxu0
        %v7844 = vadd.f32 0.0, %v7843
        %v7845 = vpop.f32.mrb[0].mxu0
        %v7846 = vpop.f32.mrb[0].mxu0
        %v7847 = vadd.f32 0.0, %v7846
        %v7848 = vpop.f32.mrb[0].mxu0
        %7849 = vmatprep.mubr.bf16.mxu0 0
        %7850 = vmatmul.mubr.bf16.gmra.mrb[0].mxu0 %v7226
        %v7851 = vpop.f32.mrb[0].mxu0
        %v7852 = vadd.f32 0.0, %v7851
        %v7853 = vpop.f32.mrb[0].mxu0
        %v7854 = vpop.f32.mrb[0].mxu0
        %v7855 = vadd.f32 0.0, %v7854
        %v7856 = vpop.f32.mrb[0].mxu0
        %7857 = vmatprep.mubr.bf16.mxu0 0
        %7858 = vmatmul.mubr.bf16.gmra.mrb[0].mxu0 %v7227
        %v7859 = vpop.f32.mrb[0].mxu0
        %v7860 = vadd.f32 0.0, %v7859
        %v7861 = vpop.f32.mrb[0].mxu0
        %v7862 = vpop.f32.mrb[0].mxu0
        %v7863 = vadd.f32 0.0, %v7862
        %v7864 = vpop.f32.mrb[0].mxu0
        %7865 = vmatprep.mubr.bf16.mxu0 0
        %7866 = vmatmul.mubr.bf16.gmra.mrb[0].mxu0 %v7228
        %v7867 = vpop.f32.mrb[0].mxu0
        %v7868 = vadd.f32 0.0, %v7867
        %v7869 = vpop.f32.mrb[0].mxu0
        %v7870 = vpop.f32.mrb[0].mxu0
        %v7871 = vadd.f32 0.0, %v7870
        %v7872 = vpop.f32.mrb[0].mxu0
        %7873 = vmatprep.mubr.bf16.mxu0 0
        %7874 = vmatmul.mubr.bf16.gmra.mrb[0].mxu0 %v7229
        %v7875 = vpop.f32.mrb[0].mxu0
        %v7876 = vadd.f32 0.0, %v7875
        %v7877 = vpop.f32.mrb[0].mxu0
        %v7878 = vpop.f32.mrb[0].mxu0
        %v7879 = vadd.f32 0.0, %v7878
        %v7880 = vpop.f32.mrb[0].mxu0
        %7881 = vmatprep.mubr.bf16.mxu0 0
        %7882 = vmatmul.mubr.bf16.gmra.mrb[0].mxu0 %v7230
        %v7883 = vpop.f32.mrb[0].mxu0
        %v7884 = vadd.f32 0.0, %v7883
        %v7885 = vpop.f32.mrb[0].mxu0
        %v7886 = vpop.f32.mrb[0].mxu0
        %v7887 = vadd.f32 0.0, %v7886
        %v7888 = vpop.f32.mrb[0].mxu0
        %7889 = vdwg.mxu0
        %v7890 = vadd.f32 %v7622, %v7756
        %v7891 = vadd.f32 %v7623, %v7759
        %v7892 = vadd.f32 %v7624, %v7764
        %v7893 = vadd.f32 %v7625, %v7767
        %v7894 = vadd.f32 %v7626, %v7772
        %v7895 = vadd.f32 %v7627, %v7775
        %v7896 = vadd.f32 %v7628, %v7780
        %v7897 = vadd.f32 %v7629, %v7783
        %v7898 = vadd.f32 %v7630, %v7788
        %v7899 = vadd.f32 %v7631, %v7791
        %v7900 = vadd.f32 %v7632, %v7796
        %v7901 = vadd.f32 %v7633, %v7799
        %v7902 = vadd.f32 %v7634, %v7804
        %v7903 = vadd.f32 %v7635, %v7807
        %v7904 = vadd.f32 %v7636, %v7812
        %v7905 = vadd.f32 %v7637, %v7815
        %v7906 = vadd.f32 %v7638, %v7820
        %v7907 = vadd.f32 %v7639, %v7823
        %v7908 = vadd.f32 %v7640, %v7828
        %v7909 = vadd.f32 %v7641, %v7831
        %v7910 = vadd.f32 %v7642, %v7836
        %v7911 = vadd.f32 %v7643, %v7839
        %v7912 = vadd.f32 %v7644, %v7844
        %v7913 = vadd.f32 %v7645, %v7847
        %v7914 = vadd.f32 %v7646, %v7852
        %v7915 = vadd.f32 %v7647, %v7855
        %v7916 = vadd.f32 %v7648, %v7860
        %v7917 = vadd.f32 %v7649, %v7863
        %v7918 = vadd.f32 %v7650, %v7868
        %v7919 = vadd.f32 %v7651, %v7871
        %v7920 = vadd.f32 %v7652, %v7876
        %v7921 = vadd.f32 %v7653, %v7879
        %v7922 = vadd.f32 %v7654, %v7884
        %v7923 = vadd.f32 %v7655, %v7887
        %v7924 = vld [vmem:[#allocation2 + $0x10] sm:$0xff]
        %v7925 = vld [vmem:[#allocation2 + $0x18] sm:$0xff]
        %v7926 = vld [vmem:[#allocation2 + $0x20] sm:$0xff]
        %v7927 = vld [vmem:[#allocation2 + $0x28] sm:$0xff]
        %v7928 = vld [vmem:[#allocation2 + $0x30] sm:$0xff]
        %v7929 = vld [vmem:[#allocation2 + $0x38] sm:$0xff]
        %v7930 = vld [vmem:[#allocation2 + $0x40] sm:$0xff]
        %v7931 = vld [vmem:[#allocation2 + $0x48] sm:$0xff]
        %v7932 = vld [vmem:[#allocation2 + $0x50] sm:$0xff]
        %v7933 = vld [vmem:[#allocation2 + $0x58] sm:$0xff]
        %v7934 = vld [vmem:[#allocation2 + $0x60] sm:$0xff]
        %v7935 = vld [vmem:[#allocation2 + $0x68] sm:$0xff]
        %v7936 = vld [vmem:[#allocation2 + $0x70] sm:$0xff]
        %v7937 = vld [vmem:[#allocation2 + $0x78] sm:$0xff]
        %v7938 = vld [vmem:[#allocation2 + $0x80] sm:$0xff]
        %v7939 = vld [vmem:[#allocation2 + $0x88] sm:$0xff]
        %v7940 = vld [vmem:[#allocation2 + $0x90] sm:$0xff]
        %v7941 = vld [vmem:[#allocation2 + $0x98] sm:$0x1]
        %s7942 = scalar_lea.vmem [#allocation8], 320
        %v7943 = vld [vmem:[%s7942] sm:$0xf]
        %v7944 = vld [vmem:[%s7942 + $0x4] sm:$0xf]
        %v7945 = vld [vmem:[%s7942 + $0x8] sm:$0xf]
        %v7946 = vld [vmem:[%s7942 + $0xc] sm:$0xf]
        %v7947 = vld [vmem:[%s7942 + $0x10] sm:$0xf]
        %v7948 = vld [vmem:[%s7942 + $0x14] sm:$0xf]
        %v7949 = vld [vmem:[%s7942 + $0x18] sm:$0xf]
        %v7950 = vld [vmem:[%s7942 + $0x1c] sm:$0xf]
        %v7951 = vld [vmem:[%s7942 + $0x20] sm:$0xf]
        %v7952 = vld [vmem:[%s7942 + $0x24] sm:$0xf]
        %v7953 = vld [vmem:[%s7942 + $0x28] sm:$0xf]
        %v7954 = vld [vmem:[%s7942 + $0x2c] sm:$0xf]
        %v7955 = vld [vmem:[%s7942 + $0x30] sm:$0xf]
        %v7956 = vld [vmem:[%s7942 + $0x34] sm:$0xf]
        %v7957 = vld [vmem:[%s7942 + $0x38] sm:$0xf]
        %v7958 = vld [vmem:[%s7942 + $0x3c] sm:$0xf]
        %v7960 = vshrl.u32 %v7924, 16
        %v7962 = vshll.u32 %v7924, 16
        %v7964 = vrot.slane %v7962, 1
        %v7965 = vor.u32 %v7960, %v7964
        %v7967 = vshll.u32 %v7925, 16
        %v7969 = vrot.slane %v7967, 1
        %v7970 = vsel %vm3885, %v7965, %v7969
        %v7971 = vshrl.u32 %v7925, 16
        %v7973 = vor.u32 %v7971, %v7969
        %v7975 = vshll.u32 %v7926, 16
        %v7977 = vrot.slane %v7975, 1
        %v7978 = vsel %vm3885, %v7973, %v7977
        %v7979 = vshrl.u32 %v7926, 16
        %v7981 = vor.u32 %v7979, %v7977
        %v7983 = vshll.u32 %v7927, 16
        %v7985 = vrot.slane %v7983, 1
        %v7986 = vsel %vm3885, %v7981, %v7985
        %v7987 = vshrl.u32 %v7927, 16
        %v7989 = vor.u32 %v7987, %v7985
        %v7991 = vshll.u32 %v7928, 16
        %v7993 = vrot.slane %v7991, 1
        %v7994 = vsel %vm3885, %v7989, %v7993
        %v7995 = vshrl.u32 %v7928, 16
        %v7997 = vor.u32 %v7995, %v7993
        %v7999 = vshll.u32 %v7929, 16
        %v8001 = vrot.slane %v7999, 1
        %v8002 = vsel %vm3885, %v7997, %v8001
        %v8003 = vshrl.u32 %v7929, 16
        %v8005 = vor.u32 %v8003, %v8001
        %v8007 = vshll.u32 %v7930, 16
        %v8009 = vrot.slane %v8007, 1
        %v8010 = vsel %vm3885, %v8005, %v8009
        %v8011 = vshrl.u32 %v7930, 16
        %v8013 = vor.u32 %v8011, %v8009
        %v8015 = vshll.u32 %v7931, 16
        %v8017 = vrot.slane %v8015, 1
        %v8018 = vsel %vm3885, %v8013, %v8017
        %v8019 = vshrl.u32 %v7931, 16
        %v8021 = vor.u32 %v8019, %v8017
        %v8023 = vshll.u32 %v7932, 16
        %v8025 = vrot.slane %v8023, 1
        %v8026 = vsel %vm3885, %v8021, %v8025
        %v8027 = vshrl.u32 %v7932, 16
        %v8029 = vor.u32 %v8027, %v8025
        %v8031 = vshll.u32 %v7933, 16
        %v8033 = vrot.slane %v8031, 1
        %v8034 = vsel %vm3885, %v8029, %v8033
        %v8035 = vshrl.u32 %v7933, 16
        %v8037 = vor.u32 %v8035, %v8033
        %v8039 = vshll.u32 %v7934, 16
        %v8041 = vrot.slane %v8039, 1
        %v8042 = vsel %vm3885, %v8037, %v8041
        %v8043 = vshrl.u32 %v7934, 16
        %v8045 = vor.u32 %v8043, %v8041
        %v8047 = vshll.u32 %v7935, 16
        %v8049 = vrot.slane %v8047, 1
        %v8050 = vsel %vm3885, %v8045, %v8049
        %v8051 = vshrl.u32 %v7935, 16
        %v8053 = vor.u32 %v8051, %v8049
        %v8055 = vshll.u32 %v7936, 16
        %v8057 = vrot.slane %v8055, 1
        %v8058 = vsel %vm3885, %v8053, %v8057
        %v8059 = vshrl.u32 %v7936, 16
        %v8061 = vor.u32 %v8059, %v8057
        %v8063 = vshll.u32 %v7937, 16
        %v8065 = vrot.slane %v8063, 1
        %v8066 = vsel %vm3885, %v8061, %v8065
        %v8067 = vshrl.u32 %v7937, 16
        %v8069 = vor.u32 %v8067, %v8065
        %v8071 = vshll.u32 %v7938, 16
        %v8073 = vrot.slane %v8071, 1
        %v8074 = vsel %vm3885, %v8069, %v8073
        %v8075 = vshrl.u32 %v7938, 16
        %v8077 = vor.u32 %v8075, %v8073
        %v8079 = vshll.u32 %v7939, 16
        %v8081 = vrot.slane %v8079, 1
        %v8082 = vsel %vm3885, %v8077, %v8081
        %v8083 = vshrl.u32 %v7939, 16
        %v8085 = vor.u32 %v8083, %v8081
        %v8087 = vshll.u32 %v7940, 16
        %v8089 = vrot.slane %v8087, 1
        %v8090 = vsel %vm3885, %v8085, %v8089
        %v8091 = vshrl.u32 %v7940, 16
        %v8093 = vor.u32 %v8091, %v8089
        %v8095 = vshll.u32 %v7941, 16
        %v8097 = vrot.slane %v8095, 1
        %v8098 = vsel %vm3885, %v8093, %v8097
        %v8132 = vunpack.c.l.b16 %v7943
        %v8133 = vunpack.c.l.b16 %v7944
        %v8134 = vunpack.c.l.b16 %v7945
        %v8135 = vunpack.c.l.b16 %v7946
        %v8136 = vunpack.c.l.b16 %v7947
        %v8137 = vunpack.c.l.b16 %v7948
        %v8138 = vunpack.c.l.b16 %v7949
        %v8139 = vunpack.c.l.b16 %v7950
        %v8140 = vunpack.c.l.b16 %v7951
        %v8141 = vunpack.c.l.b16 %v7952
        %v8142 = vunpack.c.l.b16 %v7953
        %v8143 = vunpack.c.l.b16 %v7954
        %v8144 = vunpack.c.l.b16 %v7955
        %v8145 = vunpack.c.l.b16 %v7956
        %v8146 = vunpack.c.l.b16 %v7957
        %v8147 = vunpack.c.l.b16 %v7958
        %v8148 = vpack.c.b16 %v8133, %v8132
        %v8149 = vpack.c.b16 %v8135, %v8134
        %v8150 = vpack.c.b16 %v8137, %v8136
        %v8151 = vpack.c.b16 %v8139, %v8138
        %v8152 = vpack.c.b16 %v8141, %v8140
        %v8153 = vpack.c.b16 %v8143, %v8142
        %v8154 = vpack.c.b16 %v8145, %v8144
        %v8155 = vpack.c.b16 %v8147, %v8146
        %8164 = vmatprep.subr.bf16.mxu0 0
        %8165 = vmatpush1.bf16.msra.mxu0 %v8148
        %8166 = vmatprep.subr.bf16.mxu0 0
        %8167 = vmatpush1.bf16.msra.mxu0 %v8149
        %8168 = vmatprep.subr.bf16.mxu0 0
        %8169 = vmatpush1.bf16.msra.mxu0 %v8150
        %8170 = vmatprep.subr.bf16.mxu0 0
        %8171 = vmatpush1.bf16.msra.mxu0 %v8151
        %8172 = vmatprep.subr.bf16.mxu0 0
        %8173 = vmatpush1.bf16.msra.mxu0 %v8152
        %8174 = vmatprep.subr.bf16.mxu0 0
        %8175 = vmatpush1.bf16.msra.mxu0 %v8153
        %8176 = vmatprep.subr.bf16.mxu0 0
        %8177 = vmatpush1.bf16.msra.mxu0 %v8154
        %8178 = vmatprep.subr.bf16.mxu0 0
        %8179 = vmatpush1.bf16.msra.mxu0 %v8155
        %8180 = vmatprep.subr.bf16.mxu0 0
        %8181 = vmatpush1.bf16.msra.mxu0 0
        %8182 = vmatprep.subr.bf16.mxu0 0
        %8183 = vmatpush1.bf16.msra.mxu0 0
        %8184 = vmatprep.subr.bf16.mxu0 0
        %8185 = vmatpush1.bf16.msra.mxu0 0
        %8186 = vmatprep.subr.bf16.mxu0 0
        %8187 = vmatpush1.bf16.msra.mxu0 0
        %8188 = vmatprep.subr.bf16.mxu0 0
        %8189 = vmatpush1.bf16.msra.mxu0 0
        %8190 = vmatprep.subr.bf16.mxu0 0
        %8191 = vmatpush1.bf16.msra.mxu0 0
        %8192 = vmatprep.subr.bf16.mxu0 0
        %8193 = vmatpush1.bf16.msra.mxu0 0
        %8194 = vmatprep.subr.bf16.mxu0 0
        %8195 = vmatpush1.bf16.msra.mxu0 0
        %8196 = vmatprep.mubr.bf16.mxu0 0
        %8197 = vmatmul.mubr.bf16.gmra.mrb[0].mxu0 %v7970
        %v8198 = vpop.f32.mrb[0].mxu0
        %v8199 = vadd.f32 0.0, %v8198
        %v8200 = vpop.f32.mrb[0].mxu0
        %v8201 = vpop.f32.mrb[0].mxu0
        %v8202 = vadd.f32 0.0, %v8201
        %v8203 = vpop.f32.mrb[0].mxu0
        %8204 = vmatprep.mubr.bf16.mxu0 0
        %8205 = vmatmul.mubr.bf16.gmra.mrb[0].mxu0 %v7978
        %v8206 = vpop.f32.mrb[0].mxu0
        %v8207 = vadd.f32 0.0, %v8206
        %v8208 = vpop.f32.mrb[0].mxu0
        %v8209 = vpop.f32.mrb[0].mxu0
        %v8210 = vadd.f32 0.0, %v8209
        %v8211 = vpop.f32.mrb[0].mxu0
        %8212 = vmatprep.mubr.bf16.mxu0 0
        %8213 = vmatmul.mubr.bf16.gmra.mrb[0].mxu0 %v7986
        %v8214 = vpop.f32.mrb[0].mxu0
        %v8215 = vadd.f32 0.0, %v8214
        %v8216 = vpop.f32.mrb[0].mxu0
        %v8217 = vpop.f32.mrb[0].mxu0
        %v8218 = vadd.f32 0.0, %v8217
        %v8219 = vpop.f32.mrb[0].mxu0
        %8220 = vmatprep.mubr.bf16.mxu0 0
        %8221 = vmatmul.mubr.bf16.gmra.mrb[0].mxu0 %v7994
        %v8222 = vpop.f32.mrb[0].mxu0
        %v8223 = vadd.f32 0.0, %v8222
        %v8224 = vpop.f32.mrb[0].mxu0
        %v8225 = vpop.f32.mrb[0].mxu0
        %v8226 = vadd.f32 0.0, %v8225
        %v8227 = vpop.f32.mrb[0].mxu0
        %8228 = vmatprep.mubr.bf16.mxu0 0
        %8229 = vmatmul.mubr.bf16.gmra.mrb[0].mxu0 %v8002
        %v8230 = vpop.f32.mrb[0].mxu0
        %v8231 = vadd.f32 0.0, %v8230
        %v8232 = vpop.f32.mrb[0].mxu0
        %v8233 = vpop.f32.mrb[0].mxu0
        %v8234 = vadd.f32 0.0, %v8233
        %v8235 = vpop.f32.mrb[0].mxu0
        %8236 = vmatprep.mubr.bf16.mxu0 0
        %8237 = vmatmul.mubr.bf16.gmra.mrb[0].mxu0 %v8010
        %v8238 = vpop.f32.mrb[0].mxu0
        %v8239 = vadd.f32 0.0, %v8238
        %v8240 = vpop.f32.mrb[0].mxu0
        %v8241 = vpop.f32.mrb[0].mxu0
        %v8242 = vadd.f32 0.0, %v8241
        %v8243 = vpop.f32.mrb[0].mxu0
        %8244 = vmatprep.mubr.bf16.mxu0 0
        %8245 = vmatmul.mubr.bf16.gmra.mrb[0].mxu0 %v8018
        %v8246 = vpop.f32.mrb[0].mxu0
        %v8247 = vadd.f32 0.0, %v8246
        %v8248 = vpop.f32.mrb[0].mxu0
        %v8249 = vpop.f32.mrb[0].mxu0
        %v8250 = vadd.f32 0.0, %v8249
        %v8251 = vpop.f32.mrb[0].mxu0
        %8252 = vmatprep.mubr.bf16.mxu0 0
        %8253 = vmatmul.mubr.bf16.gmra.mrb[0].mxu0 %v8026
        %v8254 = vpop.f32.mrb[0].mxu0
        %v8255 = vadd.f32 0.0, %v8254
        %v8256 = vpop.f32.mrb[0].mxu0
        %v8257 = vpop.f32.mrb[0].mxu0
        %v8258 = vadd.f32 0.0, %v8257
        %v8259 = vpop.f32.mrb[0].mxu0
        %8260 = vmatprep.mubr.bf16.mxu0 0
        %8261 = vmatmul.mubr.bf16.gmra.mrb[0].mxu0 %v8034
        %v8262 = vpop.f32.mrb[0].mxu0
        %v8263 = vadd.f32 0.0, %v8262
        %v8264 = vpop.f32.mrb[0].mxu0
        %v8265 = vpop.f32.mrb[0].mxu0
        %v8266 = vadd.f32 0.0, %v8265
        %v8267 = vpop.f32.mrb[0].mxu0
        %8268 = vmatprep.mubr.bf16.mxu0 0
        %8269 = vmatmul.mubr.bf16.gmra.mrb[0].mxu0 %v8042
        %v8270 = vpop.f32.mrb[0].mxu0
        %v8271 = vadd.f32 0.0, %v8270
        %v8272 = vpop.f32.mrb[0].mxu0
        %v8273 = vpop.f32.mrb[0].mxu0
        %v8274 = vadd.f32 0.0, %v8273
        %v8275 = vpop.f32.mrb[0].mxu0
        %8276 = vmatprep.mubr.bf16.mxu0 0
        %8277 = vmatmul.mubr.bf16.gmra.mrb[0].mxu0 %v8050
        %v8278 = vpop.f32.mrb[0].mxu0
        %v8279 = vadd.f32 0.0, %v8278
        %v8280 = vpop.f32.mrb[0].mxu0
        %v8281 = vpop.f32.mrb[0].mxu0
        %v8282 = vadd.f32 0.0, %v8281
        %v8283 = vpop.f32.mrb[0].mxu0
        %8284 = vmatprep.mubr.bf16.mxu0 0
        %8285 = vmatmul.mubr.bf16.gmra.mrb[0].mxu0 %v8058
        %v8286 = vpop.f32.mrb[0].mxu0
        %v8287 = vadd.f32 0.0, %v8286
        %v8288 = vpop.f32.mrb[0].mxu0
        %v8289 = vpop.f32.mrb[0].mxu0
        %v8290 = vadd.f32 0.0, %v8289
        %v8291 = vpop.f32.mrb[0].mxu0
        %8292 = vmatprep.mubr.bf16.mxu0 0
        %8293 = vmatmul.mubr.bf16.gmra.mrb[0].mxu0 %v8066
        %v8294 = vpop.f32.mrb[0].mxu0
        %v8295 = vadd.f32 0.0, %v8294
        %v8296 = vpop.f32.mrb[0].mxu0
        %v8297 = vpop.f32.mrb[0].mxu0
        %v8298 = vadd.f32 0.0, %v8297
        %v8299 = vpop.f32.mrb[0].mxu0
        %8300 = vmatprep.mubr.bf16.mxu0 0
        %8301 = vmatmul.mubr.bf16.gmra.mrb[0].mxu0 %v8074
        %v8302 = vpop.f32.mrb[0].mxu0
        %v8303 = vadd.f32 0.0, %v8302
        %v8304 = vpop.f32.mrb[0].mxu0
        %v8305 = vpop.f32.mrb[0].mxu0
        %v8306 = vadd.f32 0.0, %v8305
        %v8307 = vpop.f32.mrb[0].mxu0
        %8308 = vmatprep.mubr.bf16.mxu0 0
        %8309 = vmatmul.mubr.bf16.gmra.mrb[0].mxu0 %v8082
        %v8310 = vpop.f32.mrb[0].mxu0
        %v8311 = vadd.f32 0.0, %v8310
        %v8312 = vpop.f32.mrb[0].mxu0
        %v8313 = vpop.f32.mrb[0].mxu0
        %v8314 = vadd.f32 0.0, %v8313
        %v8315 = vpop.f32.mrb[0].mxu0
        %8316 = vmatprep.mubr.bf16.mxu0 0
        %8317 = vmatmul.mubr.bf16.gmra.mrb[0].mxu0 %v8090
        %v8318 = vpop.f32.mrb[0].mxu0
        %v8319 = vadd.f32 0.0, %v8318
        %v8320 = vpop.f32.mrb[0].mxu0
        %v8321 = vpop.f32.mrb[0].mxu0
        %v8322 = vadd.f32 0.0, %v8321
        %v8323 = vpop.f32.mrb[0].mxu0
        %8324 = vmatprep.mubr.bf16.mxu0 0
        %8325 = vmatmul.mubr.bf16.gmra.mrb[0].mxu0 %v8098
        %v8326 = vpop.f32.mrb[0].mxu0
        %v8327 = vadd.f32 0.0, %v8326
        %v8328 = vpop.f32.mrb[0].mxu0
        %v8329 = vpop.f32.mrb[0].mxu0
        %v8330 = vadd.f32 0.0, %v8329
        %v8331 = vpop.f32.mrb[0].mxu0
        %8332 = vdwg.mxu0
        %v8333 = vadd.f32 %v7890, %v8199
        %v8334 = vadd.f32 %v7891, %v8202
        %v8335 = vadd.f32 %v7892, %v8207
        %v8336 = vadd.f32 %v7893, %v8210
        %v8337 = vadd.f32 %v7894, %v8215
        %v8338 = vadd.f32 %v7895, %v8218
        %v8339 = vadd.f32 %v7896, %v8223
        %v8340 = vadd.f32 %v7897, %v8226
        %v8341 = vadd.f32 %v7898, %v8231
        %v8342 = vadd.f32 %v7899, %v8234
        %v8343 = vadd.f32 %v7900, %v8239
        %v8344 = vadd.f32 %v7901, %v8242
        %v8345 = vadd.f32 %v7902, %v8247
        %v8346 = vadd.f32 %v7903, %v8250
        %v8347 = vadd.f32 %v7904, %v8255
        %v8348 = vadd.f32 %v7905, %v8258
        %v8349 = vadd.f32 %v7906, %v8263
        %v8350 = vadd.f32 %v7907, %v8266
        %v8351 = vadd.f32 %v7908, %v8271
        %v8352 = vadd.f32 %v7909, %v8274
        %v8353 = vadd.f32 %v7910, %v8279
        %v8354 = vadd.f32 %v7911, %v8282
        %v8355 = vadd.f32 %v7912, %v8287
        %v8356 = vadd.f32 %v7913, %v8290
        %v8357 = vadd.f32 %v7914, %v8295
        %v8358 = vadd.f32 %v7915, %v8298
        %v8359 = vadd.f32 %v7916, %v8303
        %v8360 = vadd.f32 %v7917, %v8306
        %v8361 = vadd.f32 %v7918, %v8311
        %v8362 = vadd.f32 %v7919, %v8314
        %v8363 = vadd.f32 %v7920, %v8319
        %v8364 = vadd.f32 %v7921, %v8322
        %v8365 = vadd.f32 %v7922, %v8327
        %v8366 = vadd.f32 %v7923, %v8330
        %v8367 = vld [vmem:[#allocation2 + $0x98] sm:$0xff]
        %s8368 = scalar_lea.vmem [#allocation8], 384
        %v8369 = vld [vmem:[%s8368] sm:$0xf]
        %v8370 = vld [vmem:[%s8368 + $0x4] sm:$0xf]
        %v8371 = vld [vmem:[%s8368 + $0x8] sm:$0xf]
        %v8372 = vld [vmem:[%s8368 + $0xc] sm:$0xf]
        %v8373 = vld [vmem:[%s8368 + $0x10] sm:$0xf]
        %v8374 = vld [vmem:[%s8368 + $0x14] sm:$0xf]
        %v8375 = vld [vmem:[%s8368 + $0x18] sm:$0xf]
        %v8376 = vld [vmem:[%s8368 + $0x1c] sm:$0xf]
        %v8377 = vld [vmem:[%s8368 + $0x20] sm:$0xf]
        %v8378 = vld [vmem:[%s8368 + $0x24] sm:$0xf]
        %v8379 = vld [vmem:[%s8368 + $0x28] sm:$0xf]
        %v8380 = vld [vmem:[%s8368 + $0x2c] sm:$0xf]
        %v8381 = vld [vmem:[%s8368 + $0x30] sm:$0xf]
        %v8382 = vld [vmem:[%s8368 + $0x34] sm:$0xf]
        %v8383 = vld [vmem:[%s8368 + $0x38] sm:$0xf]
        %v8384 = vld [vmem:[%s8368 + $0x3c] sm:$0xf]
        %v8401 = vunpack.c.l.b16 %v8369
        %v8402 = vunpack.c.l.b16 %v8370
        %v8403 = vunpack.c.l.b16 %v8371
        %v8404 = vunpack.c.l.b16 %v8372
        %v8405 = vunpack.c.l.b16 %v8373
        %v8406 = vunpack.c.l.b16 %v8374
        %v8407 = vunpack.c.l.b16 %v8375
        %v8408 = vunpack.c.l.b16 %v8376
        %v8409 = vunpack.c.l.b16 %v8377
        %v8410 = vunpack.c.l.b16 %v8378
        %v8411 = vunpack.c.l.b16 %v8379
        %v8412 = vunpack.c.l.b16 %v8380
        %v8413 = vunpack.c.l.b16 %v8381
        %v8414 = vunpack.c.l.b16 %v8382
        %v8415 = vunpack.c.l.b16 %v8383
        %v8416 = vunpack.c.l.b16 %v8384
        %v8417 = vpack.c.b16 %v8402, %v8401
        %v8418 = vpack.c.b16 %v8404, %v8403
        %v8419 = vpack.c.b16 %v8406, %v8405
        %v8420 = vpack.c.b16 %v8408, %v8407
        %v8421 = vpack.c.b16 %v8410, %v8409
        %v8422 = vpack.c.b16 %v8412, %v8411
        %v8423 = vpack.c.b16 %v8414, %v8413
        %v8424 = vpack.c.b16 %v8416, %v8415
        %8433 = vmatprep.subr.bf16.mxu0 0
        %8434 = vmatpush1.bf16.msra.mxu0 %v8417
        %8435 = vmatprep.subr.bf16.mxu0 0
        %8436 = vmatpush1.bf16.msra.mxu0 %v8418
        %8437 = vmatprep.subr.bf16.mxu0 0
        %8438 = vmatpush1.bf16.msra.mxu0 %v8419
        %8439 = vmatprep.subr.bf16.mxu0 0
        %8440 = vmatpush1.bf16.msra.mxu0 %v8420
        %8441 = vmatprep.subr.bf16.mxu0 0
        %8442 = vmatpush1.bf16.msra.mxu0 %v8421
        %8443 = vmatprep.subr.bf16.mxu0 0
        %8444 = vmatpush1.bf16.msra.mxu0 %v8422
        %8445 = vmatprep.subr.bf16.mxu0 0
        %8446 = vmatpush1.bf16.msra.mxu0 %v8423
        %8447 = vmatprep.subr.bf16.mxu0 0
        %8448 = vmatpush1.bf16.msra.mxu0 %v8424
        %8449 = vmatprep.subr.bf16.mxu0 0
        %8450 = vmatpush1.bf16.msra.mxu0 0
        %8451 = vmatprep.subr.bf16.mxu0 0
        %8452 = vmatpush1.bf16.msra.mxu0 0
        %8453 = vmatprep.subr.bf16.mxu0 0
        %8454 = vmatpush1.bf16.msra.mxu0 0
        %8455 = vmatprep.subr.bf16.mxu0 0
        %8456 = vmatpush1.bf16.msra.mxu0 0
        %8457 = vmatprep.subr.bf16.mxu0 0
        %8458 = vmatpush1.bf16.msra.mxu0 0
        %8459 = vmatprep.subr.bf16.mxu0 0
        %8460 = vmatpush1.bf16.msra.mxu0 0
        %8461 = vmatprep.subr.bf16.mxu0 0
        %8462 = vmatpush1.bf16.msra.mxu0 0
        %8463 = vmatprep.subr.bf16.mxu0 0
        %8464 = vmatpush1.bf16.msra.mxu0 0
        %8465 = vmatprep.mubr.bf16.mxu0 0
        %8466 = vmatmul.mubr.bf16.gmra.mrb[0].mxu0 %v7925
        %v8467 = vpop.f32.mrb[0].mxu0
        %v8468 = vadd.f32 0.0, %v8467
        %v8469 = vpop.f32.mrb[0].mxu0
        %v8470 = vpop.f32.mrb[0].mxu0
        %v8471 = vadd.f32 0.0, %v8470
        %v8472 = vpop.f32.mrb[0].mxu0
        %8473 = vmatprep.mubr.bf16.mxu0 0
        %8474 = vmatmul.mubr.bf16.gmra.mrb[0].mxu0 %v7926
        %v8475 = vpop.f32.mrb[0].mxu0
        %v8476 = vadd.f32 0.0, %v8475
        %v8477 = vpop.f32.mrb[0].mxu0
        %v8478 = vpop.f32.mrb[0].mxu0
        %v8479 = vadd.f32 0.0, %v8478
        %v8480 = vpop.f32.mrb[0].mxu0
        %8481 = vmatprep.mubr.bf16.mxu0 0
        %8482 = vmatmul.mubr.bf16.gmra.mrb[0].mxu0 %v7927
        %v8483 = vpop.f32.mrb[0].mxu0
        %v8484 = vadd.f32 0.0, %v8483
        %v8485 = vpop.f32.mrb[0].mxu0
        %v8486 = vpop.f32.mrb[0].mxu0
        %v8487 = vadd.f32 0.0, %v8486
        %v8488 = vpop.f32.mrb[0].mxu0
        %8489 = vmatprep.mubr.bf16.mxu0 0
        %8490 = vmatmul.mubr.bf16.gmra.mrb[0].mxu0 %v7928
        %v8491 = vpop.f32.mrb[0].mxu0
        %v8492 = vadd.f32 0.0, %v8491
        %v8493 = vpop.f32.mrb[0].mxu0
        %v8494 = vpop.f32.mrb[0].mxu0
        %v8495 = vadd.f32 0.0, %v8494
        %v8496 = vpop.f32.mrb[0].mxu0
        %8497 = vmatprep.mubr.bf16.mxu0 0
        %8498 = vmatmul.mubr.bf16.gmra.mrb[0].mxu0 %v7929
        %v8499 = vpop.f32.mrb[0].mxu0
        %v8500 = vadd.f32 0.0, %v8499
        %v8501 = vpop.f32.mrb[0].mxu0
        %v8502 = vpop.f32.mrb[0].mxu0
        %v8503 = vadd.f32 0.0, %v8502
        %v8504 = vpop.f32.mrb[0].mxu0
        %8505 = vmatprep.mubr.bf16.mxu0 0
        %8506 = vmatmul.mubr.bf16.gmra.mrb[0].mxu0 %v7930
        %v8507 = vpop.f32.mrb[0].mxu0
        %v8508 = vadd.f32 0.0, %v8507
        %v8509 = vpop.f32.mrb[0].mxu0
        %v8510 = vpop.f32.mrb[0].mxu0
        %v8511 = vadd.f32 0.0, %v8510
        %v8512 = vpop.f32.mrb[0].mxu0
        %8513 = vmatprep.mubr.bf16.mxu0 0
        %8514 = vmatmul.mubr.bf16.gmra.mrb[0].mxu0 %v7931
        %v8515 = vpop.f32.mrb[0].mxu0
        %v8516 = vadd.f32 0.0, %v8515
        %v8517 = vpop.f32.mrb[0].mxu0
        %v8518 = vpop.f32.mrb[0].mxu0
        %v8519 = vadd.f32 0.0, %v8518
        %v8520 = vpop.f32.mrb[0].mxu0
        %8521 = vmatprep.mubr.bf16.mxu0 0
        %8522 = vmatmul.mubr.bf16.gmra.mrb[0].mxu0 %v7932
        %v8523 = vpop.f32.mrb[0].mxu0
        %v8524 = vadd.f32 0.0, %v8523
        %v8525 = vpop.f32.mrb[0].mxu0
        %v8526 = vpop.f32.mrb[0].mxu0
        %v8527 = vadd.f32 0.0, %v8526
        %v8528 = vpop.f32.mrb[0].mxu0
        %8529 = vmatprep.mubr.bf16.mxu0 0
        %8530 = vmatmul.mubr.bf16.gmra.mrb[0].mxu0 %v7933
        %v8531 = vpop.f32.mrb[0].mxu0
        %v8532 = vadd.f32 0.0, %v8531
        %v8533 = vpop.f32.mrb[0].mxu0
        %v8534 = vpop.f32.mrb[0].mxu0
        %v8535 = vadd.f32 0.0, %v8534
        %v8536 = vpop.f32.mrb[0].mxu0
        %8537 = vmatprep.mubr.bf16.mxu0 0
        %8538 = vmatmul.mubr.bf16.gmra.mrb[0].mxu0 %v7934
        %v8539 = vpop.f32.mrb[0].mxu0
        %v8540 = vadd.f32 0.0, %v8539
        %v8541 = vpop.f32.mrb[0].mxu0
        %v8542 = vpop.f32.mrb[0].mxu0
        %v8543 = vadd.f32 0.0, %v8542
        %v8544 = vpop.f32.mrb[0].mxu0
        %8545 = vmatprep.mubr.bf16.mxu0 0
        %8546 = vmatmul.mubr.bf16.gmra.mrb[0].mxu0 %v7935
        %v8547 = vpop.f32.mrb[0].mxu0
        %v8548 = vadd.f32 0.0, %v8547
        %v8549 = vpop.f32.mrb[0].mxu0
        %v8550 = vpop.f32.mrb[0].mxu0
        %v8551 = vadd.f32 0.0, %v8550
        %v8552 = vpop.f32.mrb[0].mxu0
        %8553 = vmatprep.mubr.bf16.mxu0 0
        %8554 = vmatmul.mubr.bf16.gmra.mrb[0].mxu0 %v7936
        %v8555 = vpop.f32.mrb[0].mxu0
        %v8556 = vadd.f32 0.0, %v8555
        %v8557 = vpop.f32.mrb[0].mxu0
        %v8558 = vpop.f32.mrb[0].mxu0
        %v8559 = vadd.f32 0.0, %v8558
        %v8560 = vpop.f32.mrb[0].mxu0
        %8561 = vmatprep.mubr.bf16.mxu0 0
        %8562 = vmatmul.mubr.bf16.gmra.mrb[0].mxu0 %v7937
        %v8563 = vpop.f32.mrb[0].mxu0
        %v8564 = vadd.f32 0.0, %v8563
        %v8565 = vpop.f32.mrb[0].mxu0
        %v8566 = vpop.f32.mrb[0].mxu0
        %v8567 = vadd.f32 0.0, %v8566
        %v8568 = vpop.f32.mrb[0].mxu0
        %8569 = vmatprep.mubr.bf16.mxu0 0
        %8570 = vmatmul.mubr.bf16.gmra.mrb[0].mxu0 %v7938
        %v8571 = vpop.f32.mrb[0].mxu0
        %v8572 = vadd.f32 0.0, %v8571
        %v8573 = vpop.f32.mrb[0].mxu0
        %v8574 = vpop.f32.mrb[0].mxu0
        %v8575 = vadd.f32 0.0, %v8574
        %v8576 = vpop.f32.mrb[0].mxu0
        %8577 = vmatprep.mubr.bf16.mxu0 0
        %8578 = vmatmul.mubr.bf16.gmra.mrb[0].mxu0 %v7939
        %v8579 = vpop.f32.mrb[0].mxu0
        %v8580 = vadd.f32 0.0, %v8579
        %v8581 = vpop.f32.mrb[0].mxu0
        %v8582 = vpop.f32.mrb[0].mxu0
        %v8583 = vadd.f32 0.0, %v8582
        %v8584 = vpop.f32.mrb[0].mxu0
        %8585 = vmatprep.mubr.bf16.mxu0 0
        %8586 = vmatmul.mubr.bf16.gmra.mrb[0].mxu0 %v7940
        %v8587 = vpop.f32.mrb[0].mxu0
        %v8588 = vadd.f32 0.0, %v8587
        %v8589 = vpop.f32.mrb[0].mxu0
        %v8590 = vpop.f32.mrb[0].mxu0
        %v8591 = vadd.f32 0.0, %v8590
        %v8592 = vpop.f32.mrb[0].mxu0
        %8593 = vmatprep.mubr.bf16.mxu0 0
        %8594 = vmatmul.mubr.bf16.gmra.mrb[0].mxu0 %v8367
        %v8595 = vpop.f32.mrb[0].mxu0
        %v8596 = vadd.f32 0.0, %v8595
        %v8597 = vpop.f32.mrb[0].mxu0
        %v8598 = vpop.f32.mrb[0].mxu0
        %v8599 = vadd.f32 0.0, %v8598
        %v8600 = vpop.f32.mrb[0].mxu0
        %8601 = vdwg.mxu0
        %v8602 = vadd.f32 %v8333, %v8468
        %v8603 = vadd.f32 %v8334, %v8471
        %v8604 = vadd.f32 %v8335, %v8476
        %v8605 = vadd.f32 %v8336, %v8479
        %v8606 = vadd.f32 %v8337, %v8484
        %v8607 = vadd.f32 %v8338, %v8487
        %v8608 = vadd.f32 %v8339, %v8492
        %v8609 = vadd.f32 %v8340, %v8495
        %v8610 = vadd.f32 %v8341, %v8500
        %v8611 = vadd.f32 %v8342, %v8503
        %v8612 = vadd.f32 %v8343, %v8508
        %v8613 = vadd.f32 %v8344, %v8511
        %v8614 = vadd.f32 %v8345, %v8516
        %v8615 = vadd.f32 %v8346, %v8519
        %v8616 = vadd.f32 %v8347, %v8524
        %v8617 = vadd.f32 %v8348, %v8527
        %v8618 = vadd.f32 %v8349, %v8532
        %v8619 = vadd.f32 %v8350, %v8535
        %v8620 = vadd.f32 %v8351, %v8540
        %v8621 = vadd.f32 %v8352, %v8543
        %v8622 = vadd.f32 %v8353, %v8548
        %v8623 = vadd.f32 %v8354, %v8551
        %v8624 = vadd.f32 %v8355, %v8556
        %v8625 = vadd.f32 %v8356, %v8559
        %v8626 = vadd.f32 %v8357, %v8564
        %v8627 = vadd.f32 %v8358, %v8567
        %v8628 = vadd.f32 %v8359, %v8572
        %v8629 = vadd.f32 %v8360, %v8575
        %v8630 = vadd.f32 %v8361, %v8580
        %v8631 = vadd.f32 %v8362, %v8583
        %v8632 = vadd.f32 %v8363, %v8588
        %v8633 = vadd.f32 %v8364, %v8591
        %v8634 = vadd.f32 %v8365, %v8596
        %v8635 = vadd.f32 %v8366, %v8599
        %v8636 = vld [vmem:[#allocation2 + $0x18] sm:$0xff]
        %v8637 = vld [vmem:[#allocation2 + $0x20] sm:$0xff]
        %v8638 = vld [vmem:[#allocation2 + $0x28] sm:$0xff]
        %v8639 = vld [vmem:[#allocation2 + $0x30] sm:$0xff]
        %v8640 = vld [vmem:[#allocation2 + $0x38] sm:$0xff]
        %v8641 = vld [vmem:[#allocation2 + $0x40] sm:$0xff]
        %v8642 = vld [vmem:[#allocation2 + $0x48] sm:$0xff]
        %v8643 = vld [vmem:[#allocation2 + $0x50] sm:$0xff]
        %v8644 = vld [vmem:[#allocation2 + $0x58] sm:$0xff]
        %v8645 = vld [vmem:[#allocation2 + $0x60] sm:$0xff]
        %v8646 = vld [vmem:[#allocation2 + $0x68] sm:$0xff]
        %v8647 = vld [vmem:[#allocation2 + $0x70] sm:$0xff]
        %v8648 = vld [vmem:[#allocation2 + $0x78] sm:$0xff]
        %v8649 = vld [vmem:[#allocation2 + $0x80] sm:$0xff]
        %v8650 = vld [vmem:[#allocation2 + $0x88] sm:$0xff]
        %v8651 = vld [vmem:[#allocation2 + $0x90] sm:$0xff]
        %v8652 = vld [vmem:[#allocation2 + $0x98] sm:$0xff]
        %v8653 = vld [vmem:[#allocation2 + $0xa0] sm:$0x1]
        %s8654 = scalar_lea.vmem [#allocation8], 448
        %v8655 = vld [vmem:[%s8654] sm:$0xf]
        %v8656 = vld [vmem:[%s8654 + $0x4] sm:$0xf]
        %v8657 = vld [vmem:[%s8654 + $0x8] sm:$0xf]
        %v8658 = vld [vmem:[%s8654 + $0xc] sm:$0xf]
        %v8659 = vld [vmem:[%s8654 + $0x10] sm:$0xf]
        %v8660 = vld [vmem:[%s8654 + $0x14] sm:$0xf]
        %v8661 = vld [vmem:[%s8654 + $0x18] sm:$0xf]
        %v8662 = vld [vmem:[%s8654 + $0x1c] sm:$0xf]
        %v8663 = vld [vmem:[%s8654 + $0x20] sm:$0xf]
        %v8664 = vld [vmem:[%s8654 + $0x24] sm:$0xf]
        %v8665 = vld [vmem:[%s8654 + $0x28] sm:$0xf]
        %v8666 = vld [vmem:[%s8654 + $0x2c] sm:$0xf]
        %v8667 = vld [vmem:[%s8654 + $0x30] sm:$0xf]
        %v8668 = vld [vmem:[%s8654 + $0x34] sm:$0xf]
        %v8669 = vld [vmem:[%s8654 + $0x38] sm:$0xf]
        %v8670 = vld [vmem:[%s8654 + $0x3c] sm:$0xf]
        %v8672 = vshrl.u32 %v8636, 16
        %v8674 = vshll.u32 %v8636, 16
        %v8676 = vrot.slane %v8674, 1
        %v8677 = vor.u32 %v8672, %v8676
        %v8679 = vshll.u32 %v8637, 16
        %v8681 = vrot.slane %v8679, 1
        %v8682 = vsel %vm3885, %v8677, %v8681
        %v8683 = vshrl.u32 %v8637, 16
        %v8685 = vor.u32 %v8683, %v8681
        %v8687 = vshll.u32 %v8638, 16
        %v8689 = vrot.slane %v8687, 1
        %v8690 = vsel %vm3885, %v8685, %v8689
        %v8691 = vshrl.u32 %v8638, 16
        %v8693 = vor.u32 %v8691, %v8689
        %v8695 = vshll.u32 %v8639, 16
        %v8697 = vrot.slane %v8695, 1
        %v8698 = vsel %vm3885, %v8693, %v8697
        %v8699 = vshrl.u32 %v8639, 16
        %v8701 = vor.u32 %v8699, %v8697
        %v8703 = vshll.u32 %v8640, 16
        %v8705 = vrot.slane %v8703, 1
        %v8706 = vsel %vm3885, %v8701, %v8705
        %v8707 = vshrl.u32 %v8640, 16
        %v8709 = vor.u32 %v8707, %v8705
        %v8711 = vshll.u32 %v8641, 16
        %v8713 = vrot.slane %v8711, 1
        %v8714 = vsel %vm3885, %v8709, %v8713
        %v8715 = vshrl.u32 %v8641, 16
        %v8717 = vor.u32 %v8715, %v8713
        %v8719 = vshll.u32 %v8642, 16
        %v8721 = vrot.slane %v8719, 1
        %v8722 = vsel %vm3885, %v8717, %v8721
        %v8723 = vshrl.u32 %v8642, 16
        %v8725 = vor.u32 %v8723, %v8721
        %v8727 = vshll.u32 %v8643, 16
        %v8729 = vrot.slane %v8727, 1
        %v8730 = vsel %vm3885, %v8725, %v8729
        %v8731 = vshrl.u32 %v8643, 16
        %v8733 = vor.u32 %v8731, %v8729
        %v8735 = vshll.u32 %v8644, 16
        %v8737 = vrot.slane %v8735, 1
        %v8738 = vsel %vm3885, %v8733, %v8737
        %v8739 = vshrl.u32 %v8644, 16
        %v8741 = vor.u32 %v8739, %v8737
        %v8743 = vshll.u32 %v8645, 16
        %v8745 = vrot.slane %v8743, 1
        %v8746 = vsel %vm3885, %v8741, %v8745
        %v8747 = vshrl.u32 %v8645, 16
        %v8749 = vor.u32 %v8747, %v8745
        %v8751 = vshll.u32 %v8646, 16
        %v8753 = vrot.slane %v8751, 1
        %v8754 = vsel %vm3885, %v8749, %v8753
        %v8755 = vshrl.u32 %v8646, 16
        %v8757 = vor.u32 %v8755, %v8753
        %v8759 = vshll.u32 %v8647, 16
        %v8761 = vrot.slane %v8759, 1
        %v8762 = vsel %vm3885, %v8757, %v8761
        %v8763 = vshrl.u32 %v8647, 16
        %v8765 = vor.u32 %v8763, %v8761
        %v8767 = vshll.u32 %v8648, 16
        %v8769 = vrot.slane %v8767, 1
        %v8770 = vsel %vm3885, %v8765, %v8769
        %v8771 = vshrl.u32 %v8648, 16
        %v8773 = vor.u32 %v8771, %v8769
        %v8775 = vshll.u32 %v8649, 16
        %v8777 = vrot.slane %v8775, 1
        %v8778 = vsel %vm3885, %v8773, %v8777
        %v8779 = vshrl.u32 %v8649, 16
        %v8781 = vor.u32 %v8779, %v8777
        %v8783 = vshll.u32 %v8650, 16
        %v8785 = vrot.slane %v8783, 1
        %v8786 = vsel %vm3885, %v8781, %v8785
        %v8787 = vshrl.u32 %v8650, 16
        %v8789 = vor.u32 %v8787, %v8785
        %v8791 = vshll.u32 %v8651, 16
        %v8793 = vrot.slane %v8791, 1
        %v8794 = vsel %vm3885, %v8789, %v8793
        %v8795 = vshrl.u32 %v8651, 16
        %v8797 = vor.u32 %v8795, %v8793
        %v8799 = vshll.u32 %v8652, 16
        %v8801 = vrot.slane %v8799, 1
        %v8802 = vsel %vm3885, %v8797, %v8801
        %v8803 = vshrl.u32 %v8652, 16
        %v8805 = vor.u32 %v8803, %v8801
        %v8807 = vshll.u32 %v8653, 16
        %v8809 = vrot.slane %v8807, 1
        %v8810 = vsel %vm3885, %v8805, %v8809
        %v8844 = vunpack.c.l.b16 %v8655
        %v8845 = vunpack.c.l.b16 %v8656
        %v8846 = vunpack.c.l.b16 %v8657
        %v8847 = vunpack.c.l.b16 %v8658
        %v8848 = vunpack.c.l.b16 %v8659
        %v8849 = vunpack.c.l.b16 %v8660
        %v8850 = vunpack.c.l.b16 %v8661
        %v8851 = vunpack.c.l.b16 %v8662
        %v8852 = vunpack.c.l.b16 %v8663
        %v8853 = vunpack.c.l.b16 %v8664
        %v8854 = vunpack.c.l.b16 %v8665
        %v8855 = vunpack.c.l.b16 %v8666
        %v8856 = vunpack.c.l.b16 %v8667
        %v8857 = vunpack.c.l.b16 %v8668
        %v8858 = vunpack.c.l.b16 %v8669
        %v8859 = vunpack.c.l.b16 %v8670
        %v8860 = vpack.c.b16 %v8845, %v8844
        %v8861 = vpack.c.b16 %v8847, %v8846
        %v8862 = vpack.c.b16 %v8849, %v8848
        %v8863 = vpack.c.b16 %v8851, %v8850
        %v8864 = vpack.c.b16 %v8853, %v8852
        %v8865 = vpack.c.b16 %v8855, %v8854
        %v8866 = vpack.c.b16 %v8857, %v8856
        %v8867 = vpack.c.b16 %v8859, %v8858
        %8876 = vmatprep.subr.bf16.mxu0 0
        %8877 = vmatpush1.bf16.msra.mxu0 %v8860
        %8878 = vmatprep.subr.bf16.mxu0 0
        %8879 = vmatpush1.bf16.msra.mxu0 %v8861
        %8880 = vmatprep.subr.bf16.mxu0 0
        %8881 = vmatpush1.bf16.msra.mxu0 %v8862
        %8882 = vmatprep.subr.bf16.mxu0 0
        %8883 = vmatpush1.bf16.msra.mxu0 %v8863
        %8884 = vmatprep.subr.bf16.mxu0 0
        %8885 = vmatpush1.bf16.msra.mxu0 %v8864
        %8886 = vmatprep.subr.bf16.mxu0 0
        %8887 = vmatpush1.bf16.msra.mxu0 %v8865
        %8888 = vmatprep.subr.bf16.mxu0 0
        %8889 = vmatpush1.bf16.msra.mxu0 %v8866
        %8890 = vmatprep.subr.bf16.mxu0 0
        %8891 = vmatpush1.bf16.msra.mxu0 %v8867
        %8892 = vmatprep.subr.bf16.mxu0 0
        %8893 = vmatpush1.bf16.msra.mxu0 0
        %8894 = vmatprep.subr.bf16.mxu0 0
        %8895 = vmatpush1.bf16.msra.mxu0 0
        %8896 = vmatprep.subr.bf16.mxu0 0
        %8897 = vmatpush1.bf16.msra.mxu0 0
        %8898 = vmatprep.subr.bf16.mxu0 0
        %8899 = vmatpush1.bf16.msra.mxu0 0
        %8900 = vmatprep.subr.bf16.mxu0 0
        %8901 = vmatpush1.bf16.msra.mxu0 0
        %8902 = vmatprep.subr.bf16.mxu0 0
        %8903 = vmatpush1.bf16.msra.mxu0 0
        %8904 = vmatprep.subr.bf16.mxu0 0
        %8905 = vmatpush1.bf16.msra.mxu0 0
        %8906 = vmatprep.subr.bf16.mxu0 0
        %8907 = vmatpush1.bf16.msra.mxu0 0
        %8908 = vmatprep.mubr.bf16.mxu0 0
        %8909 = vmatmul.mubr.bf16.gmra.mrb[0].mxu0 %v8682
        %v8910 = vpop.f32.mrb[0].mxu0
        %v8911 = vadd.f32 0.0, %v8910
        %v8912 = vpop.f32.mrb[0].mxu0
        %v8913 = vpop.f32.mrb[0].mxu0
        %v8914 = vadd.f32 0.0, %v8913
        %v8915 = vpop.f32.mrb[0].mxu0
        %8916 = vmatprep.mubr.bf16.mxu0 0
        %8917 = vmatmul.mubr.bf16.gmra.mrb[0].mxu0 %v8690
        %v8918 = vpop.f32.mrb[0].mxu0
        %v8919 = vadd.f32 0.0, %v8918
        %v8920 = vpop.f32.mrb[0].mxu0
        %v8921 = vpop.f32.mrb[0].mxu0
        %v8922 = vadd.f32 0.0, %v8921
        %v8923 = vpop.f32.mrb[0].mxu0
        %8924 = vmatprep.mubr.bf16.mxu0 0
        %8925 = vmatmul.mubr.bf16.gmra.mrb[0].mxu0 %v8698
        %v8926 = vpop.f32.mrb[0].mxu0
        %v8927 = vadd.f32 0.0, %v8926
        %v8928 = vpop.f32.mrb[0].mxu0
        %v8929 = vpop.f32.mrb[0].mxu0
        %v8930 = vadd.f32 0.0, %v8929
        %v8931 = vpop.f32.mrb[0].mxu0
        %8932 = vmatprep.mubr.bf16.mxu0 0
        %8933 = vmatmul.mubr.bf16.gmra.mrb[0].mxu0 %v8706
        %v8934 = vpop.f32.mrb[0].mxu0
        %v8935 = vadd.f32 0.0, %v8934
        %v8936 = vpop.f32.mrb[0].mxu0
        %v8937 = vpop.f32.mrb[0].mxu0
        %v8938 = vadd.f32 0.0, %v8937
        %v8939 = vpop.f32.mrb[0].mxu0
        %8940 = vmatprep.mubr.bf16.mxu0 0
        %8941 = vmatmul.mubr.bf16.gmra.mrb[0].mxu0 %v8714
        %v8942 = vpop.f32.mrb[0].mxu0
        %v8943 = vadd.f32 0.0, %v8942
        %v8944 = vpop.f32.mrb[0].mxu0
        %v8945 = vpop.f32.mrb[0].mxu0
        %v8946 = vadd.f32 0.0, %v8945
        %v8947 = vpop.f32.mrb[0].mxu0
        %8948 = vmatprep.mubr.bf16.mxu0 0
        %8949 = vmatmul.mubr.bf16.gmra.mrb[0].mxu0 %v8722
        %v8950 = vpop.f32.mrb[0].mxu0
        %v8951 = vadd.f32 0.0, %v8950
        %v8952 = vpop.f32.mrb[0].mxu0
        %v8953 = vpop.f32.mrb[0].mxu0
        %v8954 = vadd.f32 0.0, %v8953
        %v8955 = vpop.f32.mrb[0].mxu0
        %8956 = vmatprep.mubr.bf16.mxu0 0
        %8957 = vmatmul.mubr.bf16.gmra.mrb[0].mxu0 %v8730
        %v8958 = vpop.f32.mrb[0].mxu0
        %v8959 = vadd.f32 0.0, %v8958
        %v8960 = vpop.f32.mrb[0].mxu0
        %v8961 = vpop.f32.mrb[0].mxu0
        %v8962 = vadd.f32 0.0, %v8961
        %v8963 = vpop.f32.mrb[0].mxu0
        %8964 = vmatprep.mubr.bf16.mxu0 0
        %8965 = vmatmul.mubr.bf16.gmra.mrb[0].mxu0 %v8738
        %v8966 = vpop.f32.mrb[0].mxu0
        %v8967 = vadd.f32 0.0, %v8966
        %v8968 = vpop.f32.mrb[0].mxu0
        %v8969 = vpop.f32.mrb[0].mxu0
        %v8970 = vadd.f32 0.0, %v8969
        %v8971 = vpop.f32.mrb[0].mxu0
        %8972 = vmatprep.mubr.bf16.mxu0 0
        %8973 = vmatmul.mubr.bf16.gmra.mrb[0].mxu0 %v8746
        %v8974 = vpop.f32.mrb[0].mxu0
        %v8975 = vadd.f32 0.0, %v8974
        %v8976 = vpop.f32.mrb[0].mxu0
        %v8977 = vpop.f32.mrb[0].mxu0
        %v8978 = vadd.f32 0.0, %v8977
        %v8979 = vpop.f32.mrb[0].mxu0
        %8980 = vmatprep.mubr.bf16.mxu0 0
        %8981 = vmatmul.mubr.bf16.gmra.mrb[0].mxu0 %v8754
        %v8982 = vpop.f32.mrb[0].mxu0
        %v8983 = vadd.f32 0.0, %v8982
        %v8984 = vpop.f32.mrb[0].mxu0
        %v8985 = vpop.f32.mrb[0].mxu0
        %v8986 = vadd.f32 0.0, %v8985
        %v8987 = vpop.f32.mrb[0].mxu0
        %8988 = vmatprep.mubr.bf16.mxu0 0
        %8989 = vmatmul.mubr.bf16.gmra.mrb[0].mxu0 %v8762
        %v8990 = vpop.f32.mrb[0].mxu0
        %v8991 = vadd.f32 0.0, %v8990
        %v8992 = vpop.f32.mrb[0].mxu0
        %v8993 = vpop.f32.mrb[0].mxu0
        %v8994 = vadd.f32 0.0, %v8993
        %v8995 = vpop.f32.mrb[0].mxu0
        %8996 = vmatprep.mubr.bf16.mxu0 0
        %8997 = vmatmul.mubr.bf16.gmra.mrb[0].mxu0 %v8770
        %v8998 = vpop.f32.mrb[0].mxu0
        %v8999 = vadd.f32 0.0, %v8998
        %v9000 = vpop.f32.mrb[0].mxu0
        %v9001 = vpop.f32.mrb[0].mxu0
        %v9002 = vadd.f32 0.0, %v9001
        %v9003 = vpop.f32.mrb[0].mxu0
        %9004 = vmatprep.mubr.bf16.mxu0 0
        %9005 = vmatmul.mubr.bf16.gmra.mrb[0].mxu0 %v8778
        %v9006 = vpop.f32.mrb[0].mxu0
        %v9007 = vadd.f32 0.0, %v9006
        %v9008 = vpop.f32.mrb[0].mxu0
        %v9009 = vpop.f32.mrb[0].mxu0
        %v9010 = vadd.f32 0.0, %v9009
        %v9011 = vpop.f32.mrb[0].mxu0
        %9012 = vmatprep.mubr.bf16.mxu0 0
        %9013 = vmatmul.mubr.bf16.gmra.mrb[0].mxu0 %v8786
        %v9014 = vpop.f32.mrb[0].mxu0
        %v9015 = vadd.f32 0.0, %v9014
        %v9016 = vpop.f32.mrb[0].mxu0
        %v9017 = vpop.f32.mrb[0].mxu0
        %v9018 = vadd.f32 0.0, %v9017
        %v9019 = vpop.f32.mrb[0].mxu0
        %9020 = vmatprep.mubr.bf16.mxu0 0
        %9021 = vmatmul.mubr.bf16.gmra.mrb[0].mxu0 %v8794
        %v9022 = vpop.f32.mrb[0].mxu0
        %v9023 = vadd.f32 0.0, %v9022
        %v9024 = vpop.f32.mrb[0].mxu0
        %v9025 = vpop.f32.mrb[0].mxu0
        %v9026 = vadd.f32 0.0, %v9025
        %v9027 = vpop.f32.mrb[0].mxu0
        %9028 = vmatprep.mubr.bf16.mxu0 0
        %9029 = vmatmul.mubr.bf16.gmra.mrb[0].mxu0 %v8802
        %v9030 = vpop.f32.mrb[0].mxu0
        %v9031 = vadd.f32 0.0, %v9030
        %v9032 = vpop.f32.mrb[0].mxu0
        %v9033 = vpop.f32.mrb[0].mxu0
        %v9034 = vadd.f32 0.0, %v9033
        %v9035 = vpop.f32.mrb[0].mxu0
        %9036 = vmatprep.mubr.bf16.mxu0 0
        %9037 = vmatmul.mubr.bf16.gmra.mrb[0].mxu0 %v8810
        %v9038 = vpop.f32.mrb[0].mxu0
        %v9039 = vadd.f32 0.0, %v9038
        %v9040 = vpop.f32.mrb[0].mxu0
        %v9041 = vpop.f32.mrb[0].mxu0
        %v9042 = vadd.f32 0.0, %v9041
        %v9043 = vpop.f32.mrb[0].mxu0
        %9044 = vdwg.mxu0
        %v9045 = vadd.f32 %v8602, %v8911
        %v9046 = vadd.f32 %v8603, %v8914
        %v9047 = vadd.f32 %v8604, %v8919
        %v9048 = vadd.f32 %v8605, %v8922
        %v9049 = vadd.f32 %v8606, %v8927
        %v9050 = vadd.f32 %v8607, %v8930
        %v9051 = vadd.f32 %v8608, %v8935
        %v9052 = vadd.f32 %v8609, %v8938
        %v9053 = vadd.f32 %v8610, %v8943
        %v9054 = vadd.f32 %v8611, %v8946
        %v9055 = vadd.f32 %v8612, %v8951
        %v9056 = vadd.f32 %v8613, %v8954
        %v9057 = vadd.f32 %v8614, %v8959
        %v9058 = vadd.f32 %v8615, %v8962
        %v9059 = vadd.f32 %v8616, %v8967
        %v9060 = vadd.f32 %v8617, %v8970
        %v9061 = vadd.f32 %v8618, %v8975
        %v9062 = vadd.f32 %v8619, %v8978
        %v9063 = vadd.f32 %v8620, %v8983
        %v9064 = vadd.f32 %v8621, %v8986
        %v9065 = vadd.f32 %v8622, %v8991
        %v9066 = vadd.f32 %v8623, %v8994
        %v9067 = vadd.f32 %v8624, %v8999
        %v9068 = vadd.f32 %v8625, %v9002
        %v9069 = vadd.f32 %v8626, %v9007
        %v9070 = vadd.f32 %v8627, %v9010
        %v9071 = vadd.f32 %v8628, %v9015
        %v9072 = vadd.f32 %v8629, %v9018
        %v9073 = vadd.f32 %v8630, %v9023
        %v9074 = vadd.f32 %v8631, %v9026
        %v9075 = vadd.f32 %v8632, %v9031
        %v9076 = vadd.f32 %v8633, %v9034
        %v9077 = vadd.f32 %v8634, %v9039
        %v9078 = vadd.f32 %v8635, %v9042
        %v9079 = vld [vmem:[#allocation2 + $0x18] sm:$0xfe]
        %s9080 = scalar_lea.vmem [#allocation8], 512
        %v9081 = vld [vmem:[%s9080] sm:$0xf]
        %v9082 = vld [vmem:[%s9080 + $0x4] sm:$0xf]
        %v9083 = vld [vmem:[%s9080 + $0x8] sm:$0xf]
        %v9084 = vld [vmem:[%s9080 + $0xc] sm:$0xf]
        %v9085 = vld [vmem:[%s9080 + $0x10] sm:$0xf]
        %v9086 = vld [vmem:[%s9080 + $0x14] sm:$0xf]
        %v9087 = vld [vmem:[%s9080 + $0x18] sm:$0xf]
        %v9088 = vld [vmem:[%s9080 + $0x1c] sm:$0xf]
        %v9089 = vld [vmem:[%s9080 + $0x20] sm:$0xf]
        %v9090 = vld [vmem:[%s9080 + $0x24] sm:$0xf]
        %v9091 = vld [vmem:[%s9080 + $0x28] sm:$0xf]
        %v9092 = vld [vmem:[%s9080 + $0x2c] sm:$0xf]
        %v9093 = vld [vmem:[%s9080 + $0x30] sm:$0xf]
        %v9094 = vld [vmem:[%s9080 + $0x34] sm:$0xf]
        %v9095 = vld [vmem:[%s9080 + $0x38] sm:$0xf]
        %v9096 = vld [vmem:[%s9080 + $0x3c] sm:$0xf]
        %v9115 = vrot.slane %v9079, 1
        %v9116 = vrot.slane %v8637, 1
        %v9117 = vsel %vm5267, %v9115, %v9116
        %v9118 = vrot.slane %v8638, 1
        %v9119 = vsel %vm5267, %v9116, %v9118
        %v9120 = vrot.slane %v8639, 1
        %v9121 = vsel %vm5267, %v9118, %v9120
        %v9122 = vrot.slane %v8640, 1
        %v9123 = vsel %vm5267, %v9120, %v9122
        %v9124 = vrot.slane %v8641, 1
        %v9125 = vsel %vm5267, %v9122, %v9124
        %v9126 = vrot.slane %v8642, 1
        %v9127 = vsel %vm5267, %v9124, %v9126
        %v9128 = vrot.slane %v8643, 1
        %v9129 = vsel %vm5267, %v9126, %v9128
        %v9130 = vrot.slane %v8644, 1
        %v9131 = vsel %vm5267, %v9128, %v9130
        %v9132 = vrot.slane %v8645, 1
        %v9133 = vsel %vm5267, %v9130, %v9132
        %v9134 = vrot.slane %v8646, 1
        %v9135 = vsel %vm5267, %v9132, %v9134
        %v9136 = vrot.slane %v8647, 1
        %v9137 = vsel %vm5267, %v9134, %v9136
        %v9138 = vrot.slane %v8648, 1
        %v9139 = vsel %vm5267, %v9136, %v9138
        %v9140 = vrot.slane %v8649, 1
        %v9141 = vsel %vm5267, %v9138, %v9140
        %v9142 = vrot.slane %v8650, 1
        %v9143 = vsel %vm5267, %v9140, %v9142
        %v9144 = vrot.slane %v8651, 1
        %v9145 = vsel %vm5267, %v9142, %v9144
        %v9146 = vrot.slane %v8652, 1
        %v9147 = vsel %vm5267, %v9144, %v9146
        %v9148 = vrot.slane %v8653, 1
        %v9149 = vsel %vm5267, %v9146, %v9148
        %v9183 = vunpack.c.l.b16 %v9081
        %v9184 = vunpack.c.l.b16 %v9082
        %v9185 = vunpack.c.l.b16 %v9083
        %v9186 = vunpack.c.l.b16 %v9084
        %v9187 = vunpack.c.l.b16 %v9085
        %v9188 = vunpack.c.l.b16 %v9086
        %v9189 = vunpack.c.l.b16 %v9087
        %v9190 = vunpack.c.l.b16 %v9088
        %v9191 = vunpack.c.l.b16 %v9089
        %v9192 = vunpack.c.l.b16 %v9090
        %v9193 = vunpack.c.l.b16 %v9091
        %v9194 = vunpack.c.l.b16 %v9092
        %v9195 = vunpack.c.l.b16 %v9093
        %v9196 = vunpack.c.l.b16 %v9094
        %v9197 = vunpack.c.l.b16 %v9095
        %v9198 = vunpack.c.l.b16 %v9096
        %v9199 = vpack.c.b16 %v9184, %v9183
        %v9200 = vpack.c.b16 %v9186, %v9185
        %v9201 = vpack.c.b16 %v9188, %v9187
        %v9202 = vpack.c.b16 %v9190, %v9189
        %v9203 = vpack.c.b16 %v9192, %v9191
        %v9204 = vpack.c.b16 %v9194, %v9193
        %v9205 = vpack.c.b16 %v9196, %v9195
        %v9206 = vpack.c.b16 %v9198, %v9197
        %9215 = vmatprep.subr.bf16.mxu0 0
        %9216 = vmatpush1.bf16.msra.mxu0 %v9199
        %9217 = vmatprep.subr.bf16.mxu0 0
        %9218 = vmatpush1.bf16.msra.mxu0 %v9200
        %9219 = vmatprep.subr.bf16.mxu0 0
        %9220 = vmatpush1.bf16.msra.mxu0 %v9201
        %9221 = vmatprep.subr.bf16.mxu0 0
        %9222 = vmatpush1.bf16.msra.mxu0 %v9202
        %9223 = vmatprep.subr.bf16.mxu0 0
        %9224 = vmatpush1.bf16.msra.mxu0 %v9203
        %9225 = vmatprep.subr.bf16.mxu0 0
        %9226 = vmatpush1.bf16.msra.mxu0 %v9204
        %9227 = vmatprep.subr.bf16.mxu0 0
        %9228 = vmatpush1.bf16.msra.mxu0 %v9205
        %9229 = vmatprep.subr.bf16.mxu0 0
        %9230 = vmatpush1.bf16.msra.mxu0 %v9206
        %9231 = vmatprep.subr.bf16.mxu0 0
        %9232 = vmatpush1.bf16.msra.mxu0 0
        %9233 = vmatprep.subr.bf16.mxu0 0
        %9234 = vmatpush1.bf16.msra.mxu0 0
        %9235 = vmatprep.subr.bf16.mxu0 0
        %9236 = vmatpush1.bf16.msra.mxu0 0
        %9237 = vmatprep.subr.bf16.mxu0 0
        %9238 = vmatpush1.bf16.msra.mxu0 0
        %9239 = vmatprep.subr.bf16.mxu0 0
        %9240 = vmatpush1.bf16.msra.mxu0 0
        %9241 = vmatprep.subr.bf16.mxu0 0
        %9242 = vmatpush1.bf16.msra.mxu0 0
        %9243 = vmatprep.subr.bf16.mxu0 0
        %9244 = vmatpush1.bf16.msra.mxu0 0
        %9245 = vmatprep.subr.bf16.mxu0 0
        %9246 = vmatpush1.bf16.msra.mxu0 0
        %9247 = vmatprep.mubr.bf16.mxu0 0
        %9248 = vmatmul.mubr.bf16.gmra.mrb[0].mxu0 %v9117
        %v9249 = vpop.f32.mrb[0].mxu0
        %v9250 = vadd.f32 0.0, %v9249
        %v9251 = vpop.f32.mrb[0].mxu0
        %v9252 = vpop.f32.mrb[0].mxu0
        %v9253 = vadd.f32 0.0, %v9252
        %v9254 = vpop.f32.mrb[0].mxu0
        %9255 = vmatprep.mubr.bf16.mxu0 0
        %9256 = vmatmul.mubr.bf16.gmra.mrb[0].mxu0 %v9119
        %v9257 = vpop.f32.mrb[0].mxu0
        %v9258 = vadd.f32 0.0, %v9257
        %v9259 = vpop.f32.mrb[0].mxu0
        %v9260 = vpop.f32.mrb[0].mxu0
        %v9261 = vadd.f32 0.0, %v9260
        %v9262 = vpop.f32.mrb[0].mxu0
        %9263 = vmatprep.mubr.bf16.mxu0 0
        %9264 = vmatmul.mubr.bf16.gmra.mrb[0].mxu0 %v9121
        %v9265 = vpop.f32.mrb[0].mxu0
        %v9266 = vadd.f32 0.0, %v9265
        %v9267 = vpop.f32.mrb[0].mxu0
        %v9268 = vpop.f32.mrb[0].mxu0
        %v9269 = vadd.f32 0.0, %v9268
        %v9270 = vpop.f32.mrb[0].mxu0
        %9271 = vmatprep.mubr.bf16.mxu0 0
        %9272 = vmatmul.mubr.bf16.gmra.mrb[0].mxu0 %v9123
        %v9273 = vpop.f32.mrb[0].mxu0
        %v9274 = vadd.f32 0.0, %v9273
        %v9275 = vpop.f32.mrb[0].mxu0
        %v9276 = vpop.f32.mrb[0].mxu0
        %v9277 = vadd.f32 0.0, %v9276
        %v9278 = vpop.f32.mrb[0].mxu0
        %9279 = vmatprep.mubr.bf16.mxu0 0
        %9280 = vmatmul.mubr.bf16.gmra.mrb[0].mxu0 %v9125
        %v9281 = vpop.f32.mrb[0].mxu0
        %v9282 = vadd.f32 0.0, %v9281
        %v9283 = vpop.f32.mrb[0].mxu0
        %v9284 = vpop.f32.mrb[0].mxu0
        %v9285 = vadd.f32 0.0, %v9284
        %v9286 = vpop.f32.mrb[0].mxu0
        %9287 = vmatprep.mubr.bf16.mxu0 0
        %9288 = vmatmul.mubr.bf16.gmra.mrb[0].mxu0 %v9127
        %v9289 = vpop.f32.mrb[0].mxu0
        %v9290 = vadd.f32 0.0, %v9289
        %v9291 = vpop.f32.mrb[0].mxu0
        %v9292 = vpop.f32.mrb[0].mxu0
        %v9293 = vadd.f32 0.0, %v9292
        %v9294 = vpop.f32.mrb[0].mxu0
        %9295 = vmatprep.mubr.bf16.mxu0 0
        %9296 = vmatmul.mubr.bf16.gmra.mrb[0].mxu0 %v9129
        %v9297 = vpop.f32.mrb[0].mxu0
        %v9298 = vadd.f32 0.0, %v9297
        %v9299 = vpop.f32.mrb[0].mxu0
        %v9300 = vpop.f32.mrb[0].mxu0
        %v9301 = vadd.f32 0.0, %v9300
        %v9302 = vpop.f32.mrb[0].mxu0
        %9303 = vmatprep.mubr.bf16.mxu0 0
        %9304 = vmatmul.mubr.bf16.gmra.mrb[0].mxu0 %v9131
        %v9305 = vpop.f32.mrb[0].mxu0
        %v9306 = vadd.f32 0.0, %v9305
        %v9307 = vpop.f32.mrb[0].mxu0
        %v9308 = vpop.f32.mrb[0].mxu0
        %v9309 = vadd.f32 0.0, %v9308
        %v9310 = vpop.f32.mrb[0].mxu0
        %9311 = vmatprep.mubr.bf16.mxu0 0
        %9312 = vmatmul.mubr.bf16.gmra.mrb[0].mxu0 %v9133
        %v9313 = vpop.f32.mrb[0].mxu0
        %v9314 = vadd.f32 0.0, %v9313
        %v9315 = vpop.f32.mrb[0].mxu0
        %v9316 = vpop.f32.mrb[0].mxu0
        %v9317 = vadd.f32 0.0, %v9316
        %v9318 = vpop.f32.mrb[0].mxu0
        %9319 = vmatprep.mubr.bf16.mxu0 0
        %9320 = vmatmul.mubr.bf16.gmra.mrb[0].mxu0 %v9135
        %v9321 = vpop.f32.mrb[0].mxu0
        %v9322 = vadd.f32 0.0, %v9321
        %v9323 = vpop.f32.mrb[0].mxu0
        %v9324 = vpop.f32.mrb[0].mxu0
        %v9325 = vadd.f32 0.0, %v9324
        %v9326 = vpop.f32.mrb[0].mxu0
        %9327 = vmatprep.mubr.bf16.mxu0 0
        %9328 = vmatmul.mubr.bf16.gmra.mrb[0].mxu0 %v9137
        %v9329 = vpop.f32.mrb[0].mxu0
        %v9330 = vadd.f32 0.0, %v9329
        %v9331 = vpop.f32.mrb[0].mxu0
        %v9332 = vpop.f32.mrb[0].mxu0
        %v9333 = vadd.f32 0.0, %v9332
        %v9334 = vpop.f32.mrb[0].mxu0
        %9335 = vmatprep.mubr.bf16.mxu0 0
        %9336 = vmatmul.mubr.bf16.gmra.mrb[0].mxu0 %v9139
        %v9337 = vpop.f32.mrb[0].mxu0
        %v9338 = vadd.f32 0.0, %v9337
        %v9339 = vpop.f32.mrb[0].mxu0
        %v9340 = vpop.f32.mrb[0].mxu0
        %v9341 = vadd.f32 0.0, %v9340
        %v9342 = vpop.f32.mrb[0].mxu0
        %9343 = vmatprep.mubr.bf16.mxu0 0
        %9344 = vmatmul.mubr.bf16.gmra.mrb[0].mxu0 %v9141
        %v9345 = vpop.f32.mrb[0].mxu0
        %v9346 = vadd.f32 0.0, %v9345
        %v9347 = vpop.f32.mrb[0].mxu0
        %v9348 = vpop.f32.mrb[0].mxu0
        %v9349 = vadd.f32 0.0, %v9348
        %v9350 = vpop.f32.mrb[0].mxu0
        %9351 = vmatprep.mubr.bf16.mxu0 0
        %9352 = vmatmul.mubr.bf16.gmra.mrb[0].mxu0 %v9143
        %v9353 = vpop.f32.mrb[0].mxu0
        %v9354 = vadd.f32 0.0, %v9353
        %v9355 = vpop.f32.mrb[0].mxu0
        %v9356 = vpop.f32.mrb[0].mxu0
        %v9357 = vadd.f32 0.0, %v9356
        %v9358 = vpop.f32.mrb[0].mxu0
        %9359 = vmatprep.mubr.bf16.mxu0 0
        %9360 = vmatmul.mubr.bf16.gmra.mrb[0].mxu0 %v9145
        %v9361 = vpop.f32.mrb[0].mxu0
        %v9362 = vadd.f32 0.0, %v9361
        %v9363 = vpop.f32.mrb[0].mxu0
        %v9364 = vpop.f32.mrb[0].mxu0
        %v9365 = vadd.f32 0.0, %v9364
        %v9366 = vpop.f32.mrb[0].mxu0
        %9367 = vmatprep.mubr.bf16.mxu0 0
        %9368 = vmatmul.mubr.bf16.gmra.mrb[0].mxu0 %v9147
        %v9369 = vpop.f32.mrb[0].mxu0
        %v9370 = vadd.f32 0.0, %v9369
        %v9371 = vpop.f32.mrb[0].mxu0
        %v9372 = vpop.f32.mrb[0].mxu0
        %v9373 = vadd.f32 0.0, %v9372
        %v9374 = vpop.f32.mrb[0].mxu0
        %9375 = vmatprep.mubr.bf16.mxu0 0
        %9376 = vmatmul.mubr.bf16.gmra.mrb[0].mxu0 %v9149
        %v9377 = vpop.f32.mrb[0].mxu0
        %v9378 = vadd.f32 0.0, %v9377
        %v9379 = vpop.f32.mrb[0].mxu0
        %v9380 = vpop.f32.mrb[0].mxu0
        %v9381 = vadd.f32 0.0, %v9380
        %v9382 = vpop.f32.mrb[0].mxu0
        %9383 = vdwg.mxu0
        %v9384 = vadd.f32 %v9045, %v9250
        %v9385 = vadd.f32 %v9046, %v9253
        %v9386 = vadd.f32 %v9047, %v9258
        %v9387 = vadd.f32 %v9048, %v9261
        %v9388 = vadd.f32 %v9049, %v9266
        %v9389 = vadd.f32 %v9050, %v9269
        %v9390 = vadd.f32 %v9051, %v9274
        %v9391 = vadd.f32 %v9052, %v9277
        %v9392 = vadd.f32 %v9053, %v9282
        %v9393 = vadd.f32 %v9054, %v9285
        %v9394 = vadd.f32 %v9055, %v9290
        %v9395 = vadd.f32 %v9056, %v9293
        %v9396 = vadd.f32 %v9057, %v9298
        %v9397 = vadd.f32 %v9058, %v9301
        %v9398 = vadd.f32 %v9059, %v9306
        %v9399 = vadd.f32 %v9060, %v9309
        %v9400 = vadd.f32 %v9061, %v9314
        %v9401 = vadd.f32 %v9062, %v9317
        %v9402 = vadd.f32 %v9063, %v9322
        %v9403 = vadd.f32 %v9064, %v9325
        %v9404 = vadd.f32 %v9065, %v9330
        %v9405 = vadd.f32 %v9066, %v9333
        %v9406 = vadd.f32 %v9067, %v9338
        %v9407 = vadd.f32 %v9068, %v9341
        %v9408 = vadd.f32 %v9069, %v9346
        %v9409 = vadd.f32 %v9070, %v9349
        %v9410 = vadd.f32 %v9071, %v9354
        %v9411 = vadd.f32 %v9072, %v9357
        %v9412 = vadd.f32 %v9073, %v9362
        %v9413 = vadd.f32 %v9074, %v9365
        %v9414 = vadd.f32 %v9075, %v9370
        %v9415 = vadd.f32 %v9076, %v9373
        %v9416 = vadd.f32 %v9077, %v9378
        %v9417 = vadd.f32 %v9078, %v9381
        %v9418 = vmax.f32 %v9384, 0.0
        %v9419 = vmax.f32 %v9385, 0.0
        %v9420 = vmax.f32 %v9386, 0.0
        %v9421 = vmax.f32 %v9387, 0.0
        %v9422 = vmax.f32 %v9388, 0.0
        %v9423 = vmax.f32 %v9389, 0.0
        %v9424 = vmax.f32 %v9390, 0.0
        %v9425 = vmax.f32 %v9391, 0.0
        %v9426 = vmax.f32 %v9392, 0.0
        %v9427 = vmax.f32 %v9393, 0.0
        %v9428 = vmax.f32 %v9394, 0.0
        %v9429 = vmax.f32 %v9395, 0.0
        %v9430 = vmax.f32 %v9396, 0.0
        %v9431 = vmax.f32 %v9397, 0.0
        %v9432 = vmax.f32 %v9398, 0.0
        %v9433 = vmax.f32 %v9399, 0.0
        %v9434 = vmax.f32 %v9400, 0.0
        %v9435 = vmax.f32 %v9401, 0.0
        %v9436 = vmax.f32 %v9402, 0.0
        %v9437 = vmax.f32 %v9403, 0.0
        %v9438 = vmax.f32 %v9404, 0.0
        %v9439 = vmax.f32 %v9405, 0.0
        %v9440 = vmax.f32 %v9406, 0.0
        %v9441 = vmax.f32 %v9407, 0.0
        %v9442 = vmax.f32 %v9408, 0.0
        %v9443 = vmax.f32 %v9409, 0.0
        %v9444 = vmax.f32 %v9410, 0.0
        %v9445 = vmax.f32 %v9411, 0.0
        %v9446 = vmax.f32 %v9412, 0.0
        %v9447 = vmax.f32 %v9413, 0.0
        %v9448 = vmax.f32 %v9414, 0.0
        %v9449 = vmax.f32 %v9415, 0.0
        %v9450 = vmax.f32 %v9416, 0.0
        %v9451 = vmax.f32 %v9417, 0.0
        %9452 = vst [vmem:[%s340] sm:$0xff] %v9418
        %9453 = vst [vmem:[%s340 + $0x8] sm:$0xff] %v9419
        %9454 = vst [vmem:[%s340 + $0x10] sm:$0xff] %v9420
        %9455 = vst [vmem:[%s340 + $0x18] sm:$0xff] %v9421
        %9456 = vst [vmem:[%s340 + $0x20] sm:$0xff] %v9422
        %9457 = vst [vmem:[%s340 + $0x28] sm:$0xff] %v9423
        %9458 = vst [vmem:[%s340 + $0x30] sm:$0xff] %v9424
        %9459 = vst [vmem:[%s340 + $0x38] sm:$0xff] %v9425
        %9460 = vst [vmem:[%s340 + $0x40] sm:$0xff] %v9426
        %9461 = vst [vmem:[%s340 + $0x48] sm:$0xff] %v9427
        %9462 = vst [vmem:[%s340 + $0x50] sm:$0xff] %v9428
        %9463 = vst [vmem:[%s340 + $0x58] sm:$0xff] %v9429
        %9464 = vst [vmem:[%s340 + $0x60] sm:$0xff] %v9430
        %9465 = vst [vmem:[%s340 + $0x68] sm:$0xff] %v9431
        %9466 = vst [vmem:[%s340 + $0x70] sm:$0xff] %v9432
        %9467 = vst [vmem:[%s340 + $0x78] sm:$0xff] %v9433
        %9468 = vst [vmem:[%s340 + $0x80] sm:$0xff] %v9434
        %9469 = vst [vmem:[%s340 + $0x88] sm:$0xff] %v9435
        %9470 = vst [vmem:[%s340 + $0x90] sm:$0xff] %v9436
        %9471 = vst [vmem:[%s340 + $0x98] sm:$0xff] %v9437
        %9472 = vst [vmem:[%s340 + $0xa0] sm:$0xff] %v9438
        %9473 = vst [vmem:[%s340 + $0xa8] sm:$0xff] %v9439
        %9474 = vst [vmem:[%s340 + $0xb0] sm:$0xff] %v9440
        %9475 = vst [vmem:[%s340 + $0xb8] sm:$0xff] %v9441
        %9476 = vst [vmem:[%s340 + $0xc0] sm:$0xff] %v9442
        %9477 = vst [vmem:[%s340 + $0xc8] sm:$0xff] %v9443
        %9478 = vst [vmem:[%s340 + $0xd0] sm:$0xff] %v9444
        %9479 = vst [vmem:[%s340 + $0xd8] sm:$0xff] %v9445
        %9480 = vst [vmem:[%s340 + $0xe0] sm:$0xff] %v9446
        %9481 = vst [vmem:[%s340 + $0xe8] sm:$0xff] %v9447
        %9482 = vst [vmem:[%s340 + $0xf0] sm:$0xff] %v9448
        %9483 = vst [vmem:[%s340 + $0xf8] sm:$0xff] %v9449
        %9484 = vst [vmem:[%s340 + $0x100] sm:$0xff] %v9450
        %9485 = vst [vmem:[%s340 + $0x108] sm:$0xff] %v9451
        %s9486 = sand.u32 %s186, 1
        %s9487 = scalar_lea.sflag [#allocation5], %s9486
        %s9488 = sand.u32 %s186, 1
        %s9489 = smul.addr %s9488, 272
        %s9490 = scalar_lea.vmem [#allocation11], %s9489
        // Predicated region
        $region65: #{tpu_custom_call.1} parent=47 // pred_check
          %p9491 = pneg %p196
        $region66: #{tpu_custom_call.1} parent=47 // pred_check_branch
          %9493 = sbr.rel (%p9491) target = $region68
        $region67: #{tpu_custom_call.1} parent=47 // pred_region
          %s9494 = smul.u32 34, %s26
          %s9496 = ssub.s32 4352, 4352
          %9497 = vsyncadd %s9487, %s9496
          %s9498 = smul.addr %s9494, 128
          %s9499 = scalar_lea.hbm %s7, %s9498
          %s9500 = sshll.u32 %s9490, 4
          %s9501 = int_to_ptr.vmem [resolvable:$true] %s9500
          %9506 = dma.vmem_to_hbm [thread:$0]  %s9501, 4352, %s9499, %s9487, 128, 128, 8
        $region68: #{tpu_custom_call.1} parent=47 // pred_fallthru
          _
      $region48: #{tpu_custom_call.1} parent=5 // pred_fallthru
        _
      %p9507 = scmp.le.s32.totalorder 2, %s21
      // Predicated region
      $region69: #{tpu_custom_call.1} parent=5 // pred_check
        %p9508 = pneg %p9507
      $region70: #{tpu_custom_call.1} parent=5 // pred_check_branch
        %9510 = sbr.rel (%p9508) target = $region72
      $region71: #{tpu_custom_call.1} parent=5 // pred_region
        %s9511 = ssub.s32 %s21, 2
        // Predicated region
        $region73: #{tpu_custom_call.1} parent=71 // pred_check
          %p9512 = pneg %p202
        $region74: #{tpu_custom_call.1} parent=71 // pred_check_branch
          %9514 = sbr.rel (%p9512) target = $region76
        $region75: #{tpu_custom_call.1} parent=71 // pred_region
          %s9515 = sand.u32 %s187, 1
          %s9516 = scalar_lea.sflag [#allocation5], %s9515
          %s9517 = sand.u32 %s187, 1
          %s9518 = smul.addr %s9517, 272
          %s9519 = scalar_lea.vmem [#allocation11], %s9518
          %9520 = dma.done %s9516, 4352
        $region76: #{tpu_custom_call.1} parent=71 // pred_fallthru
          _
      $region72: #{tpu_custom_call.1} parent=5 // pred_fallthru
        _
    $region6: #{tpu_custom_call.1} parent=1 // loop_footer
      %s25 = sadd.s32 1, %s21
    $region7: #{tpu_custom_call.1} parent=1 // loop_footer_branch
      %20 = sbr.rel target = $region3
    $region8: #{tpu_custom_call.1} parent=1 // loop_exit
      _
    %9521 = vsyncpa [#allocation4], 1
    %s9522 = scalar_lea.sflag [#allocation4], 1
    %9523 = vsyncpa %s9522, 1
    %9524 = vsyncpa [#allocation7], 1
    %9525 = vsyncpa [#allocation10], 1
    %9526 = vsyncpa [#allocation5], 1
    %s9527 = scalar_lea.sflag [#allocation5], 1
    %9528 = vsyncpa %s9527, 1

</llo_original>
